<compile_context>
chip_gen: v6e
topology: v6e:2x2x1
jax: 0.10.0
libtpu: 0.0.40
codegen_flags: <defaults>
</compile_context>

<pallas_src>
import functools
import math

import numpy as np
import jax
import jax.numpy as jnp
from jax.experimental import pallas as pl
from jax.experimental.pallas import tpu as pltpu


# --------------------------------------------------------------------------
# tile selection helper
# --------------------------------------------------------------------------
def _pick_tile(dim, target, align):
    """Largest multiple of `align` that divides `dim` and is <= target (else full dim)."""
    if dim <= target:
        return dim
    t = (target // align) * align
    while t >= align:
        if dim % t == 0:
            return t
        t -= align
    return dim  # fall back to full extent (always legal)


def _gelu_exact(x):
    # exact (erf) GELU, matching torch.nn.GELU() default
    return 0.5 * x * (1.0 + jax.lax.erf(x * 0.7071067811865476))


# --------------------------------------------------------------------------
# Pallas kernels
# --------------------------------------------------------------------------
def _linear_kernel(*refs, activation, has_residual):
    """o = [residual +] act(x @ w + b), K-tiled with an f32 VMEM accumulator."""
    if has_residual:
        x_ref, w_ref, b_ref, r_ref, o_ref, acc_ref = refs
    else:
        x_ref, w_ref, b_ref, o_ref, acc_ref = refs
        r_ref = None

    @pl.when(pl.program_id(2) == 0)
    def _():
        acc_ref[...] = jnp.zeros_like(acc_ref)

    acc_ref[...] += jnp.dot(x_ref[...], w_ref[...],
                            preferred_element_type=jnp.float32)

    @pl.when(pl.program_id(2) == pl.num_programs(2) - 1)
    def _():
        acc = acc_ref[...] + b_ref[...].astype(jnp.float32)
        if activation == "gelu":
            acc = _gelu_exact(acc)
        if has_residual:
            acc = acc + r_ref[...].astype(jnp.float32)
        o_ref[...] = acc.astype(o_ref.dtype)


def _ln_linear_kernel(x_ref, g_ref, b_ref, w_ref, bias_ref, o_ref, xn_ref,
                      *, eps, activation):
    """o = act(LayerNorm(x) @ w + bias).

    LN stats in f32; the normalized row tile is computed ONCE (at j == 0) into a bf16
    VMEM scratch and reused for every output-column tile j.
    """
    @pl.when(pl.program_id(1) == 0)
    def _():
        x = x_ref[...].astype(jnp.float32)
        mean = jnp.mean(x, axis=-1, keepdims=True)
        var = jnp.mean(jnp.square(x - mean), axis=-1, keepdims=True)
        xn = (x - mean) * jax.lax.rsqrt(var + eps)
        xn = xn * g_ref[...] + b_ref[...]
        xn_ref[...] = xn.astype(jnp.bfloat16)

    acc = jnp.dot(xn_ref[...], w_ref[...], preferred_element_type=jnp.float32)
    acc = acc + bias_ref[...].astype(jnp.float32)
    if activation == "gelu":
        acc = _gelu_exact(acc)
    o_ref[...] = acc.astype(o_ref.dtype)


def _attention_kernel(q_ref, k_ref, v_ref, o_ref, *, seq_len, scale):
    """Single (batch, head) attention step.

    q/k/v refs: [1, 1, S_pad, Dh] bf16.  o ref: [1, 1, S_pad, Dh].
    The 1/sqrt(Dh) scale is folded into q (S*Dh mul, not S*S).
    Padded key positions (>= seq_len) are masked out of the softmax.
    """
    q = q_ref[0, 0] * scale                                  # [S_pad, Dh] bf16
    k = k_ref[0, 0]
    v = v_ref[0, 0]
    # scores: contract last dims directly (no explicit K transpose)
    s = jax.lax.dot_general(q, k, (((1,), (1,)), ((), ())),
                            preferred_element_type=jnp.float32)   # [S_pad, S_pad] f32
    col = jax.lax.broadcasted_iota(jnp.int32, s.shape, 1)
    s = jnp.where(col < seq_len, s, -1e30)
    m = jnp.max(s, axis=-1, keepdims=True)
    p = jnp.exp(s - m)
    p = p * pl.reciprocal(jnp.sum(p, axis=-1, keepdims=True), approx=True)
    o = jax.lax.dot_general(p.astype(jnp.bfloat16), v, (((1,), (0,)), ((), ())),
                            preferred_element_type=jnp.float32)
    o_ref[0, 0] = o.astype(o_ref.dtype)


# --------------------------------------------------------------------------
# pallas_call wrappers
# --------------------------------------------------------------------------
def pallas_linear(x, w, b, residual=None, activation=None, out_dtype=jnp.bfloat16):
    M, K = x.shape
    N = w.shape[1]
    tm = _pick_tile(M, 256, 128)
    tn = _pick_tile(N, 512, 128)
    tk = _pick_tile(K, 768, 128)
    grid = (M // tm, N // tn, K // tk)
    has_res = residual is not None
    kern = functools.partial(_linear_kernel, activation=activation,
                             has_residual=has_res)

    in_specs = [
        pl.BlockSpec((tm, tk), lambda i, j, k: (i, k)),
        pl.BlockSpec((tk, tn), lambda i, j, k: (k, j)),
        pl.BlockSpec((1, tn), lambda i, j, k: (0, j)),
    ]
    args = [x, w, b.reshape(1, N)]
    if has_res:
        in_specs.append(pl.BlockSpec((tm, tn), lambda i, j, k: (i, j)))
        args.append(residual)

    bytes_accessed = int(x.size * x.dtype.itemsize + w.size * w.dtype.itemsize
                         + (residual.size * residual.dtype.itemsize if has_res else 0)
                         + M * N * np.dtype(out_dtype).itemsize)
    transcendentals = M * N if activation == "gelu" else 0
    return pl.pallas_call(
        kern,
        out_shape=jax.ShapeDtypeStruct((M, N), out_dtype),
        grid=grid,
        in_specs=in_specs,
        out_specs=pl.BlockSpec((tm, tn), lambda i, j, k: (i, j)),
        scratch_shapes=[pltpu.VMEM((tm, tn), jnp.float32)],
        compiler_params=pltpu.CompilerParams(
            dimension_semantics=("parallel", "parallel", "arbitrary")),
        cost_estimate=pl.CostEstimate(flops=2 * M * N * K,
                                      transcendentals=transcendentals,
                                      bytes_accessed=bytes_accessed),
    )(*args)


def pallas_ln_linear(x, g, b, w, bias, *, eps, activation=None,
                     out_dtype=jnp.bfloat16):
    M, D = x.shape
    N = w.shape[1]
    tm = _pick_tile(M, 256, 128)
    tn = _pick_tile(N, 512, 128)
    grid = (M // tm, N // tn)
    kern = functools.partial(_ln_linear_kernel, eps=eps, activation=activation)
    bytes_accessed = int(x.size * x.dtype.itemsize + w.size * w.dtype.itemsize
                         + M * N * np.dtype(out_dtype).itemsize)
    transcendentals = (M * N if activation == "gelu" else 0) + M  # erf + rsqrt
    return pl.pallas_call(
        kern,
        out_shape=jax.ShapeDtypeStruct((M, N), out_dtype),
        grid=grid,
        in_specs=[
            pl.BlockSpec((tm, D), lambda i, j: (i, 0)),
            pl.BlockSpec((1, D), lambda i, j: (0, 0)),
            pl.BlockSpec((1, D), lambda i, j: (0, 0)),
            pl.BlockSpec((D, tn), lambda i, j: (0, j)),
            pl.BlockSpec((1, tn), lambda i, j: (0, j)),
        ],
        out_specs=pl.BlockSpec((tm, tn), lambda i, j: (i, j)),
        scratch_shapes=[pltpu.VMEM((tm, D), jnp.bfloat16)],   # normalized row tile
        compiler_params=pltpu.CompilerParams(
            dimension_semantics=("parallel", "arbitrary")),
        cost_estimate=pl.CostEstimate(flops=2 * M * N * D,
                                      transcendentals=transcendentals,
                                      bytes_accessed=bytes_accessed),
    )(x, g.reshape(1, D), b.reshape(1, D), w, bias.reshape(1, N))


def pallas_attention(qkv, *, heads, seq_len):
    """qkv: [B, S_pad, 3*D] bf16 ([q|k|v], head-major within each).  Returns [B, S_pad, D]."""
    B, S_pad, threeD = qkv.shape
    D = threeD // 3
    Dh = D // heads
    scale = 1.0 / math.sqrt(Dh)

    # re-lay-out to per-head blocks: (3, B, heads, S_pad, Dh)   (cheap XLA glue)
    qkv_r = qkv.reshape(B, S_pad, 3, heads, Dh).transpose(2, 0, 3, 1, 4)
    q, k, v = qkv_r[0], qkv_r[1], qkv_r[2]

    kern = functools.partial(_attention_kernel, seq_len=seq_len, scale=scale)
    spec = pl.BlockSpec((1, 1, S_pad, Dh), lambda b, h: (b, h, 0, 0))
    flops = 4 * B * heads * S_pad * S_pad * Dh
    out = pl.pallas_call(
        kern,
        out_shape=jax.ShapeDtypeStruct((B, heads, S_pad, Dh), jnp.bfloat16),
        grid=(B, heads),
        in_specs=[spec, spec, spec],
        out_specs=spec,
        compiler_params=pltpu.CompilerParams(
            dimension_semantics=("parallel", "parallel")),
        cost_estimate=pl.CostEstimate(
            flops=flops,
            transcendentals=B * heads * S_pad * S_pad,
            bytes_accessed=int(4 * B * heads * S_pad * Dh * 2)),
    )(q, k, v)
    return out.transpose(0, 2, 1, 3).reshape(B, S_pad, D)


# --------------------------------------------------------------------------
# ViT forward (glue in plain JAX, hot paths in fused Pallas kernels)
# --------------------------------------------------------------------------
def vit_forward(x, params, cfg):
    B, C, H, W = x.shape
    P, D, heads = cfg["patch"], cfg["hidden"], cfg["heads"]
    eps = cfg["eps"]
    Hp, Wp = H // P, W // P
    N = Hp * Wp
    S = N + 1
    S_pad = ((S + 127) // 128) * 128   # pad token axis to a lane multiple; kernels mask pad keys

    # --- patch embedding: Conv2d(k=P, stride=P) == patch flatten + matmul (bf16) ---
    patches = (
        x.reshape(B, C, Hp, P, Wp, P)
        .transpose(0, 2, 4, 1, 3, 5)          # (B, Hp, Wp, C, P, P)
        .reshape(B * N, C * P * P)            # rows ordered (c, ph, pw)
        .astype(jnp.bfloat16)
    )
    tokens = pallas_linear(patches, params["w_patch"], params["b_patch"],
                           out_dtype=jnp.float32).reshape(B, N, D)

    # --- cls token + positional embedding, then pad S -> S_pad; residual stream in bf16 ---
    cls = jnp.broadcast_to(params["cls_token"], (B, 1, D))
    seq = jnp.concatenate([cls, tokens], axis=1) + params["pos_emb"]   # (B, S, D) f32
    y = jnp.pad(seq, ((0, 0), (0, S_pad - S), (0, 0))).astype(jnp.bfloat16)

    # --- pre-LN transformer encoder blocks ---
    for lp in params["layers"]:
        x2 = y.reshape(B * S_pad, D)
        # fused: LN1 + QKV projection (single [D, 3D] matmul), bf16 output
        qkv = pallas_ln_linear(x2, lp["ln1_g"], lp["ln1_b"],
                               lp["w_qkv"], lp["b_qkv"], eps=eps,
                               out_dtype=jnp.bfloat16)
        attn = pallas_attention(qkv.reshape(B, S_pad, 3 * D),
                                heads=heads, seq_len=S)                 # (B, S_pad, D) bf16
        # fused: output projection + residual add
        y = pallas_linear(attn.reshape(B * S_pad, D), lp["wo"], lp["bo"],
                          residual=x2, out_dtype=jnp.bfloat16
                          ).reshape(B, S_pad, D)

        x3 = y.reshape(B * S_pad, D)
        # fused: LN2 + FC1 + exact GELU, bf16 output
        h1 = pallas_ln_linear(x3, lp["ln2_g"], lp["ln2_b"],
                              lp["w_fc1"], lp["b_fc1"], eps=eps,
                              activation="gelu", out_dtype=jnp.bfloat16)
        # fused: FC2 + residual add
        y = pallas_linear(h1, lp["w_fc2"], lp["b_fc2"],
                          residual=x3, out_dtype=jnp.bfloat16
                          ).reshape(B, S_pad, D)

    # --- final LayerNorm + classification head (fused) on the cls row only ---
    cls_out = y[:, 0, :]                                               # (B, D) bf16
    ncls = params["head_w"].shape[1]
    ncls_pad = ((ncls + 127) // 128) * 128                             # lane-dense head output
    head_w = jnp.pad(params["head_w"], ((0, 0), (0, ncls_pad - ncls)))
    head_b = jnp.pad(params["head_b"], ((0, ncls_pad - ncls),))
    logits = pallas_ln_linear(cls_out, params["lnf_g"], params["lnf_b"],
                              head_w, head_b, eps=eps,
                              out_dtype=jnp.float32)[:, :ncls]
    return logits


# --------------------------------------------------------------------------
# Deterministic parameter init (synthetic; no checkpoint loading)
# --------------------------------------------------------------------------
def init_params(key, cfg):
    C, P, D = cfg["in_ch"], cfg["patch"], cfg["hidden"]
    mlp, L, ncls = cfg["mlp"], cfg["layers"], cfg["classes"]
    S = (cfg["image"] // P) ** 2 + 1

    def nrm(k, shape, scale=0.02, dtype=jnp.bfloat16):
        return (scale * jax.random.normal(k, shape, jnp.float32)).astype(dtype)

    keys = iter(jax.random.split(key, 8 + 6 * L))
    params = {
        "w_patch": nrm(next(keys), (C * P * P, D)),          # conv as matmul, bf16
        "b_patch": jnp.zeros((D,), jnp.float32),
        "cls_token": nrm(next(keys), (1, 1, D), dtype=jnp.float32),
        "pos_emb": nrm(next(keys), (1, S, D), dtype=jnp.float32),
        "lnf_g": jnp.ones((D,), jnp.float32),
        "lnf_b": jnp.zeros((D,), jnp.float32),
        "head_w": nrm(next(keys), (D, ncls)),
        "head_b": jnp.zeros((ncls,), jnp.float32),
        "layers": [],
    }
    for _ in range(L):
        params["layers"].append({
            "ln1_g": jnp.ones((D,), jnp.float32), "ln1_b": jnp.zeros((D,), jnp.float32),
            "w_qkv": nrm(next(keys), (D, 3 * D)),            # fused [q|k|v]
            "b_qkv": jnp.zeros((3 * D,), jnp.float32),
            "wo": nrm(next(keys), (D, D)), "bo": jnp.zeros((D,), jnp.float32),
            "ln2_g": jnp.ones((D,), jnp.float32), "ln2_b": jnp.zeros((D,), jnp.float32),
            "w_fc1": nrm(next(keys), (D, mlp)), "b_fc1": jnp.zeros((mlp,), jnp.float32),
            "w_fc2": nrm(next(keys), (mlp, D)), "b_fc2": jnp.zeros((D,), jnp.float32),
        })
    return params


if __name__ == "__main__":
    # Small ViT config (real ViT-B/16 would be image=224, hidden=768, heads=12,
    # mlp=3072, layers=12 — same code path, just bigger tensors / more tiles).
    cfg = dict(image=32, patch=16, in_ch=3, hidden=64, heads=4,
               mlp=128, layers=2, classes=10, eps=1e-6)

    key = jax.random.PRNGKey(0)
    k_x, k_p = jax.random.split(key)
    x = jax.random.normal(k_x, (2, cfg["in_ch"], cfg["image"], cfg["image"]), jnp.float32)
    params = init_params(k_p, cfg)

    fwd = jax.jit(functools.partial(vit_forward, cfg=cfg))
    logits = fwd(x, params)
    jax.block_until_ready(logits)
    assert logits.shape == (2, cfg["classes"]) and logits.dtype == jnp.float32
    assert bool(jnp.all(jnp.isfinite(logits)))
    print("KERNEL_OK")
</pallas_src>

<mosaic_0001>
module attributes {stable_mosaic.version = 11 : i64} {
  func.func @_linear_kernel(%arg0: i32, %arg1: i32, %arg2: i32, %arg3: memref<8x768xbf16, #tpu.memory_space<vmem>>, %arg4: memref<768x64xbf16, #tpu.memory_space<vmem>>, %arg5: memref<1x64xf32, #tpu.memory_space<vmem>>, %arg6: memref<8x64xf32, #tpu.memory_space<vmem>>, %arg7: memref<8x64xf32, #tpu.memory_space<vmem>>) attributes {dimension_semantics = [#tpu.dimension_semantics<parallel>, #tpu.dimension_semantics<parallel>, #tpu.dimension_semantics<arbitrary>], iteration_bounds = array<i64: 1, 1, 1>, scalar_prefetch = 0 : i64, scratch_operands = 1 : i64, tpu.core_type = #tpu.core_type<tc>, window_params = [{transform_indices = @transform_0, window_bounds = array<i64: 8, 768>}, {transform_indices = @transform_1, window_bounds = array<i64: 768, 64>}, {transform_indices = @transform_2, window_bounds = array<i64: 1, 64>}, {transform_indices = @transform_3, window_bounds = array<i64: 8, 64>}]} {
    %c0_i32 = arith.constant 0 : i32
    %0 = arith.cmpi eq, %arg2, %c0_i32 : i32
    %1 = arith.extui %0 : i1 to i32
    %c0_i32_0 = arith.constant 0 : i32
    %2 = arith.cmpi ne, %1, %c0_i32_0 : i32
    scf.if %2 {
      %cst_10 = arith.constant 0.000000e+00 : f32
      %12 = vector.broadcast %cst_10 : f32 to vector<8x64xf32>
      %c0_11 = arith.constant 0 : index
      %c0_12 = arith.constant 0 : index
      %13 = vector.load %arg7[%c0_11, %c0_12] : memref<8x64xf32, #tpu.memory_space<vmem>>, vector<8x64xf32>
      tpu.vector_store %arg7[%c0_11, %c0_12], %12 {strides = array<i32>} : memref<8x64xf32, #tpu.memory_space<vmem>>, vector<8x64xf32>,
    } else {
    }
    %c0 = arith.constant 0 : index
    %c0_1 = arith.constant 0 : index
    %3 = vector.load %arg7[%c0, %c0_1] : memref<8x64xf32, #tpu.memory_space<vmem>>, vector<8x64xf32>
    %c0_2 = arith.constant 0 : index
    %c0_3 = arith.constant 0 : index
    %4 = vector.load %arg3[%c0_2, %c0_3] : memref<8x768xbf16, #tpu.memory_space<vmem>>, vector<8x768xbf16>
    %c0_4 = arith.constant 0 : index
    %c0_5 = arith.constant 0 : index
    %5 = vector.load %arg4[%c0_4, %c0_5] : memref<768x64xbf16, #tpu.memory_space<vmem>>, vector<768x64xbf16>
    %cst = arith.constant dense<0.000000e+00> : vector<8x64xf32>
    %6 = tpu.matmul %4, %5, %cst {dimension_numbers = #tpu.dot_dimension_numbers<[1], [0], [0], [1], [0, 0, 1, 1], [], []>} : vector<8x768xbf16>, vector<768x64xbf16>, vector<8x64xf32> -> vector<8x64xf32>
    %7 = arith.addf %3, %6 : vector<8x64xf32>
    %c0_6 = arith.constant 0 : index
    %c0_7 = arith.constant 0 : index
    %8 = vector.load %arg7[%c0_6, %c0_7] : memref<8x64xf32, #tpu.memory_space<vmem>>, vector<8x64xf32>
    tpu.vector_store %arg7[%c0_6, %c0_7], %7 {strides = array<i32>} : memref<8x64xf32, #tpu.memory_space<vmem>>, vector<8x64xf32>,
    %c0_i32_8 = arith.constant 0 : i32
    %9 = arith.cmpi eq, %arg2, %c0_i32_8 : i32
    %10 = arith.extui %9 : i1 to i32
    %c0_i32_9 = arith.constant 0 : i32
    %11 = arith.cmpi ne, %10, %c0_i32_9 : i32
    scf.if %11 {
      %c0_10 = arith.constant 0 : index
      %c0_11 = arith.constant 0 : index
      %12 = vector.load %arg7[%c0_10, %c0_11] : memref<8x64xf32, #tpu.memory_space<vmem>>, vector<8x64xf32>
      %c0_12 = arith.constant 0 : index
      %c0_13 = arith.constant 0 : index
      %13 = vector.load %arg5[%c0_12, %c0_13] : memref<1x64xf32, #tpu.memory_space<vmem>>, vector<1x64xf32>
      %14 = vector.broadcast %13 : vector<1x64xf32> to vector<8x64xf32>
      %15 = arith.addf %12, %14 : vector<8x64xf32>
      %c0_14 = arith.constant 0 : index
      %c0_15 = arith.constant 0 : index
      %16 = vector.load %arg6[%c0_14, %c0_15] : memref<8x64xf32, #tpu.memory_space<vmem>>, vector<8x64xf32>
      tpu.vector_store %arg6[%c0_14, %c0_15], %15 {strides = array<i32>} : memref<8x64xf32, #tpu.memory_space<vmem>>, vector<8x64xf32>,
    } else {
    }
    return
  }
  func.func @transform_0(%arg0: i32, %arg1: i32, %arg2: i32) -> (i32, i32) {
    %c0_i32 = arith.constant 0 : i32
    return %arg0, %arg2 : i32, i32
  }
  func.func @transform_1(%arg0: i32, %arg1: i32, %arg2: i32) -> (i32, i32) {
    %c0_i32 = arith.constant 0 : i32
    return %arg2, %arg1 : i32, i32
  }
  func.func @transform_2(%arg0: i32, %arg1: i32, %arg2: i32) -> (i32, i32) {
    %c0_i32 = arith.constant 0 : i32
    %c0_i32_0 = arith.constant 0 : i32
    return %c0_i32, %arg1 : i32, i32
  }
  func.func @transform_3(%arg0: i32, %arg1: i32, %arg2: i32) -> (i32, i32) {
    %c0_i32 = arith.constant 0 : i32
    return %arg0, %arg1 : i32, i32
  }
}

module attributes {stable_mosaic.version = 11 : i64} {
  func.func @_ln_linear_kernel(%arg0: i32, %arg1: i32, %arg2: memref<256x64xbf16, #tpu.memory_space<vmem>>, %arg3: memref<1x64xf32, #tpu.memory_space<vmem>>, %arg4: memref<1x64xf32, #tpu.memory_space<vmem>>, %arg5: memref<64x192xbf16, #tpu.memory_space<vmem>>, %arg6: memref<1x192xf32, #tpu.memory_space<vmem>>, %arg7: memref<256x192xbf16, #tpu.memory_space<vmem>>, %arg8: memref<256x64xbf16, #tpu.memory_space<vmem>>) attributes {dimension_semantics = [#tpu.dimension_semantics<parallel>, #tpu.dimension_semantics<arbitrary>], iteration_bounds = array<i64: 1, 1>, scalar_prefetch = 0 : i64, scratch_operands = 1 : i64, tpu.core_type = #tpu.core_type<tc>, window_params = [{transform_indices = @transform_0, window_bounds = array<i64: 256, 64>}, {pipeline_mode = #tpu.pipeline_mode<synchronous>, transform_indices = @transform_1, window_bounds = array<i64: 1, 64>}, {pipeline_mode = #tpu.pipeline_mode<synchronous>, transform_indices = @transform_2, window_bounds = array<i64: 1, 64>}, {transform_indices = @transform_3, window_bounds = array<i64: 64, 192>}, {transform_indices = @transform_4, window_bounds = array<i64: 1, 192>}, {transform_indices = @transform_5, window_bounds = array<i64: 256, 192>}]} {
    %c0_i32 = arith.constant 0 : i32
    %0 = arith.cmpi eq, %arg1, %c0_i32 : i32
    %1 = arith.extui %0 : i1 to i32
    %c0_i32_0 = arith.constant 0 : i32
    %2 = arith.cmpi ne, %1, %c0_i32_0 : i32
    scf.if %2 {
      %c0_8 = arith.constant 0 : index
      %c0_9 = arith.constant 0 : index
      %11 = vector.load %arg2[%c0_8, %c0_9] : memref<256x64xbf16, #tpu.memory_space<vmem>>, vector<256x64xbf16>
      %12 = arith.extf %11 : vector<256x64xbf16> to vector<256x64xf32>
      %cst_10 = arith.constant dense<0.000000e+00> : vector<256xf32>
      %13 = vector.multi_reduction <add>, %12, %cst_10 [1] : vector<256x64xf32> to vector<256xf32>
      %14 = vector.shape_cast %13 : vector<256xf32> to vector<256x1xf32>
      %cst_11 = arith.constant 6.400000e+01 : f32
      %15 = vector.broadcast %cst_11 : f32 to vector<256x1xf32>
      %16 = arith.divf %14, %15 : vector<256x1xf32>
      %17 = vector.broadcast %16 : vector<256x1xf32> to vector<256x64xf32>
      %18 = arith.subf %12, %17 : vector<256x64xf32>
      %19 = arith.mulf %18, %18 : vector<256x64xf32>
      %cst_12 = arith.constant dense<0.000000e+00> : vector<256xf32>
      %20 = vector.multi_reduction <add>, %19, %cst_12 [1] : vector<256x64xf32> to vector<256xf32>
      %21 = vector.shape_cast %20 : vector<256xf32> to vector<256x1xf32>
      %cst_13 = arith.constant 6.400000e+01 : f32
      %22 = vector.broadcast %cst_13 : f32 to vector<256x1xf32>
      %23 = arith.divf %21, %22 : vector<256x1xf32>
      %24 = vector.broadcast %16 : vector<256x1xf32> to vector<256x64xf32>
      %25 = arith.subf %12, %24 : vector<256x64xf32>
      %cst_14 = arith.constant 9.99999997E-7 : f32
      %26 = vector.broadcast %cst_14 : f32 to vector<256x1xf32>
      %27 = arith.addf %23, %26 : vector<256x1xf32>
      %28 = math.rsqrt %27 : vector<256x1xf32>
      %29 = vector.broadcast %28 : vector<256x1xf32> to vector<256x64xf32>
      %30 = arith.mulf %25, %29 : vector<256x64xf32>
      %c0_15 = arith.constant 0 : index
      %c0_16 = arith.constant 0 : index
      %31 = vector.load %arg3[%c0_15, %c0_16] : memref<1x64xf32, #tpu.memory_space<vmem>>, vector<1x64xf32>
      %32 = vector.broadcast %31 : vector<1x64xf32> to vector<256x64xf32>
      %33 = arith.mulf %30, %32 : vector<256x64xf32>
      %c0_17 = arith.constant 0 : index
      %c0_18 = arith.constant 0 : index
      %34 = vector.load %arg4[%c0_17, %c0_18] : memref<1x64xf32, #tpu.memory_space<vmem>>, vector<1x64xf32>
      %35 = vector.broadcast %34 : vector<1x64xf32> to vector<256x64xf32>
      %36 = arith.addf %33, %35 : vector<256x64xf32>
      %37 = arith.truncf %36 : vector<256x64xf32> to vector<256x64xbf16>
      %c0_19 = arith.constant 0 : index
      %c0_20 = arith.constant 0 : index
      %38 = vector.load %arg8[%c0_19, %c0_20] : memref<256x64xbf16, #tpu.memory_space<vmem>>, vector<256x64xbf16>
      tpu.vector_store %arg8[%c0_19, %c0_20], %37 {strides = array<i32>} : memref<256x64xbf16, #tpu.memory_space<vmem>>, vector<256x64xbf16>,
    } else {
    }
    %c0 = arith.constant 0 : index
    %c0_1 = arith.constant 0 : index
    %3 = vector.load %arg8[%c0, %c0_1] : memref<256x64xbf16, #tpu.memory_space<vmem>>, vector<256x64xbf16>
    %c0_2 = arith.constant 0 : index
    %c0_3 = arith.constant 0 : index
    %4 = vector.load %arg5[%c0_2, %c0_3] : memref<64x192xbf16, #tpu.memory_space<vmem>>, vector<64x192xbf16>
    %cst = arith.constant dense<0.000000e+00> : vector<256x192xf32>
    %5 = tpu.matmul %3, %4, %cst {dimension_numbers = #tpu.dot_dimension_numbers<[1], [0], [0], [1], [0, 0, 1, 1], [], []>} : vector<256x64xbf16>, vector<64x192xbf16>, vector<256x192xf32> -> vector<256x192xf32>
    %c0_4 = arith.constant 0 : index
    %c0_5 = arith.constant 0 : index
    %6 = vector.load %arg6[%c0_4, %c0_5] : memref<1x192xf32, #tpu.memory_space<vmem>>, vector<1x192xf32>
    %7 = vector.broadcast %6 : vector<1x192xf32> to vector<256x192xf32>
    %8 = arith.addf %5, %7 : vector<256x192xf32>
    %9 = arith.truncf %8 : vector<256x192xf32> to vector<256x192xbf16>
    %c0_6 = arith.constant 0 : index
    %c0_7 = arith.constant 0 : index
    %10 = vector.load %arg7[%c0_6, %c0_7] : memref<256x192xbf16, #tpu.memory_space<vmem>>, vector<256x192xbf16>
    tpu.vector_store %arg7[%c0_6, %c0_7], %9 {strides = array<i32>} : memref<256x192xbf16, #tpu.memory_space<vmem>>, vector<256x192xbf16>,
    return
  }
  func.func @transform_0(%arg0: i32, %arg1: i32) -> (i32, i32) {
    %c0_i32 = arith.constant 0 : i32
    %c0_i32_0 = arith.constant 0 : i32
    return %arg0, %c0_i32 : i32, i32
  }
  func.func @transform_1(%arg0: i32, %arg1: i32) -> (i32, i32) {
    %c0_i32 = arith.constant 0 : i32
    %c0_i32_0 = arith.constant 0 : i32
    %c0_i32_1 = arith.constant 0 : i32
    return %c0_i32, %c0_i32_0 : i32, i32
  }
  func.func @transform_2(%arg0: i32, %arg1: i32) -> (i32, i32) {
    %c0_i32 = arith.constant 0 : i32
    %c0_i32_0 = arith.constant 0 : i32
    %c0_i32_1 = arith.constant 0 : i32
    return %c0_i32, %c0_i32_0 : i32, i32
  }
  func.func @transform_3(%arg0: i32, %arg1: i32) -> (i32, i32) {
    %c0_i32 = arith.constant 0 : i32
    %c0_i32_0 = arith.constant 0 : i32
    return %c0_i32, %arg1 : i32, i32
  }
  func.func @transform_4(%arg0: i32, %arg1: i32) -> (i32, i32) {
    %c0_i32 = arith.constant 0 : i32
    %c0_i32_0 = arith.constant 0 : i32
    return %c0_i32, %arg1 : i32, i32
  }
  func.func @transform_5(%arg0: i32, %arg1: i32) -> (i32, i32) {
    %c0_i32 = arith.constant 0 : i32
    return %arg0, %arg1 : i32, i32
  }
}

module attributes {stable_mosaic.version = 11 : i64} {
  func.func @_attention_kernel(%arg0: i32, %arg1: i32, %arg2: memref<1x1x128x16xbf16, #tpu.memory_space<vmem>>, %arg3: memref<1x1x128x16xbf16, #tpu.memory_space<vmem>>, %arg4: memref<1x1x128x16xbf16, #tpu.memory_space<vmem>>, %arg5: memref<1x1x128x16xbf16, #tpu.memory_space<vmem>>) attributes {dimension_semantics = [#tpu.dimension_semantics<parallel>, #tpu.dimension_semantics<parallel>], iteration_bounds = array<i64: 2, 4>, scalar_prefetch = 0 : i64, scratch_operands = 0 : i64, tpu.core_type = #tpu.core_type<tc>, window_params = [{transform_indices = @transform_0, window_bounds = array<i64: 1, 1, 128, 16>}, {transform_indices = @transform_1, window_bounds = array<i64: 1, 1, 128, 16>}, {transform_indices = @transform_2, window_bounds = array<i64: 1, 1, 128, 16>}, {transform_indices = @transform_3, window_bounds = array<i64: 1, 1, 128, 16>}]} {
    %c0 = arith.constant 0 : index
    %c0_0 = arith.constant 0 : index
    %c0_1 = arith.constant 0 : index
    %c0_2 = arith.constant 0 : index
    %0 = vector.load %arg2[%c0, %c0_0, %c0_1, %c0_2] : memref<1x1x128x16xbf16, #tpu.memory_space<vmem>>, vector<1x1x128x16xbf16>
    %1 = vector.shape_cast %0 : vector<1x1x128x16xbf16> to vector<128x16xbf16>
    %cst = arith.constant 2.500000e-01 : bf16
    %2 = vector.broadcast %cst : bf16 to vector<128x16xbf16>
    %3 = arith.mulf %1, %2 : vector<128x16xbf16>
    %c0_3 = arith.constant 0 : index
    %c0_4 = arith.constant 0 : index
    %c0_5 = arith.constant 0 : index
    %c0_6 = arith.constant 0 : index
    %4 = vector.load %arg3[%c0_3, %c0_4, %c0_5, %c0_6] : memref<1x1x128x16xbf16, #tpu.memory_space<vmem>>, vector<1x1x128x16xbf16>
    %5 = vector.shape_cast %4 : vector<1x1x128x16xbf16> to vector<128x16xbf16>
    %c0_7 = arith.constant 0 : index
    %c0_8 = arith.constant 0 : index
    %c0_9 = arith.constant 0 : index
    %c0_10 = arith.constant 0 : index
    %6 = vector.load %arg4[%c0_7, %c0_8, %c0_9, %c0_10] : memref<1x1x128x16xbf16, #tpu.memory_space<vmem>>, vector<1x1x128x16xbf16>
    %7 = vector.shape_cast %6 : vector<1x1x128x16xbf16> to vector<128x16xbf16>
    %cst_11 = arith.constant dense<0.000000e+00> : vector<128x128xf32>
    %8 = tpu.matmul %3, %5, %cst_11 {dimension_numbers = #tpu.dot_dimension_numbers<[1], [1], [0], [0], [0, 0, 1, 0], [], []>} : vector<128x16xbf16>, vector<128x16xbf16>, vector<128x128xf32> -> vector<128x128xf32>
    %9 = tpu.iota {dimensions = array<i32: 1>} : vector<128x128xi32>
    %c5_i32 = arith.constant 5 : i32
    %10 = vector.broadcast %c5_i32 : i32 to vector<128x128xi32>
    %11 = arith.cmpi slt, %9, %10 : vector<128x128xi32>
    %cst_12 = arith.constant -1.000000e+30 : f32
    %12 = vector.broadcast %cst_12 : f32 to vector<128x128xf32>
    %13 = arith.select %11, %8, %12 : vector<128x128xi1>, vector<128x128xf32>
    %cst_13 = arith.constant dense<0xFF800000> : vector<128xf32>
    %14 = vector.multi_reduction <maximumf>, %13, %cst_13 [1] : vector<128x128xf32> to vector<128xf32>
    %15 = vector.shape_cast %14 : vector<128xf32> to vector<128x1xf32>
    %16 = vector.broadcast %15 : vector<128x1xf32> to vector<128x128xf32>
    %17 = arith.subf %13, %16 : vector<128x128xf32>
    %18 = math.exp %17 : vector<128x128xf32>
    %cst_14 = arith.constant dense<0.000000e+00> : vector<128xf32>
    %19 = vector.multi_reduction <add>, %18, %cst_14 [1] : vector<128x128xf32> to vector<128xf32>
    %20 = vector.shape_cast %19 : vector<128xf32> to vector<128x1xf32>
    %21 = tpu.reciprocal %20 {approx = true} : vector<128x1xf32> -> vector<128x1xf32>
    %22 = vector.broadcast %21 : vector<128x1xf32> to vector<128x128xf32>
    %23 = arith.mulf %18, %22 : vector<128x128xf32>
    %24 = arith.truncf %23 : vector<128x128xf32> to vector<128x128xbf16>
    %cst_15 = arith.constant dense<0.000000e+00> : vector<128x16xf32>
    %25 = tpu.matmul %24, %7, %cst_15 {dimension_numbers = #tpu.dot_dimension_numbers<[1], [0], [0], [1], [0, 0, 1, 1], [], []>} : vector<128x128xbf16>, vector<128x16xbf16>, vector<128x16xf32> -> vector<128x16xf32>
    %26 = arith.truncf %25 : vector<128x16xf32> to vector<128x16xbf16>
    %c0_16 = arith.constant 0 : index
    %c0_17 = arith.constant 0 : index
    %c0_18 = arith.constant 0 : index
    %c0_19 = arith.constant 0 : index
    %27 = vector.load %arg5[%c0_16, %c0_17, %c0_18, %c0_19] : memref<1x1x128x16xbf16, #tpu.memory_space<vmem>>, vector<1x1x128x16xbf16>
    %28 = vector.shape_cast %27 : vector<1x1x128x16xbf16> to vector<128x16xbf16>
    %29 = vector.shape_cast %26 : vector<128x16xbf16> to vector<1x1x128x16xbf16>
    tpu.vector_store %arg5[%c0_16, %c0_17, %c0_18, %c0_19], %29 {strides = array<i32>} : memref<1x1x128x16xbf16, #tpu.memory_space<vmem>>, vector<1x1x128x16xbf16>,
    return
  }
  func.func @transform_0(%arg0: i32, %arg1: i32) -> (i32, i32, i32, i32) {
    %c0_i32 = arith.constant 0 : i32
    %c0_i32_0 = arith.constant 0 : i32
    %c0_i32_1 = arith.constant 0 : i32
    return %arg0, %arg1, %c0_i32, %c0_i32_0 : i32, i32, i32, i32
  }
  func.func @transform_1(%arg0: i32, %arg1: i32) -> (i32, i32, i32, i32) {
    %c0_i32 = arith.constant 0 : i32
    %c0_i32_0 = arith.constant 0 : i32
    %c0_i32_1 = arith.constant 0 : i32
    return %arg0, %arg1, %c0_i32, %c0_i32_0 : i32, i32, i32, i32
  }
  func.func @transform_2(%arg0: i32, %arg1: i32) -> (i32, i32, i32, i32) {
    %c0_i32 = arith.constant 0 : i32
    %c0_i32_0 = arith.constant 0 : i32
    %c0_i32_1 = arith.constant 0 : i32
    return %arg0, %arg1, %c0_i32, %c0_i32_0 : i32, i32, i32, i32
  }
  func.func @transform_3(%arg0: i32, %arg1: i32) -> (i32, i32, i32, i32) {
    %c0_i32 = arith.constant 0 : i32
    %c0_i32_0 = arith.constant 0 : i32
    %c0_i32_1 = arith.constant 0 : i32
    return %arg0, %arg1, %c0_i32, %c0_i32_0 : i32, i32, i32, i32
  }
}

module attributes {stable_mosaic.version = 11 : i64} {
  func.func @_linear_kernel(%arg0: i32, %arg1: i32, %arg2: i32, %arg3: memref<256x64xbf16, #tpu.memory_space<vmem>>, %arg4: memref<64x64xbf16, #tpu.memory_space<vmem>>, %arg5: memref<1x64xf32, #tpu.memory_space<vmem>>, %arg6: memref<256x64xbf16, #tpu.memory_space<vmem>>, %arg7: memref<256x64xbf16, #tpu.memory_space<vmem>>, %arg8: memref<256x64xf32, #tpu.memory_space<vmem>>) attributes {dimension_semantics = [#tpu.dimension_semantics<parallel>, #tpu.dimension_semantics<parallel>, #tpu.dimension_semantics<arbitrary>], iteration_bounds = array<i64: 1, 1, 1>, scalar_prefetch = 0 : i64, scratch_operands = 1 : i64, tpu.core_type = #tpu.core_type<tc>, window_params = [{transform_indices = @transform_0, window_bounds = array<i64: 256, 64>}, {transform_indices = @transform_1, window_bounds = array<i64: 64, 64>}, {transform_indices = @transform_2, window_bounds = array<i64: 1, 64>}, {transform_indices = @transform_3, window_bounds = array<i64: 256, 64>}, {transform_indices = @transform_4, window_bounds = array<i64: 256, 64>}]} {
    %c0_i32 = arith.constant 0 : i32
    %0 = arith.cmpi eq, %arg2, %c0_i32 : i32
    %1 = arith.extui %0 : i1 to i32
    %c0_i32_0 = arith.constant 0 : i32
    %2 = arith.cmpi ne, %1, %c0_i32_0 : i32
    scf.if %2 {
      %cst_10 = arith.constant 0.000000e+00 : f32
      %12 = vector.broadcast %cst_10 : f32 to vector<256x64xf32>
      %c0_11 = arith.constant 0 : index
      %c0_12 = arith.constant 0 : index
      %13 = vector.load %arg8[%c0_11, %c0_12] : memref<256x64xf32, #tpu.memory_space<vmem>>, vector<256x64xf32>
      tpu.vector_store %arg8[%c0_11, %c0_12], %12 {strides = array<i32>} : memref<256x64xf32, #tpu.memory_space<vmem>>, vector<256x64xf32>,
    } else {
    }
    %c0 = arith.constant 0 : index
    %c0_1 = arith.constant 0 : index
    %3 = vector.load %arg8[%c0, %c0_1] : memref<256x64xf32, #tpu.memory_space<vmem>>, vector<256x64xf32>
    %c0_2 = arith.constant 0 : index
    %c0_3 = arith.constant 0 : index
    %4 = vector.load %arg3[%c0_2, %c0_3] : memref<256x64xbf16, #tpu.memory_space<vmem>>, vector<256x64xbf16>
    %c0_4 = arith.constant 0 : index
    %c0_5 = arith.constant 0 : index
    %5 = vector.load %arg4[%c0_4, %c0_5] : memref<64x64xbf16, #tpu.memory_space<vmem>>, vector<64x64xbf16>
    %cst = arith.constant dense<0.000000e+00> : vector<256x64xf32>
    %6 = tpu.matmul %4, %5, %cst {dimension_numbers = #tpu.dot_dimension_numbers<[1], [0], [0], [1], [0, 0, 1, 1], [], []>} : vector<256x64xbf16>, vector<64x64xbf16>, vector<256x64xf32> -> vector<256x64xf32>
    %7 = arith.addf %3, %6 : vector<256x64xf32>
    %c0_6 = arith.constant 0 : index
    %c0_7 = arith.constant 0 : index
    %8 = vector.load %arg8[%c0_6, %c0_7] : memref<256x64xf32, #tpu.memory_space<vmem>>, vector<256x64xf32>
    tpu.vector_store %arg8[%c0_6, %c0_7], %7 {strides = array<i32>} : memref<256x64xf32, #tpu.memory_space<vmem>>, vector<256x64xf32>,
    %c0_i32_8 = arith.constant 0 : i32
    %9 = arith.cmpi eq, %arg2, %c0_i32_8 : i32
    %10 = arith.extui %9 : i1 to i32
    %c0_i32_9 = arith.constant 0 : i32
    %11 = arith.cmpi ne, %10, %c0_i32_9 : i32
    scf.if %11 {
      %c0_10 = arith.constant 0 : index
      %c0_11 = arith.constant 0 : index
      %12 = vector.load %arg8[%c0_10, %c0_11] : memref<256x64xf32, #tpu.memory_space<vmem>>, vector<256x64xf32>
      %c0_12 = arith.constant 0 : index
      %c0_13 = arith.constant 0 : index
      %13 = vector.load %arg5[%c0_12, %c0_13] : memref<1x64xf32, #tpu.memory_space<vmem>>, vector<1x64xf32>
      %14 = vector.broadcast %13 : vector<1x64xf32> to vector<256x64xf32>
      %15 = arith.addf %12, %14 : vector<256x64xf32>
      %c0_14 = arith.constant 0 : index
      %c0_15 = arith.constant 0 : index
      %16 = vector.load %arg6[%c0_14, %c0_15] : memref<256x64xbf16, #tpu.memory_space<vmem>>, vector<256x64xbf16>
      %17 = arith.extf %16 : vector<256x64xbf16> to vector<256x64xf32>
      %18 = arith.addf %15, %17 : vector<256x64xf32>
      %19 = arith.truncf %18 : vector<256x64xf32> to vector<256x64xbf16>
      %c0_16 = arith.constant 0 : index
      %c0_17 = arith.constant 0 : index
      %20 = vector.load %arg7[%c0_16, %c0_17] : memref<256x64xbf16, #tpu.memory_space<vmem>>, vector<256x64xbf16>
      tpu.vector_store %arg7[%c0_16, %c0_17], %19 {strides = array<i32>} : memref<256x64xbf16, #tpu.memory_space<vmem>>, vector<256x64xbf16>,
    } else {
    }
    return
  }
  func.func @transform_0(%arg0: i32, %arg1: i32, %arg2: i32) -> (i32, i32) {
    %c0_i32 = arith.constant 0 : i32
    return %arg0, %arg2 : i32, i32
  }
  func.func @transform_1(%arg0: i32, %arg1: i32, %arg2: i32) -> (i32, i32) {
    %c0_i32 = arith.constant 0 : i32
    return %arg2, %arg1 : i32, i32
  }
  func.func @transform_2(%arg0: i32, %arg1: i32, %arg2: i32) -> (i32, i32) {
    %c0_i32 = arith.constant 0 : i32
    %c0_i32_0 = arith.constant 0 : i32
    return %c0_i32, %arg1 : i32, i32
  }
  func.func @transform_3(%arg0: i32, %arg1: i32, %arg2: i32) -> (i32, i32) {
    %c0_i32 = arith.constant 0 : i32
    return %arg0, %arg1 : i32, i32
  }
  func.func @transform_4(%arg0: i32, %arg1: i32, %arg2: i32) -> (i32, i32) {
    %c0_i32 = arith.constant 0 : i32
    return %arg0, %arg1 : i32, i32
  }
}

module attributes {stable_mosaic.version = 11 : i64} {
  func.func @_ln_linear_kernel(%arg0: i32, %arg1: i32, %arg2: memref<256x64xbf16, #tpu.memory_space<vmem>>, %arg3: memref<1x64xf32, #tpu.memory_space<vmem>>, %arg4: memref<1x64xf32, #tpu.memory_space<vmem>>, %arg5: memref<64x128xbf16, #tpu.memory_space<vmem>>, %arg6: memref<1x128xf32, #tpu.memory_space<vmem>>, %arg7: memref<256x128xbf16, #tpu.memory_space<vmem>>, %arg8: memref<256x64xbf16, #tpu.memory_space<vmem>>) attributes {dimension_semantics = [#tpu.dimension_semantics<parallel>, #tpu.dimension_semantics<arbitrary>], iteration_bounds = array<i64: 1, 1>, scalar_prefetch = 0 : i64, scratch_operands = 1 : i64, tpu.core_type = #tpu.core_type<tc>, window_params = [{transform_indices = @transform_0, window_bounds = array<i64: 256, 64>}, {pipeline_mode = #tpu.pipeline_mode<synchronous>, transform_indices = @transform_1, window_bounds = array<i64: 1, 64>}, {pipeline_mode = #tpu.pipeline_mode<synchronous>, transform_indices = @transform_2, window_bounds = array<i64: 1, 64>}, {transform_indices = @transform_3, window_bounds = array<i64: 64, 128>}, {transform_indices = @transform_4, window_bounds = array<i64: 1, 128>}, {transform_indices = @transform_5, window_bounds = array<i64: 256, 128>}]} {
    %c0_i32 = arith.constant 0 : i32
    %0 = arith.cmpi eq, %arg1, %c0_i32 : i32
    %1 = arith.extui %0 : i1 to i32
    %c0_i32_0 = arith.constant 0 : i32
    %2 = arith.cmpi ne, %1, %c0_i32_0 : i32
    scf.if %2 {
      %c0_11 = arith.constant 0 : index
      %c0_12 = arith.constant 0 : index
      %19 = vector.load %arg2[%c0_11, %c0_12] : memref<256x64xbf16, #tpu.memory_space<vmem>>, vector<256x64xbf16>
      %20 = arith.extf %19 : vector<256x64xbf16> to vector<256x64xf32>
      %cst_13 = arith.constant dense<0.000000e+00> : vector<256xf32>
      %21 = vector.multi_reduction <add>, %20, %cst_13 [1] : vector<256x64xf32> to vector<256xf32>
      %22 = vector.shape_cast %21 : vector<256xf32> to vector<256x1xf32>
      %cst_14 = arith.constant 6.400000e+01 : f32
      %23 = vector.broadcast %cst_14 : f32 to vector<256x1xf32>
      %24 = arith.divf %22, %23 : vector<256x1xf32>
      %25 = vector.broadcast %24 : vector<256x1xf32> to vector<256x64xf32>
      %26 = arith.subf %20, %25 : vector<256x64xf32>
      %27 = arith.mulf %26, %26 : vector<256x64xf32>
      %cst_15 = arith.constant dense<0.000000e+00> : vector<256xf32>
      %28 = vector.multi_reduction <add>, %27, %cst_15 [1] : vector<256x64xf32> to vector<256xf32>
      %29 = vector.shape_cast %28 : vector<256xf32> to vector<256x1xf32>
      %cst_16 = arith.constant 6.400000e+01 : f32
      %30 = vector.broadcast %cst_16 : f32 to vector<256x1xf32>
      %31 = arith.divf %29, %30 : vector<256x1xf32>
      %32 = vector.broadcast %24 : vector<256x1xf32> to vector<256x64xf32>
      %33 = arith.subf %20, %32 : vector<256x64xf32>
      %cst_17 = arith.constant 9.99999997E-7 : f32
      %34 = vector.broadcast %cst_17 : f32 to vector<256x1xf32>
      %35 = arith.addf %31, %34 : vector<256x1xf32>
      %36 = math.rsqrt %35 : vector<256x1xf32>
      %37 = vector.broadcast %36 : vector<256x1xf32> to vector<256x64xf32>
      %38 = arith.mulf %33, %37 : vector<256x64xf32>
      %c0_18 = arith.constant 0 : index
      %c0_19 = arith.constant 0 : index
      %39 = vector.load %arg3[%c0_18, %c0_19] : memref<1x64xf32, #tpu.memory_space<vmem>>, vector<1x64xf32>
      %40 = vector.broadcast %39 : vector<1x64xf32> to vector<256x64xf32>
      %41 = arith.mulf %38, %40 : vector<256x64xf32>
      %c0_20 = arith.constant 0 : index
      %c0_21 = arith.constant 0 : index
      %42 = vector.load %arg4[%c0_20, %c0_21] : memref<1x64xf32, #tpu.memory_space<vmem>>, vector<1x64xf32>
      %43 = vector.broadcast %42 : vector<1x64xf32> to vector<256x64xf32>
      %44 = arith.addf %41, %43 : vector<256x64xf32>
      %45 = arith.truncf %44 : vector<256x64xf32> to vector<256x64xbf16>
      %c0_22 = arith.constant 0 : index
      %c0_23 = arith.constant 0 : index
      %46 = vector.load %arg8[%c0_22, %c0_23] : memref<256x64xbf16, #tpu.memory_space<vmem>>, vector<256x64xbf16>
      tpu.vector_store %arg8[%c0_22, %c0_23], %45 {strides = array<i32>} : memref<256x64xbf16, #tpu.memory_space<vmem>>, vector<256x64xbf16>,
    } else {
    }
    %c0 = arith.constant 0 : index
    %c0_1 = arith.constant 0 : index
    %3 = vector.load %arg8[%c0, %c0_1] : memref<256x64xbf16, #tpu.memory_space<vmem>>, vector<256x64xbf16>
    %c0_2 = arith.constant 0 : index
    %c0_3 = arith.constant 0 : index
    %4 = vector.load %arg5[%c0_2, %c0_3] : memref<64x128xbf16, #tpu.memory_space<vmem>>, vector<64x128xbf16>
    %cst = arith.constant dense<0.000000e+00> : vector<256x128xf32>
    %5 = tpu.matmul %3, %4, %cst {dimension_numbers = #tpu.dot_dimension_numbers<[1], [0], [0], [1], [0, 0, 1, 1], [], []>} : vector<256x64xbf16>, vector<64x128xbf16>, vector<256x128xf32> -> vector<256x128xf32>
    %c0_4 = arith.constant 0 : index
    %c0_5 = arith.constant 0 : index
    %6 = vector.load %arg6[%c0_4, %c0_5] : memref<1x128xf32, #tpu.memory_space<vmem>>, vector<1x128xf32>
    %7 = vector.broadcast %6 : vector<1x128xf32> to vector<256x128xf32>
    %8 = arith.addf %5, %7 : vector<256x128xf32>
    %cst_6 = arith.constant 5.000000e-01 : f32
    %9 = vector.broadcast %cst_6 : f32 to vector<256x128xf32>
    %10 = arith.mulf %9, %8 : vector<256x128xf32>
    %cst_7 = arith.constant 0.707106769 : f32
    %11 = vector.broadcast %cst_7 : f32 to vector<256x128xf32>
    %12 = arith.mulf %8, %11 : vector<256x128xf32>
    %13 = math.erf %12 : vector<256x128xf32>
    %cst_8 = arith.constant 1.000000e+00 : f32
    %14 = vector.broadcast %cst_8 : f32 to vector<256x128xf32>
    %15 = arith.addf %14, %13 : vector<256x128xf32>
    %16 = arith.mulf %10, %15 : vector<256x128xf32>
    %17 = arith.truncf %16 : vector<256x128xf32> to vector<256x128xbf16>
    %c0_9 = arith.constant 0 : index
    %c0_10 = arith.constant 0 : index
    %18 = vector.load %arg7[%c0_9, %c0_10] : memref<256x128xbf16, #tpu.memory_space<vmem>>, vector<256x128xbf16>
    tpu.vector_store %arg7[%c0_9, %c0_10], %17 {strides = array<i32>} : memref<256x128xbf16, #tpu.memory_space<vmem>>, vector<256x128xbf16>,
    return
  }
  func.func @transform_0(%arg0: i32, %arg1: i32) -> (i32, i32) {
    %c0_i32 = arith.constant 0 : i32
    %c0_i32_0 = arith.constant 0 : i32
    return %arg0, %c0_i32 : i32, i32
  }
  func.func @transform_1(%arg0: i32, %arg1: i32) -> (i32, i32) {
    %c0_i32 = arith.constant 0 : i32
    %c0_i32_0 = arith.constant 0 : i32
    %c0_i32_1 = arith.constant 0 : i32
    return %c0_i32, %c0_i32_0 : i32, i32
  }
  func.func @transform_2(%arg0: i32, %arg1: i32) -> (i32, i32) {
    %c0_i32 = arith.constant 0 : i32
    %c0_i32_0 = arith.constant 0 : i32
    %c0_i32_1 = arith.constant 0 : i32
    return %c0_i32, %c0_i32_0 : i32, i32
  }
  func.func @transform_3(%arg0: i32, %arg1: i32) -> (i32, i32) {
    %c0_i32 = arith.constant 0 : i32
    %c0_i32_0 = arith.constant 0 : i32
    return %c0_i32, %arg1 : i32, i32
  }
  func.func @transform_4(%arg0: i32, %arg1: i32) -> (i32, i32) {
    %c0_i32 = arith.constant 0 : i32
    %c0_i32_0 = arith.constant 0 : i32
    return %c0_i32, %arg1 : i32, i32
  }
  func.func @transform_5(%arg0: i32, %arg1: i32) -> (i32, i32) {
    %c0_i32 = arith.constant 0 : i32
    return %arg0, %arg1 : i32, i32
  }
}

module attributes {stable_mosaic.version = 11 : i64} {
  func.func @_linear_kernel(%arg0: i32, %arg1: i32, %arg2: i32, %arg3: memref<256x128xbf16, #tpu.memory_space<vmem>>, %arg4: memref<128x64xbf16, #tpu.memory_space<vmem>>, %arg5: memref<1x64xf32, #tpu.memory_space<vmem>>, %arg6: memref<256x64xbf16, #tpu.memory_space<vmem>>, %arg7: memref<256x64xbf16, #tpu.memory_space<vmem>>, %arg8: memref<256x64xf32, #tpu.memory_space<vmem>>) attributes {dimension_semantics = [#tpu.dimension_semantics<parallel>, #tpu.dimension_semantics<parallel>, #tpu.dimension_semantics<arbitrary>], iteration_bounds = array<i64: 1, 1, 1>, scalar_prefetch = 0 : i64, scratch_operands = 1 : i64, tpu.core_type = #tpu.core_type<tc>, window_params = [{transform_indices = @transform_0, window_bounds = array<i64: 256, 128>}, {transform_indices = @transform_1, window_bounds = array<i64: 128, 64>}, {transform_indices = @transform_2, window_bounds = array<i64: 1, 64>}, {transform_indices = @transform_3, window_bounds = array<i64: 256, 64>}, {transform_indices = @transform_4, window_bounds = array<i64: 256, 64>}]} {
    %c0_i32 = arith.constant 0 : i32
    %0 = arith.cmpi eq, %arg2, %c0_i32 : i32
    %1 = arith.extui %0 : i1 to i32
    %c0_i32_0 = arith.constant 0 : i32
    %2 = arith.cmpi ne, %1, %c0_i32_0 : i32
    scf.if %2 {
      %cst_10 = arith.constant 0.000000e+00 : f32
      %12 = vector.broadcast %cst_10 : f32 to vector<256x64xf32>
      %c0_11 = arith.constant 0 : index
      %c0_12 = arith.constant 0 : index
      %13 = vector.load %arg8[%c0_11, %c0_12] : memref<256x64xf32, #tpu.memory_space<vmem>>, vector<256x64xf32>
      tpu.vector_store %arg8[%c0_11, %c0_12], %12 {strides = array<i32>} : memref<256x64xf32, #tpu.memory_space<vmem>>, vector<256x64xf32>,
    } else {
    }
    %c0 = arith.constant 0 : index
    %c0_1 = arith.constant 0 : index
    %3 = vector.load %arg8[%c0, %c0_1] : memref<256x64xf32, #tpu.memory_space<vmem>>, vector<256x64xf32>
    %c0_2 = arith.constant 0 : index
    %c0_3 = arith.constant 0 : index
    %4 = vector.load %arg3[%c0_2, %c0_3] : memref<256x128xbf16, #tpu.memory_space<vmem>>, vector<256x128xbf16>
    %c0_4 = arith.constant 0 : index
    %c0_5 = arith.constant 0 : index
    %5 = vector.load %arg4[%c0_4, %c0_5] : memref<128x64xbf16, #tpu.memory_space<vmem>>, vector<128x64xbf16>
    %cst = arith.constant dense<0.000000e+00> : vector<256x64xf32>
    %6 = tpu.matmul %4, %5, %cst {dimension_numbers = #tpu.dot_dimension_numbers<[1], [0], [0], [1], [0, 0, 1, 1], [], []>} : vector<256x128xbf16>, vector<128x64xbf16>, vector<256x64xf32> -> vector<256x64xf32>
    %7 = arith.addf %3, %6 : vector<256x64xf32>
    %c0_6 = arith.constant 0 : index
    %c0_7 = arith.constant 0 : index
    %8 = vector.load %arg8[%c0_6, %c0_7] : memref<256x64xf32, #tpu.memory_space<vmem>>, vector<256x64xf32>
    tpu.vector_store %arg8[%c0_6, %c0_7], %7 {strides = array<i32>} : memref<256x64xf32, #tpu.memory_space<vmem>>, vector<256x64xf32>,
    %c0_i32_8 = arith.constant 0 : i32
    %9 = arith.cmpi eq, %arg2, %c0_i32_8 : i32
    %10 = arith.extui %9 : i1 to i32
    %c0_i32_9 = arith.constant 0 : i32
    %11 = arith.cmpi ne, %10, %c0_i32_9 : i32
    scf.if %11 {
      %c0_10 = arith.constant 0 : index
      %c0_11 = arith.constant 0 : index
      %12 = vector.load %arg8[%c0_10, %c0_11] : memref<256x64xf32, #tpu.memory_space<vmem>>, vector<256x64xf32>
      %c0_12 = arith.constant 0 : index
      %c0_13 = arith.constant 0 : index
      %13 = vector.load %arg5[%c0_12, %c0_13] : memref<1x64xf32, #tpu.memory_space<vmem>>, vector<1x64xf32>
      %14 = vector.broadcast %13 : vector<1x64xf32> to vector<256x64xf32>
      %15 = arith.addf %12, %14 : vector<256x64xf32>
      %c0_14 = arith.constant 0 : index
      %c0_15 = arith.constant 0 : index
      %16 = vector.load %arg6[%c0_14, %c0_15] : memref<256x64xbf16, #tpu.memory_space<vmem>>, vector<256x64xbf16>
      %17 = arith.extf %16 : vector<256x64xbf16> to vector<256x64xf32>
      %18 = arith.addf %15, %17 : vector<256x64xf32>
      %19 = arith.truncf %18 : vector<256x64xf32> to vector<256x64xbf16>
      %c0_16 = arith.constant 0 : index
      %c0_17 = arith.constant 0 : index
      %20 = vector.load %arg7[%c0_16, %c0_17] : memref<256x64xbf16, #tpu.memory_space<vmem>>, vector<256x64xbf16>
      tpu.vector_store %arg7[%c0_16, %c0_17], %19 {strides = array<i32>} : memref<256x64xbf16, #tpu.memory_space<vmem>>, vector<256x64xbf16>,
    } else {
    }
    return
  }
  func.func @transform_0(%arg0: i32, %arg1: i32, %arg2: i32) -> (i32, i32) {
    %c0_i32 = arith.constant 0 : i32
    return %arg0, %arg2 : i32, i32
  }
  func.func @transform_1(%arg0: i32, %arg1: i32, %arg2: i32) -> (i32, i32) {
    %c0_i32 = arith.constant 0 : i32
    return %arg2, %arg1 : i32, i32
  }
  func.func @transform_2(%arg0: i32, %arg1: i32, %arg2: i32) -> (i32, i32) {
    %c0_i32 = arith.constant 0 : i32
    %c0_i32_0 = arith.constant 0 : i32
    return %c0_i32, %arg1 : i32, i32
  }
  func.func @transform_3(%arg0: i32, %arg1: i32, %arg2: i32) -> (i32, i32) {
    %c0_i32 = arith.constant 0 : i32
    return %arg0, %arg1 : i32, i32
  }
  func.func @transform_4(%arg0: i32, %arg1: i32, %arg2: i32) -> (i32, i32) {
    %c0_i32 = arith.constant 0 : i32
    return %arg0, %arg1 : i32, i32
  }
}

module attributes {stable_mosaic.version = 11 : i64} {
  func.func @_ln_linear_kernel(%arg0: i32, %arg1: i32, %arg2: memref<2x64xbf16, #tpu.memory_space<vmem>>, %arg3: memref<1x64xf32, #tpu.memory_space<vmem>>, %arg4: memref<1x64xf32, #tpu.memory_space<vmem>>, %arg5: memref<64x128xbf16, #tpu.memory_space<vmem>>, %arg6: memref<1x128xf32, #tpu.memory_space<vmem>>, %arg7: memref<2x128xf32, #tpu.memory_space<vmem>>, %arg8: memref<2x64xbf16, #tpu.memory_space<vmem>>) attributes {dimension_semantics = [#tpu.dimension_semantics<parallel>, #tpu.dimension_semantics<arbitrary>], iteration_bounds = array<i64: 1, 1>, scalar_prefetch = 0 : i64, scratch_operands = 1 : i64, tpu.core_type = #tpu.core_type<tc>, window_params = [{transform_indices = @transform_0, window_bounds = array<i64: 2, 64>}, {pipeline_mode = #tpu.pipeline_mode<synchronous>, transform_indices = @transform_1, window_bounds = array<i64: 1, 64>}, {pipeline_mode = #tpu.pipeline_mode<synchronous>, transform_indices = @transform_2, window_bounds = array<i64: 1, 64>}, {transform_indices = @transform_3, window_bounds = array<i64: 64, 128>}, {transform_indices = @transform_4, window_bounds = array<i64: 1, 128>}, {transform_indices = @transform_5, window_bounds = array<i64: 2, 128>}]} {
    %c0_i32 = arith.constant 0 : i32
    %0 = arith.cmpi eq, %arg1, %c0_i32 : i32
    %1 = arith.extui %0 : i1 to i32
    %c0_i32_0 = arith.constant 0 : i32
    %2 = arith.cmpi ne, %1, %c0_i32_0 : i32
    scf.if %2 {
      %c0_8 = arith.constant 0 : index
      %c0_9 = arith.constant 0 : index
      %10 = vector.load %arg2[%c0_8, %c0_9] : memref<2x64xbf16, #tpu.memory_space<vmem>>, vector<2x64xbf16>
      %11 = arith.extf %10 : vector<2x64xbf16> to vector<2x64xf32>
      %cst_10 = arith.constant dense<0.000000e+00> : vector<2xf32>
      %12 = vector.multi_reduction <add>, %11, %cst_10 [1] : vector<2x64xf32> to vector<2xf32>
      %13 = vector.shape_cast %12 : vector<2xf32> to vector<2x1xf32>
      %cst_11 = arith.constant 6.400000e+01 : f32
      %14 = vector.broadcast %cst_11 : f32 to vector<2x1xf32>
      %15 = arith.divf %13, %14 : vector<2x1xf32>
      %16 = vector.broadcast %15 : vector<2x1xf32> to vector<2x64xf32>
      %17 = arith.subf %11, %16 : vector<2x64xf32>
      %18 = arith.mulf %17, %17 : vector<2x64xf32>
      %cst_12 = arith.constant dense<0.000000e+00> : vector<2xf32>
      %19 = vector.multi_reduction <add>, %18, %cst_12 [1] : vector<2x64xf32> to vector<2xf32>
      %20 = vector.shape_cast %19 : vector<2xf32> to vector<2x1xf32>
      %cst_13 = arith.constant 6.400000e+01 : f32
      %21 = vector.broadcast %cst_13 : f32 to vector<2x1xf32>
      %22 = arith.divf %20, %21 : vector<2x1xf32>
      %23 = vector.broadcast %15 : vector<2x1xf32> to vector<2x64xf32>
      %24 = arith.subf %11, %23 : vector<2x64xf32>
      %cst_14 = arith.constant 9.99999997E-7 : f32
      %25 = vector.broadcast %cst_14 : f32 to vector<2x1xf32>
      %26 = arith.addf %22, %25 : vector<2x1xf32>
      %27 = math.rsqrt %26 : vector<2x1xf32>
      %28 = vector.broadcast %27 : vector<2x1xf32> to vector<2x64xf32>
      %29 = arith.mulf %24, %28 : vector<2x64xf32>
      %c0_15 = arith.constant 0 : index
      %c0_16 = arith.constant 0 : index
      %30 = vector.load %arg3[%c0_15, %c0_16] : memref<1x64xf32, #tpu.memory_space<vmem>>, vector<1x64xf32>
      %31 = vector.broadcast %30 : vector<1x64xf32> to vector<2x64xf32>
      %32 = arith.mulf %29, %31 : vector<2x64xf32>
      %c0_17 = arith.constant 0 : index
      %c0_18 = arith.constant 0 : index
      %33 = vector.load %arg4[%c0_17, %c0_18] : memref<1x64xf32, #tpu.memory_space<vmem>>, vector<1x64xf32>
      %34 = vector.broadcast %33 : vector<1x64xf32> to vector<2x64xf32>
      %35 = arith.addf %32, %34 : vector<2x64xf32>
      %36 = arith.truncf %35 : vector<2x64xf32> to vector<2x64xbf16>
      %c0_19 = arith.constant 0 : index
      %c0_20 = arith.constant 0 : index
      %37 = vector.load %arg8[%c0_19, %c0_20] : memref<2x64xbf16, #tpu.memory_space<vmem>>, vector<2x64xbf16>
      tpu.vector_store %arg8[%c0_19, %c0_20], %36 {strides = array<i32>} : memref<2x64xbf16, #tpu.memory_space<vmem>>, vector<2x64xbf16>,
    } else {
    }
    %c0 = arith.constant 0 : index
    %c0_1 = arith.constant 0 : index
    %3 = vector.load %arg8[%c0, %c0_1] : memref<2x64xbf16, #tpu.memory_space<vmem>>, vector<2x64xbf16>
    %c0_2 = arith.constant 0 : index
    %c0_3 = arith.constant 0 : index
    %4 = vector.load %arg5[%c0_2, %c0_3] : memref<64x128xbf16, #tpu.memory_space<vmem>>, vector<64x128xbf16>
    %cst = arith.constant dense<0.000000e+00> : vector<2x128xf32>
    %5 = tpu.matmul %3, %4, %cst {dimension_numbers = #tpu.dot_dimension_numbers<[1], [0], [0], [1], [0, 0, 1, 1], [], []>} : vector<2x64xbf16>, vector<64x128xbf16>, vector<2x128xf32> -> vector<2x128xf32>
    %c0_4 = arith.constant 0 : index
    %c0_5 = arith.constant 0 : index
    %6 = vector.load %arg6[%c0_4, %c0_5] : memref<1x128xf32, #tpu.memory_space<vmem>>, vector<1x128xf32>
    %7 = vector.broadcast %6 : vector<1x128xf32> to vector<2x128xf32>
    %8 = arith.addf %5, %7 : vector<2x128xf32>
    %c0_6 = arith.constant 0 : index
    %c0_7 = arith.constant 0 : index
    %9 = vector.load %arg7[%c0_6, %c0_7] : memref<2x128xf32, #tpu.memory_space<vmem>>, vector<2x128xf32>
    tpu.vector_store %arg7[%c0_6, %c0_7], %8 {strides = array<i32>} : memref<2x128xf32, #tpu.memory_space<vmem>>, vector<2x128xf32>,
    return
  }
  func.func @transform_0(%arg0: i32, %arg1: i32) -> (i32, i32) {
    %c0_i32 = arith.constant 0 : i32
    %c0_i32_0 = arith.constant 0 : i32
    return %arg0, %c0_i32 : i32, i32
  }
  func.func @transform_1(%arg0: i32, %arg1: i32) -> (i32, i32) {
    %c0_i32 = arith.constant 0 : i32
    %c0_i32_0 = arith.constant 0 : i32
    %c0_i32_1 = arith.constant 0 : i32
    return %c0_i32, %c0_i32_0 : i32, i32
  }
  func.func @transform_2(%arg0: i32, %arg1: i32) -> (i32, i32) {
    %c0_i32 = arith.constant 0 : i32
    %c0_i32_0 = arith.constant 0 : i32
    %c0_i32_1 = arith.constant 0 : i32
    return %c0_i32, %c0_i32_0 : i32, i32
  }
  func.func @transform_3(%arg0: i32, %arg1: i32) -> (i32, i32) {
    %c0_i32 = arith.constant 0 : i32
    %c0_i32_0 = arith.constant 0 : i32
    return %c0_i32, %arg1 : i32, i32
  }
  func.func @transform_4(%arg0: i32, %arg1: i32) -> (i32, i32) {
    %c0_i32 = arith.constant 0 : i32
    %c0_i32_0 = arith.constant 0 : i32
    return %c0_i32, %arg1 : i32, i32
  }
  func.func @transform_5(%arg0: i32, %arg1: i32) -> (i32, i32) {
    %c0_i32 = arith.constant 0 : i32
    return %arg0, %arg1 : i32, i32
  }
}

</mosaic_0001>

<llo_original>
// kernel: vit_forward.12
$region0: #{vit_forward.12}
  #allocation0 [shape = 'u32[]', space=smem, size = 0x4, offset = 0x4, fixed_abs, tag = 'smem constant byte address 0x4 - core index']
  #allocation1 [shape = 'u32[144,128]{1,0:T(1,128)}', space=vmem, size = 0x12000, scoped, tag = 'internal scratch']
  #allocation2 [shape = 'f32[8,64]{1,0:T(8,128)}', space=vmem, size = 0x1000, scoped, tag = 'scratch operand']
  %s0 = inlined_call_operand.vmem [shape: bf16[8,768], index: 0, kind: input, shape index: {}]
  %s1 = inlined_call_operand.vmem [shape: bf16[768,64], index: 1, kind: input, shape index: {}]
  %s2 = inlined_call_operand.vmem [shape: f32[1,64], index: 2, kind: input, shape index: {}]
  %s3 = inlined_call_operand.vmem [shape: f32[8,64], index: 3, kind: output, shape index: {}]
  %s4 = sld [smem:[#allocation0]]
  $region30: #{vit_forward.12} parent=0
    _
  %s6 = ssub.s32 1, %s4
  %s7 = scalar_select 0, %s6, %s4
  // Predicated region
  $region2: #{vit_forward.12} parent=0 // pred_check
    _
  $region3: #{vit_forward.12} parent=0 // pred_check_branch
    %9 = sbr.rel (0) target = $region5
  $region4: #{vit_forward.12} parent=0 // pred_region
    _
  $region5: #{vit_forward.12} parent=0 // pred_fallthru
    _
  // Predicated region
  $region6: #{vit_forward.12} parent=0 // pred_check
    _
  $region7: #{vit_forward.12} parent=0 // pred_check_branch
    %11 = sbr.rel (0) target = $region9
  $region8: #{vit_forward.12} parent=0 // pred_region
    _
  $region9: #{vit_forward.12} parent=0 // pred_fallthru
    _
  // Predicated region
  $region10: #{vit_forward.12} parent=0 // pred_check
    _
  $region11: #{vit_forward.12} parent=0 // pred_check_branch
    %13 = sbr.rel (0) target = $region13
  $region12: #{vit_forward.12} parent=0 // pred_region
    _
  $region13: #{vit_forward.12} parent=0 // pred_fallthru
    _
  %p15 = scmp.eq.s32.totalorder 0, 0
  // Predicated region
  $region14: #{vit_forward.12} parent=0 // pred_check
    %p16 = pneg %p15
  $region15: #{vit_forward.12} parent=0 // pred_check_branch
    %18 = sbr.rel (%p16) target = $region17
  $region16: #{vit_forward.12} parent=0 // pred_region
    %vm19 = vcmask 523264
    %20 = vst.msk [vmem:[#allocation2] sm:$0xff] %vm19, 0.0
  $region17: #{vit_forward.12} parent=0 // pred_fallthru
    _
  %v21 = vld [vmem:[#allocation2] sm:$0xff]
  %v22 = vld [vmem:[%s0] sm:$0xff]
  %v23 = vld [vmem:[%s0 + $0x8] sm:$0xff]
  %v24 = vld [vmem:[%s0 + $0x10] sm:$0xff]
  %v25 = vld [vmem:[%s1] sm:$0xf]
  %v26 = vld [vmem:[%s1 + $0x4] sm:$0xf]
  %v27 = vld [vmem:[%s1 + $0x8] sm:$0xf]
  %v28 = vld [vmem:[%s1 + $0xc] sm:$0xf]
  %v29 = vld [vmem:[%s1 + $0x10] sm:$0xf]
  %v30 = vld [vmem:[%s1 + $0x14] sm:$0xf]
  %v31 = vld [vmem:[%s1 + $0x18] sm:$0xf]
  %v32 = vld [vmem:[%s1 + $0x1c] sm:$0xf]
  %v33 = vld [vmem:[%s1 + $0x20] sm:$0xf]
  %v34 = vld [vmem:[%s1 + $0x24] sm:$0xf]
  %v35 = vld [vmem:[%s1 + $0x28] sm:$0xf]
  %v36 = vld [vmem:[%s1 + $0x2c] sm:$0xf]
  %v37 = vld [vmem:[%s1 + $0x30] sm:$0xf]
  %v38 = vld [vmem:[%s1 + $0x34] sm:$0xf]
  %v39 = vld [vmem:[%s1 + $0x38] sm:$0xf]
  %v40 = vld [vmem:[%s1 + $0x3c] sm:$0xf]
  %v41 = vld [vmem:[%s1 + $0x40] sm:$0xf]
  %v42 = vld [vmem:[%s1 + $0x44] sm:$0xf]
  %v43 = vld [vmem:[%s1 + $0x48] sm:$0xf]
  %v44 = vld [vmem:[%s1 + $0x4c] sm:$0xf]
  %v45 = vld [vmem:[%s1 + $0x50] sm:$0xf]
  %v46 = vld [vmem:[%s1 + $0x54] sm:$0xf]
  %v47 = vld [vmem:[%s1 + $0x58] sm:$0xf]
  %v48 = vld [vmem:[%s1 + $0x5c] sm:$0xf]
  %v49 = vld [vmem:[%s1 + $0x60] sm:$0xf]
  %v50 = vld [vmem:[%s1 + $0x64] sm:$0xf]
  %v51 = vld [vmem:[%s1 + $0x68] sm:$0xf]
  %v52 = vld [vmem:[%s1 + $0x6c] sm:$0xf]
  %v53 = vld [vmem:[%s1 + $0x70] sm:$0xf]
  %v54 = vld [vmem:[%s1 + $0x74] sm:$0xf]
  %v55 = vld [vmem:[%s1 + $0x78] sm:$0xf]
  %v56 = vld [vmem:[%s1 + $0x7c] sm:$0xf]
  %v57 = vld [vmem:[%s1 + $0x80] sm:$0xf]
  %v58 = vld [vmem:[%s1 + $0x84] sm:$0xf]
  %v59 = vld [vmem:[%s1 + $0x88] sm:$0xf]
  %v60 = vld [vmem:[%s1 + $0x8c] sm:$0xf]
  %v61 = vld [vmem:[%s1 + $0x90] sm:$0xf]
  %v62 = vld [vmem:[%s1 + $0x94] sm:$0xf]
  %v63 = vld [vmem:[%s1 + $0x98] sm:$0xf]
  %v64 = vld [vmem:[%s1 + $0x9c] sm:$0xf]
  %v65 = vld [vmem:[%s1 + $0xa0] sm:$0xf]
  %v66 = vld [vmem:[%s1 + $0xa4] sm:$0xf]
  %v67 = vld [vmem:[%s1 + $0xa8] sm:$0xf]
  %v68 = vld [vmem:[%s1 + $0xac] sm:$0xf]
  %v69 = vld [vmem:[%s1 + $0xb0] sm:$0xf]
  %v70 = vld [vmem:[%s1 + $0xb4] sm:$0xf]
  %v71 = vld [vmem:[%s1 + $0xb8] sm:$0xf]
  %v72 = vld [vmem:[%s1 + $0xbc] sm:$0xf]
  %v73 = vld [vmem:[%s1 + $0xc0] sm:$0xf]
  %v74 = vld [vmem:[%s1 + $0xc4] sm:$0xf]
  %v75 = vld [vmem:[%s1 + $0xc8] sm:$0xf]
  %v76 = vld [vmem:[%s1 + $0xcc] sm:$0xf]
  %v77 = vld [vmem:[%s1 + $0xd0] sm:$0xf]
  %v78 = vld [vmem:[%s1 + $0xd4] sm:$0xf]
  %v79 = vld [vmem:[%s1 + $0xd8] sm:$0xf]
  %v80 = vld [vmem:[%s1 + $0xdc] sm:$0xf]
  %v81 = vld [vmem:[%s1 + $0xe0] sm:$0xf]
  %v82 = vld [vmem:[%s1 + $0xe4] sm:$0xf]
  %v83 = vld [vmem:[%s1 + $0xe8] sm:$0xf]
  %v84 = vld [vmem:[%s1 + $0xec] sm:$0xf]
  %v85 = vld [vmem:[%s1 + $0xf0] sm:$0xf]
  %v86 = vld [vmem:[%s1 + $0xf4] sm:$0xf]
  %v87 = vld [vmem:[%s1 + $0xf8] sm:$0xf]
  %v88 = vld [vmem:[%s1 + $0xfc] sm:$0xf]
  %v89 = vld [vmem:[%s1 + $0x100] sm:$0xf]
  %v90 = vld [vmem:[%s1 + $0x104] sm:$0xf]
  %v91 = vld [vmem:[%s1 + $0x108] sm:$0xf]
  %v92 = vld [vmem:[%s1 + $0x10c] sm:$0xf]
  %v93 = vld [vmem:[%s1 + $0x110] sm:$0xf]
  %v94 = vld [vmem:[%s1 + $0x114] sm:$0xf]
  %v95 = vld [vmem:[%s1 + $0x118] sm:$0xf]
  %v96 = vld [vmem:[%s1 + $0x11c] sm:$0xf]
  %v97 = vld [vmem:[%s1 + $0x120] sm:$0xf]
  %v98 = vld [vmem:[%s1 + $0x124] sm:$0xf]
  %v99 = vld [vmem:[%s1 + $0x128] sm:$0xf]
  %v100 = vld [vmem:[%s1 + $0x12c] sm:$0xf]
  %v101 = vld [vmem:[%s1 + $0x130] sm:$0xf]
  %v102 = vld [vmem:[%s1 + $0x134] sm:$0xf]
  %v103 = vld [vmem:[%s1 + $0x138] sm:$0xf]
  %v104 = vld [vmem:[%s1 + $0x13c] sm:$0xf]
  %v105 = vld [vmem:[%s1 + $0x140] sm:$0xf]
  %v106 = vld [vmem:[%s1 + $0x144] sm:$0xf]
  %v107 = vld [vmem:[%s1 + $0x148] sm:$0xf]
  %v108 = vld [vmem:[%s1 + $0x14c] sm:$0xf]
  %v109 = vld [vmem:[%s1 + $0x150] sm:$0xf]
  %v110 = vld [vmem:[%s1 + $0x154] sm:$0xf]
  %v111 = vld [vmem:[%s1 + $0x158] sm:$0xf]
  %v112 = vld [vmem:[%s1 + $0x15c] sm:$0xf]
  %v113 = vld [vmem:[%s1 + $0x160] sm:$0xf]
  %v114 = vld [vmem:[%s1 + $0x164] sm:$0xf]
  %v115 = vld [vmem:[%s1 + $0x168] sm:$0xf]
  %v116 = vld [vmem:[%s1 + $0x16c] sm:$0xf]
  %v117 = vld [vmem:[%s1 + $0x170] sm:$0xf]
  %v118 = vld [vmem:[%s1 + $0x174] sm:$0xf]
  %v119 = vld [vmem:[%s1 + $0x178] sm:$0xf]
  %v120 = vld [vmem:[%s1 + $0x17c] sm:$0xf]
  %v124 = vunpack.c.l.b16 %v22
  %v125 = vunpack.c.h.b16 %v22
  %v126 = vunpack.c.l.b16 %v23
  %v127 = vunpack.c.h.b16 %v23
  %v128 = vunpack.c.l.b16 %v24
  %v129 = vunpack.c.h.b16 %v24
  %v130 = vpack.c.b16 %v124, %v124
  %v131 = vpack.c.b16 %v125, %v125
  %v132 = vpack.c.b16 %v126, %v126
  %v133 = vpack.c.b16 %v127, %v127
  %v134 = vpack.c.b16 %v128, %v128
  %v135 = vpack.c.b16 %v129, %v129
  %v238 = vunpack.c.l.b16 %v25
  %v239 = vunpack.c.l.b16 %v26
  %v240 = vunpack.c.l.b16 %v27
  %v241 = vunpack.c.l.b16 %v28
  %v242 = vunpack.c.l.b16 %v29
  %v243 = vunpack.c.l.b16 %v30
  %v244 = vunpack.c.l.b16 %v31
  %v245 = vunpack.c.l.b16 %v32
  %v246 = vunpack.c.l.b16 %v33
  %v247 = vunpack.c.l.b16 %v34
  %v248 = vunpack.c.l.b16 %v35
  %v249 = vunpack.c.l.b16 %v36
  %v250 = vunpack.c.l.b16 %v37
  %v251 = vunpack.c.l.b16 %v38
  %v252 = vunpack.c.l.b16 %v39
  %v253 = vunpack.c.l.b16 %v40
  %v254 = vunpack.c.l.b16 %v41
  %v255 = vunpack.c.l.b16 %v42
  %v256 = vunpack.c.l.b16 %v43
  %v257 = vunpack.c.l.b16 %v44
  %v258 = vunpack.c.l.b16 %v45
  %v259 = vunpack.c.l.b16 %v46
  %v260 = vunpack.c.l.b16 %v47
  %v261 = vunpack.c.l.b16 %v48
  %v262 = vunpack.c.l.b16 %v49
  %v263 = vunpack.c.l.b16 %v50
  %v264 = vunpack.c.l.b16 %v51
  %v265 = vunpack.c.l.b16 %v52
  %v266 = vunpack.c.l.b16 %v53
  %v267 = vunpack.c.l.b16 %v54
  %v268 = vunpack.c.l.b16 %v55
  %v269 = vunpack.c.l.b16 %v56
  %v270 = vunpack.c.l.b16 %v57
  %v271 = vunpack.c.l.b16 %v58
  %v272 = vunpack.c.l.b16 %v59
  %v273 = vunpack.c.l.b16 %v60
  %v274 = vunpack.c.l.b16 %v61
  %v275 = vunpack.c.l.b16 %v62
  %v276 = vunpack.c.l.b16 %v63
  %v277 = vunpack.c.l.b16 %v64
  %v278 = vunpack.c.l.b16 %v65
  %v279 = vunpack.c.l.b16 %v66
  %v280 = vunpack.c.l.b16 %v67
  %v281 = vunpack.c.l.b16 %v68
  %v282 = vunpack.c.l.b16 %v69
  %v283 = vunpack.c.l.b16 %v70
  %v284 = vunpack.c.l.b16 %v71
  %v285 = vunpack.c.l.b16 %v72
  %v286 = vunpack.c.l.b16 %v73
  %v287 = vunpack.c.l.b16 %v74
  %v288 = vunpack.c.l.b16 %v75
  %v289 = vunpack.c.l.b16 %v76
  %v290 = vunpack.c.l.b16 %v77
  %v291 = vunpack.c.l.b16 %v78
  %v292 = vunpack.c.l.b16 %v79
  %v293 = vunpack.c.l.b16 %v80
  %v294 = vunpack.c.l.b16 %v81
  %v295 = vunpack.c.l.b16 %v82
  %v296 = vunpack.c.l.b16 %v83
  %v297 = vunpack.c.l.b16 %v84
  %v298 = vunpack.c.l.b16 %v85
  %v299 = vunpack.c.l.b16 %v86
  %v300 = vunpack.c.l.b16 %v87
  %v301 = vunpack.c.l.b16 %v88
  %v302 = vunpack.c.l.b16 %v89
  %v303 = vunpack.c.l.b16 %v90
  %v304 = vunpack.c.l.b16 %v91
  %v305 = vunpack.c.l.b16 %v92
  %v306 = vunpack.c.l.b16 %v93
  %v307 = vunpack.c.l.b16 %v94
  %v308 = vunpack.c.l.b16 %v95
  %v309 = vunpack.c.l.b16 %v96
  %v310 = vunpack.c.l.b16 %v97
  %v311 = vunpack.c.l.b16 %v98
  %v312 = vunpack.c.l.b16 %v99
  %v313 = vunpack.c.l.b16 %v100
  %v314 = vunpack.c.l.b16 %v101
  %v315 = vunpack.c.l.b16 %v102
  %v316 = vunpack.c.l.b16 %v103
  %v317 = vunpack.c.l.b16 %v104
  %v318 = vunpack.c.l.b16 %v105
  %v319 = vunpack.c.l.b16 %v106
  %v320 = vunpack.c.l.b16 %v107
  %v321 = vunpack.c.l.b16 %v108
  %v322 = vunpack.c.l.b16 %v109
  %v323 = vunpack.c.l.b16 %v110
  %v324 = vunpack.c.l.b16 %v111
  %v325 = vunpack.c.l.b16 %v112
  %v326 = vunpack.c.l.b16 %v113
  %v327 = vunpack.c.l.b16 %v114
  %v328 = vunpack.c.l.b16 %v115
  %v329 = vunpack.c.l.b16 %v116
  %v330 = vunpack.c.l.b16 %v117
  %v331 = vunpack.c.l.b16 %v118
  %v332 = vunpack.c.l.b16 %v119
  %v333 = vunpack.c.l.b16 %v120
  %v334 = vpack.c.b16 %v239, %v238
  %v335 = vpack.c.b16 %v241, %v240
  %v336 = vpack.c.b16 %v243, %v242
  %v337 = vpack.c.b16 %v245, %v244
  %v338 = vpack.c.b16 %v247, %v246
  %v339 = vpack.c.b16 %v249, %v248
  %v340 = vpack.c.b16 %v251, %v250
  %v341 = vpack.c.b16 %v253, %v252
  %v342 = vpack.c.b16 %v255, %v254
  %v343 = vpack.c.b16 %v257, %v256
  %v344 = vpack.c.b16 %v259, %v258
  %v345 = vpack.c.b16 %v261, %v260
  %v346 = vpack.c.b16 %v263, %v262
  %v347 = vpack.c.b16 %v265, %v264
  %v348 = vpack.c.b16 %v267, %v266
  %v349 = vpack.c.b16 %v269, %v268
  %v350 = vpack.c.b16 %v271, %v270
  %v351 = vpack.c.b16 %v273, %v272
  %v352 = vpack.c.b16 %v275, %v274
  %v353 = vpack.c.b16 %v277, %v276
  %v354 = vpack.c.b16 %v279, %v278
  %v355 = vpack.c.b16 %v281, %v280
  %v356 = vpack.c.b16 %v283, %v282
  %v357 = vpack.c.b16 %v285, %v284
  %v358 = vpack.c.b16 %v287, %v286
  %v359 = vpack.c.b16 %v289, %v288
  %v360 = vpack.c.b16 %v291, %v290
  %v361 = vpack.c.b16 %v293, %v292
  %v362 = vpack.c.b16 %v295, %v294
  %v363 = vpack.c.b16 %v297, %v296
  %v364 = vpack.c.b16 %v299, %v298
  %v365 = vpack.c.b16 %v301, %v300
  %v366 = vpack.c.b16 %v303, %v302
  %v367 = vpack.c.b16 %v305, %v304
  %v368 = vpack.c.b16 %v307, %v306
  %v369 = vpack.c.b16 %v309, %v308
  %v370 = vpack.c.b16 %v311, %v310
  %v371 = vpack.c.b16 %v313, %v312
  %v372 = vpack.c.b16 %v315, %v314
  %v373 = vpack.c.b16 %v317, %v316
  %v374 = vpack.c.b16 %v319, %v318
  %v375 = vpack.c.b16 %v321, %v320
  %v376 = vpack.c.b16 %v323, %v322
  %v377 = vpack.c.b16 %v325, %v324
  %v378 = vpack.c.b16 %v327, %v326
  %v379 = vpack.c.b16 %v329, %v328
  %v380 = vpack.c.b16 %v331, %v330
  %v381 = vpack.c.b16 %v333, %v332
  %430 = vmatprep.subr.bf16.mxu0 0
  %431 = vmatpush1.bf16.msra.mxu0 %v341
  %432 = vmatprep.subr.bf16.mxu0 0
  %433 = vmatpush1.bf16.msra.mxu0 %v340
  %434 = vmatprep.subr.bf16.mxu0 0
  %435 = vmatpush1.bf16.msra.mxu0 %v339
  %436 = vmatprep.subr.bf16.mxu0 0
  %437 = vmatpush1.bf16.msra.mxu0 %v338
  %438 = vmatprep.subr.bf16.mxu0 0
  %439 = vmatpush1.bf16.msra.mxu0 %v337
  %440 = vmatprep.subr.bf16.mxu0 0
  %441 = vmatpush1.bf16.msra.mxu0 %v336
  %442 = vmatprep.subr.bf16.mxu0 0
  %443 = vmatpush1.bf16.msra.mxu0 %v335
  %444 = vmatprep.subr.bf16.mxu0 0
  %445 = vmatpush1.bf16.msra.mxu0 %v334
  %446 = vmatprep.subr.bf16.mxu0 0
  %447 = vmatpush2.bf16.msra.mxu0 %v349
  %448 = vmatprep.subr.bf16.mxu0 0
  %449 = vmatpush2.bf16.msra.mxu0 %v348
  %450 = vmatprep.subr.bf16.mxu0 0
  %451 = vmatpush2.bf16.msra.mxu0 %v347
  %452 = vmatprep.subr.bf16.mxu0 0
  %453 = vmatpush2.bf16.msra.mxu0 %v346
  %454 = vmatprep.subr.bf16.mxu0 0
  %455 = vmatpush2.bf16.msra.mxu0 %v345
  %456 = vmatprep.subr.bf16.mxu0 0
  %457 = vmatpush2.bf16.msra.mxu0 %v344
  %458 = vmatprep.subr.bf16.mxu0 0
  %459 = vmatpush2.bf16.msra.mxu0 %v343
  %460 = vmatprep.subr.bf16.mxu0 0
  %461 = vmatpush2.bf16.msra.mxu0 %v342
  %462 = vmatprep.mubr.bf16.mxu0 %v131
  %463 = vmatmul.mubr.bf16.gmra.mxu0 %v130
  %v464 = vpop.f32.mrf.mxu0
  %v465 = vadd.f32 0.0, %v464
  %v466 = vpop.f32.mrf.mxu0
  %v467 = vpop.f32.mrf.mxu0
  %v468 = vpop.f32.mrf.mxu0
  %469 = vdwg.mxu0
  %470 = vmatprep.subr.bf16.mxu0 0
  %471 = vmatpush1.bf16.msra.mxu0 %v357
  %472 = vmatprep.subr.bf16.mxu0 0
  %473 = vmatpush1.bf16.msra.mxu0 %v356
  %474 = vmatprep.subr.bf16.mxu0 0
  %475 = vmatpush1.bf16.msra.mxu0 %v355
  %476 = vmatprep.subr.bf16.mxu0 0
  %477 = vmatpush1.bf16.msra.mxu0 %v354
  %478 = vmatprep.subr.bf16.mxu0 0
  %479 = vmatpush1.bf16.msra.mxu0 %v353
  %480 = vmatprep.subr.bf16.mxu0 0
  %481 = vmatpush1.bf16.msra.mxu0 %v352
  %482 = vmatprep.subr.bf16.mxu0 0
  %483 = vmatpush1.bf16.msra.mxu0 %v351
  %484 = vmatprep.subr.bf16.mxu0 0
  %485 = vmatpush1.bf16.msra.mxu0 %v350
  %486 = vmatprep.subr.bf16.mxu0 0
  %487 = vmatpush2.bf16.msra.mxu0 %v365
  %488 = vmatprep.subr.bf16.mxu0 0
  %489 = vmatpush2.bf16.msra.mxu0 %v364
  %490 = vmatprep.subr.bf16.mxu0 0
  %491 = vmatpush2.bf16.msra.mxu0 %v363
  %492 = vmatprep.subr.bf16.mxu0 0
  %493 = vmatpush2.bf16.msra.mxu0 %v362
  %494 = vmatprep.subr.bf16.mxu0 0
  %495 = vmatpush2.bf16.msra.mxu0 %v361
  %496 = vmatprep.subr.bf16.mxu0 0
  %497 = vmatpush2.bf16.msra.mxu0 %v360
  %498 = vmatprep.subr.bf16.mxu0 0
  %499 = vmatpush2.bf16.msra.mxu0 %v359
  %500 = vmatprep.subr.bf16.mxu0 0
  %501 = vmatpush2.bf16.msra.mxu0 %v358
  %502 = vmatprep.mubr.bf16.mxu0 %v133
  %503 = vmatmul.mubr.bf16.gmra.mxu0 %v132
  %v504 = vpop.f32.mrf.mxu0
  %v505 = vadd.f32 %v465, %v504
  %v506 = vpop.f32.mrf.mxu0
  %v507 = vpop.f32.mrf.mxu0
  %v508 = vpop.f32.mrf.mxu0
  %509 = vdwg.mxu0
  %510 = vmatprep.subr.bf16.mxu0 0
  %511 = vmatpush1.bf16.msra.mxu0 %v373
  %512 = vmatprep.subr.bf16.mxu0 0
  %513 = vmatpush1.bf16.msra.mxu0 %v372
  %514 = vmatprep.subr.bf16.mxu0 0
  %515 = vmatpush1.bf16.msra.mxu0 %v371
  %516 = vmatprep.subr.bf16.mxu0 0
  %517 = vmatpush1.bf16.msra.mxu0 %v370
  %518 = vmatprep.subr.bf16.mxu0 0
  %519 = vmatpush1.bf16.msra.mxu0 %v369
  %520 = vmatprep.subr.bf16.mxu0 0
  %521 = vmatpush1.bf16.msra.mxu0 %v368
  %522 = vmatprep.subr.bf16.mxu0 0
  %523 = vmatpush1.bf16.msra.mxu0 %v367
  %524 = vmatprep.subr.bf16.mxu0 0
  %525 = vmatpush1.bf16.msra.mxu0 %v366
  %526 = vmatprep.subr.bf16.mxu0 0
  %527 = vmatpush2.bf16.msra.mxu0 %v381
  %528 = vmatprep.subr.bf16.mxu0 0
  %529 = vmatpush2.bf16.msra.mxu0 %v380
  %530 = vmatprep.subr.bf16.mxu0 0
  %531 = vmatpush2.bf16.msra.mxu0 %v379
  %532 = vmatprep.subr.bf16.mxu0 0
  %533 = vmatpush2.bf16.msra.mxu0 %v378
  %534 = vmatprep.subr.bf16.mxu0 0
  %535 = vmatpush2.bf16.msra.mxu0 %v377
  %536 = vmatprep.subr.bf16.mxu0 0
  %537 = vmatpush2.bf16.msra.mxu0 %v376
  %538 = vmatprep.subr.bf16.mxu0 0
  %539 = vmatpush2.bf16.msra.mxu0 %v375
  %540 = vmatprep.subr.bf16.mxu0 0
  %541 = vmatpush2.bf16.msra.mxu0 %v374
  %542 = vmatprep.mubr.bf16.mxu0 %v135
  %543 = vmatmul.mubr.bf16.gmra.mxu0 %v134
  %v544 = vpop.f32.mrf.mxu0
  %v545 = vadd.f32 %v505, %v544
  %v546 = vpop.f32.mrf.mxu0
  %v547 = vpop.f32.mrf.mxu0
  %v548 = vpop.f32.mrf.mxu0
  %549 = vdwg.mxu0
  %v550 = vadd.f32 %v21, %v545
  %vm551 = vcmask 523264
  %552 = vst.msk [vmem:[#allocation2] sm:$0xff] %vm551, %v550
  // Predicated region
  $region18: #{vit_forward.12} parent=0 // pred_check
    %p553 = pneg %p15
  $region19: #{vit_forward.12} parent=0 // pred_check_branch
    %555 = sbr.rel (%p553) target = $region21
  $region20: #{vit_forward.12} parent=0 // pred_region
    %v556 = vld [vmem:[#allocation2] sm:$0xff]
    %v557 = vld [vmem:[%s2] sm:$0x1]
    %v559 = vlaneseq
    %v560 = vshrl.u32 %v559, 7
    %v561 = vsub.s32 0, %v560
    %v562 = vrot.slane %v557, %v561
    %v564 = vadd.f32 %v556, %v562
    %565 = vst.msk [vmem:[%s3] sm:$0xff] %vm551, %v564
  $region21: #{vit_forward.12} parent=0 // pred_fallthru
    _
  // Predicated region
  $region22: #{vit_forward.12} parent=0 // pred_check
    _
  $region23: #{vit_forward.12} parent=0 // pred_check_branch
    %567 = sbr.rel (0) target = $region25
  $region24: #{vit_forward.12} parent=0 // pred_region
    _
  $region25: #{vit_forward.12} parent=0 // pred_fallthru
    _
  // Predicated region
  $region26: #{vit_forward.12} parent=0 // pred_check
    _
  $region27: #{vit_forward.12} parent=0 // pred_check_branch
    %569 = sbr.rel (0) target = $region29
  $region28: #{vit_forward.12} parent=0 // pred_region
    _
  $region29: #{vit_forward.12} parent=0 // pred_fallthru
    _

// kernel: vit_forward.13
$region0: #{vit_forward.13}
  #allocation0 [shape = 'u32[]', space=smem, size = 0x4, offset = 0x4, fixed_abs, tag = 'smem constant byte address 0x4 - core index']
  #allocation1 [shape = 'u32[144,128]{1,0:T(1,128)}', space=vmem, size = 0x12000, scoped, tag = 'internal scratch']
  #allocation2 [shape = 'bf16[256,64]{1,0:T(8,128)(2,1)}', space=vmem, size = 0x10000, scoped, tag = 'scratch operand']
  %s0 = inlined_call_operand.vmem [shape: bf16[256,64], index: 0, kind: input, shape index: {}]
  %s1 = inlined_call_operand.vmem [shape: f32[1,64], index: 1, kind: input, shape index: {}]
  %s2 = inlined_call_operand.vmem [shape: f32[1,64], index: 2, kind: input, shape index: {}]
  %s3 = inlined_call_operand.vmem [shape: bf16[64,192], index: 3, kind: input, shape index: {}]
  %s4 = inlined_call_operand.vmem [shape: f32[1,192], index: 4, kind: input, shape index: {}]
  %s5 = inlined_call_operand.vmem [shape: bf16[256,192], index: 5, kind: output, shape index: {}]
  %s6 = sld [smem:[#allocation0]]
  $region34: #{vit_forward.13} parent=0
    _
  %s8 = ssub.s32 1, %s6
  %s9 = scalar_select 0, %s8, %s6
  // Predicated region
  $region2: #{vit_forward.13} parent=0 // pred_check
    _
  $region3: #{vit_forward.13} parent=0 // pred_check_branch
    %11 = sbr.rel (0) target = $region5
  $region4: #{vit_forward.13} parent=0 // pred_region
    _
  $region5: #{vit_forward.13} parent=0 // pred_fallthru
    _
  // Predicated region
  $region6: #{vit_forward.13} parent=0 // pred_check
    _
  $region7: #{vit_forward.13} parent=0 // pred_check_branch
    %13 = sbr.rel (0) target = $region9
  $region8: #{vit_forward.13} parent=0 // pred_region
    _
  $region9: #{vit_forward.13} parent=0 // pred_fallthru
    _
  // Predicated region
  $region10: #{vit_forward.13} parent=0 // pred_check
    _
  $region11: #{vit_forward.13} parent=0 // pred_check_branch
    %15 = sbr.rel (0) target = $region13
  $region12: #{vit_forward.13} parent=0 // pred_region
    _
  $region13: #{vit_forward.13} parent=0 // pred_fallthru
    _
  // Predicated region
  $region14: #{vit_forward.13} parent=0 // pred_check
    _
  $region15: #{vit_forward.13} parent=0 // pred_check_branch
    %17 = sbr.rel (0) target = $region17
  $region16: #{vit_forward.13} parent=0 // pred_region
    _
  $region17: #{vit_forward.13} parent=0 // pred_fallthru
    _
  // Predicated region
  $region18: #{vit_forward.13} parent=0 // pred_check
    _
  $region19: #{vit_forward.13} parent=0 // pred_check_branch
    %19 = sbr.rel (0) target = $region21
  $region20: #{vit_forward.13} parent=0 // pred_region
    _
  $region21: #{vit_forward.13} parent=0 // pred_fallthru
    _
  %p21 = scmp.eq.s32.totalorder 0, 0
  // Predicated region
  $region22: #{vit_forward.13} parent=0 // pred_check
    %p22 = pneg %p21
  $region23: #{vit_forward.13} parent=0 // pred_check_branch
    %24 = sbr.rel (%p22) target = $region25
  $region24: #{vit_forward.13} parent=0 // pred_region
    %v25 = vld [vmem:[%s0] sm:$0xf]
    %v26 = vld [vmem:[%s0 + $0x4] sm:$0xf]
    %v27 = vld [vmem:[%s0 + $0x8] sm:$0xf]
    %v28 = vld [vmem:[%s0 + $0xc] sm:$0xf]
    %v29 = vld [vmem:[%s0 + $0x10] sm:$0xf]
    %v30 = vld [vmem:[%s0 + $0x14] sm:$0xf]
    %v31 = vld [vmem:[%s0 + $0x18] sm:$0xf]
    %v32 = vld [vmem:[%s0 + $0x1c] sm:$0xf]
    %v33 = vld [vmem:[%s0 + $0x20] sm:$0xf]
    %v34 = vld [vmem:[%s0 + $0x24] sm:$0xf]
    %v35 = vld [vmem:[%s0 + $0x28] sm:$0xf]
    %v36 = vld [vmem:[%s0 + $0x2c] sm:$0xf]
    %v37 = vld [vmem:[%s0 + $0x30] sm:$0xf]
    %v38 = vld [vmem:[%s0 + $0x34] sm:$0xf]
    %v39 = vld [vmem:[%s0 + $0x38] sm:$0xf]
    %v40 = vld [vmem:[%s0 + $0x3c] sm:$0xf]
    %v41 = vld [vmem:[%s0 + $0x40] sm:$0xf]
    %v42 = vld [vmem:[%s0 + $0x44] sm:$0xf]
    %v43 = vld [vmem:[%s0 + $0x48] sm:$0xf]
    %v44 = vld [vmem:[%s0 + $0x4c] sm:$0xf]
    %v45 = vld [vmem:[%s0 + $0x50] sm:$0xf]
    %v46 = vld [vmem:[%s0 + $0x54] sm:$0xf]
    %v47 = vld [vmem:[%s0 + $0x58] sm:$0xf]
    %v48 = vld [vmem:[%s0 + $0x5c] sm:$0xf]
    %v49 = vld [vmem:[%s0 + $0x60] sm:$0xf]
    %v50 = vld [vmem:[%s0 + $0x64] sm:$0xf]
    %v51 = vld [vmem:[%s0 + $0x68] sm:$0xf]
    %v52 = vld [vmem:[%s0 + $0x6c] sm:$0xf]
    %v53 = vld [vmem:[%s0 + $0x70] sm:$0xf]
    %v54 = vld [vmem:[%s0 + $0x74] sm:$0xf]
    %v55 = vld [vmem:[%s0 + $0x78] sm:$0xf]
    %v56 = vld [vmem:[%s0 + $0x7c] sm:$0xf]
    %v57 = vunpack.c.l.bf16 %v25
    %v58 = vunpack.c.l.bf16 %v26
    %v59 = vunpack.c.l.bf16 %v27
    %v60 = vunpack.c.l.bf16 %v28
    %v61 = vunpack.c.l.bf16 %v29
    %v62 = vunpack.c.l.bf16 %v30
    %v63 = vunpack.c.l.bf16 %v31
    %v64 = vunpack.c.l.bf16 %v32
    %v65 = vunpack.c.l.bf16 %v33
    %v66 = vunpack.c.l.bf16 %v34
    %v67 = vunpack.c.l.bf16 %v35
    %v68 = vunpack.c.l.bf16 %v36
    %v69 = vunpack.c.l.bf16 %v37
    %v70 = vunpack.c.l.bf16 %v38
    %v71 = vunpack.c.l.bf16 %v39
    %v72 = vunpack.c.l.bf16 %v40
    %v73 = vunpack.c.l.bf16 %v41
    %v74 = vunpack.c.l.bf16 %v42
    %v75 = vunpack.c.l.bf16 %v43
    %v76 = vunpack.c.l.bf16 %v44
    %v77 = vunpack.c.l.bf16 %v45
    %v78 = vunpack.c.l.bf16 %v46
    %v79 = vunpack.c.l.bf16 %v47
    %v80 = vunpack.c.l.bf16 %v48
    %v81 = vunpack.c.l.bf16 %v49
    %v82 = vunpack.c.l.bf16 %v50
    %v83 = vunpack.c.l.bf16 %v51
    %v84 = vunpack.c.l.bf16 %v52
    %v85 = vunpack.c.l.bf16 %v53
    %v86 = vunpack.c.l.bf16 %v54
    %v87 = vunpack.c.l.bf16 %v55
    %v88 = vunpack.c.l.bf16 %v56
    %vm89 = vcmask 523264
    %v90 = vsel %vm89, %v57, 0.0
    %91 = vadd.xlane.f32.xlu0 %v90
    %v92 = vpop.xlane.xlu0 %91
    %v93 = vsel %vm89, %v58, 0.0
    %94 = vadd.xlane.f32.xlu0 %v93
    %v95 = vpop.xlane.xlu0 %94
    %v96 = vsel %vm89, %v59, 0.0
    %97 = vadd.xlane.f32.xlu0 %v96
    %v98 = vpop.xlane.xlu0 %97
    %v99 = vsel %vm89, %v60, 0.0
    %100 = vadd.xlane.f32.xlu0 %v99
    %v101 = vpop.xlane.xlu0 %100
    %v102 = vsel %vm89, %v61, 0.0
    %103 = vadd.xlane.f32.xlu0 %v102
    %v104 = vpop.xlane.xlu0 %103
    %v105 = vsel %vm89, %v62, 0.0
    %106 = vadd.xlane.f32.xlu0 %v105
    %v107 = vpop.xlane.xlu0 %106
    %v108 = vsel %vm89, %v63, 0.0
    %109 = vadd.xlane.f32.xlu0 %v108
    %v110 = vpop.xlane.xlu0 %109
    %v111 = vsel %vm89, %v64, 0.0
    %112 = vadd.xlane.f32.xlu0 %v111
    %v113 = vpop.xlane.xlu0 %112
    %v114 = vsel %vm89, %v65, 0.0
    %115 = vadd.xlane.f32.xlu0 %v114
    %v116 = vpop.xlane.xlu0 %115
    %v117 = vsel %vm89, %v66, 0.0
    %118 = vadd.xlane.f32.xlu0 %v117
    %v119 = vpop.xlane.xlu0 %118
    %v120 = vsel %vm89, %v67, 0.0
    %121 = vadd.xlane.f32.xlu0 %v120
    %v122 = vpop.xlane.xlu0 %121
    %v123 = vsel %vm89, %v68, 0.0
    %124 = vadd.xlane.f32.xlu0 %v123
    %v125 = vpop.xlane.xlu0 %124
    %v126 = vsel %vm89, %v69, 0.0
    %127 = vadd.xlane.f32.xlu0 %v126
    %v128 = vpop.xlane.xlu0 %127
    %v129 = vsel %vm89, %v70, 0.0
    %130 = vadd.xlane.f32.xlu0 %v129
    %v131 = vpop.xlane.xlu0 %130
    %v132 = vsel %vm89, %v71, 0.0
    %133 = vadd.xlane.f32.xlu0 %v132
    %v134 = vpop.xlane.xlu0 %133
    %v135 = vsel %vm89, %v72, 0.0
    %136 = vadd.xlane.f32.xlu0 %v135
    %v137 = vpop.xlane.xlu0 %136
    %v138 = vsel %vm89, %v73, 0.0
    %139 = vadd.xlane.f32.xlu0 %v138
    %v140 = vpop.xlane.xlu0 %139
    %v141 = vsel %vm89, %v74, 0.0
    %142 = vadd.xlane.f32.xlu0 %v141
    %v143 = vpop.xlane.xlu0 %142
    %v144 = vsel %vm89, %v75, 0.0
    %145 = vadd.xlane.f32.xlu0 %v144
    %v146 = vpop.xlane.xlu0 %145
    %v147 = vsel %vm89, %v76, 0.0
    %148 = vadd.xlane.f32.xlu0 %v147
    %v149 = vpop.xlane.xlu0 %148
    %v150 = vsel %vm89, %v77, 0.0
    %151 = vadd.xlane.f32.xlu0 %v150
    %v152 = vpop.xlane.xlu0 %151
    %v153 = vsel %vm89, %v78, 0.0
    %154 = vadd.xlane.f32.xlu0 %v153
    %v155 = vpop.xlane.xlu0 %154
    %v156 = vsel %vm89, %v79, 0.0
    %157 = vadd.xlane.f32.xlu0 %v156
    %v158 = vpop.xlane.xlu0 %157
    %v159 = vsel %vm89, %v80, 0.0
    %160 = vadd.xlane.f32.xlu0 %v159
    %v161 = vpop.xlane.xlu0 %160
    %v162 = vsel %vm89, %v81, 0.0
    %163 = vadd.xlane.f32.xlu0 %v162
    %v164 = vpop.xlane.xlu0 %163
    %v165 = vsel %vm89, %v82, 0.0
    %166 = vadd.xlane.f32.xlu0 %v165
    %v167 = vpop.xlane.xlu0 %166
    %v168 = vsel %vm89, %v83, 0.0
    %169 = vadd.xlane.f32.xlu0 %v168
    %v170 = vpop.xlane.xlu0 %169
    %v171 = vsel %vm89, %v84, 0.0
    %172 = vadd.xlane.f32.xlu0 %v171
    %v173 = vpop.xlane.xlu0 %172
    %v174 = vsel %vm89, %v85, 0.0
    %175 = vadd.xlane.f32.xlu0 %v174
    %v176 = vpop.xlane.xlu0 %175
    %v177 = vsel %vm89, %v86, 0.0
    %178 = vadd.xlane.f32.xlu0 %v177
    %v179 = vpop.xlane.xlu0 %178
    %v180 = vsel %vm89, %v87, 0.0
    %181 = vadd.xlane.f32.xlu0 %v180
    %v182 = vpop.xlane.xlu0 %181
    %v183 = vsel %vm89, %v88, 0.0
    %184 = vadd.xlane.f32.xlu0 %v183
    %v185 = vpop.xlane.xlu0 %184
    %v186 = vrcp.pop 64.0
    %v187 = vmul.f32 %v92, %v186
    %v188 = vmul.f32 %v95, %v186
    %v189 = vmul.f32 %v98, %v186
    %v190 = vmul.f32 %v101, %v186
    %v191 = vmul.f32 %v104, %v186
    %v192 = vmul.f32 %v107, %v186
    %v193 = vmul.f32 %v110, %v186
    %v194 = vmul.f32 %v113, %v186
    %v195 = vmul.f32 %v116, %v186
    %v196 = vmul.f32 %v119, %v186
    %v197 = vmul.f32 %v122, %v186
    %v198 = vmul.f32 %v125, %v186
    %v199 = vmul.f32 %v128, %v186
    %v200 = vmul.f32 %v131, %v186
    %v201 = vmul.f32 %v134, %v186
    %v202 = vmul.f32 %v137, %v186
    %v203 = vmul.f32 %v140, %v186
    %v204 = vmul.f32 %v143, %v186
    %v205 = vmul.f32 %v146, %v186
    %v206 = vmul.f32 %v149, %v186
    %v207 = vmul.f32 %v152, %v186
    %v208 = vmul.f32 %v155, %v186
    %v209 = vmul.f32 %v158, %v186
    %v210 = vmul.f32 %v161, %v186
    %v211 = vmul.f32 %v164, %v186
    %v212 = vmul.f32 %v167, %v186
    %v213 = vmul.f32 %v170, %v186
    %v214 = vmul.f32 %v173, %v186
    %v215 = vmul.f32 %v176, %v186
    %v216 = vmul.f32 %v179, %v186
    %v217 = vmul.f32 %v182, %v186
    %v218 = vmul.f32 %v185, %v186
    %v219 = vsub.f32 %v57, %v187
    %v220 = vsub.f32 %v58, %v188
    %v221 = vsub.f32 %v59, %v189
    %v222 = vsub.f32 %v60, %v190
    %v223 = vsub.f32 %v61, %v191
    %v224 = vsub.f32 %v62, %v192
    %v225 = vsub.f32 %v63, %v193
    %v226 = vsub.f32 %v64, %v194
    %v227 = vsub.f32 %v65, %v195
    %v228 = vsub.f32 %v66, %v196
    %v229 = vsub.f32 %v67, %v197
    %v230 = vsub.f32 %v68, %v198
    %v231 = vsub.f32 %v69, %v199
    %v232 = vsub.f32 %v70, %v200
    %v233 = vsub.f32 %v71, %v201
    %v234 = vsub.f32 %v72, %v202
    %v235 = vsub.f32 %v73, %v203
    %v236 = vsub.f32 %v74, %v204
    %v237 = vsub.f32 %v75, %v205
    %v238 = vsub.f32 %v76, %v206
    %v239 = vsub.f32 %v77, %v207
    %v240 = vsub.f32 %v78, %v208
    %v241 = vsub.f32 %v79, %v209
    %v242 = vsub.f32 %v80, %v210
    %v243 = vsub.f32 %v81, %v211
    %v244 = vsub.f32 %v82, %v212
    %v245 = vsub.f32 %v83, %v213
    %v246 = vsub.f32 %v84, %v214
    %v247 = vsub.f32 %v85, %v215
    %v248 = vsub.f32 %v86, %v216
    %v249 = vsub.f32 %v87, %v217
    %v250 = vsub.f32 %v88, %v218
    %v251 = vmul.f32 %v219, %v219
    %v252 = vmul.f32 %v220, %v220
    %v253 = vmul.f32 %v221, %v221
    %v254 = vmul.f32 %v222, %v222
    %v255 = vmul.f32 %v223, %v223
    %v256 = vmul.f32 %v224, %v224
    %v257 = vmul.f32 %v225, %v225
    %v258 = vmul.f32 %v226, %v226
    %v259 = vmul.f32 %v227, %v227
    %v260 = vmul.f32 %v228, %v228
    %v261 = vmul.f32 %v229, %v229
    %v262 = vmul.f32 %v230, %v230
    %v263 = vmul.f32 %v231, %v231
    %v264 = vmul.f32 %v232, %v232
    %v265 = vmul.f32 %v233, %v233
    %v266 = vmul.f32 %v234, %v234
    %v267 = vmul.f32 %v235, %v235
    %v268 = vmul.f32 %v236, %v236
    %v269 = vmul.f32 %v237, %v237
    %v270 = vmul.f32 %v238, %v238
    %v271 = vmul.f32 %v239, %v239
    %v272 = vmul.f32 %v240, %v240
    %v273 = vmul.f32 %v241, %v241
    %v274 = vmul.f32 %v242, %v242
    %v275 = vmul.f32 %v243, %v243
    %v276 = vmul.f32 %v244, %v244
    %v277 = vmul.f32 %v245, %v245
    %v278 = vmul.f32 %v246, %v246
    %v279 = vmul.f32 %v247, %v247
    %v280 = vmul.f32 %v248, %v248
    %v281 = vmul.f32 %v249, %v249
    %v282 = vmul.f32 %v250, %v250
    %v283 = vsel %vm89, %v251, 0.0
    %284 = vadd.xlane.f32.xlu0 %v283
    %v285 = vpop.xlane.xlu0 %284
    %v286 = vsel %vm89, %v252, 0.0
    %287 = vadd.xlane.f32.xlu0 %v286
    %v288 = vpop.xlane.xlu0 %287
    %v289 = vsel %vm89, %v253, 0.0
    %290 = vadd.xlane.f32.xlu0 %v289
    %v291 = vpop.xlane.xlu0 %290
    %v292 = vsel %vm89, %v254, 0.0
    %293 = vadd.xlane.f32.xlu0 %v292
    %v294 = vpop.xlane.xlu0 %293
    %v295 = vsel %vm89, %v255, 0.0
    %296 = vadd.xlane.f32.xlu0 %v295
    %v297 = vpop.xlane.xlu0 %296
    %v298 = vsel %vm89, %v256, 0.0
    %299 = vadd.xlane.f32.xlu0 %v298
    %v300 = vpop.xlane.xlu0 %299
    %v301 = vsel %vm89, %v257, 0.0
    %302 = vadd.xlane.f32.xlu0 %v301
    %v303 = vpop.xlane.xlu0 %302
    %v304 = vsel %vm89, %v258, 0.0
    %305 = vadd.xlane.f32.xlu0 %v304
    %v306 = vpop.xlane.xlu0 %305
    %v307 = vsel %vm89, %v259, 0.0
    %308 = vadd.xlane.f32.xlu0 %v307
    %v309 = vpop.xlane.xlu0 %308
    %v310 = vsel %vm89, %v260, 0.0
    %311 = vadd.xlane.f32.xlu0 %v310
    %v312 = vpop.xlane.xlu0 %311
    %v313 = vsel %vm89, %v261, 0.0
    %314 = vadd.xlane.f32.xlu0 %v313
    %v315 = vpop.xlane.xlu0 %314
    %v316 = vsel %vm89, %v262, 0.0
    %317 = vadd.xlane.f32.xlu0 %v316
    %v318 = vpop.xlane.xlu0 %317
    %v319 = vsel %vm89, %v263, 0.0
    %320 = vadd.xlane.f32.xlu0 %v319
    %v321 = vpop.xlane.xlu0 %320
    %v322 = vsel %vm89, %v264, 0.0
    %323 = vadd.xlane.f32.xlu0 %v322
    %v324 = vpop.xlane.xlu0 %323
    %v325 = vsel %vm89, %v265, 0.0
    %326 = vadd.xlane.f32.xlu0 %v325
    %v327 = vpop.xlane.xlu0 %326
    %v328 = vsel %vm89, %v266, 0.0
    %329 = vadd.xlane.f32.xlu0 %v328
    %v330 = vpop.xlane.xlu0 %329
    %v331 = vsel %vm89, %v267, 0.0
    %332 = vadd.xlane.f32.xlu0 %v331
    %v333 = vpop.xlane.xlu0 %332
    %v334 = vsel %vm89, %v268, 0.0
    %335 = vadd.xlane.f32.xlu0 %v334
    %v336 = vpop.xlane.xlu0 %335
    %v337 = vsel %vm89, %v269, 0.0
    %338 = vadd.xlane.f32.xlu0 %v337
    %v339 = vpop.xlane.xlu0 %338
    %v340 = vsel %vm89, %v270, 0.0
    %341 = vadd.xlane.f32.xlu0 %v340
    %v342 = vpop.xlane.xlu0 %341
    %v343 = vsel %vm89, %v271, 0.0
    %344 = vadd.xlane.f32.xlu0 %v343
    %v345 = vpop.xlane.xlu0 %344
    %v346 = vsel %vm89, %v272, 0.0
    %347 = vadd.xlane.f32.xlu0 %v346
    %v348 = vpop.xlane.xlu0 %347
    %v349 = vsel %vm89, %v273, 0.0
    %350 = vadd.xlane.f32.xlu0 %v349
    %v351 = vpop.xlane.xlu0 %350
    %v352 = vsel %vm89, %v274, 0.0
    %353 = vadd.xlane.f32.xlu0 %v352
    %v354 = vpop.xlane.xlu0 %353
    %v355 = vsel %vm89, %v275, 0.0
    %356 = vadd.xlane.f32.xlu0 %v355
    %v357 = vpop.xlane.xlu0 %356
    %v358 = vsel %vm89, %v276, 0.0
    %359 = vadd.xlane.f32.xlu0 %v358
    %v360 = vpop.xlane.xlu0 %359
    %v361 = vsel %vm89, %v277, 0.0
    %362 = vadd.xlane.f32.xlu0 %v361
    %v363 = vpop.xlane.xlu0 %362
    %v364 = vsel %vm89, %v278, 0.0
    %365 = vadd.xlane.f32.xlu0 %v364
    %v366 = vpop.xlane.xlu0 %365
    %v367 = vsel %vm89, %v279, 0.0
    %368 = vadd.xlane.f32.xlu0 %v367
    %v369 = vpop.xlane.xlu0 %368
    %v370 = vsel %vm89, %v280, 0.0
    %371 = vadd.xlane.f32.xlu0 %v370
    %v372 = vpop.xlane.xlu0 %371
    %v373 = vsel %vm89, %v281, 0.0
    %374 = vadd.xlane.f32.xlu0 %v373
    %v375 = vpop.xlane.xlu0 %374
    %v376 = vsel %vm89, %v282, 0.0
    %377 = vadd.xlane.f32.xlu0 %v376
    %v378 = vpop.xlane.xlu0 %377
    %v379 = vmul.f32 %v285, %v186
    %v380 = vmul.f32 %v288, %v186
    %v381 = vmul.f32 %v291, %v186
    %v382 = vmul.f32 %v294, %v186
    %v383 = vmul.f32 %v297, %v186
    %v384 = vmul.f32 %v300, %v186
    %v385 = vmul.f32 %v303, %v186
    %v386 = vmul.f32 %v306, %v186
    %v387 = vmul.f32 %v309, %v186
    %v388 = vmul.f32 %v312, %v186
    %v389 = vmul.f32 %v315, %v186
    %v390 = vmul.f32 %v318, %v186
    %v391 = vmul.f32 %v321, %v186
    %v392 = vmul.f32 %v324, %v186
    %v393 = vmul.f32 %v327, %v186
    %v394 = vmul.f32 %v330, %v186
    %v395 = vmul.f32 %v333, %v186
    %v396 = vmul.f32 %v336, %v186
    %v397 = vmul.f32 %v339, %v186
    %v398 = vmul.f32 %v342, %v186
    %v399 = vmul.f32 %v345, %v186
    %v400 = vmul.f32 %v348, %v186
    %v401 = vmul.f32 %v351, %v186
    %v402 = vmul.f32 %v354, %v186
    %v403 = vmul.f32 %v357, %v186
    %v404 = vmul.f32 %v360, %v186
    %v405 = vmul.f32 %v363, %v186
    %v406 = vmul.f32 %v366, %v186
    %v407 = vmul.f32 %v369, %v186
    %v408 = vmul.f32 %v372, %v186
    %v409 = vmul.f32 %v375, %v186
    %v410 = vmul.f32 %v378, %v186
    %v411 = vadd.f32 %v379, 1e-06
    %v412 = vadd.f32 %v380, 1e-06
    %v413 = vadd.f32 %v381, 1e-06
    %v414 = vadd.f32 %v382, 1e-06
    %v415 = vadd.f32 %v383, 1e-06
    %v416 = vadd.f32 %v384, 1e-06
    %v417 = vadd.f32 %v385, 1e-06
    %v418 = vadd.f32 %v386, 1e-06
    %v419 = vadd.f32 %v387, 1e-06
    %v420 = vadd.f32 %v388, 1e-06
    %v421 = vadd.f32 %v389, 1e-06
    %v422 = vadd.f32 %v390, 1e-06
    %v423 = vadd.f32 %v391, 1e-06
    %v424 = vadd.f32 %v392, 1e-06
    %v425 = vadd.f32 %v393, 1e-06
    %v426 = vadd.f32 %v394, 1e-06
    %v427 = vadd.f32 %v395, 1e-06
    %v428 = vadd.f32 %v396, 1e-06
    %v429 = vadd.f32 %v397, 1e-06
    %v430 = vadd.f32 %v398, 1e-06
    %v431 = vadd.f32 %v399, 1e-06
    %v432 = vadd.f32 %v400, 1e-06
    %v433 = vadd.f32 %v401, 1e-06
    %v434 = vadd.f32 %v402, 1e-06
    %v435 = vadd.f32 %v403, 1e-06
    %v436 = vadd.f32 %v404, 1e-06
    %v437 = vadd.f32 %v405, 1e-06
    %v438 = vadd.f32 %v406, 1e-06
    %v439 = vadd.f32 %v407, 1e-06
    %v440 = vadd.f32 %v408, 1e-06
    %v441 = vadd.f32 %v409, 1e-06
    %v442 = vadd.f32 %v410, 1e-06
    %v443 = vrsqrt.pop %v411
    %v444 = vrsqrt.pop %v412
    %v445 = vrsqrt.pop %v413
    %v446 = vrsqrt.pop %v414
    %v447 = vrsqrt.pop %v415
    %v448 = vrsqrt.pop %v416
    %v449 = vrsqrt.pop %v417
    %v450 = vrsqrt.pop %v418
    %v451 = vrsqrt.pop %v419
    %v452 = vrsqrt.pop %v420
    %v453 = vrsqrt.pop %v421
    %v454 = vrsqrt.pop %v422
    %v455 = vrsqrt.pop %v423
    %v456 = vrsqrt.pop %v424
    %v457 = vrsqrt.pop %v425
    %v458 = vrsqrt.pop %v426
    %v459 = vrsqrt.pop %v427
    %v460 = vrsqrt.pop %v428
    %v461 = vrsqrt.pop %v429
    %v462 = vrsqrt.pop %v430
    %v463 = vrsqrt.pop %v431
    %v464 = vrsqrt.pop %v432
    %v465 = vrsqrt.pop %v433
    %v466 = vrsqrt.pop %v434
    %v467 = vrsqrt.pop %v435
    %v468 = vrsqrt.pop %v436
    %v469 = vrsqrt.pop %v437
    %v470 = vrsqrt.pop %v438
    %v471 = vrsqrt.pop %v439
    %v472 = vrsqrt.pop %v440
    %v473 = vrsqrt.pop %v441
    %v474 = vrsqrt.pop %v442
    %v475 = vmul.f32 %v219, %v443
    %v476 = vmul.f32 %v220, %v444
    %v477 = vmul.f32 %v221, %v445
    %v478 = vmul.f32 %v222, %v446
    %v479 = vmul.f32 %v223, %v447
    %v480 = vmul.f32 %v224, %v448
    %v481 = vmul.f32 %v225, %v449
    %v482 = vmul.f32 %v226, %v450
    %v483 = vmul.f32 %v227, %v451
    %v484 = vmul.f32 %v228, %v452
    %v485 = vmul.f32 %v229, %v453
    %v486 = vmul.f32 %v230, %v454
    %v487 = vmul.f32 %v231, %v455
    %v488 = vmul.f32 %v232, %v456
    %v489 = vmul.f32 %v233, %v457
    %v490 = vmul.f32 %v234, %v458
    %v491 = vmul.f32 %v235, %v459
    %v492 = vmul.f32 %v236, %v460
    %v493 = vmul.f32 %v237, %v461
    %v494 = vmul.f32 %v238, %v462
    %v495 = vmul.f32 %v239, %v463
    %v496 = vmul.f32 %v240, %v464
    %v497 = vmul.f32 %v241, %v465
    %v498 = vmul.f32 %v242, %v466
    %v499 = vmul.f32 %v243, %v467
    %v500 = vmul.f32 %v244, %v468
    %v501 = vmul.f32 %v245, %v469
    %v502 = vmul.f32 %v246, %v470
    %v503 = vmul.f32 %v247, %v471
    %v504 = vmul.f32 %v248, %v472
    %v505 = vmul.f32 %v249, %v473
    %v506 = vmul.f32 %v250, %v474
    %v507 = vld [vmem:[%s1] sm:$0x1]
    %v509 = vlaneseq
    %v510 = vshrl.u32 %v509, 7
    %v511 = vsub.s32 0, %v510
    %v512 = vrot.slane %v507, %v511
    %v514 = vmul.f32 %v475, %v512
    %v515 = vmul.f32 %v476, %v512
    %v516 = vmul.f32 %v477, %v512
    %v517 = vmul.f32 %v478, %v512
    %v518 = vmul.f32 %v479, %v512
    %v519 = vmul.f32 %v480, %v512
    %v520 = vmul.f32 %v481, %v512
    %v521 = vmul.f32 %v482, %v512
    %v522 = vmul.f32 %v483, %v512
    %v523 = vmul.f32 %v484, %v512
    %v524 = vmul.f32 %v485, %v512
    %v525 = vmul.f32 %v486, %v512
    %v526 = vmul.f32 %v487, %v512
    %v527 = vmul.f32 %v488, %v512
    %v528 = vmul.f32 %v489, %v512
    %v529 = vmul.f32 %v490, %v512
    %v530 = vmul.f32 %v491, %v512
    %v531 = vmul.f32 %v492, %v512
    %v532 = vmul.f32 %v493, %v512
    %v533 = vmul.f32 %v494, %v512
    %v534 = vmul.f32 %v495, %v512
    %v535 = vmul.f32 %v496, %v512
    %v536 = vmul.f32 %v497, %v512
    %v537 = vmul.f32 %v498, %v512
    %v538 = vmul.f32 %v499, %v512
    %v539 = vmul.f32 %v500, %v512
    %v540 = vmul.f32 %v501, %v512
    %v541 = vmul.f32 %v502, %v512
    %v542 = vmul.f32 %v503, %v512
    %v543 = vmul.f32 %v504, %v512
    %v544 = vmul.f32 %v505, %v512
    %v545 = vmul.f32 %v506, %v512
    %v546 = vld [vmem:[%s2] sm:$0x1]
    %v548 = vlaneseq
    %v549 = vshrl.u32 %v548, 7
    %v550 = vsub.s32 0, %v549
    %v551 = vrot.slane %v546, %v550
    %v553 = vadd.f32 %v514, %v551
    %v554 = vadd.f32 %v515, %v551
    %v555 = vadd.f32 %v516, %v551
    %v556 = vadd.f32 %v517, %v551
    %v557 = vadd.f32 %v518, %v551
    %v558 = vadd.f32 %v519, %v551
    %v559 = vadd.f32 %v520, %v551
    %v560 = vadd.f32 %v521, %v551
    %v561 = vadd.f32 %v522, %v551
    %v562 = vadd.f32 %v523, %v551
    %v563 = vadd.f32 %v524, %v551
    %v564 = vadd.f32 %v525, %v551
    %v565 = vadd.f32 %v526, %v551
    %v566 = vadd.f32 %v527, %v551
    %v567 = vadd.f32 %v528, %v551
    %v568 = vadd.f32 %v529, %v551
    %v569 = vadd.f32 %v530, %v551
    %v570 = vadd.f32 %v531, %v551
    %v571 = vadd.f32 %v532, %v551
    %v572 = vadd.f32 %v533, %v551
    %v573 = vadd.f32 %v534, %v551
    %v574 = vadd.f32 %v535, %v551
    %v575 = vadd.f32 %v536, %v551
    %v576 = vadd.f32 %v537, %v551
    %v577 = vadd.f32 %v538, %v551
    %v578 = vadd.f32 %v539, %v551
    %v579 = vadd.f32 %v540, %v551
    %v580 = vadd.f32 %v541, %v551
    %v581 = vadd.f32 %v542, %v551
    %v582 = vadd.f32 %v543, %v551
    %v583 = vadd.f32 %v544, %v551
    %v584 = vadd.f32 %v545, %v551
    %v585 = vpack.c.bf16 %v554, %v553
    %v586 = vpack.c.bf16 %v556, %v555
    %v587 = vpack.c.bf16 %v558, %v557
    %v588 = vpack.c.bf16 %v560, %v559
    %v589 = vpack.c.bf16 %v562, %v561
    %v590 = vpack.c.bf16 %v564, %v563
    %v591 = vpack.c.bf16 %v566, %v565
    %v592 = vpack.c.bf16 %v568, %v567
    %v593 = vpack.c.bf16 %v570, %v569
    %v594 = vpack.c.bf16 %v572, %v571
    %v595 = vpack.c.bf16 %v574, %v573
    %v596 = vpack.c.bf16 %v576, %v575
    %v597 = vpack.c.bf16 %v578, %v577
    %v598 = vpack.c.bf16 %v580, %v579
    %v599 = vpack.c.bf16 %v582, %v581
    %v600 = vpack.c.bf16 %v584, %v583
    %v617 = vunpack.c.l.b16 %v585
    %v618 = vunpack.c.h.b16 %v585
    %v619 = vunpack.c.l.b16 %v586
    %v620 = vunpack.c.h.b16 %v586
    %v621 = vunpack.c.l.b16 %v587
    %v622 = vunpack.c.h.b16 %v587
    %v623 = vunpack.c.l.b16 %v588
    %v624 = vunpack.c.h.b16 %v588
    %v625 = vunpack.c.l.b16 %v589
    %v626 = vunpack.c.h.b16 %v589
    %v627 = vunpack.c.l.b16 %v590
    %v628 = vunpack.c.h.b16 %v590
    %v629 = vunpack.c.l.b16 %v591
    %v630 = vunpack.c.h.b16 %v591
    %v631 = vunpack.c.l.b16 %v592
    %v632 = vunpack.c.h.b16 %v592
    %v633 = vunpack.c.l.b16 %v593
    %v634 = vunpack.c.h.b16 %v593
    %v635 = vunpack.c.l.b16 %v594
    %v636 = vunpack.c.h.b16 %v594
    %v637 = vunpack.c.l.b16 %v595
    %v638 = vunpack.c.h.b16 %v595
    %v639 = vunpack.c.l.b16 %v596
    %v640 = vunpack.c.h.b16 %v596
    %v641 = vunpack.c.l.b16 %v597
    %v642 = vunpack.c.h.b16 %v597
    %v643 = vunpack.c.l.b16 %v598
    %v644 = vunpack.c.h.b16 %v598
    %v645 = vunpack.c.l.b16 %v599
    %v646 = vunpack.c.h.b16 %v599
    %v647 = vunpack.c.l.b16 %v600
    %v648 = vunpack.c.h.b16 %v600
    %v649 = vpack.c.b16 %v617, %v617
    %v650 = vpack.c.b16 %v618, %v618
    %v651 = vpack.c.b16 %v619, %v619
    %v652 = vpack.c.b16 %v620, %v620
    %v653 = vpack.c.b16 %v621, %v621
    %v654 = vpack.c.b16 %v622, %v622
    %v655 = vpack.c.b16 %v623, %v623
    %v656 = vpack.c.b16 %v624, %v624
    %v657 = vpack.c.b16 %v625, %v625
    %v658 = vpack.c.b16 %v626, %v626
    %v659 = vpack.c.b16 %v627, %v627
    %v660 = vpack.c.b16 %v628, %v628
    %v661 = vpack.c.b16 %v629, %v629
    %v662 = vpack.c.b16 %v630, %v630
    %v663 = vpack.c.b16 %v631, %v631
    %v664 = vpack.c.b16 %v632, %v632
    %v665 = vpack.c.b16 %v633, %v633
    %v666 = vpack.c.b16 %v634, %v634
    %v667 = vpack.c.b16 %v635, %v635
    %v668 = vpack.c.b16 %v636, %v636
    %v669 = vpack.c.b16 %v637, %v637
    %v670 = vpack.c.b16 %v638, %v638
    %v671 = vpack.c.b16 %v639, %v639
    %v672 = vpack.c.b16 %v640, %v640
    %v673 = vpack.c.b16 %v641, %v641
    %v674 = vpack.c.b16 %v642, %v642
    %v675 = vpack.c.b16 %v643, %v643
    %v676 = vpack.c.b16 %v644, %v644
    %v677 = vpack.c.b16 %v645, %v645
    %v678 = vpack.c.b16 %v646, %v646
    %v679 = vpack.c.b16 %v647, %v647
    %v680 = vpack.c.b16 %v648, %v648
    %vm713 = vcmask 519168
    %714 = vst.msk [vmem:[#allocation2] sm:$0xf] %vm713, %v649
    %715 = vst.msk [vmem:[#allocation2 + $0x4] sm:$0xf] %vm713, %v650
    %716 = vst.msk [vmem:[#allocation2 + $0x8] sm:$0xf] %vm713, %v651
    %717 = vst.msk [vmem:[#allocation2 + $0xc] sm:$0xf] %vm713, %v652
    %718 = vst.msk [vmem:[#allocation2 + $0x10] sm:$0xf] %vm713, %v653
    %719 = vst.msk [vmem:[#allocation2 + $0x14] sm:$0xf] %vm713, %v654
    %720 = vst.msk [vmem:[#allocation2 + $0x18] sm:$0xf] %vm713, %v655
    %721 = vst.msk [vmem:[#allocation2 + $0x1c] sm:$0xf] %vm713, %v656
    %722 = vst.msk [vmem:[#allocation2 + $0x20] sm:$0xf] %vm713, %v657
    %723 = vst.msk [vmem:[#allocation2 + $0x24] sm:$0xf] %vm713, %v658
    %724 = vst.msk [vmem:[#allocation2 + $0x28] sm:$0xf] %vm713, %v659
    %725 = vst.msk [vmem:[#allocation2 + $0x2c] sm:$0xf] %vm713, %v660
    %726 = vst.msk [vmem:[#allocation2 + $0x30] sm:$0xf] %vm713, %v661
    %727 = vst.msk [vmem:[#allocation2 + $0x34] sm:$0xf] %vm713, %v662
    %728 = vst.msk [vmem:[#allocation2 + $0x38] sm:$0xf] %vm713, %v663
    %729 = vst.msk [vmem:[#allocation2 + $0x3c] sm:$0xf] %vm713, %v664
    %730 = vst.msk [vmem:[#allocation2 + $0x40] sm:$0xf] %vm713, %v665
    %731 = vst.msk [vmem:[#allocation2 + $0x44] sm:$0xf] %vm713, %v666
    %732 = vst.msk [vmem:[#allocation2 + $0x48] sm:$0xf] %vm713, %v667
    %733 = vst.msk [vmem:[#allocation2 + $0x4c] sm:$0xf] %vm713, %v668
    %734 = vst.msk [vmem:[#allocation2 + $0x50] sm:$0xf] %vm713, %v669
    %735 = vst.msk [vmem:[#allocation2 + $0x54] sm:$0xf] %vm713, %v670
    %736 = vst.msk [vmem:[#allocation2 + $0x58] sm:$0xf] %vm713, %v671
    %737 = vst.msk [vmem:[#allocation2 + $0x5c] sm:$0xf] %vm713, %v672
    %738 = vst.msk [vmem:[#allocation2 + $0x60] sm:$0xf] %vm713, %v673
    %739 = vst.msk [vmem:[#allocation2 + $0x64] sm:$0xf] %vm713, %v674
    %740 = vst.msk [vmem:[#allocation2 + $0x68] sm:$0xf] %vm713, %v675
    %741 = vst.msk [vmem:[#allocation2 + $0x6c] sm:$0xf] %vm713, %v676
    %742 = vst.msk [vmem:[#allocation2 + $0x70] sm:$0xf] %vm713, %v677
    %743 = vst.msk [vmem:[#allocation2 + $0x74] sm:$0xf] %vm713, %v678
    %744 = vst.msk [vmem:[#allocation2 + $0x78] sm:$0xf] %vm713, %v679
    %745 = vst.msk [vmem:[#allocation2 + $0x7c] sm:$0xf] %vm713, %v680
  $region25: #{vit_forward.13} parent=0 // pred_fallthru
    _
  %v746 = vld [vmem:[#allocation2] sm:$0xf]
  %v747 = vld [vmem:[#allocation2 + $0x4] sm:$0xf]
  %v748 = vld [vmem:[#allocation2 + $0x8] sm:$0xf]
  %v749 = vld [vmem:[#allocation2 + $0xc] sm:$0xf]
  %v750 = vld [vmem:[#allocation2 + $0x10] sm:$0xf]
  %v751 = vld [vmem:[#allocation2 + $0x14] sm:$0xf]
  %v752 = vld [vmem:[#allocation2 + $0x18] sm:$0xf]
  %v753 = vld [vmem:[#allocation2 + $0x1c] sm:$0xf]
  %v754 = vld [vmem:[#allocation2 + $0x20] sm:$0xf]
  %v755 = vld [vmem:[#allocation2 + $0x24] sm:$0xf]
  %v756 = vld [vmem:[#allocation2 + $0x28] sm:$0xf]
  %v757 = vld [vmem:[#allocation2 + $0x2c] sm:$0xf]
  %v758 = vld [vmem:[#allocation2 + $0x30] sm:$0xf]
  %v759 = vld [vmem:[#allocation2 + $0x34] sm:$0xf]
  %v760 = vld [vmem:[#allocation2 + $0x38] sm:$0xf]
  %v761 = vld [vmem:[#allocation2 + $0x3c] sm:$0xf]
  %v762 = vld [vmem:[#allocation2 + $0x40] sm:$0xf]
  %v763 = vld [vmem:[#allocation2 + $0x44] sm:$0xf]
  %v764 = vld [vmem:[#allocation2 + $0x48] sm:$0xf]
  %v765 = vld [vmem:[#allocation2 + $0x4c] sm:$0xf]
  %v766 = vld [vmem:[#allocation2 + $0x50] sm:$0xf]
  %v767 = vld [vmem:[#allocation2 + $0x54] sm:$0xf]
  %v768 = vld [vmem:[#allocation2 + $0x58] sm:$0xf]
  %v769 = vld [vmem:[#allocation2 + $0x5c] sm:$0xf]
  %v770 = vld [vmem:[#allocation2 + $0x60] sm:$0xf]
  %v771 = vld [vmem:[#allocation2 + $0x64] sm:$0xf]
  %v772 = vld [vmem:[#allocation2 + $0x68] sm:$0xf]
  %v773 = vld [vmem:[#allocation2 + $0x6c] sm:$0xf]
  %v774 = vld [vmem:[#allocation2 + $0x70] sm:$0xf]
  %v775 = vld [vmem:[#allocation2 + $0x74] sm:$0xf]
  %v776 = vld [vmem:[#allocation2 + $0x78] sm:$0xf]
  %v777 = vld [vmem:[#allocation2 + $0x7c] sm:$0xf]
  %v778 = vld [vmem:[%s3] sm:$0xff]
  %v779 = vld [vmem:[%s3 + $0x8] sm:$0xff]
  %v780 = vld [vmem:[%s3 + $0x10] sm:$0xff]
  %v781 = vld [vmem:[%s3 + $0x18] sm:$0xff]
  %v782 = vld [vmem:[%s3 + $0x20] sm:$0xff]
  %v783 = vld [vmem:[%s3 + $0x28] sm:$0xff]
  %v784 = vld [vmem:[%s3 + $0x30] sm:$0xff]
  %v785 = vld [vmem:[%s3 + $0x38] sm:$0xff]
  %v786 = vld [vmem:[%s4] sm:$0x3]
  %v788 = vlaneseq
  %v789 = vshrl.u32 %v788, 7
  %v790 = vsub.s32 0, %v789
  %v791 = vrot.slane %v786, %v790
  %v792 = vlaneseq
  %v793 = vshrl.u32 %v792, 7
  %v794 = vsub.s32 1, %v793
  %v795 = vrot.slane %v786, %v794
  %v830 = vunpack.c.l.b16 %v746
  %v831 = vunpack.c.l.b16 %v747
  %v832 = vunpack.c.l.b16 %v748
  %v833 = vunpack.c.l.b16 %v749
  %v834 = vunpack.c.l.b16 %v750
  %v835 = vunpack.c.l.b16 %v751
  %v836 = vunpack.c.l.b16 %v752
  %v837 = vunpack.c.l.b16 %v753
  %v838 = vunpack.c.l.b16 %v754
  %v839 = vunpack.c.l.b16 %v755
  %v840 = vunpack.c.l.b16 %v756
  %v841 = vunpack.c.l.b16 %v757
  %v842 = vunpack.c.l.b16 %v758
  %v843 = vunpack.c.l.b16 %v759
  %v844 = vunpack.c.l.b16 %v760
  %v845 = vunpack.c.l.b16 %v761
  %v846 = vunpack.c.l.b16 %v762
  %v847 = vunpack.c.l.b16 %v763
  %v848 = vunpack.c.l.b16 %v764
  %v849 = vunpack.c.l.b16 %v765
  %v850 = vunpack.c.l.b16 %v766
  %v851 = vunpack.c.l.b16 %v767
  %v852 = vunpack.c.l.b16 %v768
  %v853 = vunpack.c.l.b16 %v769
  %v854 = vunpack.c.l.b16 %v770
  %v855 = vunpack.c.l.b16 %v771
  %v856 = vunpack.c.l.b16 %v772
  %v857 = vunpack.c.l.b16 %v773
  %v858 = vunpack.c.l.b16 %v774
  %v859 = vunpack.c.l.b16 %v775
  %v860 = vunpack.c.l.b16 %v776
  %v861 = vunpack.c.l.b16 %v777
  %v862 = vpack.c.b16 %v831, %v830
  %v863 = vpack.c.b16 %v833, %v832
  %v864 = vpack.c.b16 %v835, %v834
  %v865 = vpack.c.b16 %v837, %v836
  %v866 = vpack.c.b16 %v839, %v838
  %v867 = vpack.c.b16 %v841, %v840
  %v868 = vpack.c.b16 %v843, %v842
  %v869 = vpack.c.b16 %v845, %v844
  %v870 = vpack.c.b16 %v847, %v846
  %v871 = vpack.c.b16 %v849, %v848
  %v872 = vpack.c.b16 %v851, %v850
  %v873 = vpack.c.b16 %v853, %v852
  %v874 = vpack.c.b16 %v855, %v854
  %v875 = vpack.c.b16 %v857, %v856
  %v876 = vpack.c.b16 %v859, %v858
  %v877 = vpack.c.b16 %v861, %v860
  %v886 = vunpack.c.l.b16 %v778
  %v887 = vunpack.c.h.b16 %v778
  %v888 = vunpack.c.l.b16 %v779
  %v889 = vunpack.c.h.b16 %v779
  %v890 = vunpack.c.l.b16 %v780
  %v891 = vunpack.c.h.b16 %v780
  %v892 = vunpack.c.l.b16 %v781
  %v893 = vunpack.c.h.b16 %v781
  %v894 = vunpack.c.l.b16 %v782
  %v895 = vunpack.c.h.b16 %v782
  %v896 = vunpack.c.l.b16 %v783
  %v897 = vunpack.c.h.b16 %v783
  %v898 = vunpack.c.l.b16 %v784
  %v899 = vunpack.c.h.b16 %v784
  %v900 = vunpack.c.l.b16 %v785
  %v901 = vunpack.c.h.b16 %v785
  %v902 = vpack.c.b16 %v888, %v886
  %v903 = vpack.c.b16 %v889, %v887
  %v904 = vpack.c.b16 %v892, %v890
  %v905 = vpack.c.b16 %v893, %v891
  %v906 = vpack.c.b16 %v896, %v894
  %v907 = vpack.c.b16 %v897, %v895
  %v908 = vpack.c.b16 %v900, %v898
  %v909 = vpack.c.b16 %v901, %v899
  %vm918 = vcmask 523264
  %v920 = vsel %vm918, %v862, 0
  %v923 = vsel %vm918, %v863, 0
  %v926 = vsel %vm918, %v864, 0
  %v929 = vsel %vm918, %v865, 0
  %v932 = vsel %vm918, %v866, 0
  %v935 = vsel %vm918, %v867, 0
  %v938 = vsel %vm918, %v868, 0
  %v941 = vsel %vm918, %v869, 0
  %v944 = vsel %vm918, %v870, 0
  %v947 = vsel %vm918, %v871, 0
  %v950 = vsel %vm918, %v872, 0
  %v953 = vsel %vm918, %v873, 0
  %v956 = vsel %vm918, %v874, 0
  %v959 = vsel %vm918, %v875, 0
  %v962 = vsel %vm918, %v876, 0
  %v965 = vsel %vm918, %v877, 0
  %967 = vmatprep.subr.bf16.mxu0 0
  %968 = vmatpush1.bf16.msra.mxu0 0
  %969 = vmatprep.subr.bf16.mxu0 0
  %970 = vmatpush1.bf16.msra.mxu0 0
  %971 = vmatprep.subr.bf16.mxu0 0
  %972 = vmatpush1.bf16.msra.mxu0 0
  %973 = vmatprep.subr.bf16.mxu0 0
  %974 = vmatpush1.bf16.msra.mxu0 0
  %975 = vmatprep.subr.bf16.mxu0 %v909
  %976 = vmatpush1.bf16.msra.mxu0 %v908
  %977 = vmatprep.subr.bf16.mxu0 %v907
  %978 = vmatpush1.bf16.msra.mxu0 %v906
  %979 = vmatprep.subr.bf16.mxu0 %v905
  %980 = vmatpush1.bf16.msra.mxu0 %v904
  %981 = vmatprep.subr.bf16.mxu0 %v903
  %982 = vmatpush1.bf16.msra.mxu0 %v902
  %983 = vmatprep.subr.bf16.mxu0 0
  %984 = vmatpush2.bf16.msra.mxu0 0
  %985 = vmatprep.subr.bf16.mxu0 0
  %986 = vmatpush2.bf16.msra.mxu0 0
  %987 = vmatprep.subr.bf16.mxu0 0
  %988 = vmatpush2.bf16.msra.mxu0 0
  %989 = vmatprep.subr.bf16.mxu0 0
  %990 = vmatpush2.bf16.msra.mxu0 0
  %991 = vmatprep.subr.bf16.mxu0 0
  %992 = vmatpush2.bf16.msra.mxu0 0
  %993 = vmatprep.subr.bf16.mxu0 0
  %994 = vmatpush2.bf16.msra.mxu0 0
  %995 = vmatprep.subr.bf16.mxu0 0
  %996 = vmatpush2.bf16.msra.mxu0 0
  %997 = vmatprep.subr.bf16.mxu0 0
  %998 = vmatpush2.bf16.msra.mxu0 0
  %999 = vmatprep.mubr.bf16.mxu0 0
  %1000 = vmatmul.mubr.bf16.gmra.mxu0 %v920
  %v1001 = vpop.f32.mrf.mxu0
  %v1002 = vadd.f32 %v791, %v1001
  %v1003 = vpop.f32.mrf.mxu0
  %v1004 = vadd.f32 %v795, %v1003
  %v1005 = vpop.f32.mrf.mxu0
  %v1006 = vadd.f32 %v791, %v1005
  %v1007 = vpop.f32.mrf.mxu0
  %v1008 = vadd.f32 %v795, %v1007
  %1009 = vmatprep.mubr.bf16.mxu0 0
  %1010 = vmatmul.mubr.bf16.gmra.mxu0 %v923
  %v1011 = vpop.f32.mrf.mxu0
  %v1012 = vadd.f32 %v791, %v1011
  %v1013 = vpop.f32.mrf.mxu0
  %v1014 = vadd.f32 %v795, %v1013
  %v1015 = vpop.f32.mrf.mxu0
  %v1016 = vadd.f32 %v791, %v1015
  %v1017 = vpop.f32.mrf.mxu0
  %v1018 = vadd.f32 %v795, %v1017
  %1019 = vmatprep.mubr.bf16.mxu0 0
  %1020 = vmatmul.mubr.bf16.gmra.mxu0 %v926
  %v1021 = vpop.f32.mrf.mxu0
  %v1022 = vadd.f32 %v791, %v1021
  %v1023 = vpop.f32.mrf.mxu0
  %v1024 = vadd.f32 %v795, %v1023
  %v1025 = vpop.f32.mrf.mxu0
  %v1026 = vadd.f32 %v791, %v1025
  %v1027 = vpop.f32.mrf.mxu0
  %v1028 = vadd.f32 %v795, %v1027
  %1029 = vmatprep.mubr.bf16.mxu0 0
  %1030 = vmatmul.mubr.bf16.gmra.mxu0 %v929
  %v1031 = vpop.f32.mrf.mxu0
  %v1032 = vadd.f32 %v791, %v1031
  %v1033 = vpop.f32.mrf.mxu0
  %v1034 = vadd.f32 %v795, %v1033
  %v1035 = vpop.f32.mrf.mxu0
  %v1036 = vadd.f32 %v791, %v1035
  %v1037 = vpop.f32.mrf.mxu0
  %v1038 = vadd.f32 %v795, %v1037
  %1039 = vmatprep.mubr.bf16.mxu0 0
  %1040 = vmatmul.mubr.bf16.gmra.mxu0 %v932
  %v1041 = vpop.f32.mrf.mxu0
  %v1042 = vadd.f32 %v791, %v1041
  %v1043 = vpop.f32.mrf.mxu0
  %v1044 = vadd.f32 %v795, %v1043
  %v1045 = vpop.f32.mrf.mxu0
  %v1046 = vadd.f32 %v791, %v1045
  %v1047 = vpop.f32.mrf.mxu0
  %v1048 = vadd.f32 %v795, %v1047
  %1049 = vmatprep.mubr.bf16.mxu0 0
  %1050 = vmatmul.mubr.bf16.gmra.mxu0 %v935
  %v1051 = vpop.f32.mrf.mxu0
  %v1052 = vadd.f32 %v791, %v1051
  %v1053 = vpop.f32.mrf.mxu0
  %v1054 = vadd.f32 %v795, %v1053
  %v1055 = vpop.f32.mrf.mxu0
  %v1056 = vadd.f32 %v791, %v1055
  %v1057 = vpop.f32.mrf.mxu0
  %v1058 = vadd.f32 %v795, %v1057
  %1059 = vmatprep.mubr.bf16.mxu0 0
  %1060 = vmatmul.mubr.bf16.gmra.mxu0 %v938
  %v1061 = vpop.f32.mrf.mxu0
  %v1062 = vadd.f32 %v791, %v1061
  %v1063 = vpop.f32.mrf.mxu0
  %v1064 = vadd.f32 %v795, %v1063
  %v1065 = vpop.f32.mrf.mxu0
  %v1066 = vadd.f32 %v791, %v1065
  %v1067 = vpop.f32.mrf.mxu0
  %v1068 = vadd.f32 %v795, %v1067
  %1069 = vmatprep.mubr.bf16.mxu0 0
  %1070 = vmatmul.mubr.bf16.gmra.mxu0 %v941
  %v1071 = vpop.f32.mrf.mxu0
  %v1072 = vadd.f32 %v791, %v1071
  %v1073 = vpop.f32.mrf.mxu0
  %v1074 = vadd.f32 %v795, %v1073
  %v1075 = vpop.f32.mrf.mxu0
  %v1076 = vadd.f32 %v791, %v1075
  %v1077 = vpop.f32.mrf.mxu0
  %v1078 = vadd.f32 %v795, %v1077
  %1079 = vmatprep.mubr.bf16.mxu0 0
  %1080 = vmatmul.mubr.bf16.gmra.mxu0 %v944
  %v1081 = vpop.f32.mrf.mxu0
  %v1082 = vadd.f32 %v791, %v1081
  %v1083 = vpop.f32.mrf.mxu0
  %v1084 = vadd.f32 %v795, %v1083
  %v1085 = vpop.f32.mrf.mxu0
  %v1086 = vadd.f32 %v791, %v1085
  %v1087 = vpop.f32.mrf.mxu0
  %v1088 = vadd.f32 %v795, %v1087
  %1089 = vmatprep.mubr.bf16.mxu0 0
  %1090 = vmatmul.mubr.bf16.gmra.mxu0 %v947
  %v1091 = vpop.f32.mrf.mxu0
  %v1092 = vadd.f32 %v791, %v1091
  %v1093 = vpop.f32.mrf.mxu0
  %v1094 = vadd.f32 %v795, %v1093
  %v1095 = vpop.f32.mrf.mxu0
  %v1096 = vadd.f32 %v791, %v1095
  %v1097 = vpop.f32.mrf.mxu0
  %v1098 = vadd.f32 %v795, %v1097
  %1099 = vmatprep.mubr.bf16.mxu0 0
  %1100 = vmatmul.mubr.bf16.gmra.mxu0 %v950
  %v1101 = vpop.f32.mrf.mxu0
  %v1102 = vadd.f32 %v791, %v1101
  %v1103 = vpop.f32.mrf.mxu0
  %v1104 = vadd.f32 %v795, %v1103
  %v1105 = vpop.f32.mrf.mxu0
  %v1106 = vadd.f32 %v791, %v1105
  %v1107 = vpop.f32.mrf.mxu0
  %v1108 = vadd.f32 %v795, %v1107
  %1109 = vmatprep.mubr.bf16.mxu0 0
  %1110 = vmatmul.mubr.bf16.gmra.mxu0 %v953
  %v1111 = vpop.f32.mrf.mxu0
  %v1112 = vadd.f32 %v791, %v1111
  %v1113 = vpop.f32.mrf.mxu0
  %v1114 = vadd.f32 %v795, %v1113
  %v1115 = vpop.f32.mrf.mxu0
  %v1116 = vadd.f32 %v791, %v1115
  %v1117 = vpop.f32.mrf.mxu0
  %v1118 = vadd.f32 %v795, %v1117
  %1119 = vmatprep.mubr.bf16.mxu0 0
  %1120 = vmatmul.mubr.bf16.gmra.mxu0 %v956
  %v1121 = vpop.f32.mrf.mxu0
  %v1122 = vadd.f32 %v791, %v1121
  %v1123 = vpop.f32.mrf.mxu0
  %v1124 = vadd.f32 %v795, %v1123
  %v1125 = vpop.f32.mrf.mxu0
  %v1126 = vadd.f32 %v791, %v1125
  %v1127 = vpop.f32.mrf.mxu0
  %v1128 = vadd.f32 %v795, %v1127
  %1129 = vmatprep.mubr.bf16.mxu0 0
  %1130 = vmatmul.mubr.bf16.gmra.mxu0 %v959
  %v1131 = vpop.f32.mrf.mxu0
  %v1132 = vadd.f32 %v791, %v1131
  %v1133 = vpop.f32.mrf.mxu0
  %v1134 = vadd.f32 %v795, %v1133
  %v1135 = vpop.f32.mrf.mxu0
  %v1136 = vadd.f32 %v791, %v1135
  %v1137 = vpop.f32.mrf.mxu0
  %v1138 = vadd.f32 %v795, %v1137
  %1139 = vmatprep.mubr.bf16.mxu0 0
  %1140 = vmatmul.mubr.bf16.gmra.mxu0 %v962
  %v1141 = vpop.f32.mrf.mxu0
  %v1142 = vadd.f32 %v791, %v1141
  %v1143 = vpop.f32.mrf.mxu0
  %v1144 = vadd.f32 %v795, %v1143
  %v1145 = vpop.f32.mrf.mxu0
  %v1146 = vadd.f32 %v791, %v1145
  %v1147 = vpop.f32.mrf.mxu0
  %v1148 = vadd.f32 %v795, %v1147
  %1149 = vmatprep.mubr.bf16.mxu0 0
  %1150 = vmatmul.mubr.bf16.gmra.mxu0 %v965
  %v1151 = vpop.f32.mrf.mxu0
  %v1152 = vadd.f32 %v791, %v1151
  %v1153 = vpop.f32.mrf.mxu0
  %v1154 = vadd.f32 %v795, %v1153
  %v1155 = vpop.f32.mrf.mxu0
  %v1156 = vadd.f32 %v791, %v1155
  %v1157 = vpop.f32.mrf.mxu0
  %v1158 = vadd.f32 %v795, %v1157
  %1159 = vdwg.mxu0
  %v1160 = vpack.c.bf16 %v1006, %v1002
  %v1161 = vpack.c.bf16 %v1008, %v1004
  %v1162 = vpack.c.bf16 %v1016, %v1012
  %v1163 = vpack.c.bf16 %v1018, %v1014
  %v1164 = vpack.c.bf16 %v1026, %v1022
  %v1165 = vpack.c.bf16 %v1028, %v1024
  %v1166 = vpack.c.bf16 %v1036, %v1032
  %v1167 = vpack.c.bf16 %v1038, %v1034
  %v1168 = vpack.c.bf16 %v1046, %v1042
  %v1169 = vpack.c.bf16 %v1048, %v1044
  %v1170 = vpack.c.bf16 %v1056, %v1052
  %v1171 = vpack.c.bf16 %v1058, %v1054
  %v1172 = vpack.c.bf16 %v1066, %v1062
  %v1173 = vpack.c.bf16 %v1068, %v1064
  %v1174 = vpack.c.bf16 %v1076, %v1072
  %v1175 = vpack.c.bf16 %v1078, %v1074
  %v1176 = vpack.c.bf16 %v1086, %v1082
  %v1177 = vpack.c.bf16 %v1088, %v1084
  %v1178 = vpack.c.bf16 %v1096, %v1092
  %v1179 = vpack.c.bf16 %v1098, %v1094
  %v1180 = vpack.c.bf16 %v1106, %v1102
  %v1181 = vpack.c.bf16 %v1108, %v1104
  %v1182 = vpack.c.bf16 %v1116, %v1112
  %v1183 = vpack.c.bf16 %v1118, %v1114
  %v1184 = vpack.c.bf16 %v1126, %v1122
  %v1185 = vpack.c.bf16 %v1128, %v1124
  %v1186 = vpack.c.bf16 %v1136, %v1132
  %v1187 = vpack.c.bf16 %v1138, %v1134
  %v1188 = vpack.c.bf16 %v1146, %v1142
  %v1189 = vpack.c.bf16 %v1148, %v1144
  %v1190 = vpack.c.bf16 %v1156, %v1152
  %v1191 = vpack.c.bf16 %v1158, %v1154
  %v1224 = vunpack.c.l.b16 %v1160
  %v1225 = vunpack.c.l.b16 %v1161
  %v1226 = vunpack.c.h.b16 %v1160
  %v1227 = vunpack.c.h.b16 %v1161
  %v1228 = vunpack.c.l.b16 %v1162
  %v1229 = vunpack.c.l.b16 %v1163
  %v1230 = vunpack.c.h.b16 %v1162
  %v1231 = vunpack.c.h.b16 %v1163
  %v1232 = vunpack.c.l.b16 %v1164
  %v1233 = vunpack.c.l.b16 %v1165
  %v1234 = vunpack.c.h.b16 %v1164
  %v1235 = vunpack.c.h.b16 %v1165
  %v1236 = vunpack.c.l.b16 %v1166
  %v1237 = vunpack.c.l.b16 %v1167
  %v1238 = vunpack.c.h.b16 %v1166
  %v1239 = vunpack.c.h.b16 %v1167
  %v1240 = vunpack.c.l.b16 %v1168
  %v1241 = vunpack.c.l.b16 %v1169
  %v1242 = vunpack.c.h.b16 %v1168
  %v1243 = vunpack.c.h.b16 %v1169
  %v1244 = vunpack.c.l.b16 %v1170
  %v1245 = vunpack.c.l.b16 %v1171
  %v1246 = vunpack.c.h.b16 %v1170
  %v1247 = vunpack.c.h.b16 %v1171
  %v1248 = vunpack.c.l.b16 %v1172
  %v1249 = vunpack.c.l.b16 %v1173
  %v1250 = vunpack.c.h.b16 %v1172
  %v1251 = vunpack.c.h.b16 %v1173
  %v1252 = vunpack.c.l.b16 %v1174
  %v1253 = vunpack.c.l.b16 %v1175
  %v1254 = vunpack.c.h.b16 %v1174
  %v1255 = vunpack.c.h.b16 %v1175
  %v1256 = vunpack.c.l.b16 %v1176
  %v1257 = vunpack.c.l.b16 %v1177
  %v1258 = vunpack.c.h.b16 %v1176
  %v1259 = vunpack.c.h.b16 %v1177
  %v1260 = vunpack.c.l.b16 %v1178
  %v1261 = vunpack.c.l.b16 %v1179
  %v1262 = vunpack.c.h.b16 %v1178
  %v1263 = vunpack.c.h.b16 %v1179
  %v1264 = vunpack.c.l.b16 %v1180
  %v1265 = vunpack.c.l.b16 %v1181
  %v1266 = vunpack.c.h.b16 %v1180
  %v1267 = vunpack.c.h.b16 %v1181
  %v1268 = vunpack.c.l.b16 %v1182
  %v1269 = vunpack.c.l.b16 %v1183
  %v1270 = vunpack.c.h.b16 %v1182
  %v1271 = vunpack.c.h.b16 %v1183
  %v1272 = vunpack.c.l.b16 %v1184
  %v1273 = vunpack.c.l.b16 %v1185
  %v1274 = vunpack.c.h.b16 %v1184
  %v1275 = vunpack.c.h.b16 %v1185
  %v1276 = vunpack.c.l.b16 %v1186
  %v1277 = vunpack.c.l.b16 %v1187
  %v1278 = vunpack.c.h.b16 %v1186
  %v1279 = vunpack.c.h.b16 %v1187
  %v1280 = vunpack.c.l.b16 %v1188
  %v1281 = vunpack.c.l.b16 %v1189
  %v1282 = vunpack.c.h.b16 %v1188
  %v1283 = vunpack.c.h.b16 %v1189
  %v1284 = vunpack.c.l.b16 %v1190
  %v1285 = vunpack.c.l.b16 %v1191
  %v1286 = vunpack.c.h.b16 %v1190
  %v1287 = vunpack.c.h.b16 %v1191
  %v1288 = vpack.c.b16 %v1225, %v1224
  %v1289 = vpack.c.b16 %v1227, %v1226
  %v1290 = vpack.c.b16 %v1229, %v1228
  %v1291 = vpack.c.b16 %v1231, %v1230
  %v1292 = vpack.c.b16 %v1233, %v1232
  %v1293 = vpack.c.b16 %v1235, %v1234
  %v1294 = vpack.c.b16 %v1237, %v1236
  %v1295 = vpack.c.b16 %v1239, %v1238
  %v1296 = vpack.c.b16 %v1241, %v1240
  %v1297 = vpack.c.b16 %v1243, %v1242
  %v1298 = vpack.c.b16 %v1245, %v1244
  %v1299 = vpack.c.b16 %v1247, %v1246
  %v1300 = vpack.c.b16 %v1249, %v1248
  %v1301 = vpack.c.b16 %v1251, %v1250
  %v1302 = vpack.c.b16 %v1253, %v1252
  %v1303 = vpack.c.b16 %v1255, %v1254
  %v1304 = vpack.c.b16 %v1257, %v1256
  %v1305 = vpack.c.b16 %v1259, %v1258
  %v1306 = vpack.c.b16 %v1261, %v1260
  %v1307 = vpack.c.b16 %v1263, %v1262
  %v1308 = vpack.c.b16 %v1265, %v1264
  %v1309 = vpack.c.b16 %v1267, %v1266
  %v1310 = vpack.c.b16 %v1269, %v1268
  %v1311 = vpack.c.b16 %v1271, %v1270
  %v1312 = vpack.c.b16 %v1273, %v1272
  %v1313 = vpack.c.b16 %v1275, %v1274
  %v1314 = vpack.c.b16 %v1277, %v1276
  %v1315 = vpack.c.b16 %v1279, %v1278
  %v1316 = vpack.c.b16 %v1281, %v1280
  %v1317 = vpack.c.b16 %v1283, %v1282
  %v1318 = vpack.c.b16 %v1285, %v1284
  %v1319 = vpack.c.b16 %v1287, %v1286
  %vm1352 = vcmask 1043456
  %vm1353 = vcmask 523268
  %vm1354 = vmor %vm1353, %vm1352
  %1355 = vst.msk [vmem:[%s5] sm:$0xff] %vm1354, %v1288
  %1356 = vst.msk [vmem:[%s5 + $0x8] sm:$0xff] %vm1354, %v1289
  %1357 = vst.msk [vmem:[%s5 + $0x10] sm:$0xff] %vm1354, %v1290
  %1358 = vst.msk [vmem:[%s5 + $0x18] sm:$0xff] %vm1354, %v1291
  %1359 = vst.msk [vmem:[%s5 + $0x20] sm:$0xff] %vm1354, %v1292
  %1360 = vst.msk [vmem:[%s5 + $0x28] sm:$0xff] %vm1354, %v1293
  %1361 = vst.msk [vmem:[%s5 + $0x30] sm:$0xff] %vm1354, %v1294
  %1362 = vst.msk [vmem:[%s5 + $0x38] sm:$0xff] %vm1354, %v1295
  %1363 = vst.msk [vmem:[%s5 + $0x40] sm:$0xff] %vm1354, %v1296
  %1364 = vst.msk [vmem:[%s5 + $0x48] sm:$0xff] %vm1354, %v1297
  %1365 = vst.msk [vmem:[%s5 + $0x50] sm:$0xff] %vm1354, %v1298
  %1366 = vst.msk [vmem:[%s5 + $0x58] sm:$0xff] %vm1354, %v1299
  %1367 = vst.msk [vmem:[%s5 + $0x60] sm:$0xff] %vm1354, %v1300
  %1368 = vst.msk [vmem:[%s5 + $0x68] sm:$0xff] %vm1354, %v1301
  %1369 = vst.msk [vmem:[%s5 + $0x70] sm:$0xff] %vm1354, %v1302
  %1370 = vst.msk [vmem:[%s5 + $0x78] sm:$0xff] %vm1354, %v1303
  %1371 = vst.msk [vmem:[%s5 + $0x80] sm:$0xff] %vm1354, %v1304
  %1372 = vst.msk [vmem:[%s5 + $0x88] sm:$0xff] %vm1354, %v1305
  %1373 = vst.msk [vmem:[%s5 + $0x90] sm:$0xff] %vm1354, %v1306
  %1374 = vst.msk [vmem:[%s5 + $0x98] sm:$0xff] %vm1354, %v1307
  %1375 = vst.msk [vmem:[%s5 + $0xa0] sm:$0xff] %vm1354, %v1308
  %1376 = vst.msk [vmem:[%s5 + $0xa8] sm:$0xff] %vm1354, %v1309
  %1377 = vst.msk [vmem:[%s5 + $0xb0] sm:$0xff] %vm1354, %v1310
  %1378 = vst.msk [vmem:[%s5 + $0xb8] sm:$0xff] %vm1354, %v1311
  %1379 = vst.msk [vmem:[%s5 + $0xc0] sm:$0xff] %vm1354, %v1312
  %1380 = vst.msk [vmem:[%s5 + $0xc8] sm:$0xff] %vm1354, %v1313
  %1381 = vst.msk [vmem:[%s5 + $0xd0] sm:$0xff] %vm1354, %v1314
  %1382 = vst.msk [vmem:[%s5 + $0xd8] sm:$0xff] %vm1354, %v1315
  %1383 = vst.msk [vmem:[%s5 + $0xe0] sm:$0xff] %vm1354, %v1316
  %1384 = vst.msk [vmem:[%s5 + $0xe8] sm:$0xff] %vm1354, %v1317
  %1385 = vst.msk [vmem:[%s5 + $0xf0] sm:$0xff] %vm1354, %v1318
  %1386 = vst.msk [vmem:[%s5 + $0xf8] sm:$0xff] %vm1354, %v1319
  // Predicated region
  $region26: #{vit_forward.13} parent=0 // pred_check
    _
  $region27: #{vit_forward.13} parent=0 // pred_check_branch
    %1388 = sbr.rel (0) target = $region29
  $region28: #{vit_forward.13} parent=0 // pred_region
    _
  $region29: #{vit_forward.13} parent=0 // pred_fallthru
    _
  // Predicated region
  $region30: #{vit_forward.13} parent=0 // pred_check
    _
  $region31: #{vit_forward.13} parent=0 // pred_check_branch
    %1390 = sbr.rel (0) target = $region33
  $region32: #{vit_forward.13} parent=0 // pred_region
    _
  $region33: #{vit_forward.13} parent=0 // pred_fallthru
    _

// kernel: vit_forward.14
$region0: #{vit_forward.14}
  #allocation0 [shape = 'u32[]', space=smem, size = 0x4, offset = 0x4, fixed_abs, tag = 'smem constant byte address 0x4 - core index']
  #allocation1 [shape = 'u32[144,128]{1,0:T(1,128)}', space=vmem, size = 0x12000, scoped, tag = 'internal scratch']
  %s0 = inlined_call_operand.vmem [shape: bf16[2,4,128,16], index: 0, kind: input, shape index: {}]
  %s1 = inlined_call_operand.vmem [shape: bf16[2,4,128,16], index: 1, kind: input, shape index: {}]
  %s2 = inlined_call_operand.vmem [shape: bf16[2,4,128,16], index: 2, kind: input, shape index: {}]
  %s3 = inlined_call_operand.vmem [shape: bf16[2,4,128,16], index: 3, kind: output, shape index: {}]
  %s4 = sld [smem:[#allocation0]]
  $region45: #{vit_forward.14} parent=0
    _
  %s6 = ssub.s32 1, %s4
  %s7 = scalar_select 0, %s6, %s4
  loop: start=0, step=1, limit=10
  $region2: #{vit_forward.14} parent=0 // loop_pre_header
    _
  $region3: #{vit_forward.14} parent=0 // loop_header
    %s9 = sphi 0, %s13
    %p10 = scmp.ge.s32.totalorder %s9, 10
    %s16 = sphi 0, %s28
    %s17 = sphi 0, %s24
    %s18 = sphi 0, %s16
    %s19 = sphi 0, %s17
    %s20 = sphi 0, %s18
    %s21 = sphi 0, %s19
    %s33 = sphi 0, %s35
    %s36 = sphi 0, %s33
    %s37 = sphi 0, %s36
    %s53 = sphi 0, %s37
    %s61 = sphi 0, %s63
    %s64 = sphi 0, %s61
    %s65 = sphi 0, %s64
    %s81 = sphi 0, %s65
    %s89 = sphi 0, %s91
    %s92 = sphi 0, %s89
    %s93 = sphi 0, %s92
    %s109 = sphi 0, %s93
    %s117 = sphi 0, %s119
    %s120 = sphi 0, %s117
    %s121 = sphi 0, %s120
    %s137 = sphi 0, %s121
  $region4: #{vit_forward.14} parent=0 // loop_header_branch
    %12 = sbr.rel (%p10) target = $region8
  $region5: #{vit_forward.14} parent=0 // loop_body
    %s14 = ssub.s32 %s9, 1
    %s15 = ssub.s32 %s9, 2
    %s22 = sadd.s32 1, %s17
    %p23 = scmp.ge.s32.totalorder %s22, 4
    %s24 = scalar_select %p23, 0, %s22
    %s25 = sadd.s32 1, %s16
    %s26 = scalar_select %p23, %s25, %s16
    %p27 = scmp.ge.s32.totalorder %s26, 2
    %s28 = scalar_select %p27, 0, %s26
    %s29 = ssub.s32 %s16, %s28
    %s30 = ssub.s32 %s17, %s24
    %s31 = sor.u32 %s29, %s30
    %p32 = scmp.eq.s32.totalorder %s31, 0
    %s34 = sadd.s32 %s33, 1
    %s35 = scalar_select %p32, %s33, %s34
    %p38 = pneg %p32
    %p39 = scmp.eq.s32.totalorder %s9, 7
    %p40 = por %p38, %p39
    %p41 = scmp.ne.s32.totalorder %s33, %s36
    %p42 = scmp.eq.s32.totalorder %s9, 0
    %p43 = por %p41, %p42
    %p44 = scmp.ne.s32.totalorder %s33, %s36
    %p45 = scmp.eq.s32.totalorder %s14, 7
    %p46 = por %p44, %p45
    %p47 = scmp.ne.s32.totalorder %s36, %s37
    %p48 = scmp.eq.s32.totalorder %s14, 0
    %p49 = por %p47, %p48
    %p50 = scmp.ne.s32.totalorder %s36, %s37
    %p51 = scmp.eq.s32.totalorder %s15, 7
    %p52 = por %p50, %p51
    %p54 = scmp.ne.s32.totalorder %s37, %s53
    %p55 = scmp.eq.s32.totalorder %s15, 0
    %p56 = por %p54, %p55
    %s57 = ssub.s32 %s16, %s28
    %s58 = ssub.s32 %s17, %s24
    %s59 = sor.u32 %s57, %s58
    %p60 = scmp.eq.s32.totalorder %s59, 0
    %s62 = sadd.s32 %s61, 1
    %s63 = scalar_select %p60, %s61, %s62
    %p66 = pneg %p60
    %p67 = scmp.eq.s32.totalorder %s9, 7
    %p68 = por %p66, %p67
    %p69 = scmp.ne.s32.totalorder %s61, %s64
    %p70 = scmp.eq.s32.totalorder %s9, 0
    %p71 = por %p69, %p70
    %p72 = scmp.ne.s32.totalorder %s61, %s64
    %p73 = scmp.eq.s32.totalorder %s14, 7
    %p74 = por %p72, %p73
    %p75 = scmp.ne.s32.totalorder %s64, %s65
    %p76 = scmp.eq.s32.totalorder %s14, 0
    %p77 = por %p75, %p76
    %p78 = scmp.ne.s32.totalorder %s64, %s65
    %p79 = scmp.eq.s32.totalorder %s15, 7
    %p80 = por %p78, %p79
    %p82 = scmp.ne.s32.totalorder %s65, %s81
    %p83 = scmp.eq.s32.totalorder %s15, 0
    %p84 = por %p82, %p83
    %s85 = ssub.s32 %s16, %s28
    %s86 = ssub.s32 %s17, %s24
    %s87 = sor.u32 %s85, %s86
    %p88 = scmp.eq.s32.totalorder %s87, 0
    %s90 = sadd.s32 %s89, 1
    %s91 = scalar_select %p88, %s89, %s90
    %p94 = pneg %p88
    %p95 = scmp.eq.s32.totalorder %s9, 7
    %p96 = por %p94, %p95
    %p97 = scmp.ne.s32.totalorder %s89, %s92
    %p98 = scmp.eq.s32.totalorder %s9, 0
    %p99 = por %p97, %p98
    %p100 = scmp.ne.s32.totalorder %s89, %s92
    %p101 = scmp.eq.s32.totalorder %s14, 7
    %p102 = por %p100, %p101
    %p103 = scmp.ne.s32.totalorder %s92, %s93
    %p104 = scmp.eq.s32.totalorder %s14, 0
    %p105 = por %p103, %p104
    %p106 = scmp.ne.s32.totalorder %s92, %s93
    %p107 = scmp.eq.s32.totalorder %s15, 7
    %p108 = por %p106, %p107
    %p110 = scmp.ne.s32.totalorder %s93, %s109
    %p111 = scmp.eq.s32.totalorder %s15, 0
    %p112 = por %p110, %p111
    %s113 = ssub.s32 %s16, %s28
    %s114 = ssub.s32 %s17, %s24
    %s115 = sor.u32 %s113, %s114
    %p116 = scmp.eq.s32.totalorder %s115, 0
    %s118 = sadd.s32 %s117, 1
    %s119 = scalar_select %p116, %s117, %s118
    %p122 = pneg %p116
    %p123 = scmp.eq.s32.totalorder %s9, 7
    %p124 = por %p122, %p123
    %p125 = scmp.ne.s32.totalorder %s117, %s120
    %p126 = scmp.eq.s32.totalorder %s9, 0
    %p127 = por %p125, %p126
    %p128 = scmp.ne.s32.totalorder %s117, %s120
    %p129 = scmp.eq.s32.totalorder %s14, 7
    %p130 = por %p128, %p129
    %p131 = scmp.ne.s32.totalorder %s120, %s121
    %p132 = scmp.eq.s32.totalorder %s14, 0
    %p133 = por %p131, %p132
    %p134 = scmp.ne.s32.totalorder %s120, %s121
    %p135 = scmp.eq.s32.totalorder %s15, 7
    %p136 = por %p134, %p135
    %p138 = scmp.ne.s32.totalorder %s121, %s137
    %p139 = scmp.eq.s32.totalorder %s15, 0
    %p140 = por %p138, %p139
    %p141 = scmp.le.s32.totalorder 1, %s9
    %p142 = scmp.lt.s32.totalorder %s9, 9
    %p143 = pnand %p141, %p142
    %p144 = pneg %p143
    // Predicated region
    $region9: #{vit_forward.14} parent=5 // pred_check
      _
    $region10: #{vit_forward.14} parent=5 // pred_check_branch
      %146 = sbr.rel (%p143) target = $region12
    $region11: #{vit_forward.14} parent=5 // pred_region
      %s147 = ssub.s32 %s9, 1
    $region12: #{vit_forward.14} parent=5 // pred_fallthru
      _
    %p148 = scmp.lt.s32.totalorder %s9, 8
    // Predicated region
    $region13: #{vit_forward.14} parent=5 // pred_check
      %p149 = pneg %p148
    $region14: #{vit_forward.14} parent=5 // pred_check_branch
      %151 = sbr.rel (%p149) target = $region16
    $region15: #{vit_forward.14} parent=5 // pred_region
      // Predicated region
      $region17: #{vit_forward.14} parent=15 // pred_check
        %p152 = pneg %p43
      $region18: #{vit_forward.14} parent=15 // pred_check_branch
        %154 = sbr.rel (%p152) target = $region20
      $region19: #{vit_forward.14} parent=15 // pred_region
        %p155 = scmp.lt.s32.totalorder %s16, 1
        %s156 = scalar_select %p155, %s16, 1
        %p157 = scmp.lt.s32.totalorder %s17, 3
        %s158 = scalar_select %p157, %s17, 3
        %s159 = smul.addr %s158, 16
        %s160 = smul.addr %s156, 64
        %s161 = sadd.s32 %s159, %s160
        %s162 = smul.addr %s161, 4
        %s163 = scalar_lea.vmem %s0, %s162
      $region20: #{vit_forward.14} parent=15 // pred_fallthru
        _
      // Predicated region
      $region21: #{vit_forward.14} parent=15 // pred_check
        %p164 = pneg %p71
      $region22: #{vit_forward.14} parent=15 // pred_check_branch
        %166 = sbr.rel (%p164) target = $region24
      $region23: #{vit_forward.14} parent=15 // pred_region
        %p167 = scmp.lt.s32.totalorder %s16, 1
        %s168 = scalar_select %p167, %s16, 1
        %p169 = scmp.lt.s32.totalorder %s17, 3
        %s170 = scalar_select %p169, %s17, 3
        %s171 = smul.addr %s170, 16
        %s172 = smul.addr %s168, 64
        %s173 = sadd.s32 %s171, %s172
        %s174 = smul.addr %s173, 4
        %s175 = scalar_lea.vmem %s1, %s174
      $region24: #{vit_forward.14} parent=15 // pred_fallthru
        _
      // Predicated region
      $region25: #{vit_forward.14} parent=15 // pred_check
        %p176 = pneg %p99
      $region26: #{vit_forward.14} parent=15 // pred_check_branch
        %178 = sbr.rel (%p176) target = $region28
      $region27: #{vit_forward.14} parent=15 // pred_region
        %p179 = scmp.lt.s32.totalorder %s16, 1
        %s180 = scalar_select %p179, %s16, 1
        %p181 = scmp.lt.s32.totalorder %s17, 3
        %s182 = scalar_select %p181, %s17, 3
        %s183 = smul.addr %s182, 16
        %s184 = smul.addr %s180, 64
        %s185 = sadd.s32 %s183, %s184
        %s186 = smul.addr %s185, 4
        %s187 = scalar_lea.vmem %s2, %s186
      $region28: #{vit_forward.14} parent=15 // pred_fallthru
        _
    $region16: #{vit_forward.14} parent=5 // pred_fallthru
      _
    %p188 = scmp.le.s32.totalorder 1, %s9
    %p189 = scmp.lt.s32.totalorder %s9, 9
    %p190 = pnand %p188, %p189
    %p191 = pneg %p190
    // Predicated region
    $region29: #{vit_forward.14} parent=5 // pred_check
      _
    $region30: #{vit_forward.14} parent=5 // pred_check_branch
      %193 = sbr.rel (%p190) target = $region32
    $region31: #{vit_forward.14} parent=5 // pred_region
      %s194 = ssub.s32 %s9, 1
      %p195 = scmp.lt.s32.totalorder %s18, 1
      %s196 = scalar_select %p195, %s18, 1
      %p197 = scmp.lt.s32.totalorder %s19, 3
      %s198 = scalar_select %p197, %s19, 3
      %s199 = smul.addr %s198, 16
      %s200 = smul.addr %s196, 64
      %s201 = sadd.s32 %s199, %s200
      %s202 = smul.addr %s201, 4
      %s203 = scalar_lea.vmem %s0, %s202
      %p204 = pneg %p49
      %p205 = pneg %p46
      %p206 = scmp.lt.s32.totalorder %s18, 1
      %s207 = scalar_select %p206, %s18, 1
      %p208 = scmp.lt.s32.totalorder %s19, 3
      %s209 = scalar_select %p208, %s19, 3
      %s210 = smul.addr %s209, 16
      %s211 = smul.addr %s207, 64
      %s212 = sadd.s32 %s210, %s211
      %s213 = smul.addr %s212, 4
      %s214 = scalar_lea.vmem %s1, %s213
      %p215 = pneg %p77
      %p216 = pneg %p74
      %p217 = scmp.lt.s32.totalorder %s18, 1
      %s218 = scalar_select %p217, %s18, 1
      %p219 = scmp.lt.s32.totalorder %s19, 3
      %s220 = scalar_select %p219, %s19, 3
      %s221 = smul.addr %s220, 16
      %s222 = smul.addr %s218, 64
      %s223 = sadd.s32 %s221, %s222
      %s224 = smul.addr %s223, 4
      %s225 = scalar_lea.vmem %s2, %s224
      %p226 = pneg %p105
      %p227 = pneg %p102
      %p228 = pneg %p133
      %p229 = pneg %p130
      %p230 = scmp.lt.s32.totalorder %s18, 1
      %s231 = scalar_select %p230, %s18, 1
      %p232 = scmp.lt.s32.totalorder %s19, 3
      %s233 = scalar_select %p232, %s19, 3
      %s234 = smul.addr %s233, 16
      %s235 = smul.addr %s231, 64
      %s236 = sadd.s32 %s234, %s235
      %s237 = smul.addr %s236, 4
      %s238 = scalar_lea.vmem %s3, %s237
      %p239 = scmp.lt.s32.totalorder %s18, 1
      %s240 = scalar_select %p239, %s18, 1
      %p241 = scmp.lt.s32.totalorder %s19, 3
      %s242 = scalar_select %p241, %s19, 3
      %s243 = smul.addr %s242, 16
      %s244 = smul.addr %s240, 64
      %s245 = sadd.s32 %s243, %s244
      %s246 = smul.addr %s245, 4
      %s247 = scalar_lea.vmem %s0, %s246
      %p248 = scmp.lt.s32.totalorder %s18, 1
      %s249 = scalar_select %p248, %s18, 1
      %p250 = scmp.lt.s32.totalorder %s19, 3
      %s251 = scalar_select %p250, %s19, 3
      %s252 = smul.addr %s251, 16
      %s253 = smul.addr %s249, 64
      %s254 = sadd.s32 %s252, %s253
      %s255 = smul.addr %s254, 4
      %s256 = scalar_lea.vmem %s1, %s255
      %p257 = scmp.lt.s32.totalorder %s18, 1
      %s258 = scalar_select %p257, %s18, 1
      %p259 = scmp.lt.s32.totalorder %s19, 3
      %s260 = scalar_select %p259, %s19, 3
      %s261 = smul.addr %s260, 16
      %s262 = smul.addr %s258, 64
      %s263 = sadd.s32 %s261, %s262
      %s264 = smul.addr %s263, 4
      %s265 = scalar_lea.vmem %s2, %s264
      %p266 = scmp.lt.s32.totalorder %s18, 1
      %s267 = scalar_select %p266, %s18, 1
      %p268 = scmp.lt.s32.totalorder %s19, 3
      %s269 = scalar_select %p268, %s19, 3
      %s270 = smul.addr %s269, 16
      %s271 = smul.addr %s267, 64
      %s272 = sadd.s32 %s270, %s271
      %s273 = smul.addr %s272, 4
      %s274 = scalar_lea.vmem %s3, %s273
      %v277 = vld [vmem:[%s247] sm:$0xf]
      %v278 = vld [vmem:[%s247 + $0x4] sm:$0xf]
      %v279 = vld [vmem:[%s247 + $0x8] sm:$0xf]
      %v280 = vld [vmem:[%s247 + $0xc] sm:$0xf]
      %v281 = vld [vmem:[%s247 + $0x10] sm:$0xf]
      %v282 = vld [vmem:[%s247 + $0x14] sm:$0xf]
      %v283 = vld [vmem:[%s247 + $0x18] sm:$0xf]
      %v284 = vld [vmem:[%s247 + $0x1c] sm:$0xf]
      %v285 = vld [vmem:[%s247 + $0x20] sm:$0xf]
      %v286 = vld [vmem:[%s247 + $0x24] sm:$0xf]
      %v287 = vld [vmem:[%s247 + $0x28] sm:$0xf]
      %v288 = vld [vmem:[%s247 + $0x2c] sm:$0xf]
      %v289 = vld [vmem:[%s247 + $0x30] sm:$0xf]
      %v290 = vld [vmem:[%s247 + $0x34] sm:$0xf]
      %v291 = vld [vmem:[%s247 + $0x38] sm:$0xf]
      %v292 = vld [vmem:[%s247 + $0x3c] sm:$0xf]
      %v293 = vmul.bf16 %v277, 1048592000
      %v294 = vmul.bf16 %v278, 1048592000
      %v295 = vmul.bf16 %v279, 1048592000
      %v296 = vmul.bf16 %v280, 1048592000
      %v297 = vmul.bf16 %v281, 1048592000
      %v298 = vmul.bf16 %v282, 1048592000
      %v299 = vmul.bf16 %v283, 1048592000
      %v300 = vmul.bf16 %v284, 1048592000
      %v301 = vmul.bf16 %v285, 1048592000
      %v302 = vmul.bf16 %v286, 1048592000
      %v303 = vmul.bf16 %v287, 1048592000
      %v304 = vmul.bf16 %v288, 1048592000
      %v305 = vmul.bf16 %v289, 1048592000
      %v306 = vmul.bf16 %v290, 1048592000
      %v307 = vmul.bf16 %v291, 1048592000
      %v308 = vmul.bf16 %v292, 1048592000
      %v309 = vld [vmem:[%s256] sm:$0xf]
      %v310 = vld [vmem:[%s256 + $0x4] sm:$0xf]
      %v311 = vld [vmem:[%s256 + $0x8] sm:$0xf]
      %v312 = vld [vmem:[%s256 + $0xc] sm:$0xf]
      %v313 = vld [vmem:[%s256 + $0x10] sm:$0xf]
      %v314 = vld [vmem:[%s256 + $0x14] sm:$0xf]
      %v315 = vld [vmem:[%s256 + $0x18] sm:$0xf]
      %v316 = vld [vmem:[%s256 + $0x1c] sm:$0xf]
      %v317 = vld [vmem:[%s256 + $0x20] sm:$0xf]
      %v318 = vld [vmem:[%s256 + $0x24] sm:$0xf]
      %v319 = vld [vmem:[%s256 + $0x28] sm:$0xf]
      %v320 = vld [vmem:[%s256 + $0x2c] sm:$0xf]
      %v321 = vld [vmem:[%s256 + $0x30] sm:$0xf]
      %v322 = vld [vmem:[%s256 + $0x34] sm:$0xf]
      %v323 = vld [vmem:[%s256 + $0x38] sm:$0xf]
      %v324 = vld [vmem:[%s256 + $0x3c] sm:$0xf]
      %v325 = vld [vmem:[%s265] sm:$0xf]
      %v326 = vld [vmem:[%s265 + $0x4] sm:$0xf]
      %v327 = vld [vmem:[%s265 + $0x8] sm:$0xf]
      %v328 = vld [vmem:[%s265 + $0xc] sm:$0xf]
      %v329 = vld [vmem:[%s265 + $0x10] sm:$0xf]
      %v330 = vld [vmem:[%s265 + $0x14] sm:$0xf]
      %v331 = vld [vmem:[%s265 + $0x18] sm:$0xf]
      %v332 = vld [vmem:[%s265 + $0x1c] sm:$0xf]
      %v333 = vld [vmem:[%s265 + $0x20] sm:$0xf]
      %v334 = vld [vmem:[%s265 + $0x24] sm:$0xf]
      %v335 = vld [vmem:[%s265 + $0x28] sm:$0xf]
      %v336 = vld [vmem:[%s265 + $0x2c] sm:$0xf]
      %v337 = vld [vmem:[%s265 + $0x30] sm:$0xf]
      %v338 = vld [vmem:[%s265 + $0x34] sm:$0xf]
      %v339 = vld [vmem:[%s265 + $0x38] sm:$0xf]
      %v340 = vld [vmem:[%s265 + $0x3c] sm:$0xf]
      %v357 = vunpack.c.l.b16 %v293
      %v358 = vunpack.c.l.b16 %v294
      %v359 = vunpack.c.l.b16 %v295
      %v360 = vunpack.c.l.b16 %v296
      %v361 = vunpack.c.l.b16 %v297
      %v362 = vunpack.c.l.b16 %v298
      %v363 = vunpack.c.l.b16 %v299
      %v364 = vunpack.c.l.b16 %v300
      %v365 = vunpack.c.l.b16 %v301
      %v366 = vunpack.c.l.b16 %v302
      %v367 = vunpack.c.l.b16 %v303
      %v368 = vunpack.c.l.b16 %v304
      %v369 = vunpack.c.l.b16 %v305
      %v370 = vunpack.c.l.b16 %v306
      %v371 = vunpack.c.l.b16 %v307
      %v372 = vunpack.c.l.b16 %v308
      %v373 = vpack.c.b16 %v358, %v357
      %v374 = vpack.c.b16 %v360, %v359
      %v375 = vpack.c.b16 %v362, %v361
      %v376 = vpack.c.b16 %v364, %v363
      %v377 = vpack.c.b16 %v366, %v365
      %v378 = vpack.c.b16 %v368, %v367
      %v379 = vpack.c.b16 %v370, %v369
      %v380 = vpack.c.b16 %v372, %v371
      %v397 = vunpack.c.l.b16 %v309
      %v398 = vunpack.c.l.b16 %v310
      %v399 = vunpack.c.l.b16 %v311
      %v400 = vunpack.c.l.b16 %v312
      %v401 = vunpack.c.l.b16 %v313
      %v402 = vunpack.c.l.b16 %v314
      %v403 = vunpack.c.l.b16 %v315
      %v404 = vunpack.c.l.b16 %v316
      %v405 = vunpack.c.l.b16 %v317
      %v406 = vunpack.c.l.b16 %v318
      %v407 = vunpack.c.l.b16 %v319
      %v408 = vunpack.c.l.b16 %v320
      %v409 = vunpack.c.l.b16 %v321
      %v410 = vunpack.c.l.b16 %v322
      %v411 = vunpack.c.l.b16 %v323
      %v412 = vunpack.c.l.b16 %v324
      %v413 = vpack.c.b16 %v398, %v397
      %v414 = vpack.c.b16 %v400, %v399
      %v415 = vpack.c.b16 %v402, %v401
      %v416 = vpack.c.b16 %v404, %v403
      %v417 = vpack.c.b16 %v406, %v405
      %v418 = vpack.c.b16 %v408, %v407
      %v419 = vpack.c.b16 %v410, %v409
      %v420 = vpack.c.b16 %v412, %v411
      %vm421 = vcmask 130048
      %v423 = vsel %vm421, %v373, 0
      %v426 = vsel %vm421, %v374, 0
      %v429 = vsel %vm421, %v375, 0
      %v432 = vsel %vm421, %v376, 0
      %v435 = vsel %vm421, %v377, 0
      %v438 = vsel %vm421, %v378, 0
      %v441 = vsel %vm421, %v379, 0
      %v444 = vsel %vm421, %v380, 0
      %v447 = vsel %vm421, %v413, 0
      %v450 = vsel %vm421, %v414, 0
      %v453 = vsel %vm421, %v415, 0
      %v456 = vsel %vm421, %v416, 0
      %v459 = vsel %vm421, %v417, 0
      %v462 = vsel %vm421, %v418, 0
      %v465 = vsel %vm421, %v419, 0
      %v468 = vsel %vm421, %v420, 0
      %470 = vmatprep.subr.bf16.mxu0 0
      %471 = vmatpush1.bf16.xpose.msra.mxu0 %v468
      %472 = vmatprep.subr.bf16.mxu0 0
      %473 = vmatpush1.bf16.xpose.msra.mxu0 %v465
      %474 = vmatprep.subr.bf16.mxu0 0
      %475 = vmatpush1.bf16.xpose.msra.mxu0 %v462
      %476 = vmatprep.subr.bf16.mxu0 0
      %477 = vmatpush1.bf16.xpose.msra.mxu0 %v459
      %478 = vmatprep.subr.bf16.mxu0 0
      %479 = vmatpush1.bf16.xpose.msra.mxu0 %v456
      %480 = vmatprep.subr.bf16.mxu0 0
      %481 = vmatpush1.bf16.xpose.msra.mxu0 %v453
      %482 = vmatprep.subr.bf16.mxu0 0
      %483 = vmatpush1.bf16.xpose.msra.mxu0 %v450
      %484 = vmatprep.subr.bf16.mxu0 0
      %485 = vmatpush1.bf16.xpose.msra.mxu0 %v447
      %486 = vmatprep.subr.bf16.mxu0 0
      %487 = vmatpush2.bf16.xpose.msra.mxu0 0
      %488 = vmatprep.subr.bf16.mxu0 0
      %489 = vmatpush2.bf16.xpose.msra.mxu0 0
      %490 = vmatprep.subr.bf16.mxu0 0
      %491 = vmatpush2.bf16.xpose.msra.mxu0 0
      %492 = vmatprep.subr.bf16.mxu0 0
      %493 = vmatpush2.bf16.xpose.msra.mxu0 0
      %494 = vmatprep.subr.bf16.mxu0 0
      %495 = vmatpush2.bf16.xpose.msra.mxu0 0
      %496 = vmatprep.subr.bf16.mxu0 0
      %497 = vmatpush2.bf16.xpose.msra.mxu0 0
      %498 = vmatprep.subr.bf16.mxu0 0
      %499 = vmatpush2.bf16.xpose.msra.mxu0 0
      %500 = vmatprep.subr.bf16.mxu0 0
      %501 = vmatpush2.bf16.xpose.msra.mxu0 0
      %502 = vmatprep.mubr.bf16.mxu0 0
      %503 = vmatmul.mubr.bf16.gmra.mxu0 %v423
      %v504 = vpop.f32.mrf.mxu0
      %v505 = vadd.f32 0.0, %v504
      %v506 = vpop.f32.mrf.mxu0
      %v507 = vpop.f32.mrf.mxu0
      %v508 = vadd.f32 0.0, %v507
      %v509 = vpop.f32.mrf.mxu0
      %510 = vmatprep.mubr.bf16.mxu0 0
      %511 = vmatmul.mubr.bf16.gmra.mxu0 %v426
      %v512 = vpop.f32.mrf.mxu0
      %v513 = vadd.f32 0.0, %v512
      %v514 = vpop.f32.mrf.mxu0
      %v515 = vpop.f32.mrf.mxu0
      %v516 = vadd.f32 0.0, %v515
      %v517 = vpop.f32.mrf.mxu0
      %518 = vmatprep.mubr.bf16.mxu0 0
      %519 = vmatmul.mubr.bf16.gmra.mxu0 %v429
      %v520 = vpop.f32.mrf.mxu0
      %v521 = vadd.f32 0.0, %v520
      %v522 = vpop.f32.mrf.mxu0
      %v523 = vpop.f32.mrf.mxu0
      %v524 = vadd.f32 0.0, %v523
      %v525 = vpop.f32.mrf.mxu0
      %526 = vmatprep.mubr.bf16.mxu0 0
      %527 = vmatmul.mubr.bf16.gmra.mxu0 %v432
      %v528 = vpop.f32.mrf.mxu0
      %v529 = vadd.f32 0.0, %v528
      %v530 = vpop.f32.mrf.mxu0
      %v531 = vpop.f32.mrf.mxu0
      %v532 = vadd.f32 0.0, %v531
      %v533 = vpop.f32.mrf.mxu0
      %534 = vmatprep.mubr.bf16.mxu0 0
      %535 = vmatmul.mubr.bf16.gmra.mxu0 %v435
      %v536 = vpop.f32.mrf.mxu0
      %v537 = vadd.f32 0.0, %v536
      %v538 = vpop.f32.mrf.mxu0
      %v539 = vpop.f32.mrf.mxu0
      %v540 = vadd.f32 0.0, %v539
      %v541 = vpop.f32.mrf.mxu0
      %542 = vmatprep.mubr.bf16.mxu0 0
      %543 = vmatmul.mubr.bf16.gmra.mxu0 %v438
      %v544 = vpop.f32.mrf.mxu0
      %v545 = vadd.f32 0.0, %v544
      %v546 = vpop.f32.mrf.mxu0
      %v547 = vpop.f32.mrf.mxu0
      %v548 = vadd.f32 0.0, %v547
      %v549 = vpop.f32.mrf.mxu0
      %550 = vmatprep.mubr.bf16.mxu0 0
      %551 = vmatmul.mubr.bf16.gmra.mxu0 %v441
      %v552 = vpop.f32.mrf.mxu0
      %v553 = vadd.f32 0.0, %v552
      %v554 = vpop.f32.mrf.mxu0
      %v555 = vpop.f32.mrf.mxu0
      %v556 = vadd.f32 0.0, %v555
      %v557 = vpop.f32.mrf.mxu0
      %558 = vmatprep.mubr.bf16.mxu0 0
      %559 = vmatmul.mubr.bf16.gmra.mxu0 %v444
      %v560 = vpop.f32.mrf.mxu0
      %v561 = vadd.f32 0.0, %v560
      %v562 = vpop.f32.mrf.mxu0
      %v563 = vpop.f32.mrf.mxu0
      %v564 = vadd.f32 0.0, %v563
      %v565 = vpop.f32.mrf.mxu0
      %566 = vdwg.mxu0
      %v567 = vlaneseq
      %v568 = vand.u32 %v567, 127
      %vm569 = vcmp.lt.s32.totalorder %v568, 5
      %v570 = vsel %vm569, %v505, -1e+30
      %v571 = vsel %vm569, %v508, -1e+30
      %v572 = vsel %vm569, %v513, -1e+30
      %v573 = vsel %vm569, %v516, -1e+30
      %v574 = vsel %vm569, %v521, -1e+30
      %v575 = vsel %vm569, %v524, -1e+30
      %v576 = vsel %vm569, %v529, -1e+30
      %v577 = vsel %vm569, %v532, -1e+30
      %v578 = vsel %vm569, %v537, -1e+30
      %v579 = vsel %vm569, %v540, -1e+30
      %v580 = vsel %vm569, %v545, -1e+30
      %v581 = vsel %vm569, %v548, -1e+30
      %v582 = vsel %vm569, %v553, -1e+30
      %v583 = vsel %vm569, %v556, -1e+30
      %v584 = vsel %vm569, %v561, -1e+30
      %v585 = vsel %vm569, %v564, -1e+30
      %586 = vmax.xlane.f32.xlu0 %v570
      %v587 = vpop.xlane.xlu0 %586
      %588 = vmax.xlane.f32.xlu0 %v571
      %v589 = vpop.xlane.xlu0 %588
      %590 = vmax.xlane.f32.xlu0 %v572
      %v591 = vpop.xlane.xlu0 %590
      %592 = vmax.xlane.f32.xlu0 %v573
      %v593 = vpop.xlane.xlu0 %592
      %594 = vmax.xlane.f32.xlu0 %v574
      %v595 = vpop.xlane.xlu0 %594
      %596 = vmax.xlane.f32.xlu0 %v575
      %v597 = vpop.xlane.xlu0 %596
      %598 = vmax.xlane.f32.xlu0 %v576
      %v599 = vpop.xlane.xlu0 %598
      %600 = vmax.xlane.f32.xlu0 %v577
      %v601 = vpop.xlane.xlu0 %600
      %602 = vmax.xlane.f32.xlu0 %v578
      %v603 = vpop.xlane.xlu0 %602
      %604 = vmax.xlane.f32.xlu0 %v579
      %v605 = vpop.xlane.xlu0 %604
      %606 = vmax.xlane.f32.xlu0 %v580
      %v607 = vpop.xlane.xlu0 %606
      %608 = vmax.xlane.f32.xlu0 %v581
      %v609 = vpop.xlane.xlu0 %608
      %610 = vmax.xlane.f32.xlu0 %v582
      %v611 = vpop.xlane.xlu0 %610
      %612 = vmax.xlane.f32.xlu0 %v583
      %v613 = vpop.xlane.xlu0 %612
      %614 = vmax.xlane.f32.xlu0 %v584
      %v615 = vpop.xlane.xlu0 %614
      %616 = vmax.xlane.f32.xlu0 %v585
      %v617 = vpop.xlane.xlu0 %616
      %v618 = vsub.f32 %v570, %v587
      %v619 = vsub.f32 %v571, %v589
      %v620 = vsub.f32 %v572, %v591
      %v621 = vsub.f32 %v573, %v593
      %v622 = vsub.f32 %v574, %v595
      %v623 = vsub.f32 %v575, %v597
      %v624 = vsub.f32 %v576, %v599
      %v625 = vsub.f32 %v577, %v601
      %v626 = vsub.f32 %v578, %v603
      %v627 = vsub.f32 %v579, %v605
      %v628 = vsub.f32 %v580, %v607
      %v629 = vsub.f32 %v581, %v609
      %v630 = vsub.f32 %v582, %v611
      %v631 = vsub.f32 %v583, %v613
      %v632 = vsub.f32 %v584, %v615
      %v633 = vsub.f32 %v585, %v617
      %v634 = vmul.f32 %v618, 1.442695
      %v635 = vpow.pop %v634
      %v636 = vmul.f32 %v619, 1.442695
      %v637 = vpow.pop %v636
      %v638 = vmul.f32 %v620, 1.442695
      %v639 = vpow.pop %v638
      %v640 = vmul.f32 %v621, 1.442695
      %v641 = vpow.pop %v640
      %v642 = vmul.f32 %v622, 1.442695
      %v643 = vpow.pop %v642
      %v644 = vmul.f32 %v623, 1.442695
      %v645 = vpow.pop %v644
      %v646 = vmul.f32 %v624, 1.442695
      %v647 = vpow.pop %v646
      %v648 = vmul.f32 %v625, 1.442695
      %v649 = vpow.pop %v648
      %v650 = vmul.f32 %v626, 1.442695
      %v651 = vpow.pop %v650
      %v652 = vmul.f32 %v627, 1.442695
      %v653 = vpow.pop %v652
      %v654 = vmul.f32 %v628, 1.442695
      %v655 = vpow.pop %v654
      %v656 = vmul.f32 %v629, 1.442695
      %v657 = vpow.pop %v656
      %v658 = vmul.f32 %v630, 1.442695
      %v659 = vpow.pop %v658
      %v660 = vmul.f32 %v631, 1.442695
      %v661 = vpow.pop %v660
      %v662 = vmul.f32 %v632, 1.442695
      %v663 = vpow.pop %v662
      %v664 = vmul.f32 %v633, 1.442695
      %v665 = vpow.pop %v664
      %666 = vadd.xlane.f32.xlu0 %v635
      %v667 = vpop.xlane.xlu0 %666
      %668 = vadd.xlane.f32.xlu0 %v637
      %v669 = vpop.xlane.xlu0 %668
      %670 = vadd.xlane.f32.xlu0 %v639
      %v671 = vpop.xlane.xlu0 %670
      %672 = vadd.xlane.f32.xlu0 %v641
      %v673 = vpop.xlane.xlu0 %672
      %674 = vadd.xlane.f32.xlu0 %v643
      %v675 = vpop.xlane.xlu0 %674
      %676 = vadd.xlane.f32.xlu0 %v645
      %v677 = vpop.xlane.xlu0 %676
      %678 = vadd.xlane.f32.xlu0 %v647
      %v679 = vpop.xlane.xlu0 %678
      %680 = vadd.xlane.f32.xlu0 %v649
      %v681 = vpop.xlane.xlu0 %680
      %682 = vadd.xlane.f32.xlu0 %v651
      %v683 = vpop.xlane.xlu0 %682
      %684 = vadd.xlane.f32.xlu0 %v653
      %v685 = vpop.xlane.xlu0 %684
      %686 = vadd.xlane.f32.xlu0 %v655
      %v687 = vpop.xlane.xlu0 %686
      %688 = vadd.xlane.f32.xlu0 %v657
      %v689 = vpop.xlane.xlu0 %688
      %690 = vadd.xlane.f32.xlu0 %v659
      %v691 = vpop.xlane.xlu0 %690
      %692 = vadd.xlane.f32.xlu0 %v661
      %v693 = vpop.xlane.xlu0 %692
      %694 = vadd.xlane.f32.xlu0 %v663
      %v695 = vpop.xlane.xlu0 %694
      %696 = vadd.xlane.f32.xlu0 %v665
      %v697 = vpop.xlane.xlu0 %696
      %v698 = vrcp.pop %v667
      %v699 = vrcp.pop %v669
      %v700 = vrcp.pop %v671
      %v701 = vrcp.pop %v673
      %v702 = vrcp.pop %v675
      %v703 = vrcp.pop %v677
      %v704 = vrcp.pop %v679
      %v705 = vrcp.pop %v681
      %v706 = vrcp.pop %v683
      %v707 = vrcp.pop %v685
      %v708 = vrcp.pop %v687
      %v709 = vrcp.pop %v689
      %v710 = vrcp.pop %v691
      %v711 = vrcp.pop %v693
      %v712 = vrcp.pop %v695
      %v713 = vrcp.pop %v697
      %v714 = vmul.f32 %v635, %v698
      %v715 = vmul.f32 %v637, %v699
      %v716 = vmul.f32 %v639, %v700
      %v717 = vmul.f32 %v641, %v701
      %v718 = vmul.f32 %v643, %v702
      %v719 = vmul.f32 %v645, %v703
      %v720 = vmul.f32 %v647, %v704
      %v721 = vmul.f32 %v649, %v705
      %v722 = vmul.f32 %v651, %v706
      %v723 = vmul.f32 %v653, %v707
      %v724 = vmul.f32 %v655, %v708
      %v725 = vmul.f32 %v657, %v709
      %v726 = vmul.f32 %v659, %v710
      %v727 = vmul.f32 %v661, %v711
      %v728 = vmul.f32 %v663, %v712
      %v729 = vmul.f32 %v665, %v713
      %v730 = vpack.c.bf16 %v715, %v714
      %v731 = vpack.c.bf16 %v717, %v716
      %v732 = vpack.c.bf16 %v719, %v718
      %v733 = vpack.c.bf16 %v721, %v720
      %v734 = vpack.c.bf16 %v723, %v722
      %v735 = vpack.c.bf16 %v725, %v724
      %v736 = vpack.c.bf16 %v727, %v726
      %v737 = vpack.c.bf16 %v729, %v728
      %v754 = vunpack.c.l.b16 %v325
      %v755 = vunpack.c.l.b16 %v326
      %v756 = vunpack.c.l.b16 %v327
      %v757 = vunpack.c.l.b16 %v328
      %v758 = vunpack.c.l.b16 %v329
      %v759 = vunpack.c.l.b16 %v330
      %v760 = vunpack.c.l.b16 %v331
      %v761 = vunpack.c.l.b16 %v332
      %v762 = vunpack.c.l.b16 %v333
      %v763 = vunpack.c.l.b16 %v334
      %v764 = vunpack.c.l.b16 %v335
      %v765 = vunpack.c.l.b16 %v336
      %v766 = vunpack.c.l.b16 %v337
      %v767 = vunpack.c.l.b16 %v338
      %v768 = vunpack.c.l.b16 %v339
      %v769 = vunpack.c.l.b16 %v340
      %v770 = vpack.c.b16 %v755, %v754
      %v771 = vpack.c.b16 %v757, %v756
      %v772 = vpack.c.b16 %v759, %v758
      %v773 = vpack.c.b16 %v761, %v760
      %v774 = vpack.c.b16 %v763, %v762
      %v775 = vpack.c.b16 %v765, %v764
      %v776 = vpack.c.b16 %v767, %v766
      %v777 = vpack.c.b16 %v769, %v768
      %786 = vmatprep.subr.bf16.mxu0 0
      %787 = vmatpush1.bf16.msra.mxu0 %v777
      %788 = vmatprep.subr.bf16.mxu0 0
      %789 = vmatpush1.bf16.msra.mxu0 %v776
      %790 = vmatprep.subr.bf16.mxu0 0
      %791 = vmatpush1.bf16.msra.mxu0 %v775
      %792 = vmatprep.subr.bf16.mxu0 0
      %793 = vmatpush1.bf16.msra.mxu0 %v774
      %794 = vmatprep.subr.bf16.mxu0 0
      %795 = vmatpush1.bf16.msra.mxu0 %v773
      %796 = vmatprep.subr.bf16.mxu0 0
      %797 = vmatpush1.bf16.msra.mxu0 %v772
      %798 = vmatprep.subr.bf16.mxu0 0
      %799 = vmatpush1.bf16.msra.mxu0 %v771
      %800 = vmatprep.subr.bf16.mxu0 0
      %801 = vmatpush1.bf16.msra.mxu0 %v770
      %802 = vmatprep.subr.bf16.mxu0 0
      %803 = vmatpush2.bf16.msra.mxu0 0
      %804 = vmatprep.subr.bf16.mxu0 0
      %805 = vmatpush2.bf16.msra.mxu0 0
      %806 = vmatprep.subr.bf16.mxu0 0
      %807 = vmatpush2.bf16.msra.mxu0 0
      %808 = vmatprep.subr.bf16.mxu0 0
      %809 = vmatpush2.bf16.msra.mxu0 0
      %810 = vmatprep.subr.bf16.mxu0 0
      %811 = vmatpush2.bf16.msra.mxu0 0
      %812 = vmatprep.subr.bf16.mxu0 0
      %813 = vmatpush2.bf16.msra.mxu0 0
      %814 = vmatprep.subr.bf16.mxu0 0
      %815 = vmatpush2.bf16.msra.mxu0 0
      %816 = vmatprep.subr.bf16.mxu0 0
      %817 = vmatpush2.bf16.msra.mxu0 0
      %818 = vmatprep.mubr.bf16.mxu0 0
      %819 = vmatmul.mubr.bf16.gmra.mxu0 %v730
      %v820 = vpop.f32.mrf.mxu0
      %v821 = vadd.f32 0.0, %v820
      %v822 = vpop.f32.mrf.mxu0
      %v823 = vpop.f32.mrf.mxu0
      %v824 = vadd.f32 0.0, %v823
      %v825 = vpop.f32.mrf.mxu0
      %826 = vmatprep.mubr.bf16.mxu0 0
      %827 = vmatmul.mubr.bf16.gmra.mxu0 %v731
      %v828 = vpop.f32.mrf.mxu0
      %v829 = vadd.f32 0.0, %v828
      %v830 = vpop.f32.mrf.mxu0
      %v831 = vpop.f32.mrf.mxu0
      %v832 = vadd.f32 0.0, %v831
      %v833 = vpop.f32.mrf.mxu0
      %834 = vmatprep.mubr.bf16.mxu0 0
      %835 = vmatmul.mubr.bf16.gmra.mxu0 %v732
      %v836 = vpop.f32.mrf.mxu0
      %v837 = vadd.f32 0.0, %v836
      %v838 = vpop.f32.mrf.mxu0
      %v839 = vpop.f32.mrf.mxu0
      %v840 = vadd.f32 0.0, %v839
      %v841 = vpop.f32.mrf.mxu0
      %842 = vmatprep.mubr.bf16.mxu0 0
      %843 = vmatmul.mubr.bf16.gmra.mxu0 %v733
      %v844 = vpop.f32.mrf.mxu0
      %v845 = vadd.f32 0.0, %v844
      %v846 = vpop.f32.mrf.mxu0
      %v847 = vpop.f32.mrf.mxu0
      %v848 = vadd.f32 0.0, %v847
      %v849 = vpop.f32.mrf.mxu0
      %850 = vmatprep.mubr.bf16.mxu0 0
      %851 = vmatmul.mubr.bf16.gmra.mxu0 %v734
      %v852 = vpop.f32.mrf.mxu0
      %v853 = vadd.f32 0.0, %v852
      %v854 = vpop.f32.mrf.mxu0
      %v855 = vpop.f32.mrf.mxu0
      %v856 = vadd.f32 0.0, %v855
      %v857 = vpop.f32.mrf.mxu0
      %858 = vmatprep.mubr.bf16.mxu0 0
      %859 = vmatmul.mubr.bf16.gmra.mxu0 %v735
      %v860 = vpop.f32.mrf.mxu0
      %v861 = vadd.f32 0.0, %v860
      %v862 = vpop.f32.mrf.mxu0
      %v863 = vpop.f32.mrf.mxu0
      %v864 = vadd.f32 0.0, %v863
      %v865 = vpop.f32.mrf.mxu0
      %866 = vmatprep.mubr.bf16.mxu0 0
      %867 = vmatmul.mubr.bf16.gmra.mxu0 %v736
      %v868 = vpop.f32.mrf.mxu0
      %v869 = vadd.f32 0.0, %v868
      %v870 = vpop.f32.mrf.mxu0
      %v871 = vpop.f32.mrf.mxu0
      %v872 = vadd.f32 0.0, %v871
      %v873 = vpop.f32.mrf.mxu0
      %874 = vmatprep.mubr.bf16.mxu0 0
      %875 = vmatmul.mubr.bf16.gmra.mxu0 %v737
      %v876 = vpop.f32.mrf.mxu0
      %v877 = vadd.f32 0.0, %v876
      %v878 = vpop.f32.mrf.mxu0
      %v879 = vpop.f32.mrf.mxu0
      %v880 = vadd.f32 0.0, %v879
      %v881 = vpop.f32.mrf.mxu0
      %882 = vdwg.mxu0
      %v883 = vpack.c.bf16 %v824, %v821
      %v884 = vpack.c.bf16 %v832, %v829
      %v885 = vpack.c.bf16 %v840, %v837
      %v886 = vpack.c.bf16 %v848, %v845
      %v887 = vpack.c.bf16 %v856, %v853
      %v888 = vpack.c.bf16 %v864, %v861
      %v889 = vpack.c.bf16 %v872, %v869
      %v890 = vpack.c.bf16 %v880, %v877
      %v899 = vunpack.c.l.b16 %v883
      %v900 = vunpack.c.h.b16 %v883
      %v901 = vunpack.c.l.b16 %v884
      %v902 = vunpack.c.h.b16 %v884
      %v903 = vunpack.c.l.b16 %v885
      %v904 = vunpack.c.h.b16 %v885
      %v905 = vunpack.c.l.b16 %v886
      %v906 = vunpack.c.h.b16 %v886
      %v907 = vunpack.c.l.b16 %v887
      %v908 = vunpack.c.h.b16 %v887
      %v909 = vunpack.c.l.b16 %v888
      %v910 = vunpack.c.h.b16 %v888
      %v911 = vunpack.c.l.b16 %v889
      %v912 = vunpack.c.h.b16 %v889
      %v913 = vunpack.c.l.b16 %v890
      %v914 = vunpack.c.h.b16 %v890
      %v915 = vpack.c.b16 %v899, %v899
      %v916 = vpack.c.b16 %v900, %v900
      %v917 = vpack.c.b16 %v901, %v901
      %v918 = vpack.c.b16 %v902, %v902
      %v919 = vpack.c.b16 %v903, %v903
      %v920 = vpack.c.b16 %v904, %v904
      %v921 = vpack.c.b16 %v905, %v905
      %v922 = vpack.c.b16 %v906, %v906
      %v923 = vpack.c.b16 %v907, %v907
      %v924 = vpack.c.b16 %v908, %v908
      %v925 = vpack.c.b16 %v909, %v909
      %v926 = vpack.c.b16 %v910, %v910
      %v927 = vpack.c.b16 %v911, %v911
      %v928 = vpack.c.b16 %v912, %v912
      %v929 = vpack.c.b16 %v913, %v913
      %v930 = vpack.c.b16 %v914, %v914
      %vm947 = vcmask 125952
      %948 = vst.msk [vmem:[%s274] sm:$0xf] %vm947, %v915
      %949 = vst.msk [vmem:[%s274 + $0x4] sm:$0xf] %vm947, %v916
      %950 = vst.msk [vmem:[%s274 + $0x8] sm:$0xf] %vm947, %v917
      %951 = vst.msk [vmem:[%s274 + $0xc] sm:$0xf] %vm947, %v918
      %952 = vst.msk [vmem:[%s274 + $0x10] sm:$0xf] %vm947, %v919
      %953 = vst.msk [vmem:[%s274 + $0x14] sm:$0xf] %vm947, %v920
      %954 = vst.msk [vmem:[%s274 + $0x18] sm:$0xf] %vm947, %v921
      %955 = vst.msk [vmem:[%s274 + $0x1c] sm:$0xf] %vm947, %v922
      %956 = vst.msk [vmem:[%s274 + $0x20] sm:$0xf] %vm947, %v923
      %957 = vst.msk [vmem:[%s274 + $0x24] sm:$0xf] %vm947, %v924
      %958 = vst.msk [vmem:[%s274 + $0x28] sm:$0xf] %vm947, %v925
      %959 = vst.msk [vmem:[%s274 + $0x2c] sm:$0xf] %vm947, %v926
      %960 = vst.msk [vmem:[%s274 + $0x30] sm:$0xf] %vm947, %v927
      %961 = vst.msk [vmem:[%s274 + $0x34] sm:$0xf] %vm947, %v928
      %962 = vst.msk [vmem:[%s274 + $0x38] sm:$0xf] %vm947, %v929
      %963 = vst.msk [vmem:[%s274 + $0x3c] sm:$0xf] %vm947, %v930
      %p964 = scmp.lt.s32.totalorder %s18, 1
      %s965 = scalar_select %p964, %s18, 1
      %p966 = scmp.lt.s32.totalorder %s19, 3
      %s967 = scalar_select %p966, %s19, 3
      %s968 = smul.addr %s967, 16
      %s969 = smul.addr %s965, 64
      %s970 = sadd.s32 %s968, %s969
      %s971 = smul.addr %s970, 4
      %s972 = scalar_lea.vmem %s3, %s971
      // Predicated region
      $region33: #{vit_forward.14} parent=31 // pred_check
        %p973 = pneg %p130
      $region34: #{vit_forward.14} parent=31 // pred_check_branch
        %975 = sbr.rel (%p973) target = $region36
      $region35: #{vit_forward.14} parent=31 // pred_region
        _
      $region36: #{vit_forward.14} parent=31 // pred_fallthru
        _
    $region32: #{vit_forward.14} parent=5 // pred_fallthru
      _
    %p976 = scmp.le.s32.totalorder 2, %s9
    // Predicated region
    $region37: #{vit_forward.14} parent=5 // pred_check
      %p977 = pneg %p976
    $region38: #{vit_forward.14} parent=5 // pred_check_branch
      %979 = sbr.rel (%p977) target = $region40
    $region39: #{vit_forward.14} parent=5 // pred_region
      %s980 = ssub.s32 %s9, 2
      // Predicated region
      $region41: #{vit_forward.14} parent=39 // pred_check
        %p981 = pneg %p136
      $region42: #{vit_forward.14} parent=39 // pred_check_branch
        %983 = sbr.rel (%p981) target = $region44
      $region43: #{vit_forward.14} parent=39 // pred_region
        %p984 = scmp.lt.s32.totalorder %s20, 1
        %s985 = scalar_select %p984, %s20, 1
        %p986 = scmp.lt.s32.totalorder %s21, 3
        %s987 = scalar_select %p986, %s21, 3
        %s988 = smul.addr %s987, 16
        %s989 = smul.addr %s985, 64
        %s990 = sadd.s32 %s988, %s989
        %s991 = smul.addr %s990, 4
        %s992 = scalar_lea.vmem %s3, %s991
      $region44: #{vit_forward.14} parent=39 // pred_fallthru
        _
    $region40: #{vit_forward.14} parent=5 // pred_fallthru
      _
  $region6: #{vit_forward.14} parent=0 // loop_footer
    %s13 = sadd.s32 1, %s9
  $region7: #{vit_forward.14} parent=0 // loop_footer_branch
    %8 = sbr.rel target = $region3
  $region8: #{vit_forward.14} parent=0 // loop_exit
    _

// kernel: vit_forward.15
$region0: #{vit_forward.15}
  #allocation0 [shape = 'u32[]', space=smem, size = 0x4, offset = 0x4, fixed_abs, tag = 'smem constant byte address 0x4 - core index']
  #allocation1 [shape = 'u32[144,128]{1,0:T(1,128)}', space=vmem, size = 0x12000, scoped, tag = 'internal scratch']
  #allocation2 [shape = 'f32[256,64]{1,0:T(8,128)}', space=vmem, size = 0x20000, scoped, tag = 'scratch operand']
  %s0 = inlined_call_operand.vmem [shape: bf16[256,64], index: 0, kind: input, shape index: {}]
  %s1 = inlined_call_operand.vmem [shape: bf16[64,64], index: 1, kind: input, shape index: {}]
  %s2 = inlined_call_operand.vmem [shape: f32[1,64], index: 2, kind: input, shape index: {}]
  %s3 = inlined_call_operand.vmem [shape: bf16[256,64], index: 3, kind: input, shape index: {}]
  %s4 = inlined_call_operand.vmem [shape: bf16[256,64], index: 4, kind: output, shape index: {}]
  %s5 = sld [smem:[#allocation0]]
  $region34: #{vit_forward.15} parent=0
    _
  %s7 = ssub.s32 1, %s5
  %s8 = scalar_select 0, %s7, %s5
  // Predicated region
  $region2: #{vit_forward.15} parent=0 // pred_check
    _
  $region3: #{vit_forward.15} parent=0 // pred_check_branch
    %10 = sbr.rel (0) target = $region5
  $region4: #{vit_forward.15} parent=0 // pred_region
    _
  $region5: #{vit_forward.15} parent=0 // pred_fallthru
    _
  // Predicated region
  $region6: #{vit_forward.15} parent=0 // pred_check
    _
  $region7: #{vit_forward.15} parent=0 // pred_check_branch
    %12 = sbr.rel (0) target = $region9
  $region8: #{vit_forward.15} parent=0 // pred_region
    _
  $region9: #{vit_forward.15} parent=0 // pred_fallthru
    _
  // Predicated region
  $region10: #{vit_forward.15} parent=0 // pred_check
    _
  $region11: #{vit_forward.15} parent=0 // pred_check_branch
    %14 = sbr.rel (0) target = $region13
  $region12: #{vit_forward.15} parent=0 // pred_region
    _
  $region13: #{vit_forward.15} parent=0 // pred_fallthru
    _
  // Predicated region
  $region14: #{vit_forward.15} parent=0 // pred_check
    _
  $region15: #{vit_forward.15} parent=0 // pred_check_branch
    %16 = sbr.rel (0) target = $region17
  $region16: #{vit_forward.15} parent=0 // pred_region
    _
  $region17: #{vit_forward.15} parent=0 // pred_fallthru
    _
  %p18 = scmp.eq.s32.totalorder 0, 0
  // Predicated region
  $region18: #{vit_forward.15} parent=0 // pred_check
    %p19 = pneg %p18
  $region19: #{vit_forward.15} parent=0 // pred_check_branch
    %21 = sbr.rel (%p19) target = $region21
  $region20: #{vit_forward.15} parent=0 // pred_region
    %vm22 = vcmask 523264
    %23 = vst.msk [vmem:[#allocation2] sm:$0xff] %vm22, 0.0
    %24 = vst.msk [vmem:[#allocation2 + $0x8] sm:$0xff] %vm22, 0.0
    %25 = vst.msk [vmem:[#allocation2 + $0x10] sm:$0xff] %vm22, 0.0
    %26 = vst.msk [vmem:[#allocation2 + $0x18] sm:$0xff] %vm22, 0.0
    %27 = vst.msk [vmem:[#allocation2 + $0x20] sm:$0xff] %vm22, 0.0
    %28 = vst.msk [vmem:[#allocation2 + $0x28] sm:$0xff] %vm22, 0.0
    %29 = vst.msk [vmem:[#allocation2 + $0x30] sm:$0xff] %vm22, 0.0
    %30 = vst.msk [vmem:[#allocation2 + $0x38] sm:$0xff] %vm22, 0.0
    %31 = vst.msk [vmem:[#allocation2 + $0x40] sm:$0xff] %vm22, 0.0
    %32 = vst.msk [vmem:[#allocation2 + $0x48] sm:$0xff] %vm22, 0.0
    %33 = vst.msk [vmem:[#allocation2 + $0x50] sm:$0xff] %vm22, 0.0
    %34 = vst.msk [vmem:[#allocation2 + $0x58] sm:$0xff] %vm22, 0.0
    %35 = vst.msk [vmem:[#allocation2 + $0x60] sm:$0xff] %vm22, 0.0
    %36 = vst.msk [vmem:[#allocation2 + $0x68] sm:$0xff] %vm22, 0.0
    %37 = vst.msk [vmem:[#allocation2 + $0x70] sm:$0xff] %vm22, 0.0
    %38 = vst.msk [vmem:[#allocation2 + $0x78] sm:$0xff] %vm22, 0.0
    %39 = vst.msk [vmem:[#allocation2 + $0x80] sm:$0xff] %vm22, 0.0
    %40 = vst.msk [vmem:[#allocation2 + $0x88] sm:$0xff] %vm22, 0.0
    %41 = vst.msk [vmem:[#allocation2 + $0x90] sm:$0xff] %vm22, 0.0
    %42 = vst.msk [vmem:[#allocation2 + $0x98] sm:$0xff] %vm22, 0.0
    %43 = vst.msk [vmem:[#allocation2 + $0xa0] sm:$0xff] %vm22, 0.0
    %44 = vst.msk [vmem:[#allocation2 + $0xa8] sm:$0xff] %vm22, 0.0
    %45 = vst.msk [vmem:[#allocation2 + $0xb0] sm:$0xff] %vm22, 0.0
    %46 = vst.msk [vmem:[#allocation2 + $0xb8] sm:$0xff] %vm22, 0.0
    %47 = vst.msk [vmem:[#allocation2 + $0xc0] sm:$0xff] %vm22, 0.0
    %48 = vst.msk [vmem:[#allocation2 + $0xc8] sm:$0xff] %vm22, 0.0
    %49 = vst.msk [vmem:[#allocation2 + $0xd0] sm:$0xff] %vm22, 0.0
    %50 = vst.msk [vmem:[#allocation2 + $0xd8] sm:$0xff] %vm22, 0.0
    %51 = vst.msk [vmem:[#allocation2 + $0xe0] sm:$0xff] %vm22, 0.0
    %52 = vst.msk [vmem:[#allocation2 + $0xe8] sm:$0xff] %vm22, 0.0
    %53 = vst.msk [vmem:[#allocation2 + $0xf0] sm:$0xff] %vm22, 0.0
    %54 = vst.msk [vmem:[#allocation2 + $0xf8] sm:$0xff] %vm22, 0.0
  $region21: #{vit_forward.15} parent=0 // pred_fallthru
    _
  %v55 = vld [vmem:[#allocation2] sm:$0xff]
  %v56 = vld [vmem:[#allocation2 + $0x8] sm:$0xff]
  %v57 = vld [vmem:[#allocation2 + $0x10] sm:$0xff]
  %v58 = vld [vmem:[#allocation2 + $0x18] sm:$0xff]
  %v59 = vld [vmem:[#allocation2 + $0x20] sm:$0xff]
  %v60 = vld [vmem:[#allocation2 + $0x28] sm:$0xff]
  %v61 = vld [vmem:[#allocation2 + $0x30] sm:$0xff]
  %v62 = vld [vmem:[#allocation2 + $0x38] sm:$0xff]
  %v63 = vld [vmem:[#allocation2 + $0x40] sm:$0xff]
  %v64 = vld [vmem:[#allocation2 + $0x48] sm:$0xff]
  %v65 = vld [vmem:[#allocation2 + $0x50] sm:$0xff]
  %v66 = vld [vmem:[#allocation2 + $0x58] sm:$0xff]
  %v67 = vld [vmem:[#allocation2 + $0x60] sm:$0xff]
  %v68 = vld [vmem:[#allocation2 + $0x68] sm:$0xff]
  %v69 = vld [vmem:[#allocation2 + $0x70] sm:$0xff]
  %v70 = vld [vmem:[#allocation2 + $0x78] sm:$0xff]
  %v71 = vld [vmem:[#allocation2 + $0x80] sm:$0xff]
  %v72 = vld [vmem:[#allocation2 + $0x88] sm:$0xff]
  %v73 = vld [vmem:[#allocation2 + $0x90] sm:$0xff]
  %v74 = vld [vmem:[#allocation2 + $0x98] sm:$0xff]
  %v75 = vld [vmem:[#allocation2 + $0xa0] sm:$0xff]
  %v76 = vld [vmem:[#allocation2 + $0xa8] sm:$0xff]
  %v77 = vld [vmem:[#allocation2 + $0xb0] sm:$0xff]
  %v78 = vld [vmem:[#allocation2 + $0xb8] sm:$0xff]
  %v79 = vld [vmem:[#allocation2 + $0xc0] sm:$0xff]
  %v80 = vld [vmem:[#allocation2 + $0xc8] sm:$0xff]
  %v81 = vld [vmem:[#allocation2 + $0xd0] sm:$0xff]
  %v82 = vld [vmem:[#allocation2 + $0xd8] sm:$0xff]
  %v83 = vld [vmem:[#allocation2 + $0xe0] sm:$0xff]
  %v84 = vld [vmem:[#allocation2 + $0xe8] sm:$0xff]
  %v85 = vld [vmem:[#allocation2 + $0xf0] sm:$0xff]
  %v86 = vld [vmem:[#allocation2 + $0xf8] sm:$0xff]
  %v87 = vld [vmem:[%s0] sm:$0xf]
  %v88 = vld [vmem:[%s0 + $0x4] sm:$0xf]
  %v89 = vld [vmem:[%s0 + $0x8] sm:$0xf]
  %v90 = vld [vmem:[%s0 + $0xc] sm:$0xf]
  %v91 = vld [vmem:[%s0 + $0x10] sm:$0xf]
  %v92 = vld [vmem:[%s0 + $0x14] sm:$0xf]
  %v93 = vld [vmem:[%s0 + $0x18] sm:$0xf]
  %v94 = vld [vmem:[%s0 + $0x1c] sm:$0xf]
  %v95 = vld [vmem:[%s0 + $0x20] sm:$0xf]
  %v96 = vld [vmem:[%s0 + $0x24] sm:$0xf]
  %v97 = vld [vmem:[%s0 + $0x28] sm:$0xf]
  %v98 = vld [vmem:[%s0 + $0x2c] sm:$0xf]
  %v99 = vld [vmem:[%s0 + $0x30] sm:$0xf]
  %v100 = vld [vmem:[%s0 + $0x34] sm:$0xf]
  %v101 = vld [vmem:[%s0 + $0x38] sm:$0xf]
  %v102 = vld [vmem:[%s0 + $0x3c] sm:$0xf]
  %v103 = vld [vmem:[%s0 + $0x40] sm:$0xf]
  %v104 = vld [vmem:[%s0 + $0x44] sm:$0xf]
  %v105 = vld [vmem:[%s0 + $0x48] sm:$0xf]
  %v106 = vld [vmem:[%s0 + $0x4c] sm:$0xf]
  %v107 = vld [vmem:[%s0 + $0x50] sm:$0xf]
  %v108 = vld [vmem:[%s0 + $0x54] sm:$0xf]
  %v109 = vld [vmem:[%s0 + $0x58] sm:$0xf]
  %v110 = vld [vmem:[%s0 + $0x5c] sm:$0xf]
  %v111 = vld [vmem:[%s0 + $0x60] sm:$0xf]
  %v112 = vld [vmem:[%s0 + $0x64] sm:$0xf]
  %v113 = vld [vmem:[%s0 + $0x68] sm:$0xf]
  %v114 = vld [vmem:[%s0 + $0x6c] sm:$0xf]
  %v115 = vld [vmem:[%s0 + $0x70] sm:$0xf]
  %v116 = vld [vmem:[%s0 + $0x74] sm:$0xf]
  %v117 = vld [vmem:[%s0 + $0x78] sm:$0xf]
  %v118 = vld [vmem:[%s0 + $0x7c] sm:$0xf]
  %v119 = vld [vmem:[%s1] sm:$0xf]
  %v120 = vld [vmem:[%s1 + $0x4] sm:$0xf]
  %v121 = vld [vmem:[%s1 + $0x8] sm:$0xf]
  %v122 = vld [vmem:[%s1 + $0xc] sm:$0xf]
  %v123 = vld [vmem:[%s1 + $0x10] sm:$0xf]
  %v124 = vld [vmem:[%s1 + $0x14] sm:$0xf]
  %v125 = vld [vmem:[%s1 + $0x18] sm:$0xf]
  %v126 = vld [vmem:[%s1 + $0x1c] sm:$0xf]
  %v159 = vunpack.c.l.b16 %v87
  %v160 = vunpack.c.l.b16 %v88
  %v161 = vunpack.c.l.b16 %v89
  %v162 = vunpack.c.l.b16 %v90
  %v163 = vunpack.c.l.b16 %v91
  %v164 = vunpack.c.l.b16 %v92
  %v165 = vunpack.c.l.b16 %v93
  %v166 = vunpack.c.l.b16 %v94
  %v167 = vunpack.c.l.b16 %v95
  %v168 = vunpack.c.l.b16 %v96
  %v169 = vunpack.c.l.b16 %v97
  %v170 = vunpack.c.l.b16 %v98
  %v171 = vunpack.c.l.b16 %v99
  %v172 = vunpack.c.l.b16 %v100
  %v173 = vunpack.c.l.b16 %v101
  %v174 = vunpack.c.l.b16 %v102
  %v175 = vunpack.c.l.b16 %v103
  %v176 = vunpack.c.l.b16 %v104
  %v177 = vunpack.c.l.b16 %v105
  %v178 = vunpack.c.l.b16 %v106
  %v179 = vunpack.c.l.b16 %v107
  %v180 = vunpack.c.l.b16 %v108
  %v181 = vunpack.c.l.b16 %v109
  %v182 = vunpack.c.l.b16 %v110
  %v183 = vunpack.c.l.b16 %v111
  %v184 = vunpack.c.l.b16 %v112
  %v185 = vunpack.c.l.b16 %v113
  %v186 = vunpack.c.l.b16 %v114
  %v187 = vunpack.c.l.b16 %v115
  %v188 = vunpack.c.l.b16 %v116
  %v189 = vunpack.c.l.b16 %v117
  %v190 = vunpack.c.l.b16 %v118
  %v191 = vpack.c.b16 %v160, %v159
  %v192 = vpack.c.b16 %v162, %v161
  %v193 = vpack.c.b16 %v164, %v163
  %v194 = vpack.c.b16 %v166, %v165
  %v195 = vpack.c.b16 %v168, %v167
  %v196 = vpack.c.b16 %v170, %v169
  %v197 = vpack.c.b16 %v172, %v171
  %v198 = vpack.c.b16 %v174, %v173
  %v199 = vpack.c.b16 %v176, %v175
  %v200 = vpack.c.b16 %v178, %v177
  %v201 = vpack.c.b16 %v180, %v179
  %v202 = vpack.c.b16 %v182, %v181
  %v203 = vpack.c.b16 %v184, %v183
  %v204 = vpack.c.b16 %v186, %v185
  %v205 = vpack.c.b16 %v188, %v187
  %v206 = vpack.c.b16 %v190, %v189
  %v215 = vunpack.c.l.b16 %v119
  %v216 = vunpack.c.l.b16 %v120
  %v217 = vunpack.c.l.b16 %v121
  %v218 = vunpack.c.l.b16 %v122
  %v219 = vunpack.c.l.b16 %v123
  %v220 = vunpack.c.l.b16 %v124
  %v221 = vunpack.c.l.b16 %v125
  %v222 = vunpack.c.l.b16 %v126
  %v223 = vpack.c.b16 %v216, %v215
  %v224 = vpack.c.b16 %v218, %v217
  %v225 = vpack.c.b16 %v220, %v219
  %v226 = vpack.c.b16 %v222, %v221
  %vm231 = vcmask 523264
  %v233 = vsel %vm231, %v191, 0
  %v236 = vsel %vm231, %v192, 0
  %v239 = vsel %vm231, %v193, 0
  %v242 = vsel %vm231, %v194, 0
  %v245 = vsel %vm231, %v195, 0
  %v248 = vsel %vm231, %v196, 0
  %v251 = vsel %vm231, %v197, 0
  %v254 = vsel %vm231, %v198, 0
  %v257 = vsel %vm231, %v199, 0
  %v260 = vsel %vm231, %v200, 0
  %v263 = vsel %vm231, %v201, 0
  %v266 = vsel %vm231, %v202, 0
  %v269 = vsel %vm231, %v203, 0
  %v272 = vsel %vm231, %v204, 0
  %v275 = vsel %vm231, %v205, 0
  %v278 = vsel %vm231, %v206, 0
  %280 = vmatprep.subr.bf16.mxu0 0
  %281 = vmatpush1.bf16.msra.mxu0 0
  %282 = vmatprep.subr.bf16.mxu0 0
  %283 = vmatpush1.bf16.msra.mxu0 0
  %284 = vmatprep.subr.bf16.mxu0 0
  %285 = vmatpush1.bf16.msra.mxu0 0
  %286 = vmatprep.subr.bf16.mxu0 0
  %287 = vmatpush1.bf16.msra.mxu0 0
  %288 = vmatprep.subr.bf16.mxu0 0
  %289 = vmatpush1.bf16.msra.mxu0 %v226
  %290 = vmatprep.subr.bf16.mxu0 0
  %291 = vmatpush1.bf16.msra.mxu0 %v225
  %292 = vmatprep.subr.bf16.mxu0 0
  %293 = vmatpush1.bf16.msra.mxu0 %v224
  %294 = vmatprep.subr.bf16.mxu0 0
  %295 = vmatpush1.bf16.msra.mxu0 %v223
  %296 = vmatprep.subr.bf16.mxu0 0
  %297 = vmatpush2.bf16.msra.mxu0 0
  %298 = vmatprep.subr.bf16.mxu0 0
  %299 = vmatpush2.bf16.msra.mxu0 0
  %300 = vmatprep.subr.bf16.mxu0 0
  %301 = vmatpush2.bf16.msra.mxu0 0
  %302 = vmatprep.subr.bf16.mxu0 0
  %303 = vmatpush2.bf16.msra.mxu0 0
  %304 = vmatprep.subr.bf16.mxu0 0
  %305 = vmatpush2.bf16.msra.mxu0 0
  %306 = vmatprep.subr.bf16.mxu0 0
  %307 = vmatpush2.bf16.msra.mxu0 0
  %308 = vmatprep.subr.bf16.mxu0 0
  %309 = vmatpush2.bf16.msra.mxu0 0
  %310 = vmatprep.subr.bf16.mxu0 0
  %311 = vmatpush2.bf16.msra.mxu0 0
  %312 = vmatprep.mubr.bf16.mxu0 0
  %313 = vmatmul.mubr.bf16.gmra.mxu0 %v233
  %v314 = vpop.f32.mrf.mxu0
  %v315 = vadd.f32 0.0, %v314
  %v316 = vpop.f32.mrf.mxu0
  %v317 = vpop.f32.mrf.mxu0
  %v318 = vadd.f32 0.0, %v317
  %v319 = vpop.f32.mrf.mxu0
  %320 = vmatprep.mubr.bf16.mxu0 0
  %321 = vmatmul.mubr.bf16.gmra.mxu0 %v236
  %v322 = vpop.f32.mrf.mxu0
  %v323 = vadd.f32 0.0, %v322
  %v324 = vpop.f32.mrf.mxu0
  %v325 = vpop.f32.mrf.mxu0
  %v326 = vadd.f32 0.0, %v325
  %v327 = vpop.f32.mrf.mxu0
  %328 = vmatprep.mubr.bf16.mxu0 0
  %329 = vmatmul.mubr.bf16.gmra.mxu0 %v239
  %v330 = vpop.f32.mrf.mxu0
  %v331 = vadd.f32 0.0, %v330
  %v332 = vpop.f32.mrf.mxu0
  %v333 = vpop.f32.mrf.mxu0
  %v334 = vadd.f32 0.0, %v333
  %v335 = vpop.f32.mrf.mxu0
  %336 = vmatprep.mubr.bf16.mxu0 0
  %337 = vmatmul.mubr.bf16.gmra.mxu0 %v242
  %v338 = vpop.f32.mrf.mxu0
  %v339 = vadd.f32 0.0, %v338
  %v340 = vpop.f32.mrf.mxu0
  %v341 = vpop.f32.mrf.mxu0
  %v342 = vadd.f32 0.0, %v341
  %v343 = vpop.f32.mrf.mxu0
  %344 = vmatprep.mubr.bf16.mxu0 0
  %345 = vmatmul.mubr.bf16.gmra.mxu0 %v245
  %v346 = vpop.f32.mrf.mxu0
  %v347 = vadd.f32 0.0, %v346
  %v348 = vpop.f32.mrf.mxu0
  %v349 = vpop.f32.mrf.mxu0
  %v350 = vadd.f32 0.0, %v349
  %v351 = vpop.f32.mrf.mxu0
  %352 = vmatprep.mubr.bf16.mxu0 0
  %353 = vmatmul.mubr.bf16.gmra.mxu0 %v248
  %v354 = vpop.f32.mrf.mxu0
  %v355 = vadd.f32 0.0, %v354
  %v356 = vpop.f32.mrf.mxu0
  %v357 = vpop.f32.mrf.mxu0
  %v358 = vadd.f32 0.0, %v357
  %v359 = vpop.f32.mrf.mxu0
  %360 = vmatprep.mubr.bf16.mxu0 0
  %361 = vmatmul.mubr.bf16.gmra.mxu0 %v251
  %v362 = vpop.f32.mrf.mxu0
  %v363 = vadd.f32 0.0, %v362
  %v364 = vpop.f32.mrf.mxu0
  %v365 = vpop.f32.mrf.mxu0
  %v366 = vadd.f32 0.0, %v365
  %v367 = vpop.f32.mrf.mxu0
  %368 = vmatprep.mubr.bf16.mxu0 0
  %369 = vmatmul.mubr.bf16.gmra.mxu0 %v254
  %v370 = vpop.f32.mrf.mxu0
  %v371 = vadd.f32 0.0, %v370
  %v372 = vpop.f32.mrf.mxu0
  %v373 = vpop.f32.mrf.mxu0
  %v374 = vadd.f32 0.0, %v373
  %v375 = vpop.f32.mrf.mxu0
  %376 = vmatprep.mubr.bf16.mxu0 0
  %377 = vmatmul.mubr.bf16.gmra.mxu0 %v257
  %v378 = vpop.f32.mrf.mxu0
  %v379 = vadd.f32 0.0, %v378
  %v380 = vpop.f32.mrf.mxu0
  %v381 = vpop.f32.mrf.mxu0
  %v382 = vadd.f32 0.0, %v381
  %v383 = vpop.f32.mrf.mxu0
  %384 = vmatprep.mubr.bf16.mxu0 0
  %385 = vmatmul.mubr.bf16.gmra.mxu0 %v260
  %v386 = vpop.f32.mrf.mxu0
  %v387 = vadd.f32 0.0, %v386
  %v388 = vpop.f32.mrf.mxu0
  %v389 = vpop.f32.mrf.mxu0
  %v390 = vadd.f32 0.0, %v389
  %v391 = vpop.f32.mrf.mxu0
  %392 = vmatprep.mubr.bf16.mxu0 0
  %393 = vmatmul.mubr.bf16.gmra.mxu0 %v263
  %v394 = vpop.f32.mrf.mxu0
  %v395 = vadd.f32 0.0, %v394
  %v396 = vpop.f32.mrf.mxu0
  %v397 = vpop.f32.mrf.mxu0
  %v398 = vadd.f32 0.0, %v397
  %v399 = vpop.f32.mrf.mxu0
  %400 = vmatprep.mubr.bf16.mxu0 0
  %401 = vmatmul.mubr.bf16.gmra.mxu0 %v266
  %v402 = vpop.f32.mrf.mxu0
  %v403 = vadd.f32 0.0, %v402
  %v404 = vpop.f32.mrf.mxu0
  %v405 = vpop.f32.mrf.mxu0
  %v406 = vadd.f32 0.0, %v405
  %v407 = vpop.f32.mrf.mxu0
  %408 = vmatprep.mubr.bf16.mxu0 0
  %409 = vmatmul.mubr.bf16.gmra.mxu0 %v269
  %v410 = vpop.f32.mrf.mxu0
  %v411 = vadd.f32 0.0, %v410
  %v412 = vpop.f32.mrf.mxu0
  %v413 = vpop.f32.mrf.mxu0
  %v414 = vadd.f32 0.0, %v413
  %v415 = vpop.f32.mrf.mxu0
  %416 = vmatprep.mubr.bf16.mxu0 0
  %417 = vmatmul.mubr.bf16.gmra.mxu0 %v272
  %v418 = vpop.f32.mrf.mxu0
  %v419 = vadd.f32 0.0, %v418
  %v420 = vpop.f32.mrf.mxu0
  %v421 = vpop.f32.mrf.mxu0
  %v422 = vadd.f32 0.0, %v421
  %v423 = vpop.f32.mrf.mxu0
  %424 = vmatprep.mubr.bf16.mxu0 0
  %425 = vmatmul.mubr.bf16.gmra.mxu0 %v275
  %v426 = vpop.f32.mrf.mxu0
  %v427 = vadd.f32 0.0, %v426
  %v428 = vpop.f32.mrf.mxu0
  %v429 = vpop.f32.mrf.mxu0
  %v430 = vadd.f32 0.0, %v429
  %v431 = vpop.f32.mrf.mxu0
  %432 = vmatprep.mubr.bf16.mxu0 0
  %433 = vmatmul.mubr.bf16.gmra.mxu0 %v278
  %v434 = vpop.f32.mrf.mxu0
  %v435 = vadd.f32 0.0, %v434
  %v436 = vpop.f32.mrf.mxu0
  %v437 = vpop.f32.mrf.mxu0
  %v438 = vadd.f32 0.0, %v437
  %v439 = vpop.f32.mrf.mxu0
  %440 = vdwg.mxu0
  %v441 = vadd.f32 %v55, %v315
  %v442 = vadd.f32 %v56, %v318
  %v443 = vadd.f32 %v57, %v323
  %v444 = vadd.f32 %v58, %v326
  %v445 = vadd.f32 %v59, %v331
  %v446 = vadd.f32 %v60, %v334
  %v447 = vadd.f32 %v61, %v339
  %v448 = vadd.f32 %v62, %v342
  %v449 = vadd.f32 %v63, %v347
  %v450 = vadd.f32 %v64, %v350
  %v451 = vadd.f32 %v65, %v355
  %v452 = vadd.f32 %v66, %v358
  %v453 = vadd.f32 %v67, %v363
  %v454 = vadd.f32 %v68, %v366
  %v455 = vadd.f32 %v69, %v371
  %v456 = vadd.f32 %v70, %v374
  %v457 = vadd.f32 %v71, %v379
  %v458 = vadd.f32 %v72, %v382
  %v459 = vadd.f32 %v73, %v387
  %v460 = vadd.f32 %v74, %v390
  %v461 = vadd.f32 %v75, %v395
  %v462 = vadd.f32 %v76, %v398
  %v463 = vadd.f32 %v77, %v403
  %v464 = vadd.f32 %v78, %v406
  %v465 = vadd.f32 %v79, %v411
  %v466 = vadd.f32 %v80, %v414
  %v467 = vadd.f32 %v81, %v419
  %v468 = vadd.f32 %v82, %v422
  %v469 = vadd.f32 %v83, %v427
  %v470 = vadd.f32 %v84, %v430
  %v471 = vadd.f32 %v85, %v435
  %v472 = vadd.f32 %v86, %v438
  %473 = vst.msk [vmem:[#allocation2] sm:$0xff] %vm231, %v441
  %474 = vst.msk [vmem:[#allocation2 + $0x8] sm:$0xff] %vm231, %v442
  %475 = vst.msk [vmem:[#allocation2 + $0x10] sm:$0xff] %vm231, %v443
  %476 = vst.msk [vmem:[#allocation2 + $0x18] sm:$0xff] %vm231, %v444
  %477 = vst.msk [vmem:[#allocation2 + $0x20] sm:$0xff] %vm231, %v445
  %478 = vst.msk [vmem:[#allocation2 + $0x28] sm:$0xff] %vm231, %v446
  %479 = vst.msk [vmem:[#allocation2 + $0x30] sm:$0xff] %vm231, %v447
  %480 = vst.msk [vmem:[#allocation2 + $0x38] sm:$0xff] %vm231, %v448
  %481 = vst.msk [vmem:[#allocation2 + $0x40] sm:$0xff] %vm231, %v449
  %482 = vst.msk [vmem:[#allocation2 + $0x48] sm:$0xff] %vm231, %v450
  %483 = vst.msk [vmem:[#allocation2 + $0x50] sm:$0xff] %vm231, %v451
  %484 = vst.msk [vmem:[#allocation2 + $0x58] sm:$0xff] %vm231, %v452
  %485 = vst.msk [vmem:[#allocation2 + $0x60] sm:$0xff] %vm231, %v453
  %486 = vst.msk [vmem:[#allocation2 + $0x68] sm:$0xff] %vm231, %v454
  %487 = vst.msk [vmem:[#allocation2 + $0x70] sm:$0xff] %vm231, %v455
  %488 = vst.msk [vmem:[#allocation2 + $0x78] sm:$0xff] %vm231, %v456
  %489 = vst.msk [vmem:[#allocation2 + $0x80] sm:$0xff] %vm231, %v457
  %490 = vst.msk [vmem:[#allocation2 + $0x88] sm:$0xff] %vm231, %v458
  %491 = vst.msk [vmem:[#allocation2 + $0x90] sm:$0xff] %vm231, %v459
  %492 = vst.msk [vmem:[#allocation2 + $0x98] sm:$0xff] %vm231, %v460
  %493 = vst.msk [vmem:[#allocation2 + $0xa0] sm:$0xff] %vm231, %v461
  %494 = vst.msk [vmem:[#allocation2 + $0xa8] sm:$0xff] %vm231, %v462
  %495 = vst.msk [vmem:[#allocation2 + $0xb0] sm:$0xff] %vm231, %v463
  %496 = vst.msk [vmem:[#allocation2 + $0xb8] sm:$0xff] %vm231, %v464
  %497 = vst.msk [vmem:[#allocation2 + $0xc0] sm:$0xff] %vm231, %v465
  %498 = vst.msk [vmem:[#allocation2 + $0xc8] sm:$0xff] %vm231, %v466
  %499 = vst.msk [vmem:[#allocation2 + $0xd0] sm:$0xff] %vm231, %v467
  %500 = vst.msk [vmem:[#allocation2 + $0xd8] sm:$0xff] %vm231, %v468
  %501 = vst.msk [vmem:[#allocation2 + $0xe0] sm:$0xff] %vm231, %v469
  %502 = vst.msk [vmem:[#allocation2 + $0xe8] sm:$0xff] %vm231, %v470
  %503 = vst.msk [vmem:[#allocation2 + $0xf0] sm:$0xff] %vm231, %v471
  %504 = vst.msk [vmem:[#allocation2 + $0xf8] sm:$0xff] %vm231, %v472
  // Predicated region
  $region22: #{vit_forward.15} parent=0 // pred_check
    %p505 = pneg %p18
  $region23: #{vit_forward.15} parent=0 // pred_check_branch
    %507 = sbr.rel (%p505) target = $region25
  $region24: #{vit_forward.15} parent=0 // pred_region
    %v508 = vld [vmem:[#allocation2] sm:$0xff]
    %v509 = vld [vmem:[#allocation2 + $0x8] sm:$0xff]
    %v510 = vld [vmem:[#allocation2 + $0x10] sm:$0xff]
    %v511 = vld [vmem:[#allocation2 + $0x18] sm:$0xff]
    %v512 = vld [vmem:[#allocation2 + $0x20] sm:$0xff]
    %v513 = vld [vmem:[#allocation2 + $0x28] sm:$0xff]
    %v514 = vld [vmem:[#allocation2 + $0x30] sm:$0xff]
    %v515 = vld [vmem:[#allocation2 + $0x38] sm:$0xff]
    %v516 = vld [vmem:[#allocation2 + $0x40] sm:$0xff]
    %v517 = vld [vmem:[#allocation2 + $0x48] sm:$0xff]
    %v518 = vld [vmem:[#allocation2 + $0x50] sm:$0xff]
    %v519 = vld [vmem:[#allocation2 + $0x58] sm:$0xff]
    %v520 = vld [vmem:[#allocation2 + $0x60] sm:$0xff]
    %v521 = vld [vmem:[#allocation2 + $0x68] sm:$0xff]
    %v522 = vld [vmem:[#allocation2 + $0x70] sm:$0xff]
    %v523 = vld [vmem:[#allocation2 + $0x78] sm:$0xff]
    %v524 = vld [vmem:[#allocation2 + $0x80] sm:$0xff]
    %v525 = vld [vmem:[#allocation2 + $0x88] sm:$0xff]
    %v526 = vld [vmem:[#allocation2 + $0x90] sm:$0xff]
    %v527 = vld [vmem:[#allocation2 + $0x98] sm:$0xff]
    %v528 = vld [vmem:[#allocation2 + $0xa0] sm:$0xff]
    %v529 = vld [vmem:[#allocation2 + $0xa8] sm:$0xff]
    %v530 = vld [vmem:[#allocation2 + $0xb0] sm:$0xff]
    %v531 = vld [vmem:[#allocation2 + $0xb8] sm:$0xff]
    %v532 = vld [vmem:[#allocation2 + $0xc0] sm:$0xff]
    %v533 = vld [vmem:[#allocation2 + $0xc8] sm:$0xff]
    %v534 = vld [vmem:[#allocation2 + $0xd0] sm:$0xff]
    %v535 = vld [vmem:[#allocation2 + $0xd8] sm:$0xff]
    %v536 = vld [vmem:[#allocation2 + $0xe0] sm:$0xff]
    %v537 = vld [vmem:[#allocation2 + $0xe8] sm:$0xff]
    %v538 = vld [vmem:[#allocation2 + $0xf0] sm:$0xff]
    %v539 = vld [vmem:[#allocation2 + $0xf8] sm:$0xff]
    %v540 = vld [vmem:[%s2] sm:$0x1]
    %v542 = vlaneseq
    %v543 = vshrl.u32 %v542, 7
    %v544 = vsub.s32 0, %v543
    %v545 = vrot.slane %v540, %v544
    %v547 = vadd.f32 %v508, %v545
    %v548 = vadd.f32 %v509, %v545
    %v549 = vadd.f32 %v510, %v545
    %v550 = vadd.f32 %v511, %v545
    %v551 = vadd.f32 %v512, %v545
    %v552 = vadd.f32 %v513, %v545
    %v553 = vadd.f32 %v514, %v545
    %v554 = vadd.f32 %v515, %v545
    %v555 = vadd.f32 %v516, %v545
    %v556 = vadd.f32 %v517, %v545
    %v557 = vadd.f32 %v518, %v545
    %v558 = vadd.f32 %v519, %v545
    %v559 = vadd.f32 %v520, %v545
    %v560 = vadd.f32 %v521, %v545
    %v561 = vadd.f32 %v522, %v545
    %v562 = vadd.f32 %v523, %v545
    %v563 = vadd.f32 %v524, %v545
    %v564 = vadd.f32 %v525, %v545
    %v565 = vadd.f32 %v526, %v545
    %v566 = vadd.f32 %v527, %v545
    %v567 = vadd.f32 %v528, %v545
    %v568 = vadd.f32 %v529, %v545
    %v569 = vadd.f32 %v530, %v545
    %v570 = vadd.f32 %v531, %v545
    %v571 = vadd.f32 %v532, %v545
    %v572 = vadd.f32 %v533, %v545
    %v573 = vadd.f32 %v534, %v545
    %v574 = vadd.f32 %v535, %v545
    %v575 = vadd.f32 %v536, %v545
    %v576 = vadd.f32 %v537, %v545
    %v577 = vadd.f32 %v538, %v545
    %v578 = vadd.f32 %v539, %v545
    %v579 = vld [vmem:[%s3] sm:$0xf]
    %v580 = vld [vmem:[%s3 + $0x4] sm:$0xf]
    %v581 = vld [vmem:[%s3 + $0x8] sm:$0xf]
    %v582 = vld [vmem:[%s3 + $0xc] sm:$0xf]
    %v583 = vld [vmem:[%s3 + $0x10] sm:$0xf]
    %v584 = vld [vmem:[%s3 + $0x14] sm:$0xf]
    %v585 = vld [vmem:[%s3 + $0x18] sm:$0xf]
    %v586 = vld [vmem:[%s3 + $0x1c] sm:$0xf]
    %v587 = vld [vmem:[%s3 + $0x20] sm:$0xf]
    %v588 = vld [vmem:[%s3 + $0x24] sm:$0xf]
    %v589 = vld [vmem:[%s3 + $0x28] sm:$0xf]
    %v590 = vld [vmem:[%s3 + $0x2c] sm:$0xf]
    %v591 = vld [vmem:[%s3 + $0x30] sm:$0xf]
    %v592 = vld [vmem:[%s3 + $0x34] sm:$0xf]
    %v593 = vld [vmem:[%s3 + $0x38] sm:$0xf]
    %v594 = vld [vmem:[%s3 + $0x3c] sm:$0xf]
    %v595 = vld [vmem:[%s3 + $0x40] sm:$0xf]
    %v596 = vld [vmem:[%s3 + $0x44] sm:$0xf]
    %v597 = vld [vmem:[%s3 + $0x48] sm:$0xf]
    %v598 = vld [vmem:[%s3 + $0x4c] sm:$0xf]
    %v599 = vld [vmem:[%s3 + $0x50] sm:$0xf]
    %v600 = vld [vmem:[%s3 + $0x54] sm:$0xf]
    %v601 = vld [vmem:[%s3 + $0x58] sm:$0xf]
    %v602 = vld [vmem:[%s3 + $0x5c] sm:$0xf]
    %v603 = vld [vmem:[%s3 + $0x60] sm:$0xf]
    %v604 = vld [vmem:[%s3 + $0x64] sm:$0xf]
    %v605 = vld [vmem:[%s3 + $0x68] sm:$0xf]
    %v606 = vld [vmem:[%s3 + $0x6c] sm:$0xf]
    %v607 = vld [vmem:[%s3 + $0x70] sm:$0xf]
    %v608 = vld [vmem:[%s3 + $0x74] sm:$0xf]
    %v609 = vld [vmem:[%s3 + $0x78] sm:$0xf]
    %v610 = vld [vmem:[%s3 + $0x7c] sm:$0xf]
    %v611 = vunpack.c.l.bf16 %v579
    %v612 = vunpack.c.l.bf16 %v580
    %v613 = vunpack.c.l.bf16 %v581
    %v614 = vunpack.c.l.bf16 %v582
    %v615 = vunpack.c.l.bf16 %v583
    %v616 = vunpack.c.l.bf16 %v584
    %v617 = vunpack.c.l.bf16 %v585
    %v618 = vunpack.c.l.bf16 %v586
    %v619 = vunpack.c.l.bf16 %v587
    %v620 = vunpack.c.l.bf16 %v588
    %v621 = vunpack.c.l.bf16 %v589
    %v622 = vunpack.c.l.bf16 %v590
    %v623 = vunpack.c.l.bf16 %v591
    %v624 = vunpack.c.l.bf16 %v592
    %v625 = vunpack.c.l.bf16 %v593
    %v626 = vunpack.c.l.bf16 %v594
    %v627 = vunpack.c.l.bf16 %v595
    %v628 = vunpack.c.l.bf16 %v596
    %v629 = vunpack.c.l.bf16 %v597
    %v630 = vunpack.c.l.bf16 %v598
    %v631 = vunpack.c.l.bf16 %v599
    %v632 = vunpack.c.l.bf16 %v600
    %v633 = vunpack.c.l.bf16 %v601
    %v634 = vunpack.c.l.bf16 %v602
    %v635 = vunpack.c.l.bf16 %v603
    %v636 = vunpack.c.l.bf16 %v604
    %v637 = vunpack.c.l.bf16 %v605
    %v638 = vunpack.c.l.bf16 %v606
    %v639 = vunpack.c.l.bf16 %v607
    %v640 = vunpack.c.l.bf16 %v608
    %v641 = vunpack.c.l.bf16 %v609
    %v642 = vunpack.c.l.bf16 %v610
    %v643 = vadd.f32 %v547, %v611
    %v644 = vadd.f32 %v548, %v612
    %v645 = vadd.f32 %v549, %v613
    %v646 = vadd.f32 %v550, %v614
    %v647 = vadd.f32 %v551, %v615
    %v648 = vadd.f32 %v552, %v616
    %v649 = vadd.f32 %v553, %v617
    %v650 = vadd.f32 %v554, %v618
    %v651 = vadd.f32 %v555, %v619
    %v652 = vadd.f32 %v556, %v620
    %v653 = vadd.f32 %v557, %v621
    %v654 = vadd.f32 %v558, %v622
    %v655 = vadd.f32 %v559, %v623
    %v656 = vadd.f32 %v560, %v624
    %v657 = vadd.f32 %v561, %v625
    %v658 = vadd.f32 %v562, %v626
    %v659 = vadd.f32 %v563, %v627
    %v660 = vadd.f32 %v564, %v628
    %v661 = vadd.f32 %v565, %v629
    %v662 = vadd.f32 %v566, %v630
    %v663 = vadd.f32 %v567, %v631
    %v664 = vadd.f32 %v568, %v632
    %v665 = vadd.f32 %v569, %v633
    %v666 = vadd.f32 %v570, %v634
    %v667 = vadd.f32 %v571, %v635
    %v668 = vadd.f32 %v572, %v636
    %v669 = vadd.f32 %v573, %v637
    %v670 = vadd.f32 %v574, %v638
    %v671 = vadd.f32 %v575, %v639
    %v672 = vadd.f32 %v576, %v640
    %v673 = vadd.f32 %v577, %v641
    %v674 = vadd.f32 %v578, %v642
    %v675 = vpack.c.bf16 %v644, %v643
    %v676 = vpack.c.bf16 %v646, %v645
    %v677 = vpack.c.bf16 %v648, %v647
    %v678 = vpack.c.bf16 %v650, %v649
    %v679 = vpack.c.bf16 %v652, %v651
    %v680 = vpack.c.bf16 %v654, %v653
    %v681 = vpack.c.bf16 %v656, %v655
    %v682 = vpack.c.bf16 %v658, %v657
    %v683 = vpack.c.bf16 %v660, %v659
    %v684 = vpack.c.bf16 %v662, %v661
    %v685 = vpack.c.bf16 %v664, %v663
    %v686 = vpack.c.bf16 %v666, %v665
    %v687 = vpack.c.bf16 %v668, %v667
    %v688 = vpack.c.bf16 %v670, %v669
    %v689 = vpack.c.bf16 %v672, %v671
    %v690 = vpack.c.bf16 %v674, %v673
    %v707 = vunpack.c.l.b16 %v675
    %v708 = vunpack.c.h.b16 %v675
    %v709 = vunpack.c.l.b16 %v676
    %v710 = vunpack.c.h.b16 %v676
    %v711 = vunpack.c.l.b16 %v677
    %v712 = vunpack.c.h.b16 %v677
    %v713 = vunpack.c.l.b16 %v678
    %v714 = vunpack.c.h.b16 %v678
    %v715 = vunpack.c.l.b16 %v679
    %v716 = vunpack.c.h.b16 %v679
    %v717 = vunpack.c.l.b16 %v680
    %v718 = vunpack.c.h.b16 %v680
    %v719 = vunpack.c.l.b16 %v681
    %v720 = vunpack.c.h.b16 %v681
    %v721 = vunpack.c.l.b16 %v682
    %v722 = vunpack.c.h.b16 %v682
    %v723 = vunpack.c.l.b16 %v683
    %v724 = vunpack.c.h.b16 %v683
    %v725 = vunpack.c.l.b16 %v684
    %v726 = vunpack.c.h.b16 %v684
    %v727 = vunpack.c.l.b16 %v685
    %v728 = vunpack.c.h.b16 %v685
    %v729 = vunpack.c.l.b16 %v686
    %v730 = vunpack.c.h.b16 %v686
    %v731 = vunpack.c.l.b16 %v687
    %v732 = vunpack.c.h.b16 %v687
    %v733 = vunpack.c.l.b16 %v688
    %v734 = vunpack.c.h.b16 %v688
    %v735 = vunpack.c.l.b16 %v689
    %v736 = vunpack.c.h.b16 %v689
    %v737 = vunpack.c.l.b16 %v690
    %v738 = vunpack.c.h.b16 %v690
    %v739 = vpack.c.b16 %v707, %v707
    %v740 = vpack.c.b16 %v708, %v708
    %v741 = vpack.c.b16 %v709, %v709
    %v742 = vpack.c.b16 %v710, %v710
    %v743 = vpack.c.b16 %v711, %v711
    %v744 = vpack.c.b16 %v712, %v712
    %v745 = vpack.c.b16 %v713, %v713
    %v746 = vpack.c.b16 %v714, %v714
    %v747 = vpack.c.b16 %v715, %v715
    %v748 = vpack.c.b16 %v716, %v716
    %v749 = vpack.c.b16 %v717, %v717
    %v750 = vpack.c.b16 %v718, %v718
    %v751 = vpack.c.b16 %v719, %v719
    %v752 = vpack.c.b16 %v720, %v720
    %v753 = vpack.c.b16 %v721, %v721
    %v754 = vpack.c.b16 %v722, %v722
    %v755 = vpack.c.b16 %v723, %v723
    %v756 = vpack.c.b16 %v724, %v724
    %v757 = vpack.c.b16 %v725, %v725
    %v758 = vpack.c.b16 %v726, %v726
    %v759 = vpack.c.b16 %v727, %v727
    %v760 = vpack.c.b16 %v728, %v728
    %v761 = vpack.c.b16 %v729, %v729
    %v762 = vpack.c.b16 %v730, %v730
    %v763 = vpack.c.b16 %v731, %v731
    %v764 = vpack.c.b16 %v732, %v732
    %v765 = vpack.c.b16 %v733, %v733
    %v766 = vpack.c.b16 %v734, %v734
    %v767 = vpack.c.b16 %v735, %v735
    %v768 = vpack.c.b16 %v736, %v736
    %v769 = vpack.c.b16 %v737, %v737
    %v770 = vpack.c.b16 %v738, %v738
    %vm803 = vcmask 519168
    %804 = vst.msk [vmem:[%s4] sm:$0xf] %vm803, %v739
    %805 = vst.msk [vmem:[%s4 + $0x4] sm:$0xf] %vm803, %v740
    %806 = vst.msk [vmem:[%s4 + $0x8] sm:$0xf] %vm803, %v741
    %807 = vst.msk [vmem:[%s4 + $0xc] sm:$0xf] %vm803, %v742
    %808 = vst.msk [vmem:[%s4 + $0x10] sm:$0xf] %vm803, %v743
    %809 = vst.msk [vmem:[%s4 + $0x14] sm:$0xf] %vm803, %v744
    %810 = vst.msk [vmem:[%s4 + $0x18] sm:$0xf] %vm803, %v745
    %811 = vst.msk [vmem:[%s4 + $0x1c] sm:$0xf] %vm803, %v746
    %812 = vst.msk [vmem:[%s4 + $0x20] sm:$0xf] %vm803, %v747
    %813 = vst.msk [vmem:[%s4 + $0x24] sm:$0xf] %vm803, %v748
    %814 = vst.msk [vmem:[%s4 + $0x28] sm:$0xf] %vm803, %v749
    %815 = vst.msk [vmem:[%s4 + $0x2c] sm:$0xf] %vm803, %v750
    %816 = vst.msk [vmem:[%s4 + $0x30] sm:$0xf] %vm803, %v751
    %817 = vst.msk [vmem:[%s4 + $0x34] sm:$0xf] %vm803, %v752
    %818 = vst.msk [vmem:[%s4 + $0x38] sm:$0xf] %vm803, %v753
    %819 = vst.msk [vmem:[%s4 + $0x3c] sm:$0xf] %vm803, %v754
    %820 = vst.msk [vmem:[%s4 + $0x40] sm:$0xf] %vm803, %v755
    %821 = vst.msk [vmem:[%s4 + $0x44] sm:$0xf] %vm803, %v756
    %822 = vst.msk [vmem:[%s4 + $0x48] sm:$0xf] %vm803, %v757
    %823 = vst.msk [vmem:[%s4 + $0x4c] sm:$0xf] %vm803, %v758
    %824 = vst.msk [vmem:[%s4 + $0x50] sm:$0xf] %vm803, %v759
    %825 = vst.msk [vmem:[%s4 + $0x54] sm:$0xf] %vm803, %v760
    %826 = vst.msk [vmem:[%s4 + $0x58] sm:$0xf] %vm803, %v761
    %827 = vst.msk [vmem:[%s4 + $0x5c] sm:$0xf] %vm803, %v762
    %828 = vst.msk [vmem:[%s4 + $0x60] sm:$0xf] %vm803, %v763
    %829 = vst.msk [vmem:[%s4 + $0x64] sm:$0xf] %vm803, %v764
    %830 = vst.msk [vmem:[%s4 + $0x68] sm:$0xf] %vm803, %v765
    %831 = vst.msk [vmem:[%s4 + $0x6c] sm:$0xf] %vm803, %v766
    %832 = vst.msk [vmem:[%s4 + $0x70] sm:$0xf] %vm803, %v767
    %833 = vst.msk [vmem:[%s4 + $0x74] sm:$0xf] %vm803, %v768
    %834 = vst.msk [vmem:[%s4 + $0x78] sm:$0xf] %vm803, %v769
    %835 = vst.msk [vmem:[%s4 + $0x7c] sm:$0xf] %vm803, %v770
  $region25: #{vit_forward.15} parent=0 // pred_fallthru
    _
  // Predicated region
  $region26: #{vit_forward.15} parent=0 // pred_check
    _
  $region27: #{vit_forward.15} parent=0 // pred_check_branch
    %837 = sbr.rel (0) target = $region29
  $region28: #{vit_forward.15} parent=0 // pred_region
    _
  $region29: #{vit_forward.15} parent=0 // pred_fallthru
    _
  // Predicated region
  $region30: #{vit_forward.15} parent=0 // pred_check
    _
  $region31: #{vit_forward.15} parent=0 // pred_check_branch
    %839 = sbr.rel (0) target = $region33
  $region32: #{vit_forward.15} parent=0 // pred_region
    _
  $region33: #{vit_forward.15} parent=0 // pred_fallthru
    _

// kernel: vit_forward.23
$region0: #{vit_forward.23}
  #allocation0 [shape = 'u32[]', space=smem, size = 0x4, offset = 0x4, fixed_abs, tag = 'smem constant byte address 0x4 - core index']
  #allocation1 [shape = 'u32[144,128]{1,0:T(1,128)}', space=vmem, size = 0x12000, scoped, tag = 'internal scratch']
  #allocation2 [shape = 'bf16[2,64]{1,0:T(2,128)(2,1)}', space=vmem, size = 0x200, scoped, tag = 'scratch operand']
  %s0 = inlined_call_operand.vmem [shape: bf16[2,64], index: 0, kind: input, shape index: {}]
  %s1 = inlined_call_operand.vmem [shape: f32[1,64], index: 1, kind: input, shape index: {}]
  %s2 = inlined_call_operand.vmem [shape: f32[1,64], index: 2, kind: input, shape index: {}]
  %s3 = inlined_call_operand.vmem [shape: bf16[64,128], index: 3, kind: input, shape index: {}]
  %s4 = inlined_call_operand.vmem [shape: f32[1,128], index: 4, kind: input, shape index: {}]
  %s5 = inlined_call_operand.hbm [shape: f32[2,128], index: 5, kind: output, shape index: {}]
  %s6 = sld [smem:[#allocation0]]
  $region34: #{vit_forward.23} parent=0
    _
  %s8 = ssub.s32 1, %s6
  %s9 = scalar_select 0, %s8, %s6
  $region1: #{vit_forward.23} parent=0
    #allocation3 [shape = 'u8[1024]{0}', space=vmem, size = 0x400, scoped, tag = 'output window, operand 0, single buffered']
    #allocation4 [shape = 's32[1]{0}', space=sflag, size = 0x4, scoped, tag = 'scoped memory for vit_forward.23']
    %10 = vsyncpa [#allocation4], 0
    // Predicated region
    $region2: #{vit_forward.23} parent=1 // pred_check
      _
    $region3: #{vit_forward.23} parent=1 // pred_check_branch
      %12 = sbr.rel (0) target = $region5
    $region4: #{vit_forward.23} parent=1 // pred_region
      _
    $region5: #{vit_forward.23} parent=1 // pred_fallthru
      _
    // Predicated region
    $region6: #{vit_forward.23} parent=1 // pred_check
      _
    $region7: #{vit_forward.23} parent=1 // pred_check_branch
      %14 = sbr.rel (0) target = $region9
    $region8: #{vit_forward.23} parent=1 // pred_region
      _
    $region9: #{vit_forward.23} parent=1 // pred_fallthru
      _
    // Predicated region
    $region10: #{vit_forward.23} parent=1 // pred_check
      _
    $region11: #{vit_forward.23} parent=1 // pred_check_branch
      %16 = sbr.rel (0) target = $region13
    $region12: #{vit_forward.23} parent=1 // pred_region
      _
    $region13: #{vit_forward.23} parent=1 // pred_fallthru
      _
    // Predicated region
    $region14: #{vit_forward.23} parent=1 // pred_check
      _
    $region15: #{vit_forward.23} parent=1 // pred_check_branch
      %18 = sbr.rel (0) target = $region17
    $region16: #{vit_forward.23} parent=1 // pred_region
      _
    $region17: #{vit_forward.23} parent=1 // pred_fallthru
      _
    // Predicated region
    $region18: #{vit_forward.23} parent=1 // pred_check
      _
    $region19: #{vit_forward.23} parent=1 // pred_check_branch
      %20 = sbr.rel (0) target = $region21
    $region20: #{vit_forward.23} parent=1 // pred_region
      _
    $region21: #{vit_forward.23} parent=1 // pred_fallthru
      _
    %p22 = scmp.eq.s32.totalorder 0, 0
    // Predicated region
    $region22: #{vit_forward.23} parent=1 // pred_check
      %p23 = pneg %p22
    $region23: #{vit_forward.23} parent=1 // pred_check_branch
      %25 = sbr.rel (%p23) target = $region25
    $region24: #{vit_forward.23} parent=1 // pred_region
      %v26 = vld [vmem:[%s0] sm:$0x1]
      %v27 = vunpack.c.l.bf16 %v26
      %vm28 = vcmask 517120
      %v29 = vsel %vm28, %v27, 0.0
      %30 = vadd.xlane.f32.xlu0 %v29
      %v31 = vpop.xlane.xlu0 %30
      %v32 = vrcp.pop 64.0
      %v33 = vmul.f32 %v31, %v32
      %v34 = vsub.f32 %v27, %v33
      %v35 = vmul.f32 %v34, %v34
      %v36 = vsel %vm28, %v35, 0.0
      %37 = vadd.xlane.f32.xlu0 %v36
      %v38 = vpop.xlane.xlu0 %37
      %v39 = vmul.f32 %v38, %v32
      %v40 = vadd.f32 %v39, 1e-06
      %v41 = vrsqrt.pop %v40
      %v42 = vmul.f32 %v34, %v41
      %v43 = vld [vmem:[%s1] sm:$0x1]
      %v45 = vlaneseq
      %v46 = vshrl.u32 %v45, 7
      %v47 = vsub.s32 0, %v46
      %v48 = vrot.slane %v43, %v47
      %v50 = vmul.f32 %v42, %v48
      %v51 = vld [vmem:[%s2] sm:$0x1]
      %v53 = vlaneseq
      %v54 = vshrl.u32 %v53, 7
      %v55 = vsub.s32 0, %v54
      %v56 = vrot.slane %v51, %v55
      %v58 = vadd.f32 %v50, %v56
      %v59 = vpack.c.bf16 %v58, %v58
      %vm60 = vcmask 516096
      %61 = vst.msk [vmem:[#allocation2] sm:$0x1] %vm60, %v59
    $region25: #{vit_forward.23} parent=1 // pred_fallthru
      _
    %v62 = vld [vmem:[#allocation2] sm:$0x1]
    %v63 = vld [vmem:[%s3] sm:$0xf]
    %v64 = vld [vmem:[%s3 + $0x4] sm:$0xf]
    %v65 = vld [vmem:[%s3 + $0x8] sm:$0xf]
    %v66 = vld [vmem:[%s3 + $0xc] sm:$0xf]
    %v67 = vld [vmem:[%s3 + $0x10] sm:$0xf]
    %v68 = vld [vmem:[%s3 + $0x14] sm:$0xf]
    %v69 = vld [vmem:[%s3 + $0x18] sm:$0xf]
    %v70 = vld [vmem:[%s3 + $0x1c] sm:$0xf]
    %v71 = vld [vmem:[%s4] sm:$0x1]
    %v73 = vlaneseq
    %v74 = vshrl.u32 %v73, 7
    %v75 = vsub.s32 0, %v74
    %v76 = vrot.slane %v71, %v75
    %v86 = vunpack.c.l.b16 %v63
    %v87 = vunpack.c.l.b16 %v64
    %v88 = vunpack.c.l.b16 %v65
    %v89 = vunpack.c.l.b16 %v66
    %v90 = vunpack.c.l.b16 %v67
    %v91 = vunpack.c.l.b16 %v68
    %v92 = vunpack.c.l.b16 %v69
    %v93 = vunpack.c.l.b16 %v70
    %v94 = vpack.c.b16 %v87, %v86
    %v95 = vpack.c.b16 %v89, %v88
    %v96 = vpack.c.b16 %v91, %v90
    %v97 = vpack.c.b16 %v93, %v92
    %vm102 = vcmask 523264
    %v104 = vsel %vm102, %v62, 0
    %106 = vmatprep.subr.bf16.mxu0 0
    %107 = vmatpush1.bf16.msra.mxu0 0
    %108 = vmatprep.subr.bf16.mxu0 0
    %109 = vmatpush1.bf16.msra.mxu0 0
    %110 = vmatprep.subr.bf16.mxu0 0
    %111 = vmatpush1.bf16.msra.mxu0 0
    %112 = vmatprep.subr.bf16.mxu0 0
    %113 = vmatpush1.bf16.msra.mxu0 0
    %114 = vmatprep.subr.bf16.mxu0 0
    %115 = vmatpush1.bf16.msra.mxu0 %v97
    %116 = vmatprep.subr.bf16.mxu0 0
    %117 = vmatpush1.bf16.msra.mxu0 %v96
    %118 = vmatprep.subr.bf16.mxu0 0
    %119 = vmatpush1.bf16.msra.mxu0 %v95
    %120 = vmatprep.subr.bf16.mxu0 0
    %121 = vmatpush1.bf16.msra.mxu0 %v94
    %122 = vmatprep.subr.bf16.mxu0 0
    %123 = vmatpush2.bf16.msra.mxu0 0
    %124 = vmatprep.subr.bf16.mxu0 0
    %125 = vmatpush2.bf16.msra.mxu0 0
    %126 = vmatprep.subr.bf16.mxu0 0
    %127 = vmatpush2.bf16.msra.mxu0 0
    %128 = vmatprep.subr.bf16.mxu0 0
    %129 = vmatpush2.bf16.msra.mxu0 0
    %130 = vmatprep.subr.bf16.mxu0 0
    %131 = vmatpush2.bf16.msra.mxu0 0
    %132 = vmatprep.subr.bf16.mxu0 0
    %133 = vmatpush2.bf16.msra.mxu0 0
    %134 = vmatprep.subr.bf16.mxu0 0
    %135 = vmatpush2.bf16.msra.mxu0 0
    %136 = vmatprep.subr.bf16.mxu0 0
    %137 = vmatpush2.bf16.msra.mxu0 0
    %138 = vmatprep.mubr.bf16.mxu0 0
    %139 = vmatmul.mubr.bf16.gmra.mxu0 %v104
    %v140 = vpop.f32.mrf.mxu0
    %v141 = vadd.f32 %v76, %v140
    %v142 = vpop.f32.mrf.mxu0
    %v143 = vpop.f32.mrf.mxu0
    %v144 = vpop.f32.mrf.mxu0
    %145 = vdwg.mxu0
    %146 = vst [vmem:[#allocation3] sm:$0x3] %v141
    // Predicated region
    $region26: #{vit_forward.23} parent=1 // pred_check
      _
    $region27: #{vit_forward.23} parent=1 // pred_check_branch
      %148 = sbr.rel (0) target = $region29
    $region28: #{vit_forward.23} parent=1 // pred_region
      %s150 = ssub.s32 32, 32
      %151 = vsyncadd [#allocation4], %s150
      %s153 = sshll.u32 [#allocation3], 4
      %s154 = int_to_ptr.vmem [resolvable:$true] %s153
      %156 = dma.vmem_to_hbm [thread:$0]  %s154, 32, %s5, [#allocation4]
    $region29: #{vit_forward.23} parent=1 // pred_fallthru
      _
    // Predicated region
    $region30: #{vit_forward.23} parent=1 // pred_check
      _
    $region31: #{vit_forward.23} parent=1 // pred_check_branch
      %158 = sbr.rel (0) target = $region33
    $region32: #{vit_forward.23} parent=1 // pred_region
      %159 = dma.done [#allocation4], 32
    $region33: #{vit_forward.23} parent=1 // pred_fallthru
      _
    %160 = vsyncpa [#allocation4], 1

// kernel: vit_forward.17
$region0: #{vit_forward.17}
  #allocation0 [shape = 'u32[]', space=smem, size = 0x4, offset = 0x4, fixed_abs, tag = 'smem constant byte address 0x4 - core index']
  #allocation1 [shape = 'u32[144,128]{1,0:T(1,128)}', space=vmem, size = 0x12000, scoped, tag = 'internal scratch']
  #allocation2 [shape = 'f32[256,64]{1,0:T(8,128)}', space=vmem, size = 0x20000, scoped, tag = 'scratch operand']
  %s0 = inlined_call_operand.vmem [shape: bf16[256,128], index: 0, kind: input, shape index: {}]
  %s1 = inlined_call_operand.vmem [shape: bf16[128,64], index: 1, kind: input, shape index: {}]
  %s2 = inlined_call_operand.vmem [shape: f32[1,64], index: 2, kind: input, shape index: {}]
  %s3 = inlined_call_operand.vmem [shape: bf16[256,64], index: 3, kind: input, shape index: {}]
  %s4 = inlined_call_operand.vmem [shape: bf16[256,64], index: 4, kind: output, shape index: {}]
  %s5 = sld [smem:[#allocation0]]
  $region34: #{vit_forward.17} parent=0
    _
  %s7 = ssub.s32 1, %s5
  %s8 = scalar_select 0, %s7, %s5
  // Predicated region
  $region2: #{vit_forward.17} parent=0 // pred_check
    _
  $region3: #{vit_forward.17} parent=0 // pred_check_branch
    %10 = sbr.rel (0) target = $region5
  $region4: #{vit_forward.17} parent=0 // pred_region
    _
  $region5: #{vit_forward.17} parent=0 // pred_fallthru
    _
  // Predicated region
  $region6: #{vit_forward.17} parent=0 // pred_check
    _
  $region7: #{vit_forward.17} parent=0 // pred_check_branch
    %12 = sbr.rel (0) target = $region9
  $region8: #{vit_forward.17} parent=0 // pred_region
    _
  $region9: #{vit_forward.17} parent=0 // pred_fallthru
    _
  // Predicated region
  $region10: #{vit_forward.17} parent=0 // pred_check
    _
  $region11: #{vit_forward.17} parent=0 // pred_check_branch
    %14 = sbr.rel (0) target = $region13
  $region12: #{vit_forward.17} parent=0 // pred_region
    _
  $region13: #{vit_forward.17} parent=0 // pred_fallthru
    _
  // Predicated region
  $region14: #{vit_forward.17} parent=0 // pred_check
    _
  $region15: #{vit_forward.17} parent=0 // pred_check_branch
    %16 = sbr.rel (0) target = $region17
  $region16: #{vit_forward.17} parent=0 // pred_region
    _
  $region17: #{vit_forward.17} parent=0 // pred_fallthru
    _
  %p18 = scmp.eq.s32.totalorder 0, 0
  // Predicated region
  $region18: #{vit_forward.17} parent=0 // pred_check
    %p19 = pneg %p18
  $region19: #{vit_forward.17} parent=0 // pred_check_branch
    %21 = sbr.rel (%p19) target = $region21
  $region20: #{vit_forward.17} parent=0 // pred_region
    %vm22 = vcmask 523264
    %23 = vst.msk [vmem:[#allocation2] sm:$0xff] %vm22, 0.0
    %24 = vst.msk [vmem:[#allocation2 + $0x8] sm:$0xff] %vm22, 0.0
    %25 = vst.msk [vmem:[#allocation2 + $0x10] sm:$0xff] %vm22, 0.0
    %26 = vst.msk [vmem:[#allocation2 + $0x18] sm:$0xff] %vm22, 0.0
    %27 = vst.msk [vmem:[#allocation2 + $0x20] sm:$0xff] %vm22, 0.0
    %28 = vst.msk [vmem:[#allocation2 + $0x28] sm:$0xff] %vm22, 0.0
    %29 = vst.msk [vmem:[#allocation2 + $0x30] sm:$0xff] %vm22, 0.0
    %30 = vst.msk [vmem:[#allocation2 + $0x38] sm:$0xff] %vm22, 0.0
    %31 = vst.msk [vmem:[#allocation2 + $0x40] sm:$0xff] %vm22, 0.0
    %32 = vst.msk [vmem:[#allocation2 + $0x48] sm:$0xff] %vm22, 0.0
    %33 = vst.msk [vmem:[#allocation2 + $0x50] sm:$0xff] %vm22, 0.0
    %34 = vst.msk [vmem:[#allocation2 + $0x58] sm:$0xff] %vm22, 0.0
    %35 = vst.msk [vmem:[#allocation2 + $0x60] sm:$0xff] %vm22, 0.0
    %36 = vst.msk [vmem:[#allocation2 + $0x68] sm:$0xff] %vm22, 0.0
    %37 = vst.msk [vmem:[#allocation2 + $0x70] sm:$0xff] %vm22, 0.0
    %38 = vst.msk [vmem:[#allocation2 + $0x78] sm:$0xff] %vm22, 0.0
    %39 = vst.msk [vmem:[#allocation2 + $0x80] sm:$0xff] %vm22, 0.0
    %40 = vst.msk [vmem:[#allocation2 + $0x88] sm:$0xff] %vm22, 0.0
    %41 = vst.msk [vmem:[#allocation2 + $0x90] sm:$0xff] %vm22, 0.0
    %42 = vst.msk [vmem:[#allocation2 + $0x98] sm:$0xff] %vm22, 0.0
    %43 = vst.msk [vmem:[#allocation2 + $0xa0] sm:$0xff] %vm22, 0.0
    %44 = vst.msk [vmem:[#allocation2 + $0xa8] sm:$0xff] %vm22, 0.0
    %45 = vst.msk [vmem:[#allocation2 + $0xb0] sm:$0xff] %vm22, 0.0
    %46 = vst.msk [vmem:[#allocation2 + $0xb8] sm:$0xff] %vm22, 0.0
    %47 = vst.msk [vmem:[#allocation2 + $0xc0] sm:$0xff] %vm22, 0.0
    %48 = vst.msk [vmem:[#allocation2 + $0xc8] sm:$0xff] %vm22, 0.0
    %49 = vst.msk [vmem:[#allocation2 + $0xd0] sm:$0xff] %vm22, 0.0
    %50 = vst.msk [vmem:[#allocation2 + $0xd8] sm:$0xff] %vm22, 0.0
    %51 = vst.msk [vmem:[#allocation2 + $0xe0] sm:$0xff] %vm22, 0.0
    %52 = vst.msk [vmem:[#allocation2 + $0xe8] sm:$0xff] %vm22, 0.0
    %53 = vst.msk [vmem:[#allocation2 + $0xf0] sm:$0xff] %vm22, 0.0
    %54 = vst.msk [vmem:[#allocation2 + $0xf8] sm:$0xff] %vm22, 0.0
  $region21: #{vit_forward.17} parent=0 // pred_fallthru
    _
  %v55 = vld [vmem:[#allocation2] sm:$0xff]
  %v56 = vld [vmem:[#allocation2 + $0x8] sm:$0xff]
  %v57 = vld [vmem:[#allocation2 + $0x10] sm:$0xff]
  %v58 = vld [vmem:[#allocation2 + $0x18] sm:$0xff]
  %v59 = vld [vmem:[#allocation2 + $0x20] sm:$0xff]
  %v60 = vld [vmem:[#allocation2 + $0x28] sm:$0xff]
  %v61 = vld [vmem:[#allocation2 + $0x30] sm:$0xff]
  %v62 = vld [vmem:[#allocation2 + $0x38] sm:$0xff]
  %v63 = vld [vmem:[#allocation2 + $0x40] sm:$0xff]
  %v64 = vld [vmem:[#allocation2 + $0x48] sm:$0xff]
  %v65 = vld [vmem:[#allocation2 + $0x50] sm:$0xff]
  %v66 = vld [vmem:[#allocation2 + $0x58] sm:$0xff]
  %v67 = vld [vmem:[#allocation2 + $0x60] sm:$0xff]
  %v68 = vld [vmem:[#allocation2 + $0x68] sm:$0xff]
  %v69 = vld [vmem:[#allocation2 + $0x70] sm:$0xff]
  %v70 = vld [vmem:[#allocation2 + $0x78] sm:$0xff]
  %v71 = vld [vmem:[#allocation2 + $0x80] sm:$0xff]
  %v72 = vld [vmem:[#allocation2 + $0x88] sm:$0xff]
  %v73 = vld [vmem:[#allocation2 + $0x90] sm:$0xff]
  %v74 = vld [vmem:[#allocation2 + $0x98] sm:$0xff]
  %v75 = vld [vmem:[#allocation2 + $0xa0] sm:$0xff]
  %v76 = vld [vmem:[#allocation2 + $0xa8] sm:$0xff]
  %v77 = vld [vmem:[#allocation2 + $0xb0] sm:$0xff]
  %v78 = vld [vmem:[#allocation2 + $0xb8] sm:$0xff]
  %v79 = vld [vmem:[#allocation2 + $0xc0] sm:$0xff]
  %v80 = vld [vmem:[#allocation2 + $0xc8] sm:$0xff]
  %v81 = vld [vmem:[#allocation2 + $0xd0] sm:$0xff]
  %v82 = vld [vmem:[#allocation2 + $0xd8] sm:$0xff]
  %v83 = vld [vmem:[#allocation2 + $0xe0] sm:$0xff]
  %v84 = vld [vmem:[#allocation2 + $0xe8] sm:$0xff]
  %v85 = vld [vmem:[#allocation2 + $0xf0] sm:$0xff]
  %v86 = vld [vmem:[#allocation2 + $0xf8] sm:$0xff]
  %v87 = vld [vmem:[%s0] sm:$0xf]
  %v88 = vld [vmem:[%s0 + $0x4] sm:$0xf]
  %v89 = vld [vmem:[%s0 + $0x8] sm:$0xf]
  %v90 = vld [vmem:[%s0 + $0xc] sm:$0xf]
  %v91 = vld [vmem:[%s0 + $0x10] sm:$0xf]
  %v92 = vld [vmem:[%s0 + $0x14] sm:$0xf]
  %v93 = vld [vmem:[%s0 + $0x18] sm:$0xf]
  %v94 = vld [vmem:[%s0 + $0x1c] sm:$0xf]
  %v95 = vld [vmem:[%s0 + $0x20] sm:$0xf]
  %v96 = vld [vmem:[%s0 + $0x24] sm:$0xf]
  %v97 = vld [vmem:[%s0 + $0x28] sm:$0xf]
  %v98 = vld [vmem:[%s0 + $0x2c] sm:$0xf]
  %v99 = vld [vmem:[%s0 + $0x30] sm:$0xf]
  %v100 = vld [vmem:[%s0 + $0x34] sm:$0xf]
  %v101 = vld [vmem:[%s0 + $0x38] sm:$0xf]
  %v102 = vld [vmem:[%s0 + $0x3c] sm:$0xf]
  %v103 = vld [vmem:[%s0 + $0x40] sm:$0xf]
  %v104 = vld [vmem:[%s0 + $0x44] sm:$0xf]
  %v105 = vld [vmem:[%s0 + $0x48] sm:$0xf]
  %v106 = vld [vmem:[%s0 + $0x4c] sm:$0xf]
  %v107 = vld [vmem:[%s0 + $0x50] sm:$0xf]
  %v108 = vld [vmem:[%s0 + $0x54] sm:$0xf]
  %v109 = vld [vmem:[%s0 + $0x58] sm:$0xf]
  %v110 = vld [vmem:[%s0 + $0x5c] sm:$0xf]
  %v111 = vld [vmem:[%s0 + $0x60] sm:$0xf]
  %v112 = vld [vmem:[%s0 + $0x64] sm:$0xf]
  %v113 = vld [vmem:[%s0 + $0x68] sm:$0xf]
  %v114 = vld [vmem:[%s0 + $0x6c] sm:$0xf]
  %v115 = vld [vmem:[%s0 + $0x70] sm:$0xf]
  %v116 = vld [vmem:[%s0 + $0x74] sm:$0xf]
  %v117 = vld [vmem:[%s0 + $0x78] sm:$0xf]
  %v118 = vld [vmem:[%s0 + $0x7c] sm:$0xf]
  %v119 = vld [vmem:[%s1] sm:$0xf]
  %v120 = vld [vmem:[%s1 + $0x4] sm:$0xf]
  %v121 = vld [vmem:[%s1 + $0x8] sm:$0xf]
  %v122 = vld [vmem:[%s1 + $0xc] sm:$0xf]
  %v123 = vld [vmem:[%s1 + $0x10] sm:$0xf]
  %v124 = vld [vmem:[%s1 + $0x14] sm:$0xf]
  %v125 = vld [vmem:[%s1 + $0x18] sm:$0xf]
  %v126 = vld [vmem:[%s1 + $0x1c] sm:$0xf]
  %v127 = vld [vmem:[%s1 + $0x20] sm:$0xf]
  %v128 = vld [vmem:[%s1 + $0x24] sm:$0xf]
  %v129 = vld [vmem:[%s1 + $0x28] sm:$0xf]
  %v130 = vld [vmem:[%s1 + $0x2c] sm:$0xf]
  %v131 = vld [vmem:[%s1 + $0x30] sm:$0xf]
  %v132 = vld [vmem:[%s1 + $0x34] sm:$0xf]
  %v133 = vld [vmem:[%s1 + $0x38] sm:$0xf]
  %v134 = vld [vmem:[%s1 + $0x3c] sm:$0xf]
  %v167 = vunpack.c.l.b16 %v87
  %v168 = vunpack.c.l.b16 %v88
  %v169 = vunpack.c.l.b16 %v89
  %v170 = vunpack.c.l.b16 %v90
  %v171 = vunpack.c.l.b16 %v91
  %v172 = vunpack.c.l.b16 %v92
  %v173 = vunpack.c.l.b16 %v93
  %v174 = vunpack.c.l.b16 %v94
  %v175 = vunpack.c.l.b16 %v95
  %v176 = vunpack.c.l.b16 %v96
  %v177 = vunpack.c.l.b16 %v97
  %v178 = vunpack.c.l.b16 %v98
  %v179 = vunpack.c.l.b16 %v99
  %v180 = vunpack.c.l.b16 %v100
  %v181 = vunpack.c.l.b16 %v101
  %v182 = vunpack.c.l.b16 %v102
  %v183 = vunpack.c.l.b16 %v103
  %v184 = vunpack.c.l.b16 %v104
  %v185 = vunpack.c.l.b16 %v105
  %v186 = vunpack.c.l.b16 %v106
  %v187 = vunpack.c.l.b16 %v107
  %v188 = vunpack.c.l.b16 %v108
  %v189 = vunpack.c.l.b16 %v109
  %v190 = vunpack.c.l.b16 %v110
  %v191 = vunpack.c.l.b16 %v111
  %v192 = vunpack.c.l.b16 %v112
  %v193 = vunpack.c.l.b16 %v113
  %v194 = vunpack.c.l.b16 %v114
  %v195 = vunpack.c.l.b16 %v115
  %v196 = vunpack.c.l.b16 %v116
  %v197 = vunpack.c.l.b16 %v117
  %v198 = vunpack.c.l.b16 %v118
  %v199 = vpack.c.b16 %v168, %v167
  %v200 = vpack.c.b16 %v170, %v169
  %v201 = vpack.c.b16 %v172, %v171
  %v202 = vpack.c.b16 %v174, %v173
  %v203 = vpack.c.b16 %v176, %v175
  %v204 = vpack.c.b16 %v178, %v177
  %v205 = vpack.c.b16 %v180, %v179
  %v206 = vpack.c.b16 %v182, %v181
  %v207 = vpack.c.b16 %v184, %v183
  %v208 = vpack.c.b16 %v186, %v185
  %v209 = vpack.c.b16 %v188, %v187
  %v210 = vpack.c.b16 %v190, %v189
  %v211 = vpack.c.b16 %v192, %v191
  %v212 = vpack.c.b16 %v194, %v193
  %v213 = vpack.c.b16 %v196, %v195
  %v214 = vpack.c.b16 %v198, %v197
  %v247 = vunpack.c.l.b16 %v119
  %v248 = vunpack.c.l.b16 %v120
  %v249 = vunpack.c.l.b16 %v121
  %v250 = vunpack.c.l.b16 %v122
  %v251 = vunpack.c.l.b16 %v123
  %v252 = vunpack.c.l.b16 %v124
  %v253 = vunpack.c.l.b16 %v125
  %v254 = vunpack.c.l.b16 %v126
  %v255 = vunpack.c.l.b16 %v127
  %v256 = vunpack.c.l.b16 %v128
  %v257 = vunpack.c.l.b16 %v129
  %v258 = vunpack.c.l.b16 %v130
  %v259 = vunpack.c.l.b16 %v131
  %v260 = vunpack.c.l.b16 %v132
  %v261 = vunpack.c.l.b16 %v133
  %v262 = vunpack.c.l.b16 %v134
  %v263 = vpack.c.b16 %v248, %v247
  %v264 = vpack.c.b16 %v250, %v249
  %v265 = vpack.c.b16 %v252, %v251
  %v266 = vpack.c.b16 %v254, %v253
  %v267 = vpack.c.b16 %v256, %v255
  %v268 = vpack.c.b16 %v258, %v257
  %v269 = vpack.c.b16 %v260, %v259
  %v270 = vpack.c.b16 %v262, %v261
  %279 = vmatprep.subr.bf16.mxu0 0
  %280 = vmatpush1.bf16.msra.mxu0 %v270
  %281 = vmatprep.subr.bf16.mxu0 0
  %282 = vmatpush1.bf16.msra.mxu0 %v269
  %283 = vmatprep.subr.bf16.mxu0 0
  %284 = vmatpush1.bf16.msra.mxu0 %v268
  %285 = vmatprep.subr.bf16.mxu0 0
  %286 = vmatpush1.bf16.msra.mxu0 %v267
  %287 = vmatprep.subr.bf16.mxu0 0
  %288 = vmatpush1.bf16.msra.mxu0 %v266
  %289 = vmatprep.subr.bf16.mxu0 0
  %290 = vmatpush1.bf16.msra.mxu0 %v265
  %291 = vmatprep.subr.bf16.mxu0 0
  %292 = vmatpush1.bf16.msra.mxu0 %v264
  %293 = vmatprep.subr.bf16.mxu0 0
  %294 = vmatpush1.bf16.msra.mxu0 %v263
  %295 = vmatprep.subr.bf16.mxu0 0
  %296 = vmatpush2.bf16.msra.mxu0 0
  %297 = vmatprep.subr.bf16.mxu0 0
  %298 = vmatpush2.bf16.msra.mxu0 0
  %299 = vmatprep.subr.bf16.mxu0 0
  %300 = vmatpush2.bf16.msra.mxu0 0
  %301 = vmatprep.subr.bf16.mxu0 0
  %302 = vmatpush2.bf16.msra.mxu0 0
  %303 = vmatprep.subr.bf16.mxu0 0
  %304 = vmatpush2.bf16.msra.mxu0 0
  %305 = vmatprep.subr.bf16.mxu0 0
  %306 = vmatpush2.bf16.msra.mxu0 0
  %307 = vmatprep.subr.bf16.mxu0 0
  %308 = vmatpush2.bf16.msra.mxu0 0
  %309 = vmatprep.subr.bf16.mxu0 0
  %310 = vmatpush2.bf16.msra.mxu0 0
  %311 = vmatprep.mubr.bf16.mxu0 0
  %312 = vmatmul.mubr.bf16.gmra.mxu0 %v199
  %v313 = vpop.f32.mrf.mxu0
  %v314 = vadd.f32 0.0, %v313
  %v315 = vpop.f32.mrf.mxu0
  %v316 = vpop.f32.mrf.mxu0
  %v317 = vadd.f32 0.0, %v316
  %v318 = vpop.f32.mrf.mxu0
  %319 = vmatprep.mubr.bf16.mxu0 0
  %320 = vmatmul.mubr.bf16.gmra.mxu0 %v200
  %v321 = vpop.f32.mrf.mxu0
  %v322 = vadd.f32 0.0, %v321
  %v323 = vpop.f32.mrf.mxu0
  %v324 = vpop.f32.mrf.mxu0
  %v325 = vadd.f32 0.0, %v324
  %v326 = vpop.f32.mrf.mxu0
  %327 = vmatprep.mubr.bf16.mxu0 0
  %328 = vmatmul.mubr.bf16.gmra.mxu0 %v201
  %v329 = vpop.f32.mrf.mxu0
  %v330 = vadd.f32 0.0, %v329
  %v331 = vpop.f32.mrf.mxu0
  %v332 = vpop.f32.mrf.mxu0
  %v333 = vadd.f32 0.0, %v332
  %v334 = vpop.f32.mrf.mxu0
  %335 = vmatprep.mubr.bf16.mxu0 0
  %336 = vmatmul.mubr.bf16.gmra.mxu0 %v202
  %v337 = vpop.f32.mrf.mxu0
  %v338 = vadd.f32 0.0, %v337
  %v339 = vpop.f32.mrf.mxu0
  %v340 = vpop.f32.mrf.mxu0
  %v341 = vadd.f32 0.0, %v340
  %v342 = vpop.f32.mrf.mxu0
  %343 = vmatprep.mubr.bf16.mxu0 0
  %344 = vmatmul.mubr.bf16.gmra.mxu0 %v203
  %v345 = vpop.f32.mrf.mxu0
  %v346 = vadd.f32 0.0, %v345
  %v347 = vpop.f32.mrf.mxu0
  %v348 = vpop.f32.mrf.mxu0
  %v349 = vadd.f32 0.0, %v348
  %v350 = vpop.f32.mrf.mxu0
  %351 = vmatprep.mubr.bf16.mxu0 0
  %352 = vmatmul.mubr.bf16.gmra.mxu0 %v204
  %v353 = vpop.f32.mrf.mxu0
  %v354 = vadd.f32 0.0, %v353
  %v355 = vpop.f32.mrf.mxu0
  %v356 = vpop.f32.mrf.mxu0
  %v357 = vadd.f32 0.0, %v356
  %v358 = vpop.f32.mrf.mxu0
  %359 = vmatprep.mubr.bf16.mxu0 0
  %360 = vmatmul.mubr.bf16.gmra.mxu0 %v205
  %v361 = vpop.f32.mrf.mxu0
  %v362 = vadd.f32 0.0, %v361
  %v363 = vpop.f32.mrf.mxu0
  %v364 = vpop.f32.mrf.mxu0
  %v365 = vadd.f32 0.0, %v364
  %v366 = vpop.f32.mrf.mxu0
  %367 = vmatprep.mubr.bf16.mxu0 0
  %368 = vmatmul.mubr.bf16.gmra.mxu0 %v206
  %v369 = vpop.f32.mrf.mxu0
  %v370 = vadd.f32 0.0, %v369
  %v371 = vpop.f32.mrf.mxu0
  %v372 = vpop.f32.mrf.mxu0
  %v373 = vadd.f32 0.0, %v372
  %v374 = vpop.f32.mrf.mxu0
  %375 = vmatprep.mubr.bf16.mxu0 0
  %376 = vmatmul.mubr.bf16.gmra.mxu0 %v207
  %v377 = vpop.f32.mrf.mxu0
  %v378 = vadd.f32 0.0, %v377
  %v379 = vpop.f32.mrf.mxu0
  %v380 = vpop.f32.mrf.mxu0
  %v381 = vadd.f32 0.0, %v380
  %v382 = vpop.f32.mrf.mxu0
  %383 = vmatprep.mubr.bf16.mxu0 0
  %384 = vmatmul.mubr.bf16.gmra.mxu0 %v208
  %v385 = vpop.f32.mrf.mxu0
  %v386 = vadd.f32 0.0, %v385
  %v387 = vpop.f32.mrf.mxu0
  %v388 = vpop.f32.mrf.mxu0
  %v389 = vadd.f32 0.0, %v388
  %v390 = vpop.f32.mrf.mxu0
  %391 = vmatprep.mubr.bf16.mxu0 0
  %392 = vmatmul.mubr.bf16.gmra.mxu0 %v209
  %v393 = vpop.f32.mrf.mxu0
  %v394 = vadd.f32 0.0, %v393
  %v395 = vpop.f32.mrf.mxu0
  %v396 = vpop.f32.mrf.mxu0
  %v397 = vadd.f32 0.0, %v396
  %v398 = vpop.f32.mrf.mxu0
  %399 = vmatprep.mubr.bf16.mxu0 0
  %400 = vmatmul.mubr.bf16.gmra.mxu0 %v210
  %v401 = vpop.f32.mrf.mxu0
  %v402 = vadd.f32 0.0, %v401
  %v403 = vpop.f32.mrf.mxu0
  %v404 = vpop.f32.mrf.mxu0
  %v405 = vadd.f32 0.0, %v404
  %v406 = vpop.f32.mrf.mxu0
  %407 = vmatprep.mubr.bf16.mxu0 0
  %408 = vmatmul.mubr.bf16.gmra.mxu0 %v211
  %v409 = vpop.f32.mrf.mxu0
  %v410 = vadd.f32 0.0, %v409
  %v411 = vpop.f32.mrf.mxu0
  %v412 = vpop.f32.mrf.mxu0
  %v413 = vadd.f32 0.0, %v412
  %v414 = vpop.f32.mrf.mxu0
  %415 = vmatprep.mubr.bf16.mxu0 0
  %416 = vmatmul.mubr.bf16.gmra.mxu0 %v212
  %v417 = vpop.f32.mrf.mxu0
  %v418 = vadd.f32 0.0, %v417
  %v419 = vpop.f32.mrf.mxu0
  %v420 = vpop.f32.mrf.mxu0
  %v421 = vadd.f32 0.0, %v420
  %v422 = vpop.f32.mrf.mxu0
  %423 = vmatprep.mubr.bf16.mxu0 0
  %424 = vmatmul.mubr.bf16.gmra.mxu0 %v213
  %v425 = vpop.f32.mrf.mxu0
  %v426 = vadd.f32 0.0, %v425
  %v427 = vpop.f32.mrf.mxu0
  %v428 = vpop.f32.mrf.mxu0
  %v429 = vadd.f32 0.0, %v428
  %v430 = vpop.f32.mrf.mxu0
  %431 = vmatprep.mubr.bf16.mxu0 0
  %432 = vmatmul.mubr.bf16.gmra.mxu0 %v214
  %v433 = vpop.f32.mrf.mxu0
  %v434 = vadd.f32 0.0, %v433
  %v435 = vpop.f32.mrf.mxu0
  %v436 = vpop.f32.mrf.mxu0
  %v437 = vadd.f32 0.0, %v436
  %v438 = vpop.f32.mrf.mxu0
  %439 = vdwg.mxu0
  %v440 = vadd.f32 %v55, %v314
  %v441 = vadd.f32 %v56, %v317
  %v442 = vadd.f32 %v57, %v322
  %v443 = vadd.f32 %v58, %v325
  %v444 = vadd.f32 %v59, %v330
  %v445 = vadd.f32 %v60, %v333
  %v446 = vadd.f32 %v61, %v338
  %v447 = vadd.f32 %v62, %v341
  %v448 = vadd.f32 %v63, %v346
  %v449 = vadd.f32 %v64, %v349
  %v450 = vadd.f32 %v65, %v354
  %v451 = vadd.f32 %v66, %v357
  %v452 = vadd.f32 %v67, %v362
  %v453 = vadd.f32 %v68, %v365
  %v454 = vadd.f32 %v69, %v370
  %v455 = vadd.f32 %v70, %v373
  %v456 = vadd.f32 %v71, %v378
  %v457 = vadd.f32 %v72, %v381
  %v458 = vadd.f32 %v73, %v386
  %v459 = vadd.f32 %v74, %v389
  %v460 = vadd.f32 %v75, %v394
  %v461 = vadd.f32 %v76, %v397
  %v462 = vadd.f32 %v77, %v402
  %v463 = vadd.f32 %v78, %v405
  %v464 = vadd.f32 %v79, %v410
  %v465 = vadd.f32 %v80, %v413
  %v466 = vadd.f32 %v81, %v418
  %v467 = vadd.f32 %v82, %v421
  %v468 = vadd.f32 %v83, %v426
  %v469 = vadd.f32 %v84, %v429
  %v470 = vadd.f32 %v85, %v434
  %v471 = vadd.f32 %v86, %v437
  %vm472 = vcmask 523264
  %473 = vst.msk [vmem:[#allocation2] sm:$0xff] %vm472, %v440
  %474 = vst.msk [vmem:[#allocation2 + $0x8] sm:$0xff] %vm472, %v441
  %475 = vst.msk [vmem:[#allocation2 + $0x10] sm:$0xff] %vm472, %v442
  %476 = vst.msk [vmem:[#allocation2 + $0x18] sm:$0xff] %vm472, %v443
  %477 = vst.msk [vmem:[#allocation2 + $0x20] sm:$0xff] %vm472, %v444
  %478 = vst.msk [vmem:[#allocation2 + $0x28] sm:$0xff] %vm472, %v445
  %479 = vst.msk [vmem:[#allocation2 + $0x30] sm:$0xff] %vm472, %v446
  %480 = vst.msk [vmem:[#allocation2 + $0x38] sm:$0xff] %vm472, %v447
  %481 = vst.msk [vmem:[#allocation2 + $0x40] sm:$0xff] %vm472, %v448
  %482 = vst.msk [vmem:[#allocation2 + $0x48] sm:$0xff] %vm472, %v449
  %483 = vst.msk [vmem:[#allocation2 + $0x50] sm:$0xff] %vm472, %v450
  %484 = vst.msk [vmem:[#allocation2 + $0x58] sm:$0xff] %vm472, %v451
  %485 = vst.msk [vmem:[#allocation2 + $0x60] sm:$0xff] %vm472, %v452
  %486 = vst.msk [vmem:[#allocation2 + $0x68] sm:$0xff] %vm472, %v453
  %487 = vst.msk [vmem:[#allocation2 + $0x70] sm:$0xff] %vm472, %v454
  %488 = vst.msk [vmem:[#allocation2 + $0x78] sm:$0xff] %vm472, %v455
  %489 = vst.msk [vmem:[#allocation2 + $0x80] sm:$0xff] %vm472, %v456
  %490 = vst.msk [vmem:[#allocation2 + $0x88] sm:$0xff] %vm472, %v457
  %491 = vst.msk [vmem:[#allocation2 + $0x90] sm:$0xff] %vm472, %v458
  %492 = vst.msk [vmem:[#allocation2 + $0x98] sm:$0xff] %vm472, %v459
  %493 = vst.msk [vmem:[#allocation2 + $0xa0] sm:$0xff] %vm472, %v460
  %494 = vst.msk [vmem:[#allocation2 + $0xa8] sm:$0xff] %vm472, %v461
  %495 = vst.msk [vmem:[#allocation2 + $0xb0] sm:$0xff] %vm472, %v462
  %496 = vst.msk [vmem:[#allocation2 + $0xb8] sm:$0xff] %vm472, %v463
  %497 = vst.msk [vmem:[#allocation2 + $0xc0] sm:$0xff] %vm472, %v464
  %498 = vst.msk [vmem:[#allocation2 + $0xc8] sm:$0xff] %vm472, %v465
  %499 = vst.msk [vmem:[#allocation2 + $0xd0] sm:$0xff] %vm472, %v466
  %500 = vst.msk [vmem:[#allocation2 + $0xd8] sm:$0xff] %vm472, %v467
  %501 = vst.msk [vmem:[#allocation2 + $0xe0] sm:$0xff] %vm472, %v468
  %502 = vst.msk [vmem:[#allocation2 + $0xe8] sm:$0xff] %vm472, %v469
  %503 = vst.msk [vmem:[#allocation2 + $0xf0] sm:$0xff] %vm472, %v470
  %504 = vst.msk [vmem:[#allocation2 + $0xf8] sm:$0xff] %vm472, %v471
  // Predicated region
  $region22: #{vit_forward.17} parent=0 // pred_check
    %p505 = pneg %p18
  $region23: #{vit_forward.17} parent=0 // pred_check_branch
    %507 = sbr.rel (%p505) target = $region25
  $region24: #{vit_forward.17} parent=0 // pred_region
    %v508 = vld [vmem:[#allocation2] sm:$0xff]
    %v509 = vld [vmem:[#allocation2 + $0x8] sm:$0xff]
    %v510 = vld [vmem:[#allocation2 + $0x10] sm:$0xff]
    %v511 = vld [vmem:[#allocation2 + $0x18] sm:$0xff]
    %v512 = vld [vmem:[#allocation2 + $0x20] sm:$0xff]
    %v513 = vld [vmem:[#allocation2 + $0x28] sm:$0xff]
    %v514 = vld [vmem:[#allocation2 + $0x30] sm:$0xff]
    %v515 = vld [vmem:[#allocation2 + $0x38] sm:$0xff]
    %v516 = vld [vmem:[#allocation2 + $0x40] sm:$0xff]
    %v517 = vld [vmem:[#allocation2 + $0x48] sm:$0xff]
    %v518 = vld [vmem:[#allocation2 + $0x50] sm:$0xff]
    %v519 = vld [vmem:[#allocation2 + $0x58] sm:$0xff]
    %v520 = vld [vmem:[#allocation2 + $0x60] sm:$0xff]
    %v521 = vld [vmem:[#allocation2 + $0x68] sm:$0xff]
    %v522 = vld [vmem:[#allocation2 + $0x70] sm:$0xff]
    %v523 = vld [vmem:[#allocation2 + $0x78] sm:$0xff]
    %v524 = vld [vmem:[#allocation2 + $0x80] sm:$0xff]
    %v525 = vld [vmem:[#allocation2 + $0x88] sm:$0xff]
    %v526 = vld [vmem:[#allocation2 + $0x90] sm:$0xff]
    %v527 = vld [vmem:[#allocation2 + $0x98] sm:$0xff]
    %v528 = vld [vmem:[#allocation2 + $0xa0] sm:$0xff]
    %v529 = vld [vmem:[#allocation2 + $0xa8] sm:$0xff]
    %v530 = vld [vmem:[#allocation2 + $0xb0] sm:$0xff]
    %v531 = vld [vmem:[#allocation2 + $0xb8] sm:$0xff]
    %v532 = vld [vmem:[#allocation2 + $0xc0] sm:$0xff]
    %v533 = vld [vmem:[#allocation2 + $0xc8] sm:$0xff]
    %v534 = vld [vmem:[#allocation2 + $0xd0] sm:$0xff]
    %v535 = vld [vmem:[#allocation2 + $0xd8] sm:$0xff]
    %v536 = vld [vmem:[#allocation2 + $0xe0] sm:$0xff]
    %v537 = vld [vmem:[#allocation2 + $0xe8] sm:$0xff]
    %v538 = vld [vmem:[#allocation2 + $0xf0] sm:$0xff]
    %v539 = vld [vmem:[#allocation2 + $0xf8] sm:$0xff]
    %v540 = vld [vmem:[%s2] sm:$0x1]
    %v542 = vlaneseq
    %v543 = vshrl.u32 %v542, 7
    %v544 = vsub.s32 0, %v543
    %v545 = vrot.slane %v540, %v544
    %v547 = vadd.f32 %v508, %v545
    %v548 = vadd.f32 %v509, %v545
    %v549 = vadd.f32 %v510, %v545
    %v550 = vadd.f32 %v511, %v545
    %v551 = vadd.f32 %v512, %v545
    %v552 = vadd.f32 %v513, %v545
    %v553 = vadd.f32 %v514, %v545
    %v554 = vadd.f32 %v515, %v545
    %v555 = vadd.f32 %v516, %v545
    %v556 = vadd.f32 %v517, %v545
    %v557 = vadd.f32 %v518, %v545
    %v558 = vadd.f32 %v519, %v545
    %v559 = vadd.f32 %v520, %v545
    %v560 = vadd.f32 %v521, %v545
    %v561 = vadd.f32 %v522, %v545
    %v562 = vadd.f32 %v523, %v545
    %v563 = vadd.f32 %v524, %v545
    %v564 = vadd.f32 %v525, %v545
    %v565 = vadd.f32 %v526, %v545
    %v566 = vadd.f32 %v527, %v545
    %v567 = vadd.f32 %v528, %v545
    %v568 = vadd.f32 %v529, %v545
    %v569 = vadd.f32 %v530, %v545
    %v570 = vadd.f32 %v531, %v545
    %v571 = vadd.f32 %v532, %v545
    %v572 = vadd.f32 %v533, %v545
    %v573 = vadd.f32 %v534, %v545
    %v574 = vadd.f32 %v535, %v545
    %v575 = vadd.f32 %v536, %v545
    %v576 = vadd.f32 %v537, %v545
    %v577 = vadd.f32 %v538, %v545
    %v578 = vadd.f32 %v539, %v545
    %v579 = vld [vmem:[%s3] sm:$0xf]
    %v580 = vld [vmem:[%s3 + $0x4] sm:$0xf]
    %v581 = vld [vmem:[%s3 + $0x8] sm:$0xf]
    %v582 = vld [vmem:[%s3 + $0xc] sm:$0xf]
    %v583 = vld [vmem:[%s3 + $0x10] sm:$0xf]
    %v584 = vld [vmem:[%s3 + $0x14] sm:$0xf]
    %v585 = vld [vmem:[%s3 + $0x18] sm:$0xf]
    %v586 = vld [vmem:[%s3 + $0x1c] sm:$0xf]
    %v587 = vld [vmem:[%s3 + $0x20] sm:$0xf]
    %v588 = vld [vmem:[%s3 + $0x24] sm:$0xf]
    %v589 = vld [vmem:[%s3 + $0x28] sm:$0xf]
    %v590 = vld [vmem:[%s3 + $0x2c] sm:$0xf]
    %v591 = vld [vmem:[%s3 + $0x30] sm:$0xf]
    %v592 = vld [vmem:[%s3 + $0x34] sm:$0xf]
    %v593 = vld [vmem:[%s3 + $0x38] sm:$0xf]
    %v594 = vld [vmem:[%s3 + $0x3c] sm:$0xf]
    %v595 = vld [vmem:[%s3 + $0x40] sm:$0xf]
    %v596 = vld [vmem:[%s3 + $0x44] sm:$0xf]
    %v597 = vld [vmem:[%s3 + $0x48] sm:$0xf]
    %v598 = vld [vmem:[%s3 + $0x4c] sm:$0xf]
    %v599 = vld [vmem:[%s3 + $0x50] sm:$0xf]
    %v600 = vld [vmem:[%s3 + $0x54] sm:$0xf]
    %v601 = vld [vmem:[%s3 + $0x58] sm:$0xf]
    %v602 = vld [vmem:[%s3 + $0x5c] sm:$0xf]
    %v603 = vld [vmem:[%s3 + $0x60] sm:$0xf]
    %v604 = vld [vmem:[%s3 + $0x64] sm:$0xf]
    %v605 = vld [vmem:[%s3 + $0x68] sm:$0xf]
    %v606 = vld [vmem:[%s3 + $0x6c] sm:$0xf]
    %v607 = vld [vmem:[%s3 + $0x70] sm:$0xf]
    %v608 = vld [vmem:[%s3 + $0x74] sm:$0xf]
    %v609 = vld [vmem:[%s3 + $0x78] sm:$0xf]
    %v610 = vld [vmem:[%s3 + $0x7c] sm:$0xf]
    %v611 = vunpack.c.l.bf16 %v579
    %v612 = vunpack.c.l.bf16 %v580
    %v613 = vunpack.c.l.bf16 %v581
    %v614 = vunpack.c.l.bf16 %v582
    %v615 = vunpack.c.l.bf16 %v583
    %v616 = vunpack.c.l.bf16 %v584
    %v617 = vunpack.c.l.bf16 %v585
    %v618 = vunpack.c.l.bf16 %v586
    %v619 = vunpack.c.l.bf16 %v587
    %v620 = vunpack.c.l.bf16 %v588
    %v621 = vunpack.c.l.bf16 %v589
    %v622 = vunpack.c.l.bf16 %v590
    %v623 = vunpack.c.l.bf16 %v591
    %v624 = vunpack.c.l.bf16 %v592
    %v625 = vunpack.c.l.bf16 %v593
    %v626 = vunpack.c.l.bf16 %v594
    %v627 = vunpack.c.l.bf16 %v595
    %v628 = vunpack.c.l.bf16 %v596
    %v629 = vunpack.c.l.bf16 %v597
    %v630 = vunpack.c.l.bf16 %v598
    %v631 = vunpack.c.l.bf16 %v599
    %v632 = vunpack.c.l.bf16 %v600
    %v633 = vunpack.c.l.bf16 %v601
    %v634 = vunpack.c.l.bf16 %v602
    %v635 = vunpack.c.l.bf16 %v603
    %v636 = vunpack.c.l.bf16 %v604
    %v637 = vunpack.c.l.bf16 %v605
    %v638 = vunpack.c.l.bf16 %v606
    %v639 = vunpack.c.l.bf16 %v607
    %v640 = vunpack.c.l.bf16 %v608
    %v641 = vunpack.c.l.bf16 %v609
    %v642 = vunpack.c.l.bf16 %v610
    %v643 = vadd.f32 %v547, %v611
    %v644 = vadd.f32 %v548, %v612
    %v645 = vadd.f32 %v549, %v613
    %v646 = vadd.f32 %v550, %v614
    %v647 = vadd.f32 %v551, %v615
    %v648 = vadd.f32 %v552, %v616
    %v649 = vadd.f32 %v553, %v617
    %v650 = vadd.f32 %v554, %v618
    %v651 = vadd.f32 %v555, %v619
    %v652 = vadd.f32 %v556, %v620
    %v653 = vadd.f32 %v557, %v621
    %v654 = vadd.f32 %v558, %v622
    %v655 = vadd.f32 %v559, %v623
    %v656 = vadd.f32 %v560, %v624
    %v657 = vadd.f32 %v561, %v625
    %v658 = vadd.f32 %v562, %v626
    %v659 = vadd.f32 %v563, %v627
    %v660 = vadd.f32 %v564, %v628
    %v661 = vadd.f32 %v565, %v629
    %v662 = vadd.f32 %v566, %v630
    %v663 = vadd.f32 %v567, %v631
    %v664 = vadd.f32 %v568, %v632
    %v665 = vadd.f32 %v569, %v633
    %v666 = vadd.f32 %v570, %v634
    %v667 = vadd.f32 %v571, %v635
    %v668 = vadd.f32 %v572, %v636
    %v669 = vadd.f32 %v573, %v637
    %v670 = vadd.f32 %v574, %v638
    %v671 = vadd.f32 %v575, %v639
    %v672 = vadd.f32 %v576, %v640
    %v673 = vadd.f32 %v577, %v641
    %v674 = vadd.f32 %v578, %v642
    %v675 = vpack.c.bf16 %v644, %v643
    %v676 = vpack.c.bf16 %v646, %v645
    %v677 = vpack.c.bf16 %v648, %v647
    %v678 = vpack.c.bf16 %v650, %v649
    %v679 = vpack.c.bf16 %v652, %v651
    %v680 = vpack.c.bf16 %v654, %v653
    %v681 = vpack.c.bf16 %v656, %v655
    %v682 = vpack.c.bf16 %v658, %v657
    %v683 = vpack.c.bf16 %v660, %v659
    %v684 = vpack.c.bf16 %v662, %v661
    %v685 = vpack.c.bf16 %v664, %v663
    %v686 = vpack.c.bf16 %v666, %v665
    %v687 = vpack.c.bf16 %v668, %v667
    %v688 = vpack.c.bf16 %v670, %v669
    %v689 = vpack.c.bf16 %v672, %v671
    %v690 = vpack.c.bf16 %v674, %v673
    %v707 = vunpack.c.l.b16 %v675
    %v708 = vunpack.c.h.b16 %v675
    %v709 = vunpack.c.l.b16 %v676
    %v710 = vunpack.c.h.b16 %v676
    %v711 = vunpack.c.l.b16 %v677
    %v712 = vunpack.c.h.b16 %v677
    %v713 = vunpack.c.l.b16 %v678
    %v714 = vunpack.c.h.b16 %v678
    %v715 = vunpack.c.l.b16 %v679
    %v716 = vunpack.c.h.b16 %v679
    %v717 = vunpack.c.l.b16 %v680
    %v718 = vunpack.c.h.b16 %v680
    %v719 = vunpack.c.l.b16 %v681
    %v720 = vunpack.c.h.b16 %v681
    %v721 = vunpack.c.l.b16 %v682
    %v722 = vunpack.c.h.b16 %v682
    %v723 = vunpack.c.l.b16 %v683
    %v724 = vunpack.c.h.b16 %v683
    %v725 = vunpack.c.l.b16 %v684
    %v726 = vunpack.c.h.b16 %v684
    %v727 = vunpack.c.l.b16 %v685
    %v728 = vunpack.c.h.b16 %v685
    %v729 = vunpack.c.l.b16 %v686
    %v730 = vunpack.c.h.b16 %v686
    %v731 = vunpack.c.l.b16 %v687
    %v732 = vunpack.c.h.b16 %v687
    %v733 = vunpack.c.l.b16 %v688
    %v734 = vunpack.c.h.b16 %v688
    %v735 = vunpack.c.l.b16 %v689
    %v736 = vunpack.c.h.b16 %v689
    %v737 = vunpack.c.l.b16 %v690
    %v738 = vunpack.c.h.b16 %v690
    %v739 = vpack.c.b16 %v707, %v707
    %v740 = vpack.c.b16 %v708, %v708
    %v741 = vpack.c.b16 %v709, %v709
    %v742 = vpack.c.b16 %v710, %v710
    %v743 = vpack.c.b16 %v711, %v711
    %v744 = vpack.c.b16 %v712, %v712
    %v745 = vpack.c.b16 %v713, %v713
    %v746 = vpack.c.b16 %v714, %v714
    %v747 = vpack.c.b16 %v715, %v715
    %v748 = vpack.c.b16 %v716, %v716
    %v749 = vpack.c.b16 %v717, %v717
    %v750 = vpack.c.b16 %v718, %v718
    %v751 = vpack.c.b16 %v719, %v719
    %v752 = vpack.c.b16 %v720, %v720
    %v753 = vpack.c.b16 %v721, %v721
    %v754 = vpack.c.b16 %v722, %v722
    %v755 = vpack.c.b16 %v723, %v723
    %v756 = vpack.c.b16 %v724, %v724
    %v757 = vpack.c.b16 %v725, %v725
    %v758 = vpack.c.b16 %v726, %v726
    %v759 = vpack.c.b16 %v727, %v727
    %v760 = vpack.c.b16 %v728, %v728
    %v761 = vpack.c.b16 %v729, %v729
    %v762 = vpack.c.b16 %v730, %v730
    %v763 = vpack.c.b16 %v731, %v731
    %v764 = vpack.c.b16 %v732, %v732
    %v765 = vpack.c.b16 %v733, %v733
    %v766 = vpack.c.b16 %v734, %v734
    %v767 = vpack.c.b16 %v735, %v735
    %v768 = vpack.c.b16 %v736, %v736
    %v769 = vpack.c.b16 %v737, %v737
    %v770 = vpack.c.b16 %v738, %v738
    %vm803 = vcmask 519168
    %804 = vst.msk [vmem:[%s4] sm:$0xf] %vm803, %v739
    %805 = vst.msk [vmem:[%s4 + $0x4] sm:$0xf] %vm803, %v740
    %806 = vst.msk [vmem:[%s4 + $0x8] sm:$0xf] %vm803, %v741
    %807 = vst.msk [vmem:[%s4 + $0xc] sm:$0xf] %vm803, %v742
    %808 = vst.msk [vmem:[%s4 + $0x10] sm:$0xf] %vm803, %v743
    %809 = vst.msk [vmem:[%s4 + $0x14] sm:$0xf] %vm803, %v744
    %810 = vst.msk [vmem:[%s4 + $0x18] sm:$0xf] %vm803, %v745
    %811 = vst.msk [vmem:[%s4 + $0x1c] sm:$0xf] %vm803, %v746
    %812 = vst.msk [vmem:[%s4 + $0x20] sm:$0xf] %vm803, %v747
    %813 = vst.msk [vmem:[%s4 + $0x24] sm:$0xf] %vm803, %v748
    %814 = vst.msk [vmem:[%s4 + $0x28] sm:$0xf] %vm803, %v749
    %815 = vst.msk [vmem:[%s4 + $0x2c] sm:$0xf] %vm803, %v750
    %816 = vst.msk [vmem:[%s4 + $0x30] sm:$0xf] %vm803, %v751
    %817 = vst.msk [vmem:[%s4 + $0x34] sm:$0xf] %vm803, %v752
    %818 = vst.msk [vmem:[%s4 + $0x38] sm:$0xf] %vm803, %v753
    %819 = vst.msk [vmem:[%s4 + $0x3c] sm:$0xf] %vm803, %v754
    %820 = vst.msk [vmem:[%s4 + $0x40] sm:$0xf] %vm803, %v755
    %821 = vst.msk [vmem:[%s4 + $0x44] sm:$0xf] %vm803, %v756
    %822 = vst.msk [vmem:[%s4 + $0x48] sm:$0xf] %vm803, %v757
    %823 = vst.msk [vmem:[%s4 + $0x4c] sm:$0xf] %vm803, %v758
    %824 = vst.msk [vmem:[%s4 + $0x50] sm:$0xf] %vm803, %v759
    %825 = vst.msk [vmem:[%s4 + $0x54] sm:$0xf] %vm803, %v760
    %826 = vst.msk [vmem:[%s4 + $0x58] sm:$0xf] %vm803, %v761
    %827 = vst.msk [vmem:[%s4 + $0x5c] sm:$0xf] %vm803, %v762
    %828 = vst.msk [vmem:[%s4 + $0x60] sm:$0xf] %vm803, %v763
    %829 = vst.msk [vmem:[%s4 + $0x64] sm:$0xf] %vm803, %v764
    %830 = vst.msk [vmem:[%s4 + $0x68] sm:$0xf] %vm803, %v765
    %831 = vst.msk [vmem:[%s4 + $0x6c] sm:$0xf] %vm803, %v766
    %832 = vst.msk [vmem:[%s4 + $0x70] sm:$0xf] %vm803, %v767
    %833 = vst.msk [vmem:[%s4 + $0x74] sm:$0xf] %vm803, %v768
    %834 = vst.msk [vmem:[%s4 + $0x78] sm:$0xf] %vm803, %v769
    %835 = vst.msk [vmem:[%s4 + $0x7c] sm:$0xf] %vm803, %v770
  $region25: #{vit_forward.17} parent=0 // pred_fallthru
    _
  // Predicated region
  $region26: #{vit_forward.17} parent=0 // pred_check
    _
  $region27: #{vit_forward.17} parent=0 // pred_check_branch
    %837 = sbr.rel (0) target = $region29
  $region28: #{vit_forward.17} parent=0 // pred_region
    _
  $region29: #{vit_forward.17} parent=0 // pred_fallthru
    _
  // Predicated region
  $region30: #{vit_forward.17} parent=0 // pred_check
    _
  $region31: #{vit_forward.17} parent=0 // pred_check_branch
    %839 = sbr.rel (0) target = $region33
  $region32: #{vit_forward.17} parent=0 // pred_region
    _
  $region33: #{vit_forward.17} parent=0 // pred_fallthru
    _

// kernel: vit_forward.16
$region0: #{vit_forward.16}
  #allocation0 [shape = 'u32[]', space=smem, size = 0x4, offset = 0x4, fixed_abs, tag = 'smem constant byte address 0x4 - core index']
  #allocation1 [shape = 'u32[144,128]{1,0:T(1,128)}', space=vmem, size = 0x12000, scoped, tag = 'internal scratch']
  #allocation2 [shape = 'bf16[256,64]{1,0:T(8,128)(2,1)}', space=vmem, size = 0x10000, scoped, tag = 'scratch operand']
  %s0 = inlined_call_operand.vmem [shape: bf16[256,64], index: 0, kind: input, shape index: {}]
  %s1 = inlined_call_operand.vmem [shape: f32[1,64], index: 1, kind: input, shape index: {}]
  %s2 = inlined_call_operand.vmem [shape: f32[1,64], index: 2, kind: input, shape index: {}]
  %s3 = inlined_call_operand.vmem [shape: bf16[64,128], index: 3, kind: input, shape index: {}]
  %s4 = inlined_call_operand.vmem [shape: f32[1,128], index: 4, kind: input, shape index: {}]
  %s5 = inlined_call_operand.vmem [shape: bf16[256,128], index: 5, kind: output, shape index: {}]
  %s6 = sld [smem:[#allocation0]]
  $region34: #{vit_forward.16} parent=0
    _
  %s8 = ssub.s32 1, %s6
  %s9 = scalar_select 0, %s8, %s6
  // Predicated region
  $region2: #{vit_forward.16} parent=0 // pred_check
    _
  $region3: #{vit_forward.16} parent=0 // pred_check_branch
    %11 = sbr.rel (0) target = $region5
  $region4: #{vit_forward.16} parent=0 // pred_region
    _
  $region5: #{vit_forward.16} parent=0 // pred_fallthru
    _
  // Predicated region
  $region6: #{vit_forward.16} parent=0 // pred_check
    _
  $region7: #{vit_forward.16} parent=0 // pred_check_branch
    %13 = sbr.rel (0) target = $region9
  $region8: #{vit_forward.16} parent=0 // pred_region
    _
  $region9: #{vit_forward.16} parent=0 // pred_fallthru
    _
  // Predicated region
  $region10: #{vit_forward.16} parent=0 // pred_check
    _
  $region11: #{vit_forward.16} parent=0 // pred_check_branch
    %15 = sbr.rel (0) target = $region13
  $region12: #{vit_forward.16} parent=0 // pred_region
    _
  $region13: #{vit_forward.16} parent=0 // pred_fallthru
    _
  // Predicated region
  $region14: #{vit_forward.16} parent=0 // pred_check
    _
  $region15: #{vit_forward.16} parent=0 // pred_check_branch
    %17 = sbr.rel (0) target = $region17
  $region16: #{vit_forward.16} parent=0 // pred_region
    _
  $region17: #{vit_forward.16} parent=0 // pred_fallthru
    _
  // Predicated region
  $region18: #{vit_forward.16} parent=0 // pred_check
    _
  $region19: #{vit_forward.16} parent=0 // pred_check_branch
    %19 = sbr.rel (0) target = $region21
  $region20: #{vit_forward.16} parent=0 // pred_region
    _
  $region21: #{vit_forward.16} parent=0 // pred_fallthru
    _
  %p21 = scmp.eq.s32.totalorder 0, 0
  // Predicated region
  $region22: #{vit_forward.16} parent=0 // pred_check
    %p22 = pneg %p21
  $region23: #{vit_forward.16} parent=0 // pred_check_branch
    %24 = sbr.rel (%p22) target = $region25
  $region24: #{vit_forward.16} parent=0 // pred_region
    %v25 = vld [vmem:[%s0] sm:$0xf]
    %v26 = vld [vmem:[%s0 + $0x4] sm:$0xf]
    %v27 = vld [vmem:[%s0 + $0x8] sm:$0xf]
    %v28 = vld [vmem:[%s0 + $0xc] sm:$0xf]
    %v29 = vld [vmem:[%s0 + $0x10] sm:$0xf]
    %v30 = vld [vmem:[%s0 + $0x14] sm:$0xf]
    %v31 = vld [vmem:[%s0 + $0x18] sm:$0xf]
    %v32 = vld [vmem:[%s0 + $0x1c] sm:$0xf]
    %v33 = vld [vmem:[%s0 + $0x20] sm:$0xf]
    %v34 = vld [vmem:[%s0 + $0x24] sm:$0xf]
    %v35 = vld [vmem:[%s0 + $0x28] sm:$0xf]
    %v36 = vld [vmem:[%s0 + $0x2c] sm:$0xf]
    %v37 = vld [vmem:[%s0 + $0x30] sm:$0xf]
    %v38 = vld [vmem:[%s0 + $0x34] sm:$0xf]
    %v39 = vld [vmem:[%s0 + $0x38] sm:$0xf]
    %v40 = vld [vmem:[%s0 + $0x3c] sm:$0xf]
    %v41 = vld [vmem:[%s0 + $0x40] sm:$0xf]
    %v42 = vld [vmem:[%s0 + $0x44] sm:$0xf]
    %v43 = vld [vmem:[%s0 + $0x48] sm:$0xf]
    %v44 = vld [vmem:[%s0 + $0x4c] sm:$0xf]
    %v45 = vld [vmem:[%s0 + $0x50] sm:$0xf]
    %v46 = vld [vmem:[%s0 + $0x54] sm:$0xf]
    %v47 = vld [vmem:[%s0 + $0x58] sm:$0xf]
    %v48 = vld [vmem:[%s0 + $0x5c] sm:$0xf]
    %v49 = vld [vmem:[%s0 + $0x60] sm:$0xf]
    %v50 = vld [vmem:[%s0 + $0x64] sm:$0xf]
    %v51 = vld [vmem:[%s0 + $0x68] sm:$0xf]
    %v52 = vld [vmem:[%s0 + $0x6c] sm:$0xf]
    %v53 = vld [vmem:[%s0 + $0x70] sm:$0xf]
    %v54 = vld [vmem:[%s0 + $0x74] sm:$0xf]
    %v55 = vld [vmem:[%s0 + $0x78] sm:$0xf]
    %v56 = vld [vmem:[%s0 + $0x7c] sm:$0xf]
    %v57 = vunpack.c.l.bf16 %v25
    %v58 = vunpack.c.l.bf16 %v26
    %v59 = vunpack.c.l.bf16 %v27
    %v60 = vunpack.c.l.bf16 %v28
    %v61 = vunpack.c.l.bf16 %v29
    %v62 = vunpack.c.l.bf16 %v30
    %v63 = vunpack.c.l.bf16 %v31
    %v64 = vunpack.c.l.bf16 %v32
    %v65 = vunpack.c.l.bf16 %v33
    %v66 = vunpack.c.l.bf16 %v34
    %v67 = vunpack.c.l.bf16 %v35
    %v68 = vunpack.c.l.bf16 %v36
    %v69 = vunpack.c.l.bf16 %v37
    %v70 = vunpack.c.l.bf16 %v38
    %v71 = vunpack.c.l.bf16 %v39
    %v72 = vunpack.c.l.bf16 %v40
    %v73 = vunpack.c.l.bf16 %v41
    %v74 = vunpack.c.l.bf16 %v42
    %v75 = vunpack.c.l.bf16 %v43
    %v76 = vunpack.c.l.bf16 %v44
    %v77 = vunpack.c.l.bf16 %v45
    %v78 = vunpack.c.l.bf16 %v46
    %v79 = vunpack.c.l.bf16 %v47
    %v80 = vunpack.c.l.bf16 %v48
    %v81 = vunpack.c.l.bf16 %v49
    %v82 = vunpack.c.l.bf16 %v50
    %v83 = vunpack.c.l.bf16 %v51
    %v84 = vunpack.c.l.bf16 %v52
    %v85 = vunpack.c.l.bf16 %v53
    %v86 = vunpack.c.l.bf16 %v54
    %v87 = vunpack.c.l.bf16 %v55
    %v88 = vunpack.c.l.bf16 %v56
    %vm89 = vcmask 523264
    %v90 = vsel %vm89, %v57, 0.0
    %91 = vadd.xlane.f32.xlu0 %v90
    %v92 = vpop.xlane.xlu0 %91
    %v93 = vsel %vm89, %v58, 0.0
    %94 = vadd.xlane.f32.xlu0 %v93
    %v95 = vpop.xlane.xlu0 %94
    %v96 = vsel %vm89, %v59, 0.0
    %97 = vadd.xlane.f32.xlu0 %v96
    %v98 = vpop.xlane.xlu0 %97
    %v99 = vsel %vm89, %v60, 0.0
    %100 = vadd.xlane.f32.xlu0 %v99
    %v101 = vpop.xlane.xlu0 %100
    %v102 = vsel %vm89, %v61, 0.0
    %103 = vadd.xlane.f32.xlu0 %v102
    %v104 = vpop.xlane.xlu0 %103
    %v105 = vsel %vm89, %v62, 0.0
    %106 = vadd.xlane.f32.xlu0 %v105
    %v107 = vpop.xlane.xlu0 %106
    %v108 = vsel %vm89, %v63, 0.0
    %109 = vadd.xlane.f32.xlu0 %v108
    %v110 = vpop.xlane.xlu0 %109
    %v111 = vsel %vm89, %v64, 0.0
    %112 = vadd.xlane.f32.xlu0 %v111
    %v113 = vpop.xlane.xlu0 %112
    %v114 = vsel %vm89, %v65, 0.0
    %115 = vadd.xlane.f32.xlu0 %v114
    %v116 = vpop.xlane.xlu0 %115
    %v117 = vsel %vm89, %v66, 0.0
    %118 = vadd.xlane.f32.xlu0 %v117
    %v119 = vpop.xlane.xlu0 %118
    %v120 = vsel %vm89, %v67, 0.0
    %121 = vadd.xlane.f32.xlu0 %v120
    %v122 = vpop.xlane.xlu0 %121
    %v123 = vsel %vm89, %v68, 0.0
    %124 = vadd.xlane.f32.xlu0 %v123
    %v125 = vpop.xlane.xlu0 %124
    %v126 = vsel %vm89, %v69, 0.0
    %127 = vadd.xlane.f32.xlu0 %v126
    %v128 = vpop.xlane.xlu0 %127
    %v129 = vsel %vm89, %v70, 0.0
    %130 = vadd.xlane.f32.xlu0 %v129
    %v131 = vpop.xlane.xlu0 %130
    %v132 = vsel %vm89, %v71, 0.0
    %133 = vadd.xlane.f32.xlu0 %v132
    %v134 = vpop.xlane.xlu0 %133
    %v135 = vsel %vm89, %v72, 0.0
    %136 = vadd.xlane.f32.xlu0 %v135
    %v137 = vpop.xlane.xlu0 %136
    %v138 = vsel %vm89, %v73, 0.0
    %139 = vadd.xlane.f32.xlu0 %v138
    %v140 = vpop.xlane.xlu0 %139
    %v141 = vsel %vm89, %v74, 0.0
    %142 = vadd.xlane.f32.xlu0 %v141
    %v143 = vpop.xlane.xlu0 %142
    %v144 = vsel %vm89, %v75, 0.0
    %145 = vadd.xlane.f32.xlu0 %v144
    %v146 = vpop.xlane.xlu0 %145
    %v147 = vsel %vm89, %v76, 0.0
    %148 = vadd.xlane.f32.xlu0 %v147
    %v149 = vpop.xlane.xlu0 %148
    %v150 = vsel %vm89, %v77, 0.0
    %151 = vadd.xlane.f32.xlu0 %v150
    %v152 = vpop.xlane.xlu0 %151
    %v153 = vsel %vm89, %v78, 0.0
    %154 = vadd.xlane.f32.xlu0 %v153
    %v155 = vpop.xlane.xlu0 %154
    %v156 = vsel %vm89, %v79, 0.0
    %157 = vadd.xlane.f32.xlu0 %v156
    %v158 = vpop.xlane.xlu0 %157
    %v159 = vsel %vm89, %v80, 0.0
    %160 = vadd.xlane.f32.xlu0 %v159
    %v161 = vpop.xlane.xlu0 %160
    %v162 = vsel %vm89, %v81, 0.0
    %163 = vadd.xlane.f32.xlu0 %v162
    %v164 = vpop.xlane.xlu0 %163
    %v165 = vsel %vm89, %v82, 0.0
    %166 = vadd.xlane.f32.xlu0 %v165
    %v167 = vpop.xlane.xlu0 %166
    %v168 = vsel %vm89, %v83, 0.0
    %169 = vadd.xlane.f32.xlu0 %v168
    %v170 = vpop.xlane.xlu0 %169
    %v171 = vsel %vm89, %v84, 0.0
    %172 = vadd.xlane.f32.xlu0 %v171
    %v173 = vpop.xlane.xlu0 %172
    %v174 = vsel %vm89, %v85, 0.0
    %175 = vadd.xlane.f32.xlu0 %v174
    %v176 = vpop.xlane.xlu0 %175
    %v177 = vsel %vm89, %v86, 0.0
    %178 = vadd.xlane.f32.xlu0 %v177
    %v179 = vpop.xlane.xlu0 %178
    %v180 = vsel %vm89, %v87, 0.0
    %181 = vadd.xlane.f32.xlu0 %v180
    %v182 = vpop.xlane.xlu0 %181
    %v183 = vsel %vm89, %v88, 0.0
    %184 = vadd.xlane.f32.xlu0 %v183
    %v185 = vpop.xlane.xlu0 %184
    %v186 = vrcp.pop 64.0
    %v187 = vmul.f32 %v92, %v186
    %v188 = vmul.f32 %v95, %v186
    %v189 = vmul.f32 %v98, %v186
    %v190 = vmul.f32 %v101, %v186
    %v191 = vmul.f32 %v104, %v186
    %v192 = vmul.f32 %v107, %v186
    %v193 = vmul.f32 %v110, %v186
    %v194 = vmul.f32 %v113, %v186
    %v195 = vmul.f32 %v116, %v186
    %v196 = vmul.f32 %v119, %v186
    %v197 = vmul.f32 %v122, %v186
    %v198 = vmul.f32 %v125, %v186
    %v199 = vmul.f32 %v128, %v186
    %v200 = vmul.f32 %v131, %v186
    %v201 = vmul.f32 %v134, %v186
    %v202 = vmul.f32 %v137, %v186
    %v203 = vmul.f32 %v140, %v186
    %v204 = vmul.f32 %v143, %v186
    %v205 = vmul.f32 %v146, %v186
    %v206 = vmul.f32 %v149, %v186
    %v207 = vmul.f32 %v152, %v186
    %v208 = vmul.f32 %v155, %v186
    %v209 = vmul.f32 %v158, %v186
    %v210 = vmul.f32 %v161, %v186
    %v211 = vmul.f32 %v164, %v186
    %v212 = vmul.f32 %v167, %v186
    %v213 = vmul.f32 %v170, %v186
    %v214 = vmul.f32 %v173, %v186
    %v215 = vmul.f32 %v176, %v186
    %v216 = vmul.f32 %v179, %v186
    %v217 = vmul.f32 %v182, %v186
    %v218 = vmul.f32 %v185, %v186
    %v219 = vsub.f32 %v57, %v187
    %v220 = vsub.f32 %v58, %v188
    %v221 = vsub.f32 %v59, %v189
    %v222 = vsub.f32 %v60, %v190
    %v223 = vsub.f32 %v61, %v191
    %v224 = vsub.f32 %v62, %v192
    %v225 = vsub.f32 %v63, %v193
    %v226 = vsub.f32 %v64, %v194
    %v227 = vsub.f32 %v65, %v195
    %v228 = vsub.f32 %v66, %v196
    %v229 = vsub.f32 %v67, %v197
    %v230 = vsub.f32 %v68, %v198
    %v231 = vsub.f32 %v69, %v199
    %v232 = vsub.f32 %v70, %v200
    %v233 = vsub.f32 %v71, %v201
    %v234 = vsub.f32 %v72, %v202
    %v235 = vsub.f32 %v73, %v203
    %v236 = vsub.f32 %v74, %v204
    %v237 = vsub.f32 %v75, %v205
    %v238 = vsub.f32 %v76, %v206
    %v239 = vsub.f32 %v77, %v207
    %v240 = vsub.f32 %v78, %v208
    %v241 = vsub.f32 %v79, %v209
    %v242 = vsub.f32 %v80, %v210
    %v243 = vsub.f32 %v81, %v211
    %v244 = vsub.f32 %v82, %v212
    %v245 = vsub.f32 %v83, %v213
    %v246 = vsub.f32 %v84, %v214
    %v247 = vsub.f32 %v85, %v215
    %v248 = vsub.f32 %v86, %v216
    %v249 = vsub.f32 %v87, %v217
    %v250 = vsub.f32 %v88, %v218
    %v251 = vmul.f32 %v219, %v219
    %v252 = vmul.f32 %v220, %v220
    %v253 = vmul.f32 %v221, %v221
    %v254 = vmul.f32 %v222, %v222
    %v255 = vmul.f32 %v223, %v223
    %v256 = vmul.f32 %v224, %v224
    %v257 = vmul.f32 %v225, %v225
    %v258 = vmul.f32 %v226, %v226
    %v259 = vmul.f32 %v227, %v227
    %v260 = vmul.f32 %v228, %v228
    %v261 = vmul.f32 %v229, %v229
    %v262 = vmul.f32 %v230, %v230
    %v263 = vmul.f32 %v231, %v231
    %v264 = vmul.f32 %v232, %v232
    %v265 = vmul.f32 %v233, %v233
    %v266 = vmul.f32 %v234, %v234
    %v267 = vmul.f32 %v235, %v235
    %v268 = vmul.f32 %v236, %v236
    %v269 = vmul.f32 %v237, %v237
    %v270 = vmul.f32 %v238, %v238
    %v271 = vmul.f32 %v239, %v239
    %v272 = vmul.f32 %v240, %v240
    %v273 = vmul.f32 %v241, %v241
    %v274 = vmul.f32 %v242, %v242
    %v275 = vmul.f32 %v243, %v243
    %v276 = vmul.f32 %v244, %v244
    %v277 = vmul.f32 %v245, %v245
    %v278 = vmul.f32 %v246, %v246
    %v279 = vmul.f32 %v247, %v247
    %v280 = vmul.f32 %v248, %v248
    %v281 = vmul.f32 %v249, %v249
    %v282 = vmul.f32 %v250, %v250
    %v283 = vsel %vm89, %v251, 0.0
    %284 = vadd.xlane.f32.xlu0 %v283
    %v285 = vpop.xlane.xlu0 %284
    %v286 = vsel %vm89, %v252, 0.0
    %287 = vadd.xlane.f32.xlu0 %v286
    %v288 = vpop.xlane.xlu0 %287
    %v289 = vsel %vm89, %v253, 0.0
    %290 = vadd.xlane.f32.xlu0 %v289
    %v291 = vpop.xlane.xlu0 %290
    %v292 = vsel %vm89, %v254, 0.0
    %293 = vadd.xlane.f32.xlu0 %v292
    %v294 = vpop.xlane.xlu0 %293
    %v295 = vsel %vm89, %v255, 0.0
    %296 = vadd.xlane.f32.xlu0 %v295
    %v297 = vpop.xlane.xlu0 %296
    %v298 = vsel %vm89, %v256, 0.0
    %299 = vadd.xlane.f32.xlu0 %v298
    %v300 = vpop.xlane.xlu0 %299
    %v301 = vsel %vm89, %v257, 0.0
    %302 = vadd.xlane.f32.xlu0 %v301
    %v303 = vpop.xlane.xlu0 %302
    %v304 = vsel %vm89, %v258, 0.0
    %305 = vadd.xlane.f32.xlu0 %v304
    %v306 = vpop.xlane.xlu0 %305
    %v307 = vsel %vm89, %v259, 0.0
    %308 = vadd.xlane.f32.xlu0 %v307
    %v309 = vpop.xlane.xlu0 %308
    %v310 = vsel %vm89, %v260, 0.0
    %311 = vadd.xlane.f32.xlu0 %v310
    %v312 = vpop.xlane.xlu0 %311
    %v313 = vsel %vm89, %v261, 0.0
    %314 = vadd.xlane.f32.xlu0 %v313
    %v315 = vpop.xlane.xlu0 %314
    %v316 = vsel %vm89, %v262, 0.0
    %317 = vadd.xlane.f32.xlu0 %v316
    %v318 = vpop.xlane.xlu0 %317
    %v319 = vsel %vm89, %v263, 0.0
    %320 = vadd.xlane.f32.xlu0 %v319
    %v321 = vpop.xlane.xlu0 %320
    %v322 = vsel %vm89, %v264, 0.0
    %323 = vadd.xlane.f32.xlu0 %v322
    %v324 = vpop.xlane.xlu0 %323
    %v325 = vsel %vm89, %v265, 0.0
    %326 = vadd.xlane.f32.xlu0 %v325
    %v327 = vpop.xlane.xlu0 %326
    %v328 = vsel %vm89, %v266, 0.0
    %329 = vadd.xlane.f32.xlu0 %v328
    %v330 = vpop.xlane.xlu0 %329
    %v331 = vsel %vm89, %v267, 0.0
    %332 = vadd.xlane.f32.xlu0 %v331
    %v333 = vpop.xlane.xlu0 %332
    %v334 = vsel %vm89, %v268, 0.0
    %335 = vadd.xlane.f32.xlu0 %v334
    %v336 = vpop.xlane.xlu0 %335
    %v337 = vsel %vm89, %v269, 0.0
    %338 = vadd.xlane.f32.xlu0 %v337
    %v339 = vpop.xlane.xlu0 %338
    %v340 = vsel %vm89, %v270, 0.0
    %341 = vadd.xlane.f32.xlu0 %v340
    %v342 = vpop.xlane.xlu0 %341
    %v343 = vsel %vm89, %v271, 0.0
    %344 = vadd.xlane.f32.xlu0 %v343
    %v345 = vpop.xlane.xlu0 %344
    %v346 = vsel %vm89, %v272, 0.0
    %347 = vadd.xlane.f32.xlu0 %v346
    %v348 = vpop.xlane.xlu0 %347
    %v349 = vsel %vm89, %v273, 0.0
    %350 = vadd.xlane.f32.xlu0 %v349
    %v351 = vpop.xlane.xlu0 %350
    %v352 = vsel %vm89, %v274, 0.0
    %353 = vadd.xlane.f32.xlu0 %v352
    %v354 = vpop.xlane.xlu0 %353
    %v355 = vsel %vm89, %v275, 0.0
    %356 = vadd.xlane.f32.xlu0 %v355
    %v357 = vpop.xlane.xlu0 %356
    %v358 = vsel %vm89, %v276, 0.0
    %359 = vadd.xlane.f32.xlu0 %v358
    %v360 = vpop.xlane.xlu0 %359
    %v361 = vsel %vm89, %v277, 0.0
    %362 = vadd.xlane.f32.xlu0 %v361
    %v363 = vpop.xlane.xlu0 %362
    %v364 = vsel %vm89, %v278, 0.0
    %365 = vadd.xlane.f32.xlu0 %v364
    %v366 = vpop.xlane.xlu0 %365
    %v367 = vsel %vm89, %v279, 0.0
    %368 = vadd.xlane.f32.xlu0 %v367
    %v369 = vpop.xlane.xlu0 %368
    %v370 = vsel %vm89, %v280, 0.0
    %371 = vadd.xlane.f32.xlu0 %v370
    %v372 = vpop.xlane.xlu0 %371
    %v373 = vsel %vm89, %v281, 0.0
    %374 = vadd.xlane.f32.xlu0 %v373
    %v375 = vpop.xlane.xlu0 %374
    %v376 = vsel %vm89, %v282, 0.0
    %377 = vadd.xlane.f32.xlu0 %v376
    %v378 = vpop.xlane.xlu0 %377
    %v379 = vmul.f32 %v285, %v186
    %v380 = vmul.f32 %v288, %v186
    %v381 = vmul.f32 %v291, %v186
    %v382 = vmul.f32 %v294, %v186
    %v383 = vmul.f32 %v297, %v186
    %v384 = vmul.f32 %v300, %v186
    %v385 = vmul.f32 %v303, %v186
    %v386 = vmul.f32 %v306, %v186
    %v387 = vmul.f32 %v309, %v186
    %v388 = vmul.f32 %v312, %v186
    %v389 = vmul.f32 %v315, %v186
    %v390 = vmul.f32 %v318, %v186
    %v391 = vmul.f32 %v321, %v186
    %v392 = vmul.f32 %v324, %v186
    %v393 = vmul.f32 %v327, %v186
    %v394 = vmul.f32 %v330, %v186
    %v395 = vmul.f32 %v333, %v186
    %v396 = vmul.f32 %v336, %v186
    %v397 = vmul.f32 %v339, %v186
    %v398 = vmul.f32 %v342, %v186
    %v399 = vmul.f32 %v345, %v186
    %v400 = vmul.f32 %v348, %v186
    %v401 = vmul.f32 %v351, %v186
    %v402 = vmul.f32 %v354, %v186
    %v403 = vmul.f32 %v357, %v186
    %v404 = vmul.f32 %v360, %v186
    %v405 = vmul.f32 %v363, %v186
    %v406 = vmul.f32 %v366, %v186
    %v407 = vmul.f32 %v369, %v186
    %v408 = vmul.f32 %v372, %v186
    %v409 = vmul.f32 %v375, %v186
    %v410 = vmul.f32 %v378, %v186
    %v411 = vadd.f32 %v379, 1e-06
    %v412 = vadd.f32 %v380, 1e-06
    %v413 = vadd.f32 %v381, 1e-06
    %v414 = vadd.f32 %v382, 1e-06
    %v415 = vadd.f32 %v383, 1e-06
    %v416 = vadd.f32 %v384, 1e-06
    %v417 = vadd.f32 %v385, 1e-06
    %v418 = vadd.f32 %v386, 1e-06
    %v419 = vadd.f32 %v387, 1e-06
    %v420 = vadd.f32 %v388, 1e-06
    %v421 = vadd.f32 %v389, 1e-06
    %v422 = vadd.f32 %v390, 1e-06
    %v423 = vadd.f32 %v391, 1e-06
    %v424 = vadd.f32 %v392, 1e-06
    %v425 = vadd.f32 %v393, 1e-06
    %v426 = vadd.f32 %v394, 1e-06
    %v427 = vadd.f32 %v395, 1e-06
    %v428 = vadd.f32 %v396, 1e-06
    %v429 = vadd.f32 %v397, 1e-06
    %v430 = vadd.f32 %v398, 1e-06
    %v431 = vadd.f32 %v399, 1e-06
    %v432 = vadd.f32 %v400, 1e-06
    %v433 = vadd.f32 %v401, 1e-06
    %v434 = vadd.f32 %v402, 1e-06
    %v435 = vadd.f32 %v403, 1e-06
    %v436 = vadd.f32 %v404, 1e-06
    %v437 = vadd.f32 %v405, 1e-06
    %v438 = vadd.f32 %v406, 1e-06
    %v439 = vadd.f32 %v407, 1e-06
    %v440 = vadd.f32 %v408, 1e-06
    %v441 = vadd.f32 %v409, 1e-06
    %v442 = vadd.f32 %v410, 1e-06
    %v443 = vrsqrt.pop %v411
    %v444 = vrsqrt.pop %v412
    %v445 = vrsqrt.pop %v413
    %v446 = vrsqrt.pop %v414
    %v447 = vrsqrt.pop %v415
    %v448 = vrsqrt.pop %v416
    %v449 = vrsqrt.pop %v417
    %v450 = vrsqrt.pop %v418
    %v451 = vrsqrt.pop %v419
    %v452 = vrsqrt.pop %v420
    %v453 = vrsqrt.pop %v421
    %v454 = vrsqrt.pop %v422
    %v455 = vrsqrt.pop %v423
    %v456 = vrsqrt.pop %v424
    %v457 = vrsqrt.pop %v425
    %v458 = vrsqrt.pop %v426
    %v459 = vrsqrt.pop %v427
    %v460 = vrsqrt.pop %v428
    %v461 = vrsqrt.pop %v429
    %v462 = vrsqrt.pop %v430
    %v463 = vrsqrt.pop %v431
    %v464 = vrsqrt.pop %v432
    %v465 = vrsqrt.pop %v433
    %v466 = vrsqrt.pop %v434
    %v467 = vrsqrt.pop %v435
    %v468 = vrsqrt.pop %v436
    %v469 = vrsqrt.pop %v437
    %v470 = vrsqrt.pop %v438
    %v471 = vrsqrt.pop %v439
    %v472 = vrsqrt.pop %v440
    %v473 = vrsqrt.pop %v441
    %v474 = vrsqrt.pop %v442
    %v475 = vmul.f32 %v219, %v443
    %v476 = vmul.f32 %v220, %v444
    %v477 = vmul.f32 %v221, %v445
    %v478 = vmul.f32 %v222, %v446
    %v479 = vmul.f32 %v223, %v447
    %v480 = vmul.f32 %v224, %v448
    %v481 = vmul.f32 %v225, %v449
    %v482 = vmul.f32 %v226, %v450
    %v483 = vmul.f32 %v227, %v451
    %v484 = vmul.f32 %v228, %v452
    %v485 = vmul.f32 %v229, %v453
    %v486 = vmul.f32 %v230, %v454
    %v487 = vmul.f32 %v231, %v455
    %v488 = vmul.f32 %v232, %v456
    %v489 = vmul.f32 %v233, %v457
    %v490 = vmul.f32 %v234, %v458
    %v491 = vmul.f32 %v235, %v459
    %v492 = vmul.f32 %v236, %v460
    %v493 = vmul.f32 %v237, %v461
    %v494 = vmul.f32 %v238, %v462
    %v495 = vmul.f32 %v239, %v463
    %v496 = vmul.f32 %v240, %v464
    %v497 = vmul.f32 %v241, %v465
    %v498 = vmul.f32 %v242, %v466
    %v499 = vmul.f32 %v243, %v467
    %v500 = vmul.f32 %v244, %v468
    %v501 = vmul.f32 %v245, %v469
    %v502 = vmul.f32 %v246, %v470
    %v503 = vmul.f32 %v247, %v471
    %v504 = vmul.f32 %v248, %v472
    %v505 = vmul.f32 %v249, %v473
    %v506 = vmul.f32 %v250, %v474
    %v507 = vld [vmem:[%s1] sm:$0x1]
    %v509 = vlaneseq
    %v510 = vshrl.u32 %v509, 7
    %v511 = vsub.s32 0, %v510
    %v512 = vrot.slane %v507, %v511
    %v514 = vmul.f32 %v475, %v512
    %v515 = vmul.f32 %v476, %v512
    %v516 = vmul.f32 %v477, %v512
    %v517 = vmul.f32 %v478, %v512
    %v518 = vmul.f32 %v479, %v512
    %v519 = vmul.f32 %v480, %v512
    %v520 = vmul.f32 %v481, %v512
    %v521 = vmul.f32 %v482, %v512
    %v522 = vmul.f32 %v483, %v512
    %v523 = vmul.f32 %v484, %v512
    %v524 = vmul.f32 %v485, %v512
    %v525 = vmul.f32 %v486, %v512
    %v526 = vmul.f32 %v487, %v512
    %v527 = vmul.f32 %v488, %v512
    %v528 = vmul.f32 %v489, %v512
    %v529 = vmul.f32 %v490, %v512
    %v530 = vmul.f32 %v491, %v512
    %v531 = vmul.f32 %v492, %v512
    %v532 = vmul.f32 %v493, %v512
    %v533 = vmul.f32 %v494, %v512
    %v534 = vmul.f32 %v495, %v512
    %v535 = vmul.f32 %v496, %v512
    %v536 = vmul.f32 %v497, %v512
    %v537 = vmul.f32 %v498, %v512
    %v538 = vmul.f32 %v499, %v512
    %v539 = vmul.f32 %v500, %v512
    %v540 = vmul.f32 %v501, %v512
    %v541 = vmul.f32 %v502, %v512
    %v542 = vmul.f32 %v503, %v512
    %v543 = vmul.f32 %v504, %v512
    %v544 = vmul.f32 %v505, %v512
    %v545 = vmul.f32 %v506, %v512
    %v546 = vld [vmem:[%s2] sm:$0x1]
    %v548 = vlaneseq
    %v549 = vshrl.u32 %v548, 7
    %v550 = vsub.s32 0, %v549
    %v551 = vrot.slane %v546, %v550
    %v553 = vadd.f32 %v514, %v551
    %v554 = vadd.f32 %v515, %v551
    %v555 = vadd.f32 %v516, %v551
    %v556 = vadd.f32 %v517, %v551
    %v557 = vadd.f32 %v518, %v551
    %v558 = vadd.f32 %v519, %v551
    %v559 = vadd.f32 %v520, %v551
    %v560 = vadd.f32 %v521, %v551
    %v561 = vadd.f32 %v522, %v551
    %v562 = vadd.f32 %v523, %v551
    %v563 = vadd.f32 %v524, %v551
    %v564 = vadd.f32 %v525, %v551
    %v565 = vadd.f32 %v526, %v551
    %v566 = vadd.f32 %v527, %v551
    %v567 = vadd.f32 %v528, %v551
    %v568 = vadd.f32 %v529, %v551
    %v569 = vadd.f32 %v530, %v551
    %v570 = vadd.f32 %v531, %v551
    %v571 = vadd.f32 %v532, %v551
    %v572 = vadd.f32 %v533, %v551
    %v573 = vadd.f32 %v534, %v551
    %v574 = vadd.f32 %v535, %v551
    %v575 = vadd.f32 %v536, %v551
    %v576 = vadd.f32 %v537, %v551
    %v577 = vadd.f32 %v538, %v551
    %v578 = vadd.f32 %v539, %v551
    %v579 = vadd.f32 %v540, %v551
    %v580 = vadd.f32 %v541, %v551
    %v581 = vadd.f32 %v542, %v551
    %v582 = vadd.f32 %v543, %v551
    %v583 = vadd.f32 %v544, %v551
    %v584 = vadd.f32 %v545, %v551
    %v585 = vpack.c.bf16 %v554, %v553
    %v586 = vpack.c.bf16 %v556, %v555
    %v587 = vpack.c.bf16 %v558, %v557
    %v588 = vpack.c.bf16 %v560, %v559
    %v589 = vpack.c.bf16 %v562, %v561
    %v590 = vpack.c.bf16 %v564, %v563
    %v591 = vpack.c.bf16 %v566, %v565
    %v592 = vpack.c.bf16 %v568, %v567
    %v593 = vpack.c.bf16 %v570, %v569
    %v594 = vpack.c.bf16 %v572, %v571
    %v595 = vpack.c.bf16 %v574, %v573
    %v596 = vpack.c.bf16 %v576, %v575
    %v597 = vpack.c.bf16 %v578, %v577
    %v598 = vpack.c.bf16 %v580, %v579
    %v599 = vpack.c.bf16 %v582, %v581
    %v600 = vpack.c.bf16 %v584, %v583
    %v617 = vunpack.c.l.b16 %v585
    %v618 = vunpack.c.h.b16 %v585
    %v619 = vunpack.c.l.b16 %v586
    %v620 = vunpack.c.h.b16 %v586
    %v621 = vunpack.c.l.b16 %v587
    %v622 = vunpack.c.h.b16 %v587
    %v623 = vunpack.c.l.b16 %v588
    %v624 = vunpack.c.h.b16 %v588
    %v625 = vunpack.c.l.b16 %v589
    %v626 = vunpack.c.h.b16 %v589
    %v627 = vunpack.c.l.b16 %v590
    %v628 = vunpack.c.h.b16 %v590
    %v629 = vunpack.c.l.b16 %v591
    %v630 = vunpack.c.h.b16 %v591
    %v631 = vunpack.c.l.b16 %v592
    %v632 = vunpack.c.h.b16 %v592
    %v633 = vunpack.c.l.b16 %v593
    %v634 = vunpack.c.h.b16 %v593
    %v635 = vunpack.c.l.b16 %v594
    %v636 = vunpack.c.h.b16 %v594
    %v637 = vunpack.c.l.b16 %v595
    %v638 = vunpack.c.h.b16 %v595
    %v639 = vunpack.c.l.b16 %v596
    %v640 = vunpack.c.h.b16 %v596
    %v641 = vunpack.c.l.b16 %v597
    %v642 = vunpack.c.h.b16 %v597
    %v643 = vunpack.c.l.b16 %v598
    %v644 = vunpack.c.h.b16 %v598
    %v645 = vunpack.c.l.b16 %v599
    %v646 = vunpack.c.h.b16 %v599
    %v647 = vunpack.c.l.b16 %v600
    %v648 = vunpack.c.h.b16 %v600
    %v649 = vpack.c.b16 %v617, %v617
    %v650 = vpack.c.b16 %v618, %v618
    %v651 = vpack.c.b16 %v619, %v619
    %v652 = vpack.c.b16 %v620, %v620
    %v653 = vpack.c.b16 %v621, %v621
    %v654 = vpack.c.b16 %v622, %v622
    %v655 = vpack.c.b16 %v623, %v623
    %v656 = vpack.c.b16 %v624, %v624
    %v657 = vpack.c.b16 %v625, %v625
    %v658 = vpack.c.b16 %v626, %v626
    %v659 = vpack.c.b16 %v627, %v627
    %v660 = vpack.c.b16 %v628, %v628
    %v661 = vpack.c.b16 %v629, %v629
    %v662 = vpack.c.b16 %v630, %v630
    %v663 = vpack.c.b16 %v631, %v631
    %v664 = vpack.c.b16 %v632, %v632
    %v665 = vpack.c.b16 %v633, %v633
    %v666 = vpack.c.b16 %v634, %v634
    %v667 = vpack.c.b16 %v635, %v635
    %v668 = vpack.c.b16 %v636, %v636
    %v669 = vpack.c.b16 %v637, %v637
    %v670 = vpack.c.b16 %v638, %v638
    %v671 = vpack.c.b16 %v639, %v639
    %v672 = vpack.c.b16 %v640, %v640
    %v673 = vpack.c.b16 %v641, %v641
    %v674 = vpack.c.b16 %v642, %v642
    %v675 = vpack.c.b16 %v643, %v643
    %v676 = vpack.c.b16 %v644, %v644
    %v677 = vpack.c.b16 %v645, %v645
    %v678 = vpack.c.b16 %v646, %v646
    %v679 = vpack.c.b16 %v647, %v647
    %v680 = vpack.c.b16 %v648, %v648
    %vm713 = vcmask 519168
    %714 = vst.msk [vmem:[#allocation2] sm:$0xf] %vm713, %v649
    %715 = vst.msk [vmem:[#allocation2 + $0x4] sm:$0xf] %vm713, %v650
    %716 = vst.msk [vmem:[#allocation2 + $0x8] sm:$0xf] %vm713, %v651
    %717 = vst.msk [vmem:[#allocation2 + $0xc] sm:$0xf] %vm713, %v652
    %718 = vst.msk [vmem:[#allocation2 + $0x10] sm:$0xf] %vm713, %v653
    %719 = vst.msk [vmem:[#allocation2 + $0x14] sm:$0xf] %vm713, %v654
    %720 = vst.msk [vmem:[#allocation2 + $0x18] sm:$0xf] %vm713, %v655
    %721 = vst.msk [vmem:[#allocation2 + $0x1c] sm:$0xf] %vm713, %v656
    %722 = vst.msk [vmem:[#allocation2 + $0x20] sm:$0xf] %vm713, %v657
    %723 = vst.msk [vmem:[#allocation2 + $0x24] sm:$0xf] %vm713, %v658
    %724 = vst.msk [vmem:[#allocation2 + $0x28] sm:$0xf] %vm713, %v659
    %725 = vst.msk [vmem:[#allocation2 + $0x2c] sm:$0xf] %vm713, %v660
    %726 = vst.msk [vmem:[#allocation2 + $0x30] sm:$0xf] %vm713, %v661
    %727 = vst.msk [vmem:[#allocation2 + $0x34] sm:$0xf] %vm713, %v662
    %728 = vst.msk [vmem:[#allocation2 + $0x38] sm:$0xf] %vm713, %v663
    %729 = vst.msk [vmem:[#allocation2 + $0x3c] sm:$0xf] %vm713, %v664
    %730 = vst.msk [vmem:[#allocation2 + $0x40] sm:$0xf] %vm713, %v665
    %731 = vst.msk [vmem:[#allocation2 + $0x44] sm:$0xf] %vm713, %v666
    %732 = vst.msk [vmem:[#allocation2 + $0x48] sm:$0xf] %vm713, %v667
    %733 = vst.msk [vmem:[#allocation2 + $0x4c] sm:$0xf] %vm713, %v668
    %734 = vst.msk [vmem:[#allocation2 + $0x50] sm:$0xf] %vm713, %v669
    %735 = vst.msk [vmem:[#allocation2 + $0x54] sm:$0xf] %vm713, %v670
    %736 = vst.msk [vmem:[#allocation2 + $0x58] sm:$0xf] %vm713, %v671
    %737 = vst.msk [vmem:[#allocation2 + $0x5c] sm:$0xf] %vm713, %v672
    %738 = vst.msk [vmem:[#allocation2 + $0x60] sm:$0xf] %vm713, %v673
    %739 = vst.msk [vmem:[#allocation2 + $0x64] sm:$0xf] %vm713, %v674
    %740 = vst.msk [vmem:[#allocation2 + $0x68] sm:$0xf] %vm713, %v675
    %741 = vst.msk [vmem:[#allocation2 + $0x6c] sm:$0xf] %vm713, %v676
    %742 = vst.msk [vmem:[#allocation2 + $0x70] sm:$0xf] %vm713, %v677
    %743 = vst.msk [vmem:[#allocation2 + $0x74] sm:$0xf] %vm713, %v678
    %744 = vst.msk [vmem:[#allocation2 + $0x78] sm:$0xf] %vm713, %v679
    %745 = vst.msk [vmem:[#allocation2 + $0x7c] sm:$0xf] %vm713, %v680
  $region25: #{vit_forward.16} parent=0 // pred_fallthru
    _
  %v746 = vld [vmem:[#allocation2] sm:$0xf]
  %v747 = vld [vmem:[#allocation2 + $0x4] sm:$0xf]
  %v748 = vld [vmem:[#allocation2 + $0x8] sm:$0xf]
  %v749 = vld [vmem:[#allocation2 + $0xc] sm:$0xf]
  %v750 = vld [vmem:[#allocation2 + $0x10] sm:$0xf]
  %v751 = vld [vmem:[#allocation2 + $0x14] sm:$0xf]
  %v752 = vld [vmem:[#allocation2 + $0x18] sm:$0xf]
  %v753 = vld [vmem:[#allocation2 + $0x1c] sm:$0xf]
  %v754 = vld [vmem:[#allocation2 + $0x20] sm:$0xf]
  %v755 = vld [vmem:[#allocation2 + $0x24] sm:$0xf]
  %v756 = vld [vmem:[#allocation2 + $0x28] sm:$0xf]
  %v757 = vld [vmem:[#allocation2 + $0x2c] sm:$0xf]
  %v758 = vld [vmem:[#allocation2 + $0x30] sm:$0xf]
  %v759 = vld [vmem:[#allocation2 + $0x34] sm:$0xf]
  %v760 = vld [vmem:[#allocation2 + $0x38] sm:$0xf]
  %v761 = vld [vmem:[#allocation2 + $0x3c] sm:$0xf]
  %v762 = vld [vmem:[#allocation2 + $0x40] sm:$0xf]
  %v763 = vld [vmem:[#allocation2 + $0x44] sm:$0xf]
  %v764 = vld [vmem:[#allocation2 + $0x48] sm:$0xf]
  %v765 = vld [vmem:[#allocation2 + $0x4c] sm:$0xf]
  %v766 = vld [vmem:[#allocation2 + $0x50] sm:$0xf]
  %v767 = vld [vmem:[#allocation2 + $0x54] sm:$0xf]
  %v768 = vld [vmem:[#allocation2 + $0x58] sm:$0xf]
  %v769 = vld [vmem:[#allocation2 + $0x5c] sm:$0xf]
  %v770 = vld [vmem:[#allocation2 + $0x60] sm:$0xf]
  %v771 = vld [vmem:[#allocation2 + $0x64] sm:$0xf]
  %v772 = vld [vmem:[#allocation2 + $0x68] sm:$0xf]
  %v773 = vld [vmem:[#allocation2 + $0x6c] sm:$0xf]
  %v774 = vld [vmem:[#allocation2 + $0x70] sm:$0xf]
  %v775 = vld [vmem:[#allocation2 + $0x74] sm:$0xf]
  %v776 = vld [vmem:[#allocation2 + $0x78] sm:$0xf]
  %v777 = vld [vmem:[#allocation2 + $0x7c] sm:$0xf]
  %v778 = vld [vmem:[%s3] sm:$0xf]
  %v779 = vld [vmem:[%s3 + $0x4] sm:$0xf]
  %v780 = vld [vmem:[%s3 + $0x8] sm:$0xf]
  %v781 = vld [vmem:[%s3 + $0xc] sm:$0xf]
  %v782 = vld [vmem:[%s3 + $0x10] sm:$0xf]
  %v783 = vld [vmem:[%s3 + $0x14] sm:$0xf]
  %v784 = vld [vmem:[%s3 + $0x18] sm:$0xf]
  %v785 = vld [vmem:[%s3 + $0x1c] sm:$0xf]
  %v786 = vld [vmem:[%s4] sm:$0x1]
  %v788 = vlaneseq
  %v789 = vshrl.u32 %v788, 7
  %v790 = vsub.s32 0, %v789
  %v791 = vrot.slane %v786, %v790
  %v825 = vunpack.c.l.b16 %v746
  %v826 = vunpack.c.l.b16 %v747
  %v827 = vunpack.c.l.b16 %v748
  %v828 = vunpack.c.l.b16 %v749
  %v829 = vunpack.c.l.b16 %v750
  %v830 = vunpack.c.l.b16 %v751
  %v831 = vunpack.c.l.b16 %v752
  %v832 = vunpack.c.l.b16 %v753
  %v833 = vunpack.c.l.b16 %v754
  %v834 = vunpack.c.l.b16 %v755
  %v835 = vunpack.c.l.b16 %v756
  %v836 = vunpack.c.l.b16 %v757
  %v837 = vunpack.c.l.b16 %v758
  %v838 = vunpack.c.l.b16 %v759
  %v839 = vunpack.c.l.b16 %v760
  %v840 = vunpack.c.l.b16 %v761
  %v841 = vunpack.c.l.b16 %v762
  %v842 = vunpack.c.l.b16 %v763
  %v843 = vunpack.c.l.b16 %v764
  %v844 = vunpack.c.l.b16 %v765
  %v845 = vunpack.c.l.b16 %v766
  %v846 = vunpack.c.l.b16 %v767
  %v847 = vunpack.c.l.b16 %v768
  %v848 = vunpack.c.l.b16 %v769
  %v849 = vunpack.c.l.b16 %v770
  %v850 = vunpack.c.l.b16 %v771
  %v851 = vunpack.c.l.b16 %v772
  %v852 = vunpack.c.l.b16 %v773
  %v853 = vunpack.c.l.b16 %v774
  %v854 = vunpack.c.l.b16 %v775
  %v855 = vunpack.c.l.b16 %v776
  %v856 = vunpack.c.l.b16 %v777
  %v857 = vpack.c.b16 %v826, %v825
  %v858 = vpack.c.b16 %v828, %v827
  %v859 = vpack.c.b16 %v830, %v829
  %v860 = vpack.c.b16 %v832, %v831
  %v861 = vpack.c.b16 %v834, %v833
  %v862 = vpack.c.b16 %v836, %v835
  %v863 = vpack.c.b16 %v838, %v837
  %v864 = vpack.c.b16 %v840, %v839
  %v865 = vpack.c.b16 %v842, %v841
  %v866 = vpack.c.b16 %v844, %v843
  %v867 = vpack.c.b16 %v846, %v845
  %v868 = vpack.c.b16 %v848, %v847
  %v869 = vpack.c.b16 %v850, %v849
  %v870 = vpack.c.b16 %v852, %v851
  %v871 = vpack.c.b16 %v854, %v853
  %v872 = vpack.c.b16 %v856, %v855
  %v881 = vunpack.c.l.b16 %v778
  %v882 = vunpack.c.l.b16 %v779
  %v883 = vunpack.c.l.b16 %v780
  %v884 = vunpack.c.l.b16 %v781
  %v885 = vunpack.c.l.b16 %v782
  %v886 = vunpack.c.l.b16 %v783
  %v887 = vunpack.c.l.b16 %v784
  %v888 = vunpack.c.l.b16 %v785
  %v889 = vpack.c.b16 %v882, %v881
  %v890 = vpack.c.b16 %v884, %v883
  %v891 = vpack.c.b16 %v886, %v885
  %v892 = vpack.c.b16 %v888, %v887
  %vm897 = vcmask 523264
  %v899 = vsel %vm897, %v857, 0
  %v902 = vsel %vm897, %v858, 0
  %v905 = vsel %vm897, %v859, 0
  %v908 = vsel %vm897, %v860, 0
  %v911 = vsel %vm897, %v861, 0
  %v914 = vsel %vm897, %v862, 0
  %v917 = vsel %vm897, %v863, 0
  %v920 = vsel %vm897, %v864, 0
  %v923 = vsel %vm897, %v865, 0
  %v926 = vsel %vm897, %v866, 0
  %v929 = vsel %vm897, %v867, 0
  %v932 = vsel %vm897, %v868, 0
  %v935 = vsel %vm897, %v869, 0
  %v938 = vsel %vm897, %v870, 0
  %v941 = vsel %vm897, %v871, 0
  %v944 = vsel %vm897, %v872, 0
  %946 = vmatprep.subr.bf16.mxu0 0
  %947 = vmatpush1.bf16.msra.mxu0 0
  %948 = vmatprep.subr.bf16.mxu0 0
  %949 = vmatpush1.bf16.msra.mxu0 0
  %950 = vmatprep.subr.bf16.mxu0 0
  %951 = vmatpush1.bf16.msra.mxu0 0
  %952 = vmatprep.subr.bf16.mxu0 0
  %953 = vmatpush1.bf16.msra.mxu0 0
  %954 = vmatprep.subr.bf16.mxu0 0
  %955 = vmatpush1.bf16.msra.mxu0 %v892
  %956 = vmatprep.subr.bf16.mxu0 0
  %957 = vmatpush1.bf16.msra.mxu0 %v891
  %958 = vmatprep.subr.bf16.mxu0 0
  %959 = vmatpush1.bf16.msra.mxu0 %v890
  %960 = vmatprep.subr.bf16.mxu0 0
  %961 = vmatpush1.bf16.msra.mxu0 %v889
  %962 = vmatprep.subr.bf16.mxu0 0
  %963 = vmatpush2.bf16.msra.mxu0 0
  %964 = vmatprep.subr.bf16.mxu0 0
  %965 = vmatpush2.bf16.msra.mxu0 0
  %966 = vmatprep.subr.bf16.mxu0 0
  %967 = vmatpush2.bf16.msra.mxu0 0
  %968 = vmatprep.subr.bf16.mxu0 0
  %969 = vmatpush2.bf16.msra.mxu0 0
  %970 = vmatprep.subr.bf16.mxu0 0
  %971 = vmatpush2.bf16.msra.mxu0 0
  %972 = vmatprep.subr.bf16.mxu0 0
  %973 = vmatpush2.bf16.msra.mxu0 0
  %974 = vmatprep.subr.bf16.mxu0 0
  %975 = vmatpush2.bf16.msra.mxu0 0
  %976 = vmatprep.subr.bf16.mxu0 0
  %977 = vmatpush2.bf16.msra.mxu0 0
  %978 = vmatprep.mubr.bf16.mxu0 0
  %979 = vmatmul.mubr.bf16.gmra.mxu0 %v899
  %v980 = vpop.f32.mrf.mxu0
  %v981 = vadd.f32 %v791, %v980
  %v982 = vpop.f32.mrf.mxu0
  %v983 = vpop.f32.mrf.mxu0
  %v984 = vadd.f32 %v791, %v983
  %v985 = vpop.f32.mrf.mxu0
  %986 = vmatprep.mubr.bf16.mxu0 0
  %987 = vmatmul.mubr.bf16.gmra.mxu0 %v902
  %v988 = vpop.f32.mrf.mxu0
  %v989 = vadd.f32 %v791, %v988
  %v990 = vpop.f32.mrf.mxu0
  %v991 = vpop.f32.mrf.mxu0
  %v992 = vadd.f32 %v791, %v991
  %v993 = vpop.f32.mrf.mxu0
  %994 = vmatprep.mubr.bf16.mxu0 0
  %995 = vmatmul.mubr.bf16.gmra.mxu0 %v905
  %v996 = vpop.f32.mrf.mxu0
  %v997 = vadd.f32 %v791, %v996
  %v998 = vpop.f32.mrf.mxu0
  %v999 = vpop.f32.mrf.mxu0
  %v1000 = vadd.f32 %v791, %v999
  %v1001 = vpop.f32.mrf.mxu0
  %1002 = vmatprep.mubr.bf16.mxu0 0
  %1003 = vmatmul.mubr.bf16.gmra.mxu0 %v908
  %v1004 = vpop.f32.mrf.mxu0
  %v1005 = vadd.f32 %v791, %v1004
  %v1006 = vpop.f32.mrf.mxu0
  %v1007 = vpop.f32.mrf.mxu0
  %v1008 = vadd.f32 %v791, %v1007
  %v1009 = vpop.f32.mrf.mxu0
  %1010 = vmatprep.mubr.bf16.mxu0 0
  %1011 = vmatmul.mubr.bf16.gmra.mxu0 %v911
  %v1012 = vpop.f32.mrf.mxu0
  %v1013 = vadd.f32 %v791, %v1012
  %v1014 = vpop.f32.mrf.mxu0
  %v1015 = vpop.f32.mrf.mxu0
  %v1016 = vadd.f32 %v791, %v1015
  %v1017 = vpop.f32.mrf.mxu0
  %1018 = vmatprep.mubr.bf16.mxu0 0
  %1019 = vmatmul.mubr.bf16.gmra.mxu0 %v914
  %v1020 = vpop.f32.mrf.mxu0
  %v1021 = vadd.f32 %v791, %v1020
  %v1022 = vpop.f32.mrf.mxu0
  %v1023 = vpop.f32.mrf.mxu0
  %v1024 = vadd.f32 %v791, %v1023
  %v1025 = vpop.f32.mrf.mxu0
  %1026 = vmatprep.mubr.bf16.mxu0 0
  %1027 = vmatmul.mubr.bf16.gmra.mxu0 %v917
  %v1028 = vpop.f32.mrf.mxu0
  %v1029 = vadd.f32 %v791, %v1028
  %v1030 = vpop.f32.mrf.mxu0
  %v1031 = vpop.f32.mrf.mxu0
  %v1032 = vadd.f32 %v791, %v1031
  %v1033 = vpop.f32.mrf.mxu0
  %1034 = vmatprep.mubr.bf16.mxu0 0
  %1035 = vmatmul.mubr.bf16.gmra.mxu0 %v920
  %v1036 = vpop.f32.mrf.mxu0
  %v1037 = vadd.f32 %v791, %v1036
  %v1038 = vpop.f32.mrf.mxu0
  %v1039 = vpop.f32.mrf.mxu0
  %v1040 = vadd.f32 %v791, %v1039
  %v1041 = vpop.f32.mrf.mxu0
  %1042 = vmatprep.mubr.bf16.mxu0 0
  %1043 = vmatmul.mubr.bf16.gmra.mxu0 %v923
  %v1044 = vpop.f32.mrf.mxu0
  %v1045 = vadd.f32 %v791, %v1044
  %v1046 = vpop.f32.mrf.mxu0
  %v1047 = vpop.f32.mrf.mxu0
  %v1048 = vadd.f32 %v791, %v1047
  %v1049 = vpop.f32.mrf.mxu0
  %1050 = vmatprep.mubr.bf16.mxu0 0
  %1051 = vmatmul.mubr.bf16.gmra.mxu0 %v926
  %v1052 = vpop.f32.mrf.mxu0
  %v1053 = vadd.f32 %v791, %v1052
  %v1054 = vpop.f32.mrf.mxu0
  %v1055 = vpop.f32.mrf.mxu0
  %v1056 = vadd.f32 %v791, %v1055
  %v1057 = vpop.f32.mrf.mxu0
  %1058 = vmatprep.mubr.bf16.mxu0 0
  %1059 = vmatmul.mubr.bf16.gmra.mxu0 %v929
  %v1060 = vpop.f32.mrf.mxu0
  %v1061 = vadd.f32 %v791, %v1060
  %v1062 = vpop.f32.mrf.mxu0
  %v1063 = vpop.f32.mrf.mxu0
  %v1064 = vadd.f32 %v791, %v1063
  %v1065 = vpop.f32.mrf.mxu0
  %1066 = vmatprep.mubr.bf16.mxu0 0
  %1067 = vmatmul.mubr.bf16.gmra.mxu0 %v932
  %v1068 = vpop.f32.mrf.mxu0
  %v1069 = vadd.f32 %v791, %v1068
  %v1070 = vpop.f32.mrf.mxu0
  %v1071 = vpop.f32.mrf.mxu0
  %v1072 = vadd.f32 %v791, %v1071
  %v1073 = vpop.f32.mrf.mxu0
  %1074 = vmatprep.mubr.bf16.mxu0 0
  %1075 = vmatmul.mubr.bf16.gmra.mxu0 %v935
  %v1076 = vpop.f32.mrf.mxu0
  %v1077 = vadd.f32 %v791, %v1076
  %v1078 = vpop.f32.mrf.mxu0
  %v1079 = vpop.f32.mrf.mxu0
  %v1080 = vadd.f32 %v791, %v1079
  %v1081 = vpop.f32.mrf.mxu0
  %1082 = vmatprep.mubr.bf16.mxu0 0
  %1083 = vmatmul.mubr.bf16.gmra.mxu0 %v938
  %v1084 = vpop.f32.mrf.mxu0
  %v1085 = vadd.f32 %v791, %v1084
  %v1086 = vpop.f32.mrf.mxu0
  %v1087 = vpop.f32.mrf.mxu0
  %v1088 = vadd.f32 %v791, %v1087
  %v1089 = vpop.f32.mrf.mxu0
  %1090 = vmatprep.mubr.bf16.mxu0 0
  %1091 = vmatmul.mubr.bf16.gmra.mxu0 %v941
  %v1092 = vpop.f32.mrf.mxu0
  %v1093 = vadd.f32 %v791, %v1092
  %v1094 = vpop.f32.mrf.mxu0
  %v1095 = vpop.f32.mrf.mxu0
  %v1096 = vadd.f32 %v791, %v1095
  %v1097 = vpop.f32.mrf.mxu0
  %1098 = vmatprep.mubr.bf16.mxu0 0
  %1099 = vmatmul.mubr.bf16.gmra.mxu0 %v944
  %v1100 = vpop.f32.mrf.mxu0
  %v1101 = vadd.f32 %v791, %v1100
  %v1102 = vpop.f32.mrf.mxu0
  %v1103 = vpop.f32.mrf.mxu0
  %v1104 = vadd.f32 %v791, %v1103
  %v1105 = vpop.f32.mrf.mxu0
  %1106 = vdwg.mxu0
  %v1107 = vmul.f32 %v981, 0.5
  %v1108 = vmul.f32 %v984, 0.5
  %v1109 = vmul.f32 %v989, 0.5
  %v1110 = vmul.f32 %v992, 0.5
  %v1111 = vmul.f32 %v997, 0.5
  %v1112 = vmul.f32 %v1000, 0.5
  %v1113 = vmul.f32 %v1005, 0.5
  %v1114 = vmul.f32 %v1008, 0.5
  %v1115 = vmul.f32 %v1013, 0.5
  %v1116 = vmul.f32 %v1016, 0.5
  %v1117 = vmul.f32 %v1021, 0.5
  %v1118 = vmul.f32 %v1024, 0.5
  %v1119 = vmul.f32 %v1029, 0.5
  %v1120 = vmul.f32 %v1032, 0.5
  %v1121 = vmul.f32 %v1037, 0.5
  %v1122 = vmul.f32 %v1040, 0.5
  %v1123 = vmul.f32 %v1045, 0.5
  %v1124 = vmul.f32 %v1048, 0.5
  %v1125 = vmul.f32 %v1053, 0.5
  %v1126 = vmul.f32 %v1056, 0.5
  %v1127 = vmul.f32 %v1061, 0.5
  %v1128 = vmul.f32 %v1064, 0.5
  %v1129 = vmul.f32 %v1069, 0.5
  %v1130 = vmul.f32 %v1072, 0.5
  %v1131 = vmul.f32 %v1077, 0.5
  %v1132 = vmul.f32 %v1080, 0.5
  %v1133 = vmul.f32 %v1085, 0.5
  %v1134 = vmul.f32 %v1088, 0.5
  %v1135 = vmul.f32 %v1093, 0.5
  %v1136 = vmul.f32 %v1096, 0.5
  %v1137 = vmul.f32 %v1101, 0.5
  %v1138 = vmul.f32 %v1104, 0.5
  %v1139 = vmul.f32 %v981, 0.70710677
  %v1140 = vmul.f32 %v984, 0.70710677
  %v1141 = vmul.f32 %v989, 0.70710677
  %v1142 = vmul.f32 %v992, 0.70710677
  %v1143 = vmul.f32 %v997, 0.70710677
  %v1144 = vmul.f32 %v1000, 0.70710677
  %v1145 = vmul.f32 %v1005, 0.70710677
  %v1146 = vmul.f32 %v1008, 0.70710677
  %v1147 = vmul.f32 %v1013, 0.70710677
  %v1148 = vmul.f32 %v1016, 0.70710677
  %v1149 = vmul.f32 %v1021, 0.70710677
  %v1150 = vmul.f32 %v1024, 0.70710677
  %v1151 = vmul.f32 %v1029, 0.70710677
  %v1152 = vmul.f32 %v1032, 0.70710677
  %v1153 = vmul.f32 %v1037, 0.70710677
  %v1154 = vmul.f32 %v1040, 0.70710677
  %v1155 = vmul.f32 %v1045, 0.70710677
  %v1156 = vmul.f32 %v1048, 0.70710677
  %v1157 = vmul.f32 %v1053, 0.70710677
  %v1158 = vmul.f32 %v1056, 0.70710677
  %v1159 = vmul.f32 %v1061, 0.70710677
  %v1160 = vmul.f32 %v1064, 0.70710677
  %v1161 = vmul.f32 %v1069, 0.70710677
  %v1162 = vmul.f32 %v1072, 0.70710677
  %v1163 = vmul.f32 %v1077, 0.70710677
  %v1164 = vmul.f32 %v1080, 0.70710677
  %v1165 = vmul.f32 %v1085, 0.70710677
  %v1166 = vmul.f32 %v1088, 0.70710677
  %v1167 = vmul.f32 %v1093, 0.70710677
  %v1168 = vmul.f32 %v1096, 0.70710677
  %v1169 = vmul.f32 %v1101, 0.70710677
  %v1170 = vmul.f32 %v1104, 0.70710677
  %v1171 = verf.f32.pop %v1139
  %v1172 = verf.f32.pop %v1140
  %v1173 = verf.f32.pop %v1141
  %v1174 = verf.f32.pop %v1142
  %v1175 = verf.f32.pop %v1143
  %v1176 = verf.f32.pop %v1144
  %v1177 = verf.f32.pop %v1145
  %v1178 = verf.f32.pop %v1146
  %v1179 = verf.f32.pop %v1147
  %v1180 = verf.f32.pop %v1148
  %v1181 = verf.f32.pop %v1149
  %v1182 = verf.f32.pop %v1150
  %v1183 = verf.f32.pop %v1151
  %v1184 = verf.f32.pop %v1152
  %v1185 = verf.f32.pop %v1153
  %v1186 = verf.f32.pop %v1154
  %v1187 = verf.f32.pop %v1155
  %v1188 = verf.f32.pop %v1156
  %v1189 = verf.f32.pop %v1157
  %v1190 = verf.f32.pop %v1158
  %v1191 = verf.f32.pop %v1159
  %v1192 = verf.f32.pop %v1160
  %v1193 = verf.f32.pop %v1161
  %v1194 = verf.f32.pop %v1162
  %v1195 = verf.f32.pop %v1163
  %v1196 = verf.f32.pop %v1164
  %v1197 = verf.f32.pop %v1165
  %v1198 = verf.f32.pop %v1166
  %v1199 = verf.f32.pop %v1167
  %v1200 = verf.f32.pop %v1168
  %v1201 = verf.f32.pop %v1169
  %v1202 = verf.f32.pop %v1170
  %v1203 = vadd.f32 %v1171, 1.0
  %v1204 = vadd.f32 %v1172, 1.0
  %v1205 = vadd.f32 %v1173, 1.0
  %v1206 = vadd.f32 %v1174, 1.0
  %v1207 = vadd.f32 %v1175, 1.0
  %v1208 = vadd.f32 %v1176, 1.0
  %v1209 = vadd.f32 %v1177, 1.0
  %v1210 = vadd.f32 %v1178, 1.0
  %v1211 = vadd.f32 %v1179, 1.0
  %v1212 = vadd.f32 %v1180, 1.0
  %v1213 = vadd.f32 %v1181, 1.0
  %v1214 = vadd.f32 %v1182, 1.0
  %v1215 = vadd.f32 %v1183, 1.0
  %v1216 = vadd.f32 %v1184, 1.0
  %v1217 = vadd.f32 %v1185, 1.0
  %v1218 = vadd.f32 %v1186, 1.0
  %v1219 = vadd.f32 %v1187, 1.0
  %v1220 = vadd.f32 %v1188, 1.0
  %v1221 = vadd.f32 %v1189, 1.0
  %v1222 = vadd.f32 %v1190, 1.0
  %v1223 = vadd.f32 %v1191, 1.0
  %v1224 = vadd.f32 %v1192, 1.0
  %v1225 = vadd.f32 %v1193, 1.0
  %v1226 = vadd.f32 %v1194, 1.0
  %v1227 = vadd.f32 %v1195, 1.0
  %v1228 = vadd.f32 %v1196, 1.0
  %v1229 = vadd.f32 %v1197, 1.0
  %v1230 = vadd.f32 %v1198, 1.0
  %v1231 = vadd.f32 %v1199, 1.0
  %v1232 = vadd.f32 %v1200, 1.0
  %v1233 = vadd.f32 %v1201, 1.0
  %v1234 = vadd.f32 %v1202, 1.0
  %v1235 = vmul.f32 %v1107, %v1203
  %v1236 = vmul.f32 %v1108, %v1204
  %v1237 = vmul.f32 %v1109, %v1205
  %v1238 = vmul.f32 %v1110, %v1206
  %v1239 = vmul.f32 %v1111, %v1207
  %v1240 = vmul.f32 %v1112, %v1208
  %v1241 = vmul.f32 %v1113, %v1209
  %v1242 = vmul.f32 %v1114, %v1210
  %v1243 = vmul.f32 %v1115, %v1211
  %v1244 = vmul.f32 %v1116, %v1212
  %v1245 = vmul.f32 %v1117, %v1213
  %v1246 = vmul.f32 %v1118, %v1214
  %v1247 = vmul.f32 %v1119, %v1215
  %v1248 = vmul.f32 %v1120, %v1216
  %v1249 = vmul.f32 %v1121, %v1217
  %v1250 = vmul.f32 %v1122, %v1218
  %v1251 = vmul.f32 %v1123, %v1219
  %v1252 = vmul.f32 %v1124, %v1220
  %v1253 = vmul.f32 %v1125, %v1221
  %v1254 = vmul.f32 %v1126, %v1222
  %v1255 = vmul.f32 %v1127, %v1223
  %v1256 = vmul.f32 %v1128, %v1224
  %v1257 = vmul.f32 %v1129, %v1225
  %v1258 = vmul.f32 %v1130, %v1226
  %v1259 = vmul.f32 %v1131, %v1227
  %v1260 = vmul.f32 %v1132, %v1228
  %v1261 = vmul.f32 %v1133, %v1229
  %v1262 = vmul.f32 %v1134, %v1230
  %v1263 = vmul.f32 %v1135, %v1231
  %v1264 = vmul.f32 %v1136, %v1232
  %v1265 = vmul.f32 %v1137, %v1233
  %v1266 = vmul.f32 %v1138, %v1234
  %v1267 = vpack.c.bf16 %v1236, %v1235
  %v1268 = vpack.c.bf16 %v1238, %v1237
  %v1269 = vpack.c.bf16 %v1240, %v1239
  %v1270 = vpack.c.bf16 %v1242, %v1241
  %v1271 = vpack.c.bf16 %v1244, %v1243
  %v1272 = vpack.c.bf16 %v1246, %v1245
  %v1273 = vpack.c.bf16 %v1248, %v1247
  %v1274 = vpack.c.bf16 %v1250, %v1249
  %v1275 = vpack.c.bf16 %v1252, %v1251
  %v1276 = vpack.c.bf16 %v1254, %v1253
  %v1277 = vpack.c.bf16 %v1256, %v1255
  %v1278 = vpack.c.bf16 %v1258, %v1257
  %v1279 = vpack.c.bf16 %v1260, %v1259
  %v1280 = vpack.c.bf16 %v1262, %v1261
  %v1281 = vpack.c.bf16 %v1264, %v1263
  %v1282 = vpack.c.bf16 %v1266, %v1265
  %v1299 = vunpack.c.l.b16 %v1267
  %v1300 = vunpack.c.h.b16 %v1267
  %v1301 = vunpack.c.l.b16 %v1268
  %v1302 = vunpack.c.h.b16 %v1268
  %v1303 = vunpack.c.l.b16 %v1269
  %v1304 = vunpack.c.h.b16 %v1269
  %v1305 = vunpack.c.l.b16 %v1270
  %v1306 = vunpack.c.h.b16 %v1270
  %v1307 = vunpack.c.l.b16 %v1271
  %v1308 = vunpack.c.h.b16 %v1271
  %v1309 = vunpack.c.l.b16 %v1272
  %v1310 = vunpack.c.h.b16 %v1272
  %v1311 = vunpack.c.l.b16 %v1273
  %v1312 = vunpack.c.h.b16 %v1273
  %v1313 = vunpack.c.l.b16 %v1274
  %v1314 = vunpack.c.h.b16 %v1274
  %v1315 = vunpack.c.l.b16 %v1275
  %v1316 = vunpack.c.h.b16 %v1275
  %v1317 = vunpack.c.l.b16 %v1276
  %v1318 = vunpack.c.h.b16 %v1276
  %v1319 = vunpack.c.l.b16 %v1277
  %v1320 = vunpack.c.h.b16 %v1277
  %v1321 = vunpack.c.l.b16 %v1278
  %v1322 = vunpack.c.h.b16 %v1278
  %v1323 = vunpack.c.l.b16 %v1279
  %v1324 = vunpack.c.h.b16 %v1279
  %v1325 = vunpack.c.l.b16 %v1280
  %v1326 = vunpack.c.h.b16 %v1280
  %v1327 = vunpack.c.l.b16 %v1281
  %v1328 = vunpack.c.h.b16 %v1281
  %v1329 = vunpack.c.l.b16 %v1282
  %v1330 = vunpack.c.h.b16 %v1282
  %v1331 = vpack.c.b16 %v1299, %v1299
  %v1332 = vpack.c.b16 %v1300, %v1300
  %v1333 = vpack.c.b16 %v1301, %v1301
  %v1334 = vpack.c.b16 %v1302, %v1302
  %v1335 = vpack.c.b16 %v1303, %v1303
  %v1336 = vpack.c.b16 %v1304, %v1304
  %v1337 = vpack.c.b16 %v1305, %v1305
  %v1338 = vpack.c.b16 %v1306, %v1306
  %v1339 = vpack.c.b16 %v1307, %v1307
  %v1340 = vpack.c.b16 %v1308, %v1308
  %v1341 = vpack.c.b16 %v1309, %v1309
  %v1342 = vpack.c.b16 %v1310, %v1310
  %v1343 = vpack.c.b16 %v1311, %v1311
  %v1344 = vpack.c.b16 %v1312, %v1312
  %v1345 = vpack.c.b16 %v1313, %v1313
  %v1346 = vpack.c.b16 %v1314, %v1314
  %v1347 = vpack.c.b16 %v1315, %v1315
  %v1348 = vpack.c.b16 %v1316, %v1316
  %v1349 = vpack.c.b16 %v1317, %v1317
  %v1350 = vpack.c.b16 %v1318, %v1318
  %v1351 = vpack.c.b16 %v1319, %v1319
  %v1352 = vpack.c.b16 %v1320, %v1320
  %v1353 = vpack.c.b16 %v1321, %v1321
  %v1354 = vpack.c.b16 %v1322, %v1322
  %v1355 = vpack.c.b16 %v1323, %v1323
  %v1356 = vpack.c.b16 %v1324, %v1324
  %v1357 = vpack.c.b16 %v1325, %v1325
  %v1358 = vpack.c.b16 %v1326, %v1326
  %v1359 = vpack.c.b16 %v1327, %v1327
  %v1360 = vpack.c.b16 %v1328, %v1328
  %v1361 = vpack.c.b16 %v1329, %v1329
  %v1362 = vpack.c.b16 %v1330, %v1330
  %1395 = vst [vmem:[%s5] sm:$0xf] %v1331
  %1396 = vst [vmem:[%s5 + $0x4] sm:$0xf] %v1332
  %1397 = vst [vmem:[%s5 + $0x8] sm:$0xf] %v1333
  %1398 = vst [vmem:[%s5 + $0xc] sm:$0xf] %v1334
  %1399 = vst [vmem:[%s5 + $0x10] sm:$0xf] %v1335
  %1400 = vst [vmem:[%s5 + $0x14] sm:$0xf] %v1336
  %1401 = vst [vmem:[%s5 + $0x18] sm:$0xf] %v1337
  %1402 = vst [vmem:[%s5 + $0x1c] sm:$0xf] %v1338
  %1403 = vst [vmem:[%s5 + $0x20] sm:$0xf] %v1339
  %1404 = vst [vmem:[%s5 + $0x24] sm:$0xf] %v1340
  %1405 = vst [vmem:[%s5 + $0x28] sm:$0xf] %v1341
  %1406 = vst [vmem:[%s5 + $0x2c] sm:$0xf] %v1342
  %1407 = vst [vmem:[%s5 + $0x30] sm:$0xf] %v1343
  %1408 = vst [vmem:[%s5 + $0x34] sm:$0xf] %v1344
  %1409 = vst [vmem:[%s5 + $0x38] sm:$0xf] %v1345
  %1410 = vst [vmem:[%s5 + $0x3c] sm:$0xf] %v1346
  %1411 = vst [vmem:[%s5 + $0x40] sm:$0xf] %v1347
  %1412 = vst [vmem:[%s5 + $0x44] sm:$0xf] %v1348
  %1413 = vst [vmem:[%s5 + $0x48] sm:$0xf] %v1349
  %1414 = vst [vmem:[%s5 + $0x4c] sm:$0xf] %v1350
  %1415 = vst [vmem:[%s5 + $0x50] sm:$0xf] %v1351
  %1416 = vst [vmem:[%s5 + $0x54] sm:$0xf] %v1352
  %1417 = vst [vmem:[%s5 + $0x58] sm:$0xf] %v1353
  %1418 = vst [vmem:[%s5 + $0x5c] sm:$0xf] %v1354
  %1419 = vst [vmem:[%s5 + $0x60] sm:$0xf] %v1355
  %1420 = vst [vmem:[%s5 + $0x64] sm:$0xf] %v1356
  %1421 = vst [vmem:[%s5 + $0x68] sm:$0xf] %v1357
  %1422 = vst [vmem:[%s5 + $0x6c] sm:$0xf] %v1358
  %1423 = vst [vmem:[%s5 + $0x70] sm:$0xf] %v1359
  %1424 = vst [vmem:[%s5 + $0x74] sm:$0xf] %v1360
  %1425 = vst [vmem:[%s5 + $0x78] sm:$0xf] %v1361
  %1426 = vst [vmem:[%s5 + $0x7c] sm:$0xf] %v1362
  // Predicated region
  $region26: #{vit_forward.16} parent=0 // pred_check
    _
  $region27: #{vit_forward.16} parent=0 // pred_check_branch
    %1428 = sbr.rel (0) target = $region29
  $region28: #{vit_forward.16} parent=0 // pred_region
    _
  $region29: #{vit_forward.16} parent=0 // pred_fallthru
    _
  // Predicated region
  $region30: #{vit_forward.16} parent=0 // pred_check
    _
  $region31: #{vit_forward.16} parent=0 // pred_check_branch
    %1430 = sbr.rel (0) target = $region33
  $region32: #{vit_forward.16} parent=0 // pred_region
    _
  $region33: #{vit_forward.16} parent=0 // pred_fallthru
    _

</llo_original>
